<compile_context>
chip_gen: v7x
topology: tpu7x:2x2x1
jax: 0.10.0
libtpu: 0.0.40
codegen_flags: <defaults>
</compile_context>

<pallas_src>
import functools

import jax
import jax.numpy as jnp
import numpy as np
from jax.experimental import pallas as pl
from jax.experimental.pallas import tpu as pltpu


# ----------------------------- kernel helpers --------------------------------
def _conv3x3_from_padded(src_ref, w_ref, Ho, Wo, C, stride, deep_k):
    """3x3 conv (input already zero-padded by 1) as im2col MXU matmul(s).

    src_ref: (B, Hp, Wp, C) bf16 VMEM ref.
    w_ref:   (9*C, Cout) bf16 ref, tap-major stacking (tap = kh*3 + kw).
    Returns (B*Ho*Wo, Cout) f32.
    """
    B = src_ref.shape[0]
    M = B * Ho * Wo
    taps = []
    for kh in range(3):
        for kw in range(3):
            if stride == 1:
                p = src_ref[:, pl.ds(kh, Ho), pl.ds(kw, Wo), :]
            else:
                p = src_ref[:, pl.ds(kh, Ho, stride), pl.ds(kw, Wo, stride), :]
            taps.append(p.reshape(M, C))
    if deep_k:
        # Small C: the (M, 9*C) temp is tiny; one deep-K pass beats nine
        # tiny-K matmuls.
        patches = jnp.concatenate(taps, axis=-1)
        return jnp.dot(patches, w_ref[...], preferred_element_type=jnp.float32)
    # Large C: nine accumulated matmuls -> no big im2col concatenate temp
    # sitting on the vld/vst critical path, several MB less VMEM per step.
    acc = None
    for t, tap in enumerate(taps):
        part = jnp.dot(tap, w_ref[pl.ds(t * C, C), :],
                       preferred_element_type=jnp.float32)
        acc = part if acc is None else acc + part
    return acc


def _zero_halo(ref, B, Hi, Wi, C, dtype):
    """Zero the 1-pixel spatial halo of a (B, Hi+2, Wi+2, C) scratch.

    Re-done every grid step on purpose: with "parallel" grid partitioning each
    TensorCore has its own (uninitialized) scratch and may start at a nonzero
    program_id, so a once-only (program_id == 0) init would be unsafe there.
    """
    zrow = jnp.zeros((B, 1, Wi + 2, C), dtype)
    zcol = jnp.zeros((B, Hi, 1, C), dtype)
    ref[:, pl.ds(0, 1), :, :] = zrow
    ref[:, pl.ds(Hi + 1, 1), :, :] = zrow
    ref[:, pl.ds(1, Hi), pl.ds(0, 1), :] = zcol
    ref[:, pl.ds(1, Hi), pl.ds(Wi + 1, 1), :] = zcol


def _shake_basic_block_kernel(
    x_ref,     # (B, H, W, Cin)        f32   raw NHWC input block
    s1_ref,    # (1, Cin)              f32   BN1 scale
    t1_ref,    # (1, Cin)              f32   BN1 shift
    w1_ref,    # (9*Cin, Cout)         bf16  conv1 weights * BN2 scale
    w2_ref,    # (9*Cout, Cout)        bf16  conv2 weights * BN3 scale * keep
    b2_ref,    # (1, Cout)             f32   BN2 shift
    b3_ref,    # (1, Cout)             f32   BN3 shift * keep
    out_ref,   # (B, Ho, Wo, Cout)     f32
    xpad_ref,  # (B, H+2, W+2, Cin)    bf16  scratch: padded conv1 input
    h2p_ref,   # (B, Ho+2, Wo+2, Cout) bf16  scratch: padded conv2 input
    *, stride, deep_k1, deep_k2,
):
    B, Ho, Wo, Cout = out_ref.shape
    _, H, W, Cin = x_ref.shape
    M = B * Ho * Wo

    # ---- BN1 fused into the f32 -> bf16 staging of the padded conv1 input ----
    x = x_ref[...]                                        # f32, reused below
    _zero_halo(xpad_ref, B, H, W, Cin, jnp.bfloat16)
    s1 = s1_ref[...].reshape(1, 1, 1, Cin)
    t1 = t1_ref[...].reshape(1, 1, 1, Cin)
    xpad_ref[:, pl.ds(1, H), pl.ds(1, W), :] = (x * s1 + t1).astype(jnp.bfloat16)

    # ---- conv1: 3x3 / stride s (BN2 scale folded into w1) --------------------
    h1 = _conv3x3_from_padded(xpad_ref, w1_ref, Ho, Wo, Cin, stride, deep_k1)

    # ---- BN2 shift + ReLU -----------------------------------------------------
    h2 = jnp.maximum(h1 + b2_ref[...], 0.0)               # (M, Cout) f32

    # ---- stage conv2 input (zero halo + single interior store) ---------------
    _zero_halo(h2p_ref, B, Ho, Wo, Cout, jnp.bfloat16)
    h2p_ref[:, pl.ds(1, Ho), pl.ds(1, Wo), :] = (
        h2.reshape(B, Ho, Wo, Cout).astype(jnp.bfloat16))

    # ---- conv2: 3x3 / stride 1 (BN3 scale and ShakeDrop keep folded) ---------
    h3 = _conv3x3_from_padded(h2p_ref, w2_ref, Ho, Wo, Cout, 1, deep_k2)
    res = h3 + b3_ref[...]                                 # (M, Cout) f32

    # ---- shortcut (identity / AvgPool2d(2)) in-kernel, exact f32 -------------
    if stride == 1:
        h0 = x.reshape(M, Cin)
    else:
        h0 = (x_ref[:, pl.ds(0, Ho, 2), pl.ds(0, Wo, 2), :]
              + x_ref[:, pl.ds(0, Ho, 2), pl.ds(1, Wo, 2), :]
              + x_ref[:, pl.ds(1, Ho, 2), pl.ds(0, Wo, 2), :]
              + x_ref[:, pl.ds(1, Ho, 2), pl.ds(1, Wo, 2), :]) * 0.25
        h0 = h0.reshape(M, Cin)
    if Cin < Cout:
        h0 = jnp.concatenate(
            [h0, jnp.zeros((M, Cout - Cin), jnp.float32)], axis=-1)

    out_ref[...] = (res + h0).reshape(B, Ho, Wo, Cout)


# ------------------------------ wrapper helpers -------------------------------
def _round_up(x, m):
    return (x + m - 1) // m * m


def _vmem_bytes(shape, dtype):
    """Approx VMEM footprint of an array incl. (sublane, lane) tile padding."""
    itemsize = jnp.dtype(dtype).itemsize
    s = list(shape)
    s[-1] = _round_up(s[-1], 128)
    if len(s) >= 2:
        s[-2] = _round_up(s[-2], 8 * max(1, 4 // itemsize))
    n = 1
    for d in s:
        n *= d
    return n * itemsize


def _fold_bn(gamma, beta, mean, var, eps):
    scale = gamma / jnp.sqrt(var + eps)
    shift = beta - mean * scale
    return scale, shift


def _vmem_capacity_bytes():
    try:
        info = pltpu.get_tpu_info()
        cap = int(getattr(info, "vmem_capacity_bytes", 0) or 0)
        if cap > 0:
            return cap
    except Exception:
        pass
    return 64 << 20   # conservative fallback (v7x per-core VMEM)


def shake_basic_block(x_nchw, params, *, stride, p_drop, eps=1e-5):
    """x_nchw: (N, Cin, H, W) float32. Returns (N, Cout, Ho, Wo) float32."""
    x = jnp.transpose(x_nchw, (0, 2, 3, 1)).astype(jnp.float32)   # -> NHWC
    N, H, W, Cin = x.shape
    w1 = params["w1"].astype(jnp.float32)     # (3, 3, Cin, Cout)  HWIO
    w2 = params["w2"].astype(jnp.float32)     # (3, 3, Cout, Cout) HWIO
    Cout = w1.shape[-1]
    assert Cin <= Cout, "PyramidNet block assumes in_ch <= out_ch"
    if stride == 2:
        assert H % 2 == 0 and W % 2 == 0, "stride-2 block assumes even H, W"
    Ho = (H + 2 - 3) // stride + 1
    Wo = (W + 2 - 3) // stride + 1

    s1, t1 = _fold_bn(params["bn1_g"], params["bn1_b"], params["bn1_m"], params["bn1_v"], eps)
    s2, t2 = _fold_bn(params["bn2_g"], params["bn2_b"], params["bn2_m"], params["bn2_v"], eps)
    s3, t3 = _fold_bn(params["bn3_g"], params["bn3_b"], params["bn3_m"], params["bn3_v"], eps)
    keep = 1.0 - p_drop

    # Fold BN2 scale into conv1 weights; BN3 scale * (1 - p_drop) into conv2.
    # Weights stacked tap-major: rows [t*C, (t+1)*C) belong to tap t = kh*3+kw.
    W1 = (w1 * s2.reshape(1, 1, 1, Cout)).reshape(9 * Cin, Cout).astype(jnp.bfloat16)
    W2 = (w2 * (keep * s3).reshape(1, 1, 1, Cout)).reshape(9 * Cout, Cout).astype(jnp.bfloat16)
    b2v = t2.reshape(1, Cout).astype(jnp.float32)
    b3v = (keep * t3).reshape(1, Cout).astype(jnp.float32)
    s1v = s1.reshape(1, Cin).astype(jnp.float32)
    t1v = t1.reshape(1, Cin).astype(jnp.float32)

    # Deep-K single matmul for small channel counts, 9 accumulated matmuls
    # (no im2col concat temp) for large ones.
    deep_k1 = (9 * Cin <= 256)
    deep_k2 = (9 * Cout <= 256)

    vmem_cap = _vmem_capacity_bytes()
    vmem_budget = int(vmem_cap * 0.75)          # ~25% headroom (per review)

    def step_vmem(bb):
        m = bb * Ho * Wo
        acc = 0
        acc += 2 * _vmem_bytes((bb, H, W, Cin), jnp.float32)          # x (dbl buf)
        acc += 2 * _vmem_bytes((bb, Ho, Wo, Cout), jnp.float32)       # out (dbl buf)
        acc += 2 * (_vmem_bytes((9 * Cin, Cout), jnp.bfloat16)
                    + _vmem_bytes((9 * Cout, Cout), jnp.bfloat16))    # weights
        acc += 8 * _vmem_bytes((1, max(Cin, Cout)), jnp.float32)      # scales/shifts
        acc += _vmem_bytes((bb, H + 2, W + 2, Cin), jnp.bfloat16)     # xpad scratch
        acc += _vmem_bytes((bb, Ho + 2, Wo + 2, Cout), jnp.bfloat16)  # h2pad scratch
        acc += _vmem_bytes((m, 9 * Cin), jnp.bfloat16)                # conv1 taps
        acc += _vmem_bytes((m, 9 * Cout), jnp.bfloat16)               # conv2 taps
        acc += 4 * _vmem_bytes((m, Cout), jnp.float32)                # h1/h2/h3/res
        acc += _vmem_bytes((m, Cin), jnp.float32)                     # shortcut
        return acc

    # Batch-block the matmul M dimension (M = B_blk*Ho*Wo) so small-spatial
    # stages fill the 256-row MXUs on v6e/v7x, while keeping >=2 grid points
    # (software pipelining / v7x dual-TC) and staying inside the VMEM budget.
    B_blk = 1
    while (N % (2 * B_blk) == 0
           and B_blk * Ho * Wo < 512
           and N // (2 * B_blk) >= 2
           and step_vmem(2 * B_blk) <= vmem_budget):
        B_blk *= 2
    need = step_vmem(B_blk)
    vmem_limit = int(max(min(vmem_budget, max(2 * need, 32 << 20)),
                         min(vmem_budget, need + (4 << 20))))

    kernel = functools.partial(_shake_basic_block_kernel, stride=stride,
                               deep_k1=deep_k1, deep_k2=deep_k2)

    flops = 2 * N * Ho * Wo * 9 * (Cin * Cout + Cout * Cout)
    bytes_accessed = int(x.size * 4 + W1.size * 2 + W2.size * 2
                         + (b2v.size + b3v.size + s1v.size + t1v.size) * 4
                         + N * Ho * Wo * Cout * 4)

    out_nhwc = pl.pallas_call(
        kernel,
        out_shape=jax.ShapeDtypeStruct((N, Ho, Wo, Cout), jnp.float32),
        grid_spec=pltpu.PrefetchScalarGridSpec(
            num_scalar_prefetch=0,
            grid=(N // B_blk,),
            in_specs=[
                pl.BlockSpec((B_blk, H, W, Cin), lambda n: (n, 0, 0, 0)),
                pl.BlockSpec((1, Cin), lambda n: (0, 0)),
                pl.BlockSpec((1, Cin), lambda n: (0, 0)),
                pl.BlockSpec((9 * Cin, Cout), lambda n: (0, 0)),
                pl.BlockSpec((9 * Cout, Cout), lambda n: (0, 0)),
                pl.BlockSpec((1, Cout), lambda n: (0, 0)),
                pl.BlockSpec((1, Cout), lambda n: (0, 0)),
            ],
            out_specs=pl.BlockSpec((B_blk, Ho, Wo, Cout), lambda n: (n, 0, 0, 0)),
            scratch_shapes=[
                pltpu.VMEM((B_blk, H + 2, W + 2, Cin), jnp.bfloat16),
                pltpu.VMEM((B_blk, Ho + 2, Wo + 2, Cout), jnp.bfloat16),
            ],
        ),
        compiler_params=pltpu.CompilerParams(
            dimension_semantics=("parallel",),
            vmem_limit_bytes=vmem_limit,
        ),
        cost_estimate=pl.CostEstimate(
            flops=flops, transcendentals=0, bytes_accessed=bytes_accessed),
    )(x, s1v, t1v, W1, W2, b2v, b3v)

    return jnp.transpose(out_nhwc, (0, 3, 1, 2))   # back to NCHW


# ------------------------- pure-JAX reference --------------------------------
def reference(x_nchw, params, *, stride, p_drop, eps=1e-5):
    x = jnp.transpose(x_nchw, (0, 2, 3, 1)).astype(jnp.float32)  # NHWC
    N, H, W, Cin = x.shape
    Cout = params["w1"].shape[-1]

    def bn(y, g, b, m, v):
        return (y - m) / jnp.sqrt(v + eps) * g + b

    h = bn(x, params["bn1_g"], params["bn1_b"], params["bn1_m"], params["bn1_v"])
    h = jax.lax.conv_general_dilated(
        h, params["w1"], (stride, stride), [(1, 1), (1, 1)],
        dimension_numbers=("NHWC", "HWIO", "NHWC"))
    h = jax.nn.relu(bn(h, params["bn2_g"], params["bn2_b"], params["bn2_m"], params["bn2_v"]))
    h = jax.lax.conv_general_dilated(
        h, params["w2"], (1, 1), [(1, 1), (1, 1)],
        dimension_numbers=("NHWC", "HWIO", "NHWC"))
    h = bn(h, params["bn3_g"], params["bn3_b"], params["bn3_m"], params["bn3_v"])
    h = (1.0 - p_drop) * h

    if stride == 2:
        h0 = x.reshape(N, H // 2, 2, W // 2, 2, Cin).mean(axis=(2, 4))
    else:
        h0 = x
    h0 = jnp.pad(h0, ((0, 0), (0, 0), (0, 0), (0, Cout - Cin)))
    return jnp.transpose(h + h0, (0, 3, 1, 2))


# ------------------------------ parameters ------------------------------------
def make_params(key, in_ch, out_ch):
    ks = jax.random.split(key, 14)
    return {
        "w1": jax.random.normal(ks[0], (3, 3, in_ch, out_ch), jnp.float32)
              / np.sqrt(9 * in_ch),
        "w2": jax.random.normal(ks[1], (3, 3, out_ch, out_ch), jnp.float32)
              / np.sqrt(9 * out_ch),
        "bn1_g": jax.random.uniform(ks[2], (in_ch,), jnp.float32, 0.5, 1.5),
        "bn1_b": 0.1 * jax.random.normal(ks[3], (in_ch,), jnp.float32),
        "bn1_m": 0.1 * jax.random.normal(ks[4], (in_ch,), jnp.float32),
        "bn1_v": jax.random.uniform(ks[5], (in_ch,), jnp.float32, 0.5, 1.5),
        "bn2_g": jax.random.uniform(ks[6], (out_ch,), jnp.float32, 0.5, 1.5),
        "bn2_b": 0.1 * jax.random.normal(ks[7], (out_ch,), jnp.float32),
        "bn2_m": 0.1 * jax.random.normal(ks[8], (out_ch,), jnp.float32),
        "bn2_v": jax.random.uniform(ks[9], (out_ch,), jnp.float32, 0.5, 1.5),
        "bn3_g": jax.random.uniform(ks[10], (out_ch,), jnp.float32, 0.5, 1.5),
        "bn3_b": 0.1 * jax.random.normal(ks[11], (out_ch,), jnp.float32),
        "bn3_m": 0.1 * jax.random.normal(ks[12], (out_ch,), jnp.float32),
        "bn3_v": jax.random.uniform(ks[13], (out_ch,), jnp.float32, 0.5, 1.5),
    }


if __name__ == "__main__":
    key = jax.random.PRNGKey(0)
    N = 2
    p_drop = 0.5

    # (Cin, Cout, H, W, tol): a small early-stage block plus a wider block that
    # exercises the accumulated-matmul (non deep-K) conv2 path.  Tolerances
    # reflect bf16 MXU inputs vs. the f32 reference (errors grow ~sqrt(9*C)).
    configs = [
        (4, 8, 16, 16, 2e-2),
        (16, 32, 16, 16, 4e-2),
    ]

    for Cin, Cout, H, W, tol in configs:
        key, k_x, k_p = jax.random.split(key, 3)
        x = jax.random.normal(k_x, (N, Cin, H, W), jnp.float32)
        params = make_params(k_p, Cin, Cout)
        for stride in (1, 2):
            out = jax.block_until_ready(
                shake_basic_block(x, params, stride=stride, p_drop=p_drop))
            ref = jax.block_until_ready(
                reference(x, params, stride=stride, p_drop=p_drop))
            assert out.shape == ref.shape, (out.shape, ref.shape)
            np.testing.assert_allclose(np.asarray(out), np.asarray(ref),
                                       rtol=tol, atol=tol)

    print("KERNEL_OK")
</pallas_src>

<mosaic_0001>
module attributes {stable_mosaic.version = 11 : i64} {
  func.func @_shake_basic_block_kernel(%arg0: i32, %arg1: memref<1x16x16x4xf32, #tpu.memory_space<vmem>>, %arg2: memref<1x4xf32, #tpu.memory_space<vmem>>, %arg3: memref<1x4xf32, #tpu.memory_space<vmem>>, %arg4: memref<36x8xbf16, #tpu.memory_space<vmem>>, %arg5: memref<72x8xbf16, #tpu.memory_space<vmem>>, %arg6: memref<1x8xf32, #tpu.memory_space<vmem>>, %arg7: memref<1x8xf32, #tpu.memory_space<vmem>>, %arg8: memref<1x16x16x8xf32, #tpu.memory_space<vmem>>, %arg9: memref<1x18x18x4xbf16, #tpu.memory_space<vmem>>, %arg10: memref<1x18x18x8xbf16, #tpu.memory_space<vmem>>) attributes {dimension_semantics = [#tpu.dimension_semantics<parallel>], iteration_bounds = array<i64: 2>, scalar_prefetch = 0 : i64, scratch_operands = 2 : i64, tpu.core_type = #tpu.core_type<tc>, window_params = [{transform_indices = @transform_0, window_bounds = array<i64: 1, 16, 16, 4>}, {pipeline_mode = #tpu.pipeline_mode<synchronous>, transform_indices = @transform_1, window_bounds = array<i64: 1, 4>}, {pipeline_mode = #tpu.pipeline_mode<synchronous>, transform_indices = @transform_2, window_bounds = array<i64: 1, 4>}, {pipeline_mode = #tpu.pipeline_mode<synchronous>, transform_indices = @transform_3, window_bounds = array<i64: 36, 8>}, {pipeline_mode = #tpu.pipeline_mode<synchronous>, transform_indices = @transform_4, window_bounds = array<i64: 72, 8>}, {pipeline_mode = #tpu.pipeline_mode<synchronous>, transform_indices = @transform_5, window_bounds = array<i64: 1, 8>}, {pipeline_mode = #tpu.pipeline_mode<synchronous>, transform_indices = @transform_6, window_bounds = array<i64: 1, 8>}, {transform_indices = @transform_7, window_bounds = array<i64: 1, 16, 16, 8>}]} {
    %c0 = arith.constant 0 : index
    %c0_0 = arith.constant 0 : index
    %c0_1 = arith.constant 0 : index
    %c0_2 = arith.constant 0 : index
    %0 = vector.load %arg1[%c0, %c0_0, %c0_1, %c0_2] : memref<1x16x16x4xf32, #tpu.memory_space<vmem>>, vector<1x16x16x4xf32>
    %cst = arith.constant 0.000000e+00 : bf16
    %1 = vector.broadcast %cst : bf16 to vector<1x1x18x4xbf16>
    %cst_3 = arith.constant 0.000000e+00 : bf16
    %2 = vector.broadcast %cst_3 : bf16 to vector<1x16x1x4xbf16>
    %c0_4 = arith.constant 0 : index
    %c0_5 = arith.constant 0 : index
    %c0_6 = arith.constant 0 : index
    %c0_7 = arith.constant 0 : index
    %3 = vector.load %arg9[%c0_4, %c0_5, %c0_6, %c0_7] : memref<1x18x18x4xbf16, #tpu.memory_space<vmem>>, vector<1x1x18x4xbf16>
    tpu.vector_store %arg9[%c0_4, %c0_5, %c0_6, %c0_7], %1 {strides = array<i32>} : memref<1x18x18x4xbf16, #tpu.memory_space<vmem>>, vector<1x1x18x4xbf16>,
    %c0_8 = arith.constant 0 : index
    %c17 = arith.constant 17 : index
    %c0_9 = arith.constant 0 : index
    %c0_10 = arith.constant 0 : index
    %4 = vector.load %arg9[%c0_8, %c17, %c0_9, %c0_10] : memref<1x18x18x4xbf16, #tpu.memory_space<vmem>>, vector<1x1x18x4xbf16>
    tpu.vector_store %arg9[%c0_8, %c17, %c0_9, %c0_10], %1 {strides = array<i32>} : memref<1x18x18x4xbf16, #tpu.memory_space<vmem>>, vector<1x1x18x4xbf16>,
    %c0_11 = arith.constant 0 : index
    %c1 = arith.constant 1 : index
    %c0_12 = arith.constant 0 : index
    %c0_13 = arith.constant 0 : index
    %5 = vector.load %arg9[%c0_11, %c1, %c0_12, %c0_13] : memref<1x18x18x4xbf16, #tpu.memory_space<vmem>>, vector<1x16x1x4xbf16>
    tpu.vector_store %arg9[%c0_11, %c1, %c0_12, %c0_13], %2 {strides = array<i32>} : memref<1x18x18x4xbf16, #tpu.memory_space<vmem>>, vector<1x16x1x4xbf16>,
    %c0_14 = arith.constant 0 : index
    %c1_15 = arith.constant 1 : index
    %c17_16 = arith.constant 17 : index
    %c0_17 = arith.constant 0 : index
    %6 = vector.load %arg9[%c0_14, %c1_15, %c17_16, %c0_17] : memref<1x18x18x4xbf16, #tpu.memory_space<vmem>>, vector<1x16x1x4xbf16>
    tpu.vector_store %arg9[%c0_14, %c1_15, %c17_16, %c0_17], %2 {strides = array<i32>} : memref<1x18x18x4xbf16, #tpu.memory_space<vmem>>, vector<1x16x1x4xbf16>,
    %c0_18 = arith.constant 0 : index
    %c0_19 = arith.constant 0 : index
    %7 = vector.load %arg2[%c0_18, %c0_19] : memref<1x4xf32, #tpu.memory_space<vmem>>, vector<1x4xf32>
    %8 = vector.shape_cast %7 : vector<1x4xf32> to vector<1x1x1x4xf32>
    %c0_20 = arith.constant 0 : index
    %c0_21 = arith.constant 0 : index
    %9 = vector.load %arg3[%c0_20, %c0_21] : memref<1x4xf32, #tpu.memory_space<vmem>>, vector<1x4xf32>
    %10 = vector.shape_cast %9 : vector<1x4xf32> to vector<1x1x1x4xf32>
    %11 = vector.broadcast %8 : vector<1x1x1x4xf32> to vector<1x16x16x4xf32>
    %12 = arith.mulf %0, %11 : vector<1x16x16x4xf32>
    %13 = vector.broadcast %10 : vector<1x1x1x4xf32> to vector<1x16x16x4xf32>
    %14 = arith.addf %12, %13 : vector<1x16x16x4xf32>
    %15 = arith.truncf %14 : vector<1x16x16x4xf32> to vector<1x16x16x4xbf16>
    %c0_22 = arith.constant 0 : index
    %c1_23 = arith.constant 1 : index
    %c1_24 = arith.constant 1 : index
    %c0_25 = arith.constant 0 : index
    %16 = vector.load %arg9[%c0_22, %c1_23, %c1_24, %c0_25] : memref<1x18x18x4xbf16, #tpu.memory_space<vmem>>, vector<1x16x16x4xbf16>
    tpu.vector_store %arg9[%c0_22, %c1_23, %c1_24, %c0_25], %15 {strides = array<i32>} : memref<1x18x18x4xbf16, #tpu.memory_space<vmem>>, vector<1x16x16x4xbf16>,
    %c0_26 = arith.constant 0 : index
    %c0_27 = arith.constant 0 : index
    %c0_28 = arith.constant 0 : index
    %c0_29 = arith.constant 0 : index
    %17 = vector.load %arg9[%c0_26, %c0_27, %c0_28, %c0_29] : memref<1x18x18x4xbf16, #tpu.memory_space<vmem>>, vector<1x16x16x4xbf16>
    %18 = vector.shape_cast %17 : vector<1x16x16x4xbf16> to vector<256x4xbf16>
    %c0_30 = arith.constant 0 : index
    %c0_31 = arith.constant 0 : index
    %c1_32 = arith.constant 1 : index
    %c0_33 = arith.constant 0 : index
    %19 = vector.load %arg9[%c0_30, %c0_31, %c1_32, %c0_33] : memref<1x18x18x4xbf16, #tpu.memory_space<vmem>>, vector<1x16x16x4xbf16>
    %20 = vector.shape_cast %19 : vector<1x16x16x4xbf16> to vector<256x4xbf16>
    %c0_34 = arith.constant 0 : index
    %c0_35 = arith.constant 0 : index
    %c2 = arith.constant 2 : index
    %c0_36 = arith.constant 0 : index
    %21 = vector.load %arg9[%c0_34, %c0_35, %c2, %c0_36] : memref<1x18x18x4xbf16, #tpu.memory_space<vmem>>, vector<1x16x16x4xbf16>
    %22 = vector.shape_cast %21 : vector<1x16x16x4xbf16> to vector<256x4xbf16>
    %c0_37 = arith.constant 0 : index
    %c1_38 = arith.constant 1 : index
    %c0_39 = arith.constant 0 : index
    %c0_40 = arith.constant 0 : index
    %23 = vector.load %arg9[%c0_37, %c1_38, %c0_39, %c0_40] : memref<1x18x18x4xbf16, #tpu.memory_space<vmem>>, vector<1x16x16x4xbf16>
    %24 = vector.shape_cast %23 : vector<1x16x16x4xbf16> to vector<256x4xbf16>
    %c0_41 = arith.constant 0 : index
    %c1_42 = arith.constant 1 : index
    %c1_43 = arith.constant 1 : index
    %c0_44 = arith.constant 0 : index
    %25 = vector.load %arg9[%c0_41, %c1_42, %c1_43, %c0_44] : memref<1x18x18x4xbf16, #tpu.memory_space<vmem>>, vector<1x16x16x4xbf16>
    %26 = vector.shape_cast %25 : vector<1x16x16x4xbf16> to vector<256x4xbf16>
    %c0_45 = arith.constant 0 : index
    %c1_46 = arith.constant 1 : index
    %c2_47 = arith.constant 2 : index
    %c0_48 = arith.constant 0 : index
    %27 = vector.load %arg9[%c0_45, %c1_46, %c2_47, %c0_48] : memref<1x18x18x4xbf16, #tpu.memory_space<vmem>>, vector<1x16x16x4xbf16>
    %28 = vector.shape_cast %27 : vector<1x16x16x4xbf16> to vector<256x4xbf16>
    %c0_49 = arith.constant 0 : index
    %c2_50 = arith.constant 2 : index
    %c0_51 = arith.constant 0 : index
    %c0_52 = arith.constant 0 : index
    %29 = vector.load %arg9[%c0_49, %c2_50, %c0_51, %c0_52] : memref<1x18x18x4xbf16, #tpu.memory_space<vmem>>, vector<1x16x16x4xbf16>
    %30 = vector.shape_cast %29 : vector<1x16x16x4xbf16> to vector<256x4xbf16>
    %c0_53 = arith.constant 0 : index
    %c2_54 = arith.constant 2 : index
    %c1_55 = arith.constant 1 : index
    %c0_56 = arith.constant 0 : index
    %31 = vector.load %arg9[%c0_53, %c2_54, %c1_55, %c0_56] : memref<1x18x18x4xbf16, #tpu.memory_space<vmem>>, vector<1x16x16x4xbf16>
    %32 = vector.shape_cast %31 : vector<1x16x16x4xbf16> to vector<256x4xbf16>
    %c0_57 = arith.constant 0 : index
    %c2_58 = arith.constant 2 : index
    %c2_59 = arith.constant 2 : index
    %c0_60 = arith.constant 0 : index
    %33 = vector.load %arg9[%c0_57, %c2_58, %c2_59, %c0_60] : memref<1x18x18x4xbf16, #tpu.memory_space<vmem>>, vector<1x16x16x4xbf16>
    %34 = vector.shape_cast %33 : vector<1x16x16x4xbf16> to vector<256x4xbf16>
    %35 = tpu.concatenate %18, %20, %22, %24, %26, %28, %30, %32, %34 in 1 : vector<256x4xbf16>, vector<256x4xbf16>, vector<256x4xbf16>, vector<256x4xbf16>, vector<256x4xbf16>, vector<256x4xbf16>, vector<256x4xbf16>, vector<256x4xbf16>, vector<256x4xbf16> -> vector<256x36xbf16>
    %c0_61 = arith.constant 0 : index
    %c0_62 = arith.constant 0 : index
    %36 = vector.load %arg4[%c0_61, %c0_62] : memref<36x8xbf16, #tpu.memory_space<vmem>>, vector<36x8xbf16>
    %cst_63 = arith.constant dense<0.000000e+00> : vector<256x8xf32>
    %37 = tpu.matmul %35, %36, %cst_63 {dimension_numbers = #tpu.dot_dimension_numbers<[1], [0], [0], [1], [0, 0, 1, 1], [], []>} : vector<256x36xbf16>, vector<36x8xbf16>, vector<256x8xf32> -> vector<256x8xf32>
    %c0_64 = arith.constant 0 : index
    %c0_65 = arith.constant 0 : index
    %38 = vector.load %arg6[%c0_64, %c0_65] : memref<1x8xf32, #tpu.memory_space<vmem>>, vector<1x8xf32>
    %39 = vector.broadcast %38 : vector<1x8xf32> to vector<256x8xf32>
    %40 = arith.addf %37, %39 : vector<256x8xf32>
    %cst_66 = arith.constant 0.000000e+00 : f32
    %41 = vector.broadcast %cst_66 : f32 to vector<256x8xf32>
    %42 = arith.maximumf %40, %41 : vector<256x8xf32>
    %cst_67 = arith.constant 0.000000e+00 : bf16
    %43 = vector.broadcast %cst_67 : bf16 to vector<1x1x18x8xbf16>
    %cst_68 = arith.constant 0.000000e+00 : bf16
    %44 = vector.broadcast %cst_68 : bf16 to vector<1x16x1x8xbf16>
    %c0_69 = arith.constant 0 : index
    %c0_70 = arith.constant 0 : index
    %c0_71 = arith.constant 0 : index
    %c0_72 = arith.constant 0 : index
    %45 = vector.load %arg10[%c0_69, %c0_70, %c0_71, %c0_72] : memref<1x18x18x8xbf16, #tpu.memory_space<vmem>>, vector<1x1x18x8xbf16>
    tpu.vector_store %arg10[%c0_69, %c0_70, %c0_71, %c0_72], %43 {strides = array<i32>} : memref<1x18x18x8xbf16, #tpu.memory_space<vmem>>, vector<1x1x18x8xbf16>,
    %c0_73 = arith.constant 0 : index
    %c17_74 = arith.constant 17 : index
    %c0_75 = arith.constant 0 : index
    %c0_76 = arith.constant 0 : index
    %46 = vector.load %arg10[%c0_73, %c17_74, %c0_75, %c0_76] : memref<1x18x18x8xbf16, #tpu.memory_space<vmem>>, vector<1x1x18x8xbf16>
    tpu.vector_store %arg10[%c0_73, %c17_74, %c0_75, %c0_76], %43 {strides = array<i32>} : memref<1x18x18x8xbf16, #tpu.memory_space<vmem>>, vector<1x1x18x8xbf16>,
    %c0_77 = arith.constant 0 : index
    %c1_78 = arith.constant 1 : index
    %c0_79 = arith.constant 0 : index
    %c0_80 = arith.constant 0 : index
    %47 = vector.load %arg10[%c0_77, %c1_78, %c0_79, %c0_80] : memref<1x18x18x8xbf16, #tpu.memory_space<vmem>>, vector<1x16x1x8xbf16>
    tpu.vector_store %arg10[%c0_77, %c1_78, %c0_79, %c0_80], %44 {strides = array<i32>} : memref<1x18x18x8xbf16, #tpu.memory_space<vmem>>, vector<1x16x1x8xbf16>,
    %c0_81 = arith.constant 0 : index
    %c1_82 = arith.constant 1 : index
    %c17_83 = arith.constant 17 : index
    %c0_84 = arith.constant 0 : index
    %48 = vector.load %arg10[%c0_81, %c1_82, %c17_83, %c0_84] : memref<1x18x18x8xbf16, #tpu.memory_space<vmem>>, vector<1x16x1x8xbf16>
    tpu.vector_store %arg10[%c0_81, %c1_82, %c17_83, %c0_84], %44 {strides = array<i32>} : memref<1x18x18x8xbf16, #tpu.memory_space<vmem>>, vector<1x16x1x8xbf16>,
    %49 = vector.shape_cast %42 : vector<256x8xf32> to vector<1x16x16x8xf32>
    %50 = arith.truncf %49 : vector<1x16x16x8xf32> to vector<1x16x16x8xbf16>
    %c0_85 = arith.constant 0 : index
    %c1_86 = arith.constant 1 : index
    %c1_87 = arith.constant 1 : index
    %c0_88 = arith.constant 0 : index
    %51 = vector.load %arg10[%c0_85, %c1_86, %c1_87, %c0_88] : memref<1x18x18x8xbf16, #tpu.memory_space<vmem>>, vector<1x16x16x8xbf16>
    tpu.vector_store %arg10[%c0_85, %c1_86, %c1_87, %c0_88], %50 {strides = array<i32>} : memref<1x18x18x8xbf16, #tpu.memory_space<vmem>>, vector<1x16x16x8xbf16>,
    %c0_89 = arith.constant 0 : index
    %c0_90 = arith.constant 0 : index
    %c0_91 = arith.constant 0 : index
    %c0_92 = arith.constant 0 : index
    %52 = vector.load %arg10[%c0_89, %c0_90, %c0_91, %c0_92] : memref<1x18x18x8xbf16, #tpu.memory_space<vmem>>, vector<1x16x16x8xbf16>
    %53 = vector.shape_cast %52 : vector<1x16x16x8xbf16> to vector<256x8xbf16>
    %c0_93 = arith.constant 0 : index
    %c0_94 = arith.constant 0 : index
    %c1_95 = arith.constant 1 : index
    %c0_96 = arith.constant 0 : index
    %54 = vector.load %arg10[%c0_93, %c0_94, %c1_95, %c0_96] : memref<1x18x18x8xbf16, #tpu.memory_space<vmem>>, vector<1x16x16x8xbf16>
    %55 = vector.shape_cast %54 : vector<1x16x16x8xbf16> to vector<256x8xbf16>
    %c0_97 = arith.constant 0 : index
    %c0_98 = arith.constant 0 : index
    %c2_99 = arith.constant 2 : index
    %c0_100 = arith.constant 0 : index
    %56 = vector.load %arg10[%c0_97, %c0_98, %c2_99, %c0_100] : memref<1x18x18x8xbf16, #tpu.memory_space<vmem>>, vector<1x16x16x8xbf16>
    %57 = vector.shape_cast %56 : vector<1x16x16x8xbf16> to vector<256x8xbf16>
    %c0_101 = arith.constant 0 : index
    %c1_102 = arith.constant 1 : index
    %c0_103 = arith.constant 0 : index
    %c0_104 = arith.constant 0 : index
    %58 = vector.load %arg10[%c0_101, %c1_102, %c0_103, %c0_104] : memref<1x18x18x8xbf16, #tpu.memory_space<vmem>>, vector<1x16x16x8xbf16>
    %59 = vector.shape_cast %58 : vector<1x16x16x8xbf16> to vector<256x8xbf16>
    %c0_105 = arith.constant 0 : index
    %c1_106 = arith.constant 1 : index
    %c1_107 = arith.constant 1 : index
    %c0_108 = arith.constant 0 : index
    %60 = vector.load %arg10[%c0_105, %c1_106, %c1_107, %c0_108] : memref<1x18x18x8xbf16, #tpu.memory_space<vmem>>, vector<1x16x16x8xbf16>
    %61 = vector.shape_cast %60 : vector<1x16x16x8xbf16> to vector<256x8xbf16>
    %c0_109 = arith.constant 0 : index
    %c1_110 = arith.constant 1 : index
    %c2_111 = arith.constant 2 : index
    %c0_112 = arith.constant 0 : index
    %62 = vector.load %arg10[%c0_109, %c1_110, %c2_111, %c0_112] : memref<1x18x18x8xbf16, #tpu.memory_space<vmem>>, vector<1x16x16x8xbf16>
    %63 = vector.shape_cast %62 : vector<1x16x16x8xbf16> to vector<256x8xbf16>
    %c0_113 = arith.constant 0 : index
    %c2_114 = arith.constant 2 : index
    %c0_115 = arith.constant 0 : index
    %c0_116 = arith.constant 0 : index
    %64 = vector.load %arg10[%c0_113, %c2_114, %c0_115, %c0_116] : memref<1x18x18x8xbf16, #tpu.memory_space<vmem>>, vector<1x16x16x8xbf16>
    %65 = vector.shape_cast %64 : vector<1x16x16x8xbf16> to vector<256x8xbf16>
    %c0_117 = arith.constant 0 : index
    %c2_118 = arith.constant 2 : index
    %c1_119 = arith.constant 1 : index
    %c0_120 = arith.constant 0 : index
    %66 = vector.load %arg10[%c0_117, %c2_118, %c1_119, %c0_120] : memref<1x18x18x8xbf16, #tpu.memory_space<vmem>>, vector<1x16x16x8xbf16>
    %67 = vector.shape_cast %66 : vector<1x16x16x8xbf16> to vector<256x8xbf16>
    %c0_121 = arith.constant 0 : index
    %c2_122 = arith.constant 2 : index
    %c2_123 = arith.constant 2 : index
    %c0_124 = arith.constant 0 : index
    %68 = vector.load %arg10[%c0_121, %c2_122, %c2_123, %c0_124] : memref<1x18x18x8xbf16, #tpu.memory_space<vmem>>, vector<1x16x16x8xbf16>
    %69 = vector.shape_cast %68 : vector<1x16x16x8xbf16> to vector<256x8xbf16>
    %70 = tpu.concatenate %53, %55, %57, %59, %61, %63, %65, %67, %69 in 1 : vector<256x8xbf16>, vector<256x8xbf16>, vector<256x8xbf16>, vector<256x8xbf16>, vector<256x8xbf16>, vector<256x8xbf16>, vector<256x8xbf16>, vector<256x8xbf16>, vector<256x8xbf16> -> vector<256x72xbf16>
    %c0_125 = arith.constant 0 : index
    %c0_126 = arith.constant 0 : index
    %71 = vector.load %arg5[%c0_125, %c0_126] : memref<72x8xbf16, #tpu.memory_space<vmem>>, vector<72x8xbf16>
    %cst_127 = arith.constant dense<0.000000e+00> : vector<256x8xf32>
    %72 = tpu.matmul %70, %71, %cst_127 {dimension_numbers = #tpu.dot_dimension_numbers<[1], [0], [0], [1], [0, 0, 1, 1], [], []>} : vector<256x72xbf16>, vector<72x8xbf16>, vector<256x8xf32> -> vector<256x8xf32>
    %c0_128 = arith.constant 0 : index
    %c0_129 = arith.constant 0 : index
    %73 = vector.load %arg7[%c0_128, %c0_129] : memref<1x8xf32, #tpu.memory_space<vmem>>, vector<1x8xf32>
    %74 = vector.broadcast %73 : vector<1x8xf32> to vector<256x8xf32>
    %75 = arith.addf %72, %74 : vector<256x8xf32>
    %76 = vector.shape_cast %0 : vector<1x16x16x4xf32> to vector<256x4xf32>
    %cst_130 = arith.constant 0.000000e+00 : f32
    %77 = vector.broadcast %cst_130 : f32 to vector<256x4xf32>
    %78 = tpu.concatenate %76, %77 in 1 : vector<256x4xf32>, vector<256x4xf32> -> vector<256x8xf32>
    %79 = arith.addf %75, %78 : vector<256x8xf32>
    %80 = vector.shape_cast %79 : vector<256x8xf32> to vector<1x16x16x8xf32>
    %c0_131 = arith.constant 0 : index
    %c0_132 = arith.constant 0 : index
    %c0_133 = arith.constant 0 : index
    %c0_134 = arith.constant 0 : index
    %81 = vector.load %arg8[%c0_131, %c0_132, %c0_133, %c0_134] : memref<1x16x16x8xf32, #tpu.memory_space<vmem>>, vector<1x16x16x8xf32>
    tpu.vector_store %arg8[%c0_131, %c0_132, %c0_133, %c0_134], %80 {strides = array<i32>} : memref<1x16x16x8xf32, #tpu.memory_space<vmem>>, vector<1x16x16x8xf32>,
    return
  }
  func.func @transform_0(%arg0: i32) -> (i32, i32, i32, i32) {
    %c0_i32 = arith.constant 0 : i32
    %c0_i32_0 = arith.constant 0 : i32
    %c0_i32_1 = arith.constant 0 : i32
    %c0_i32_2 = arith.constant 0 : i32
    return %arg0, %c0_i32, %c0_i32_0, %c0_i32_1 : i32, i32, i32, i32
  }
  func.func @transform_1(%arg0: i32) -> (i32, i32) {
    %c0_i32 = arith.constant 0 : i32
    %c0_i32_0 = arith.constant 0 : i32
    %c0_i32_1 = arith.constant 0 : i32
    return %c0_i32, %c0_i32_0 : i32, i32
  }
  func.func @transform_2(%arg0: i32) -> (i32, i32) {
    %c0_i32 = arith.constant 0 : i32
    %c0_i32_0 = arith.constant 0 : i32
    %c0_i32_1 = arith.constant 0 : i32
    return %c0_i32, %c0_i32_0 : i32, i32
  }
  func.func @transform_3(%arg0: i32) -> (i32, i32) {
    %c0_i32 = arith.constant 0 : i32
    %c0_i32_0 = arith.constant 0 : i32
    %c0_i32_1 = arith.constant 0 : i32
    return %c0_i32, %c0_i32_0 : i32, i32
  }
  func.func @transform_4(%arg0: i32) -> (i32, i32) {
    %c0_i32 = arith.constant 0 : i32
    %c0_i32_0 = arith.constant 0 : i32
    %c0_i32_1 = arith.constant 0 : i32
    return %c0_i32, %c0_i32_0 : i32, i32
  }
  func.func @transform_5(%arg0: i32) -> (i32, i32) {
    %c0_i32 = arith.constant 0 : i32
    %c0_i32_0 = arith.constant 0 : i32
    %c0_i32_1 = arith.constant 0 : i32
    return %c0_i32, %c0_i32_0 : i32, i32
  }
  func.func @transform_6(%arg0: i32) -> (i32, i32) {
    %c0_i32 = arith.constant 0 : i32
    %c0_i32_0 = arith.constant 0 : i32
    %c0_i32_1 = arith.constant 0 : i32
    return %c0_i32, %c0_i32_0 : i32, i32
  }
  func.func @transform_7(%arg0: i32) -> (i32, i32, i32, i32) {
    %c0_i32 = arith.constant 0 : i32
    %c0_i32_0 = arith.constant 0 : i32
    %c0_i32_1 = arith.constant 0 : i32
    %c0_i32_2 = arith.constant 0 : i32
    return %arg0, %c0_i32, %c0_i32_0, %c0_i32_1 : i32, i32, i32, i32
  }
}

</mosaic_0001>

<llo_original>
// kernel: tpu_custom_call.1
$region0: #{tpu_custom_call.1}
  #allocation0 [shape = 'u32[]', space=smem, size = 0x4, offset = 0x4, fixed_abs, tag = 'smem constant byte address 0x4 - core index']
  #allocation1 [shape = 'u32[144,128]{1,0:T(1,128)}', space=vmem, size = 0x12000, scoped, tag = 'internal scratch']
  #allocation2 [shape = 'bf16[1,18,18,4]{3,2,1,0:T(8,128)(2,1)}', space=vmem, size = 0x1b000, scoped, tag = 'scratch operand']
  #allocation3 [shape = 'bf16[1,18,18,8]{3,2,1,0:T(8,128)(2,1)}', space=vmem, size = 0x1b000, scoped, tag = 'scratch operand']
  %s0 = inlined_call_operand.vmem [shape: f32[2,16,16,4], index: 0, kind: input, shape index: {}]
  %s1 = inlined_call_operand.vmem [shape: f32[1,4], index: 1, kind: input, shape index: {}]
  %s2 = inlined_call_operand.vmem [shape: f32[1,4], index: 2, kind: input, shape index: {}]
  %s3 = inlined_call_operand.vmem [shape: bf16[36,8], index: 3, kind: input, shape index: {}]
  %s4 = inlined_call_operand.vmem [shape: bf16[72,8], index: 4, kind: input, shape index: {}]
  %s5 = inlined_call_operand.vmem [shape: f32[1,8], index: 5, kind: input, shape index: {}]
  %s6 = inlined_call_operand.vmem [shape: f32[1,8], index: 6, kind: input, shape index: {}]
  %s7 = inlined_call_operand.vmem [shape: f32[2,16,16,8], index: 7, kind: output, shape index: {}]
  %s8 = sld [smem:[#allocation0]]
  $region61: #{tpu_custom_call.1} parent=0
    _
  %s10 = ssub.s32 1, %s8
  %s11 = scalar_select 0, %s10, %s8
  loop: start=0, step=1, limit=4
  $region2: #{tpu_custom_call.1} parent=0 // loop_pre_header
    _
  $region3: #{tpu_custom_call.1} parent=0 // loop_header
    %s13 = sphi 0, %s17
    %p14 = scmp.ge.s32.totalorder %s13, 4
    %s23 = sphi 0, %s25
    %s26 = sphi 0, %s23
    %s27 = sphi 0, %s26
    %s43 = sphi 0, %s27
    %s47 = sphi 0, %s47
    %s49 = sphi 0, %s47
    %s50 = sphi 0, %s49
    %s64 = sphi 0, %s50
    %s68 = sphi 0, %s68
    %s70 = sphi 0, %s68
    %s71 = sphi 0, %s70
    %s85 = sphi 0, %s71
    %s89 = sphi 0, %s89
    %s91 = sphi 0, %s89
    %s92 = sphi 0, %s91
    %s106 = sphi 0, %s92
    %s110 = sphi 0, %s110
    %s112 = sphi 0, %s110
    %s113 = sphi 0, %s112
    %s127 = sphi 0, %s113
    %s131 = sphi 0, %s131
    %s133 = sphi 0, %s131
    %s134 = sphi 0, %s133
    %s148 = sphi 0, %s134
    %s152 = sphi 0, %s152
    %s154 = sphi 0, %s152
    %s155 = sphi 0, %s154
    %s169 = sphi 0, %s155
    %s175 = sphi 0, %s177
    %s178 = sphi 0, %s175
    %s179 = sphi 0, %s178
    %s195 = sphi 0, %s179
  $region4: #{tpu_custom_call.1} parent=0 // loop_header_branch
    %16 = sbr.rel (%p14) target = $region8
  $region5: #{tpu_custom_call.1} parent=0 // loop_body
    %s18 = ssub.s32 %s13, 1
    %s19 = ssub.s32 %s13, 2
    %s20 = sadd.s32 %s13, 1
    %s21 = ssub.s32 %s13, %s20
    %p22 = scmp.eq.s32.totalorder %s21, 0
    %s24 = sadd.s32 %s23, 1
    %s25 = scalar_select %p22, %s23, %s24
    %p28 = pneg %p22
    %p29 = scmp.eq.s32.totalorder %s13, 1
    %p30 = por %p28, %p29
    %p31 = scmp.ne.s32.totalorder %s23, %s26
    %p32 = scmp.eq.s32.totalorder %s13, 0
    %p33 = por %p31, %p32
    %p34 = scmp.ne.s32.totalorder %s23, %s26
    %p35 = scmp.eq.s32.totalorder %s18, 1
    %p36 = por %p34, %p35
    %p37 = scmp.ne.s32.totalorder %s26, %s27
    %p38 = scmp.eq.s32.totalorder %s18, 0
    %p39 = por %p37, %p38
    %p40 = scmp.ne.s32.totalorder %s26, %s27
    %p41 = scmp.eq.s32.totalorder %s19, 1
    %p42 = por %p40, %p41
    %p44 = scmp.ne.s32.totalorder %s27, %s43
    %p45 = scmp.eq.s32.totalorder %s19, 0
    %p46 = por %p44, %p45
    %s48 = sadd.s32 %s47, 1
    %p51 = scmp.eq.s32.totalorder %s13, 1
    %p52 = scmp.ne.s32.totalorder %s47, %s49
    %p53 = scmp.eq.s32.totalorder %s13, 0
    %p54 = por %p52, %p53
    %p55 = scmp.ne.s32.totalorder %s47, %s49
    %p56 = scmp.eq.s32.totalorder %s18, 1
    %p57 = por %p55, %p56
    %p58 = scmp.ne.s32.totalorder %s49, %s50
    %p59 = scmp.eq.s32.totalorder %s18, 0
    %p60 = por %p58, %p59
    %p61 = scmp.ne.s32.totalorder %s49, %s50
    %p62 = scmp.eq.s32.totalorder %s19, 1
    %p63 = por %p61, %p62
    %p65 = scmp.ne.s32.totalorder %s50, %s64
    %p66 = scmp.eq.s32.totalorder %s19, 0
    %p67 = por %p65, %p66
    %s69 = sadd.s32 %s68, 1
    %p72 = scmp.eq.s32.totalorder %s13, 1
    %p73 = scmp.ne.s32.totalorder %s68, %s70
    %p74 = scmp.eq.s32.totalorder %s13, 0
    %p75 = por %p73, %p74
    %p76 = scmp.ne.s32.totalorder %s68, %s70
    %p77 = scmp.eq.s32.totalorder %s18, 1
    %p78 = por %p76, %p77
    %p79 = scmp.ne.s32.totalorder %s70, %s71
    %p80 = scmp.eq.s32.totalorder %s18, 0
    %p81 = por %p79, %p80
    %p82 = scmp.ne.s32.totalorder %s70, %s71
    %p83 = scmp.eq.s32.totalorder %s19, 1
    %p84 = por %p82, %p83
    %p86 = scmp.ne.s32.totalorder %s71, %s85
    %p87 = scmp.eq.s32.totalorder %s19, 0
    %p88 = por %p86, %p87
    %s90 = sadd.s32 %s89, 1
    %p93 = scmp.eq.s32.totalorder %s13, 1
    %p94 = scmp.ne.s32.totalorder %s89, %s91
    %p95 = scmp.eq.s32.totalorder %s13, 0
    %p96 = por %p94, %p95
    %p97 = scmp.ne.s32.totalorder %s89, %s91
    %p98 = scmp.eq.s32.totalorder %s18, 1
    %p99 = por %p97, %p98
    %p100 = scmp.ne.s32.totalorder %s91, %s92
    %p101 = scmp.eq.s32.totalorder %s18, 0
    %p102 = por %p100, %p101
    %p103 = scmp.ne.s32.totalorder %s91, %s92
    %p104 = scmp.eq.s32.totalorder %s19, 1
    %p105 = por %p103, %p104
    %p107 = scmp.ne.s32.totalorder %s92, %s106
    %p108 = scmp.eq.s32.totalorder %s19, 0
    %p109 = por %p107, %p108
    %s111 = sadd.s32 %s110, 1
    %p114 = scmp.eq.s32.totalorder %s13, 1
    %p115 = scmp.ne.s32.totalorder %s110, %s112
    %p116 = scmp.eq.s32.totalorder %s13, 0
    %p117 = por %p115, %p116
    %p118 = scmp.ne.s32.totalorder %s110, %s112
    %p119 = scmp.eq.s32.totalorder %s18, 1
    %p120 = por %p118, %p119
    %p121 = scmp.ne.s32.totalorder %s112, %s113
    %p122 = scmp.eq.s32.totalorder %s18, 0
    %p123 = por %p121, %p122
    %p124 = scmp.ne.s32.totalorder %s112, %s113
    %p125 = scmp.eq.s32.totalorder %s19, 1
    %p126 = por %p124, %p125
    %p128 = scmp.ne.s32.totalorder %s113, %s127
    %p129 = scmp.eq.s32.totalorder %s19, 0
    %p130 = por %p128, %p129
    %s132 = sadd.s32 %s131, 1
    %p135 = scmp.eq.s32.totalorder %s13, 1
    %p136 = scmp.ne.s32.totalorder %s131, %s133
    %p137 = scmp.eq.s32.totalorder %s13, 0
    %p138 = por %p136, %p137
    %p139 = scmp.ne.s32.totalorder %s131, %s133
    %p140 = scmp.eq.s32.totalorder %s18, 1
    %p141 = por %p139, %p140
    %p142 = scmp.ne.s32.totalorder %s133, %s134
    %p143 = scmp.eq.s32.totalorder %s18, 0
    %p144 = por %p142, %p143
    %p145 = scmp.ne.s32.totalorder %s133, %s134
    %p146 = scmp.eq.s32.totalorder %s19, 1
    %p147 = por %p145, %p146
    %p149 = scmp.ne.s32.totalorder %s134, %s148
    %p150 = scmp.eq.s32.totalorder %s19, 0
    %p151 = por %p149, %p150
    %s153 = sadd.s32 %s152, 1
    %p156 = scmp.eq.s32.totalorder %s13, 1
    %p157 = scmp.ne.s32.totalorder %s152, %s154
    %p158 = scmp.eq.s32.totalorder %s13, 0
    %p159 = por %p157, %p158
    %p160 = scmp.ne.s32.totalorder %s152, %s154
    %p161 = scmp.eq.s32.totalorder %s18, 1
    %p162 = por %p160, %p161
    %p163 = scmp.ne.s32.totalorder %s154, %s155
    %p164 = scmp.eq.s32.totalorder %s18, 0
    %p165 = por %p163, %p164
    %p166 = scmp.ne.s32.totalorder %s154, %s155
    %p167 = scmp.eq.s32.totalorder %s19, 1
    %p168 = por %p166, %p167
    %p170 = scmp.ne.s32.totalorder %s155, %s169
    %p171 = scmp.eq.s32.totalorder %s19, 0
    %p172 = por %p170, %p171
    %s173 = ssub.s32 %s13, %s20
    %p174 = scmp.eq.s32.totalorder %s173, 0
    %s176 = sadd.s32 %s175, 1
    %s177 = scalar_select %p174, %s175, %s176
    %p180 = pneg %p174
    %p181 = scmp.eq.s32.totalorder %s13, 1
    %p182 = por %p180, %p181
    %p183 = scmp.ne.s32.totalorder %s175, %s178
    %p184 = scmp.eq.s32.totalorder %s13, 0
    %p185 = por %p183, %p184
    %p186 = scmp.ne.s32.totalorder %s175, %s178
    %p187 = scmp.eq.s32.totalorder %s18, 1
    %p188 = por %p186, %p187
    %p189 = scmp.ne.s32.totalorder %s178, %s179
    %p190 = scmp.eq.s32.totalorder %s18, 0
    %p191 = por %p189, %p190
    %p192 = scmp.ne.s32.totalorder %s178, %s179
    %p193 = scmp.eq.s32.totalorder %s19, 1
    %p194 = por %p192, %p193
    %p196 = scmp.ne.s32.totalorder %s179, %s195
    %p197 = scmp.eq.s32.totalorder %s19, 0
    %p198 = por %p196, %p197
    %p199 = scmp.le.s32.totalorder 1, %s13
    %p200 = scmp.lt.s32.totalorder %s13, 3
    %p201 = pnand %p199, %p200
    %p202 = pneg %p201
    // Predicated region
    $region9: #{tpu_custom_call.1} parent=5 // pred_check
      _
    $region10: #{tpu_custom_call.1} parent=5 // pred_check_branch
      %204 = sbr.rel (%p201) target = $region12
    $region11: #{tpu_custom_call.1} parent=5 // pred_region
      %s205 = ssub.s32 %s13, 1
      // Predicated region
      $region13: #{tpu_custom_call.1} parent=11 // pred_check
        %p206 = pneg %p60
      $region14: #{tpu_custom_call.1} parent=11 // pred_check_branch
        %208 = sbr.rel (%p206) target = $region16
      $region15: #{tpu_custom_call.1} parent=11 // pred_region
        _
      $region16: #{tpu_custom_call.1} parent=11 // pred_fallthru
        _
      // Predicated region
      $region17: #{tpu_custom_call.1} parent=11 // pred_check
        %p209 = pneg %p81
      $region18: #{tpu_custom_call.1} parent=11 // pred_check_branch
        %211 = sbr.rel (%p209) target = $region20
      $region19: #{tpu_custom_call.1} parent=11 // pred_region
        _
      $region20: #{tpu_custom_call.1} parent=11 // pred_fallthru
        _
      // Predicated region
      $region21: #{tpu_custom_call.1} parent=11 // pred_check
        %p212 = pneg %p102
      $region22: #{tpu_custom_call.1} parent=11 // pred_check_branch
        %214 = sbr.rel (%p212) target = $region24
      $region23: #{tpu_custom_call.1} parent=11 // pred_region
        _
      $region24: #{tpu_custom_call.1} parent=11 // pred_fallthru
        _
      // Predicated region
      $region25: #{tpu_custom_call.1} parent=11 // pred_check
        %p215 = pneg %p123
      $region26: #{tpu_custom_call.1} parent=11 // pred_check_branch
        %217 = sbr.rel (%p215) target = $region28
      $region27: #{tpu_custom_call.1} parent=11 // pred_region
        _
      $region28: #{tpu_custom_call.1} parent=11 // pred_fallthru
        _
      // Predicated region
      $region29: #{tpu_custom_call.1} parent=11 // pred_check
        %p218 = pneg %p144
      $region30: #{tpu_custom_call.1} parent=11 // pred_check_branch
        %220 = sbr.rel (%p218) target = $region32
      $region31: #{tpu_custom_call.1} parent=11 // pred_region
        _
      $region32: #{tpu_custom_call.1} parent=11 // pred_fallthru
        _
      // Predicated region
      $region33: #{tpu_custom_call.1} parent=11 // pred_check
        %p221 = pneg %p165
      $region34: #{tpu_custom_call.1} parent=11 // pred_check_branch
        %223 = sbr.rel (%p221) target = $region36
      $region35: #{tpu_custom_call.1} parent=11 // pred_region
        _
      $region36: #{tpu_custom_call.1} parent=11 // pred_fallthru
        _
    $region12: #{tpu_custom_call.1} parent=5 // pred_fallthru
      _
    %p224 = scmp.lt.s32.totalorder %s13, 2
    // Predicated region
    $region37: #{tpu_custom_call.1} parent=5 // pred_check
      %p225 = pneg %p224
    $region38: #{tpu_custom_call.1} parent=5 // pred_check_branch
      %227 = sbr.rel (%p225) target = $region40
    $region39: #{tpu_custom_call.1} parent=5 // pred_region
      // Predicated region
      $region41: #{tpu_custom_call.1} parent=39 // pred_check
        %p228 = pneg %p33
      $region42: #{tpu_custom_call.1} parent=39 // pred_check_branch
        %230 = sbr.rel (%p228) target = $region44
      $region43: #{tpu_custom_call.1} parent=39 // pred_region
        %p231 = scmp.lt.s32.totalorder %s13, 1
        %s232 = scalar_select %p231, %s13, 1
        %s233 = smul.addr %s232, 32
        %s234 = smul.addr %s233, 8
        %s235 = scalar_lea.vmem %s0, %s234
      $region44: #{tpu_custom_call.1} parent=39 // pred_fallthru
        _
    $region40: #{tpu_custom_call.1} parent=5 // pred_fallthru
      _
    %p236 = scmp.le.s32.totalorder 1, %s13
    %p237 = scmp.lt.s32.totalorder %s13, 3
    %p238 = pnand %p236, %p237
    %p239 = pneg %p238
    // Predicated region
    $region45: #{tpu_custom_call.1} parent=5 // pred_check
      _
    $region46: #{tpu_custom_call.1} parent=5 // pred_check_branch
      %241 = sbr.rel (%p238) target = $region48
    $region47: #{tpu_custom_call.1} parent=5 // pred_region
      %s242 = ssub.s32 %s13, 1
      %p243 = scmp.lt.s32.totalorder %s18, 1
      %s244 = scalar_select %p243, %s18, 1
      %s245 = smul.addr %s244, 32
      %s246 = smul.addr %s245, 8
      %s247 = scalar_lea.vmem %s0, %s246
      %p248 = pneg %p39
      %p249 = pneg %p36
      %p250 = pneg %p60
      %p251 = pneg %p57
      %p252 = pneg %p81
      %p253 = pneg %p78
      %p254 = pneg %p102
      %p255 = pneg %p99
      %p256 = pneg %p123
      %p257 = pneg %p120
      %p258 = pneg %p144
      %p259 = pneg %p141
      %p260 = pneg %p165
      %p261 = pneg %p162
      %p262 = pneg %p191
      %p263 = pneg %p188
      %p264 = scmp.lt.s32.totalorder %s18, 1
      %s265 = scalar_select %p264, %s18, 1
      %s266 = smul.addr %s265, 32
      %s267 = smul.addr %s266, 8
      %s268 = scalar_lea.vmem %s7, %s267
      %p269 = scmp.lt.s32.totalorder %s18, 1
      %s270 = scalar_select %p269, %s18, 1
      %s271 = smul.addr %s270, 32
      %s272 = smul.addr %s271, 8
      %s273 = scalar_lea.vmem %s0, %s272
      %p274 = scmp.lt.s32.totalorder %s18, 1
      %s275 = scalar_select %p274, %s18, 1
      %s276 = smul.addr %s275, 32
      %s277 = smul.addr %s276, 8
      %s278 = scalar_lea.vmem %s7, %s277
      %v280 = vld [vmem:[%s273] sm:$0xff]
      %v281 = vld [vmem:[%s273 + $0x8] sm:$0xff]
      %v282 = vld [vmem:[%s273 + $0x10] sm:$0xff]
      %v283 = vld [vmem:[%s273 + $0x18] sm:$0xff]
      %v284 = vld [vmem:[%s273 + $0x20] sm:$0xff]
      %v285 = vld [vmem:[%s273 + $0x28] sm:$0xff]
      %v286 = vld [vmem:[%s273 + $0x30] sm:$0xff]
      %v287 = vld [vmem:[%s273 + $0x38] sm:$0xff]
      %v288 = vld [vmem:[%s273 + $0x40] sm:$0xff]
      %v289 = vld [vmem:[%s273 + $0x48] sm:$0xff]
      %v290 = vld [vmem:[%s273 + $0x50] sm:$0xff]
      %v291 = vld [vmem:[%s273 + $0x58] sm:$0xff]
      %v292 = vld [vmem:[%s273 + $0x60] sm:$0xff]
      %v293 = vld [vmem:[%s273 + $0x68] sm:$0xff]
      %v294 = vld [vmem:[%s273 + $0x70] sm:$0xff]
      %v295 = vld [vmem:[%s273 + $0x78] sm:$0xff]
      %v296 = vld [vmem:[%s273 + $0x80] sm:$0xff]
      %v297 = vld [vmem:[%s273 + $0x88] sm:$0xff]
      %v298 = vld [vmem:[%s273 + $0x90] sm:$0xff]
      %v299 = vld [vmem:[%s273 + $0x98] sm:$0xff]
      %v300 = vld [vmem:[%s273 + $0xa0] sm:$0xff]
      %v301 = vld [vmem:[%s273 + $0xa8] sm:$0xff]
      %v302 = vld [vmem:[%s273 + $0xb0] sm:$0xff]
      %v303 = vld [vmem:[%s273 + $0xb8] sm:$0xff]
      %v304 = vld [vmem:[%s273 + $0xc0] sm:$0xff]
      %v305 = vld [vmem:[%s273 + $0xc8] sm:$0xff]
      %v306 = vld [vmem:[%s273 + $0xd0] sm:$0xff]
      %v307 = vld [vmem:[%s273 + $0xd8] sm:$0xff]
      %v308 = vld [vmem:[%s273 + $0xe0] sm:$0xff]
      %v309 = vld [vmem:[%s273 + $0xe8] sm:$0xff]
      %v310 = vld [vmem:[%s273 + $0xf0] sm:$0xff]
      %v311 = vld [vmem:[%s273 + $0xf8] sm:$0xff]
      %vm312 = vcmask 27648
      %313 = vst.msk [vmem:[#allocation2] sm:$0xf] %vm312, 0
      %314 = vst.msk [vmem:[#allocation2 + $0x4] sm:$0xf] %vm312, 0
      %vm315 = vcmask 24576
      %316 = vst.msk [vmem:[#allocation2 + $0x8] sm:$0x1] %vm315, 0
      %s317 = scalar_lea.vmem [#allocation2], 204
      %318 = vst.msk [vmem:[%s317] sm:$0xf] %vm312, 0
      %319 = vst.msk [vmem:[%s317 + $0x4] sm:$0xf] %vm312, 0
      %320 = vst.msk [vmem:[%s317 + $0x8] sm:$0x1] %vm315, 0
      %s321 = scalar_lea.vmem [#allocation2], 12
      %vm322 = vcmask 24576
      %vm323 = vsmask.f32 256
      %vm324 = vmand %vm322, %vm323
      %v325 = vld [vmem:[%s321] sm:$0x1]
      %v326 = vsel %vm324, 0, %v325
      %327 = vst [vmem:[%s321] sm:$0x1] %v326
      %v328 = vld [vmem:[%s321 + $0xc] sm:$0x1]
      %v329 = vsel %vm324, 0, %v328
      %330 = vst [vmem:[%s321 + $0xc] sm:$0x1] %v329
      %v331 = vld [vmem:[%s321 + $0x18] sm:$0x1]
      %v332 = vsel %vm324, 0, %v331
      %333 = vst [vmem:[%s321 + $0x18] sm:$0x1] %v332
      %v334 = vld [vmem:[%s321 + $0x24] sm:$0x1]
      %v335 = vsel %vm324, 0, %v334
      %336 = vst [vmem:[%s321 + $0x24] sm:$0x1] %v335
      %v337 = vld [vmem:[%s321 + $0x30] sm:$0x1]
      %v338 = vsel %vm324, 0, %v337
      %339 = vst [vmem:[%s321 + $0x30] sm:$0x1] %v338
      %v340 = vld [vmem:[%s321 + $0x3c] sm:$0x1]
      %v341 = vsel %vm324, 0, %v340
      %342 = vst [vmem:[%s321 + $0x3c] sm:$0x1] %v341
      %v343 = vld [vmem:[%s321 + $0x48] sm:$0x1]
      %v344 = vsel %vm324, 0, %v343
      %345 = vst [vmem:[%s321 + $0x48] sm:$0x1] %v344
      %v346 = vld [vmem:[%s321 + $0x54] sm:$0x1]
      %v347 = vsel %vm324, 0, %v346
      %348 = vst [vmem:[%s321 + $0x54] sm:$0x1] %v347
      %v349 = vld [vmem:[%s321 + $0x60] sm:$0x1]
      %v350 = vsel %vm324, 0, %v349
      %351 = vst [vmem:[%s321 + $0x60] sm:$0x1] %v350
      %v352 = vld [vmem:[%s321 + $0x6c] sm:$0x1]
      %v353 = vsel %vm324, 0, %v352
      %354 = vst [vmem:[%s321 + $0x6c] sm:$0x1] %v353
      %v355 = vld [vmem:[%s321 + $0x78] sm:$0x1]
      %v356 = vsel %vm324, 0, %v355
      %357 = vst [vmem:[%s321 + $0x78] sm:$0x1] %v356
      %v358 = vld [vmem:[%s321 + $0x84] sm:$0x1]
      %v359 = vsel %vm324, 0, %v358
      %360 = vst [vmem:[%s321 + $0x84] sm:$0x1] %v359
      %v361 = vld [vmem:[%s321 + $0x90] sm:$0x1]
      %v362 = vsel %vm324, 0, %v361
      %363 = vst [vmem:[%s321 + $0x90] sm:$0x1] %v362
      %v364 = vld [vmem:[%s321 + $0x9c] sm:$0x1]
      %v365 = vsel %vm324, 0, %v364
      %366 = vst [vmem:[%s321 + $0x9c] sm:$0x1] %v365
      %v367 = vld [vmem:[%s321 + $0xa8] sm:$0x1]
      %v368 = vsel %vm324, 0, %v367
      %369 = vst [vmem:[%s321 + $0xa8] sm:$0x1] %v368
      %v370 = vld [vmem:[%s321 + $0xb4] sm:$0x1]
      %v371 = vsel %vm324, 0, %v370
      %372 = vst [vmem:[%s321 + $0xb4] sm:$0x1] %v371
      %vm373 = vsmask.f32 7938
      %vm374 = vmand %vm322, %vm373
      %v375 = vld [vmem:[%s321 + $0x8] sm:$0x1]
      %v376 = vsel %vm374, 0, %v375
      %377 = vst [vmem:[%s321 + $0x8] sm:$0x1] %v376
      %v378 = vld [vmem:[%s321 + $0x14] sm:$0x1]
      %v379 = vsel %vm374, 0, %v378
      %380 = vst [vmem:[%s321 + $0x14] sm:$0x1] %v379
      %v381 = vld [vmem:[%s321 + $0x20] sm:$0x1]
      %v382 = vsel %vm374, 0, %v381
      %383 = vst [vmem:[%s321 + $0x20] sm:$0x1] %v382
      %v384 = vld [vmem:[%s321 + $0x2c] sm:$0x1]
      %v385 = vsel %vm374, 0, %v384
      %386 = vst [vmem:[%s321 + $0x2c] sm:$0x1] %v385
      %v387 = vld [vmem:[%s321 + $0x38] sm:$0x1]
      %v388 = vsel %vm374, 0, %v387
      %389 = vst [vmem:[%s321 + $0x38] sm:$0x1] %v388
      %v390 = vld [vmem:[%s321 + $0x44] sm:$0x1]
      %v391 = vsel %vm374, 0, %v390
      %392 = vst [vmem:[%s321 + $0x44] sm:$0x1] %v391
      %v393 = vld [vmem:[%s321 + $0x50] sm:$0x1]
      %v394 = vsel %vm374, 0, %v393
      %395 = vst [vmem:[%s321 + $0x50] sm:$0x1] %v394
      %v396 = vld [vmem:[%s321 + $0x5c] sm:$0x1]
      %v397 = vsel %vm374, 0, %v396
      %398 = vst [vmem:[%s321 + $0x5c] sm:$0x1] %v397
      %v399 = vld [vmem:[%s321 + $0x68] sm:$0x1]
      %v400 = vsel %vm374, 0, %v399
      %401 = vst [vmem:[%s321 + $0x68] sm:$0x1] %v400
      %v402 = vld [vmem:[%s321 + $0x74] sm:$0x1]
      %v403 = vsel %vm374, 0, %v402
      %404 = vst [vmem:[%s321 + $0x74] sm:$0x1] %v403
      %v405 = vld [vmem:[%s321 + $0x80] sm:$0x1]
      %v406 = vsel %vm374, 0, %v405
      %407 = vst [vmem:[%s321 + $0x80] sm:$0x1] %v406
      %v408 = vld [vmem:[%s321 + $0x8c] sm:$0x1]
      %v409 = vsel %vm374, 0, %v408
      %410 = vst [vmem:[%s321 + $0x8c] sm:$0x1] %v409
      %v411 = vld [vmem:[%s321 + $0x98] sm:$0x1]
      %v412 = vsel %vm374, 0, %v411
      %413 = vst [vmem:[%s321 + $0x98] sm:$0x1] %v412
      %v414 = vld [vmem:[%s321 + $0xa4] sm:$0x1]
      %v415 = vsel %vm374, 0, %v414
      %416 = vst [vmem:[%s321 + $0xa4] sm:$0x1] %v415
      %v417 = vld [vmem:[%s321 + $0xb0] sm:$0x1]
      %v418 = vsel %vm374, 0, %v417
      %419 = vst [vmem:[%s321 + $0xb0] sm:$0x1] %v418
      %v420 = vld [vmem:[%s321 + $0xbc] sm:$0x1]
      %v421 = vsel %vm374, 0, %v420
      %422 = vst [vmem:[%s321 + $0xbc] sm:$0x1] %v421
      %v423 = vld [vmem:[%s1] sm:$0x1]
      %v424 = vld [vmem:[%s2] sm:$0x1]
      %v426 = vlaneseq
      %v427 = vshrl.u32 %v426, 7
      %v428 = vsub.s32 0, %v427
      %v429 = vrot.slane %v423, %v428
      %v431 = vmul.f32 %v280, %v429
      %v432 = vmul.f32 %v281, %v429
      %v433 = vmul.f32 %v282, %v429
      %v434 = vmul.f32 %v283, %v429
      %v435 = vmul.f32 %v284, %v429
      %v436 = vmul.f32 %v285, %v429
      %v437 = vmul.f32 %v286, %v429
      %v438 = vmul.f32 %v287, %v429
      %v439 = vmul.f32 %v288, %v429
      %v440 = vmul.f32 %v289, %v429
      %v441 = vmul.f32 %v290, %v429
      %v442 = vmul.f32 %v291, %v429
      %v443 = vmul.f32 %v292, %v429
      %v444 = vmul.f32 %v293, %v429
      %v445 = vmul.f32 %v294, %v429
      %v446 = vmul.f32 %v295, %v429
      %v447 = vmul.f32 %v296, %v429
      %v448 = vmul.f32 %v297, %v429
      %v449 = vmul.f32 %v298, %v429
      %v450 = vmul.f32 %v299, %v429
      %v451 = vmul.f32 %v300, %v429
      %v452 = vmul.f32 %v301, %v429
      %v453 = vmul.f32 %v302, %v429
      %v454 = vmul.f32 %v303, %v429
      %v455 = vmul.f32 %v304, %v429
      %v456 = vmul.f32 %v305, %v429
      %v457 = vmul.f32 %v306, %v429
      %v458 = vmul.f32 %v307, %v429
      %v459 = vmul.f32 %v308, %v429
      %v460 = vmul.f32 %v309, %v429
      %v461 = vmul.f32 %v310, %v429
      %v462 = vmul.f32 %v311, %v429
      %v464 = vlaneseq
      %v465 = vshrl.u32 %v464, 7
      %v466 = vsub.s32 0, %v465
      %v467 = vrot.slane %v424, %v466
      %v469 = vadd.f32 %v431, %v467
      %v470 = vadd.f32 %v432, %v467
      %v471 = vadd.f32 %v433, %v467
      %v472 = vadd.f32 %v434, %v467
      %v473 = vadd.f32 %v435, %v467
      %v474 = vadd.f32 %v436, %v467
      %v475 = vadd.f32 %v437, %v467
      %v476 = vadd.f32 %v438, %v467
      %v477 = vadd.f32 %v439, %v467
      %v478 = vadd.f32 %v440, %v467
      %v479 = vadd.f32 %v441, %v467
      %v480 = vadd.f32 %v442, %v467
      %v481 = vadd.f32 %v443, %v467
      %v482 = vadd.f32 %v444, %v467
      %v483 = vadd.f32 %v445, %v467
      %v484 = vadd.f32 %v446, %v467
      %v485 = vadd.f32 %v447, %v467
      %v486 = vadd.f32 %v448, %v467
      %v487 = vadd.f32 %v449, %v467
      %v488 = vadd.f32 %v450, %v467
      %v489 = vadd.f32 %v451, %v467
      %v490 = vadd.f32 %v452, %v467
      %v491 = vadd.f32 %v453, %v467
      %v492 = vadd.f32 %v454, %v467
      %v493 = vadd.f32 %v455, %v467
      %v494 = vadd.f32 %v456, %v467
      %v495 = vadd.f32 %v457, %v467
      %v496 = vadd.f32 %v458, %v467
      %v497 = vadd.f32 %v459, %v467
      %v498 = vadd.f32 %v460, %v467
      %v499 = vadd.f32 %v461, %v467
      %v500 = vadd.f32 %v462, %v467
      %v501 = vpack.c.bf16 %v470, %v469
      %v502 = vpack.c.bf16 %v472, %v471
      %v503 = vpack.c.bf16 %v474, %v473
      %v504 = vpack.c.bf16 %v476, %v475
      %v505 = vpack.c.bf16 %v478, %v477
      %v506 = vpack.c.bf16 %v480, %v479
      %v507 = vpack.c.bf16 %v482, %v481
      %v508 = vpack.c.bf16 %v484, %v483
      %v509 = vpack.c.bf16 %v486, %v485
      %v510 = vpack.c.bf16 %v488, %v487
      %v511 = vpack.c.bf16 %v490, %v489
      %v512 = vpack.c.bf16 %v492, %v491
      %v513 = vpack.c.bf16 %v494, %v493
      %v514 = vpack.c.bf16 %v496, %v495
      %v515 = vpack.c.bf16 %v498, %v497
      %v516 = vpack.c.bf16 %v500, %v499
      %v533 = vunpack.c.l.b16 %v501
      %v534 = vunpack.c.h.b16 %v501
      %v535 = vunpack.c.l.b16 %v502
      %v536 = vunpack.c.h.b16 %v502
      %v537 = vunpack.c.l.b16 %v503
      %v538 = vunpack.c.h.b16 %v503
      %v539 = vunpack.c.l.b16 %v504
      %v540 = vunpack.c.h.b16 %v504
      %v541 = vunpack.c.l.b16 %v505
      %v542 = vunpack.c.h.b16 %v505
      %v543 = vunpack.c.l.b16 %v506
      %v544 = vunpack.c.h.b16 %v506
      %v545 = vunpack.c.l.b16 %v507
      %v546 = vunpack.c.h.b16 %v507
      %v547 = vunpack.c.l.b16 %v508
      %v548 = vunpack.c.h.b16 %v508
      %v549 = vunpack.c.l.b16 %v509
      %v550 = vunpack.c.h.b16 %v509
      %v551 = vunpack.c.l.b16 %v510
      %v552 = vunpack.c.h.b16 %v510
      %v553 = vunpack.c.l.b16 %v511
      %v554 = vunpack.c.h.b16 %v511
      %v555 = vunpack.c.l.b16 %v512
      %v556 = vunpack.c.h.b16 %v512
      %v557 = vunpack.c.l.b16 %v513
      %v558 = vunpack.c.h.b16 %v513
      %v559 = vunpack.c.l.b16 %v514
      %v560 = vunpack.c.h.b16 %v514
      %v561 = vunpack.c.l.b16 %v515
      %v562 = vunpack.c.h.b16 %v515
      %v563 = vunpack.c.l.b16 %v516
      %v564 = vunpack.c.h.b16 %v516
      %v565 = vpack.c.b16 %v533, %v533
      %v566 = vpack.c.b16 %v534, %v534
      %v567 = vpack.c.b16 %v535, %v535
      %v568 = vpack.c.b16 %v536, %v536
      %v569 = vpack.c.b16 %v537, %v537
      %v570 = vpack.c.b16 %v538, %v538
      %v571 = vpack.c.b16 %v539, %v539
      %v572 = vpack.c.b16 %v540, %v540
      %v573 = vpack.c.b16 %v541, %v541
      %v574 = vpack.c.b16 %v542, %v542
      %v575 = vpack.c.b16 %v543, %v543
      %v576 = vpack.c.b16 %v544, %v544
      %v577 = vpack.c.b16 %v545, %v545
      %v578 = vpack.c.b16 %v546, %v546
      %v579 = vpack.c.b16 %v547, %v547
      %v580 = vpack.c.b16 %v548, %v548
      %v581 = vpack.c.b16 %v549, %v549
      %v582 = vpack.c.b16 %v550, %v550
      %v583 = vpack.c.b16 %v551, %v551
      %v584 = vpack.c.b16 %v552, %v552
      %v585 = vpack.c.b16 %v553, %v553
      %v586 = vpack.c.b16 %v554, %v554
      %v587 = vpack.c.b16 %v555, %v555
      %v588 = vpack.c.b16 %v556, %v556
      %v589 = vpack.c.b16 %v557, %v557
      %v590 = vpack.c.b16 %v558, %v558
      %v591 = vpack.c.b16 %v559, %v559
      %v592 = vpack.c.b16 %v560, %v560
      %v593 = vpack.c.b16 %v561, %v561
      %v594 = vpack.c.b16 %v562, %v562
      %v595 = vpack.c.b16 %v563, %v563
      %v596 = vpack.c.b16 %v564, %v564
      %vm597 = vsmask.f32 4368
      %vm598 = vmor %vm323, %vm597
      %v600 = vshrl.u32 %v565, 16
      %v602 = vrot.slane %v600, 7
      %v603 = vshll.u32 %v565, 16
      %v605 = vor.u32 %v602, %v603
      %v606 = vrot.slane %v602, 4
      %v608 = vshrl.u32 %v566, 16
      %v610 = vrot.slane %v608, 7
      %v611 = vshll.u32 %v566, 16
      %v613 = vor.u32 %v610, %v611
      %v614 = vsel %vm598, %v606, %v613
      %v615 = vrot.slane %v610, 4
      %v617 = vshrl.u32 %v567, 16
      %v619 = vrot.slane %v617, 7
      %v620 = vshll.u32 %v567, 16
      %v622 = vor.u32 %v619, %v620
      %v623 = vrot.slane %v619, 4
      %v625 = vshrl.u32 %v568, 16
      %v627 = vrot.slane %v625, 7
      %v628 = vshll.u32 %v568, 16
      %v630 = vor.u32 %v627, %v628
      %v631 = vsel %vm598, %v623, %v630
      %v632 = vrot.slane %v627, 4
      %v634 = vshrl.u32 %v569, 16
      %v636 = vrot.slane %v634, 7
      %v637 = vshll.u32 %v569, 16
      %v639 = vor.u32 %v636, %v637
      %v640 = vrot.slane %v636, 4
      %v642 = vshrl.u32 %v570, 16
      %v644 = vrot.slane %v642, 7
      %v645 = vshll.u32 %v570, 16
      %v647 = vor.u32 %v644, %v645
      %v648 = vsel %vm598, %v640, %v647
      %v649 = vrot.slane %v644, 4
      %v651 = vshrl.u32 %v571, 16
      %v653 = vrot.slane %v651, 7
      %v654 = vshll.u32 %v571, 16
      %v656 = vor.u32 %v653, %v654
      %v657 = vrot.slane %v653, 4
      %v659 = vshrl.u32 %v572, 16
      %v661 = vrot.slane %v659, 7
      %v662 = vshll.u32 %v572, 16
      %v664 = vor.u32 %v661, %v662
      %v665 = vsel %vm598, %v657, %v664
      %v666 = vrot.slane %v661, 4
      %v668 = vshrl.u32 %v573, 16
      %v670 = vrot.slane %v668, 7
      %v671 = vshll.u32 %v573, 16
      %v673 = vor.u32 %v670, %v671
      %v674 = vrot.slane %v670, 4
      %v676 = vshrl.u32 %v574, 16
      %v678 = vrot.slane %v676, 7
      %v679 = vshll.u32 %v574, 16
      %v681 = vor.u32 %v678, %v679
      %v682 = vsel %vm598, %v674, %v681
      %v683 = vrot.slane %v678, 4
      %v685 = vshrl.u32 %v575, 16
      %v687 = vrot.slane %v685, 7
      %v688 = vshll.u32 %v575, 16
      %v690 = vor.u32 %v687, %v688
      %v691 = vrot.slane %v687, 4
      %v693 = vshrl.u32 %v576, 16
      %v695 = vrot.slane %v693, 7
      %v696 = vshll.u32 %v576, 16
      %v698 = vor.u32 %v695, %v696
      %v699 = vsel %vm598, %v691, %v698
      %v700 = vrot.slane %v695, 4
      %v702 = vshrl.u32 %v577, 16
      %v704 = vrot.slane %v702, 7
      %v705 = vshll.u32 %v577, 16
      %v707 = vor.u32 %v704, %v705
      %v708 = vrot.slane %v704, 4
      %v710 = vshrl.u32 %v578, 16
      %v712 = vrot.slane %v710, 7
      %v713 = vshll.u32 %v578, 16
      %v715 = vor.u32 %v712, %v713
      %v716 = vsel %vm598, %v708, %v715
      %v717 = vrot.slane %v712, 4
      %v719 = vshrl.u32 %v579, 16
      %v721 = vrot.slane %v719, 7
      %v722 = vshll.u32 %v579, 16
      %v724 = vor.u32 %v721, %v722
      %v725 = vrot.slane %v721, 4
      %v727 = vshrl.u32 %v580, 16
      %v729 = vrot.slane %v727, 7
      %v730 = vshll.u32 %v580, 16
      %v732 = vor.u32 %v729, %v730
      %v733 = vsel %vm598, %v725, %v732
      %v734 = vrot.slane %v729, 4
      %v736 = vshrl.u32 %v581, 16
      %v738 = vrot.slane %v736, 7
      %v739 = vshll.u32 %v581, 16
      %v741 = vor.u32 %v738, %v739
      %v742 = vrot.slane %v738, 4
      %v744 = vshrl.u32 %v582, 16
      %v746 = vrot.slane %v744, 7
      %v747 = vshll.u32 %v582, 16
      %v749 = vor.u32 %v746, %v747
      %v750 = vsel %vm598, %v742, %v749
      %v751 = vrot.slane %v746, 4
      %v753 = vshrl.u32 %v583, 16
      %v755 = vrot.slane %v753, 7
      %v756 = vshll.u32 %v583, 16
      %v758 = vor.u32 %v755, %v756
      %v759 = vrot.slane %v755, 4
      %v761 = vshrl.u32 %v584, 16
      %v763 = vrot.slane %v761, 7
      %v764 = vshll.u32 %v584, 16
      %v766 = vor.u32 %v763, %v764
      %v767 = vsel %vm598, %v759, %v766
      %v768 = vrot.slane %v763, 4
      %v770 = vshrl.u32 %v585, 16
      %v772 = vrot.slane %v770, 7
      %v773 = vshll.u32 %v585, 16
      %v775 = vor.u32 %v772, %v773
      %v776 = vrot.slane %v772, 4
      %v778 = vshrl.u32 %v586, 16
      %v780 = vrot.slane %v778, 7
      %v781 = vshll.u32 %v586, 16
      %v783 = vor.u32 %v780, %v781
      %v784 = vsel %vm598, %v776, %v783
      %v785 = vrot.slane %v780, 4
      %v787 = vshrl.u32 %v587, 16
      %v789 = vrot.slane %v787, 7
      %v790 = vshll.u32 %v587, 16
      %v792 = vor.u32 %v789, %v790
      %v793 = vrot.slane %v789, 4
      %v795 = vshrl.u32 %v588, 16
      %v797 = vrot.slane %v795, 7
      %v798 = vshll.u32 %v588, 16
      %v800 = vor.u32 %v797, %v798
      %v801 = vsel %vm598, %v793, %v800
      %v802 = vrot.slane %v797, 4
      %v804 = vshrl.u32 %v589, 16
      %v806 = vrot.slane %v804, 7
      %v807 = vshll.u32 %v589, 16
      %v809 = vor.u32 %v806, %v807
      %v810 = vrot.slane %v806, 4
      %v812 = vshrl.u32 %v590, 16
      %v814 = vrot.slane %v812, 7
      %v815 = vshll.u32 %v590, 16
      %v817 = vor.u32 %v814, %v815
      %v818 = vsel %vm598, %v810, %v817
      %v819 = vrot.slane %v814, 4
      %v821 = vshrl.u32 %v591, 16
      %v823 = vrot.slane %v821, 7
      %v824 = vshll.u32 %v591, 16
      %v826 = vor.u32 %v823, %v824
      %v827 = vrot.slane %v823, 4
      %v829 = vshrl.u32 %v592, 16
      %v831 = vrot.slane %v829, 7
      %v832 = vshll.u32 %v592, 16
      %v834 = vor.u32 %v831, %v832
      %v835 = vsel %vm598, %v827, %v834
      %v836 = vrot.slane %v831, 4
      %v838 = vshrl.u32 %v593, 16
      %v840 = vrot.slane %v838, 7
      %v841 = vshll.u32 %v593, 16
      %v843 = vor.u32 %v840, %v841
      %v844 = vrot.slane %v840, 4
      %v846 = vshrl.u32 %v594, 16
      %v848 = vrot.slane %v846, 7
      %v849 = vshll.u32 %v594, 16
      %v851 = vor.u32 %v848, %v849
      %v852 = vsel %vm598, %v844, %v851
      %v853 = vrot.slane %v848, 4
      %v855 = vshrl.u32 %v595, 16
      %v857 = vrot.slane %v855, 7
      %v858 = vshll.u32 %v595, 16
      %v860 = vor.u32 %v857, %v858
      %v861 = vrot.slane %v857, 4
      %v863 = vshrl.u32 %v596, 16
      %v865 = vrot.slane %v863, 7
      %v866 = vshll.u32 %v596, 16
      %v868 = vor.u32 %v865, %v866
      %v869 = vsel %vm598, %v861, %v868
      %v870 = vrot.slane %v865, 4
      %vm919 = vcmask 27648
      %vm920 = vmand %vm919, %vm373
      %v921 = vld [vmem:[%s321] sm:$0xf]
      %v922 = vsel %vm920, %v605, %v921
      %923 = vst [vmem:[%s321] sm:$0xf] %v922
      %924 = vst.msk [vmem:[%s321 + $0x4] sm:$0xf] %vm312, %v614
      %v925 = vld [vmem:[%s321 + $0x8] sm:$0x1]
      %v926 = vsel %vm324, %v615, %v925
      %927 = vst [vmem:[%s321 + $0x8] sm:$0x1] %v926
      %v928 = vld [vmem:[%s321 + $0xc] sm:$0xf]
      %v929 = vsel %vm920, %v622, %v928
      %930 = vst [vmem:[%s321 + $0xc] sm:$0xf] %v929
      %931 = vst.msk [vmem:[%s321 + $0x10] sm:$0xf] %vm312, %v631
      %v932 = vld [vmem:[%s321 + $0x14] sm:$0x1]
      %v933 = vsel %vm324, %v632, %v932
      %934 = vst [vmem:[%s321 + $0x14] sm:$0x1] %v933
      %v935 = vld [vmem:[%s321 + $0x18] sm:$0xf]
      %v936 = vsel %vm920, %v639, %v935
      %937 = vst [vmem:[%s321 + $0x18] sm:$0xf] %v936
      %938 = vst.msk [vmem:[%s321 + $0x1c] sm:$0xf] %vm312, %v648
      %v939 = vld [vmem:[%s321 + $0x20] sm:$0x1]
      %v940 = vsel %vm324, %v649, %v939
      %941 = vst [vmem:[%s321 + $0x20] sm:$0x1] %v940
      %v942 = vld [vmem:[%s321 + $0x24] sm:$0xf]
      %v943 = vsel %vm920, %v656, %v942
      %944 = vst [vmem:[%s321 + $0x24] sm:$0xf] %v943
      %945 = vst.msk [vmem:[%s321 + $0x28] sm:$0xf] %vm312, %v665
      %v946 = vld [vmem:[%s321 + $0x2c] sm:$0x1]
      %v947 = vsel %vm324, %v666, %v946
      %948 = vst [vmem:[%s321 + $0x2c] sm:$0x1] %v947
      %v949 = vld [vmem:[%s321 + $0x30] sm:$0xf]
      %v950 = vsel %vm920, %v673, %v949
      %951 = vst [vmem:[%s321 + $0x30] sm:$0xf] %v950
      %952 = vst.msk [vmem:[%s321 + $0x34] sm:$0xf] %vm312, %v682
      %v953 = vld [vmem:[%s321 + $0x38] sm:$0x1]
      %v954 = vsel %vm324, %v683, %v953
      %955 = vst [vmem:[%s321 + $0x38] sm:$0x1] %v954
      %v956 = vld [vmem:[%s321 + $0x3c] sm:$0xf]
      %v957 = vsel %vm920, %v690, %v956
      %958 = vst [vmem:[%s321 + $0x3c] sm:$0xf] %v957
      %959 = vst.msk [vmem:[%s321 + $0x40] sm:$0xf] %vm312, %v699
      %v960 = vld [vmem:[%s321 + $0x44] sm:$0x1]
      %v961 = vsel %vm324, %v700, %v960
      %962 = vst [vmem:[%s321 + $0x44] sm:$0x1] %v961
      %v963 = vld [vmem:[%s321 + $0x48] sm:$0xf]
      %v964 = vsel %vm920, %v707, %v963
      %965 = vst [vmem:[%s321 + $0x48] sm:$0xf] %v964
      %966 = vst.msk [vmem:[%s321 + $0x4c] sm:$0xf] %vm312, %v716
      %v967 = vld [vmem:[%s321 + $0x50] sm:$0x1]
      %v968 = vsel %vm324, %v717, %v967
      %969 = vst [vmem:[%s321 + $0x50] sm:$0x1] %v968
      %v970 = vld [vmem:[%s321 + $0x54] sm:$0xf]
      %v971 = vsel %vm920, %v724, %v970
      %972 = vst [vmem:[%s321 + $0x54] sm:$0xf] %v971
      %973 = vst.msk [vmem:[%s321 + $0x58] sm:$0xf] %vm312, %v733
      %v974 = vld [vmem:[%s321 + $0x5c] sm:$0x1]
      %v975 = vsel %vm324, %v734, %v974
      %976 = vst [vmem:[%s321 + $0x5c] sm:$0x1] %v975
      %v977 = vld [vmem:[%s321 + $0x60] sm:$0xf]
      %v978 = vsel %vm920, %v741, %v977
      %979 = vst [vmem:[%s321 + $0x60] sm:$0xf] %v978
      %980 = vst.msk [vmem:[%s321 + $0x64] sm:$0xf] %vm312, %v750
      %v981 = vld [vmem:[%s321 + $0x68] sm:$0x1]
      %v982 = vsel %vm324, %v751, %v981
      %983 = vst [vmem:[%s321 + $0x68] sm:$0x1] %v982
      %v984 = vld [vmem:[%s321 + $0x6c] sm:$0xf]
      %v985 = vsel %vm920, %v758, %v984
      %986 = vst [vmem:[%s321 + $0x6c] sm:$0xf] %v985
      %987 = vst.msk [vmem:[%s321 + $0x70] sm:$0xf] %vm312, %v767
      %v988 = vld [vmem:[%s321 + $0x74] sm:$0x1]
      %v989 = vsel %vm324, %v768, %v988
      %990 = vst [vmem:[%s321 + $0x74] sm:$0x1] %v989
      %v991 = vld [vmem:[%s321 + $0x78] sm:$0xf]
      %v992 = vsel %vm920, %v775, %v991
      %993 = vst [vmem:[%s321 + $0x78] sm:$0xf] %v992
      %994 = vst.msk [vmem:[%s321 + $0x7c] sm:$0xf] %vm312, %v784
      %v995 = vld [vmem:[%s321 + $0x80] sm:$0x1]
      %v996 = vsel %vm324, %v785, %v995
      %997 = vst [vmem:[%s321 + $0x80] sm:$0x1] %v996
      %v998 = vld [vmem:[%s321 + $0x84] sm:$0xf]
      %v999 = vsel %vm920, %v792, %v998
      %1000 = vst [vmem:[%s321 + $0x84] sm:$0xf] %v999
      %1001 = vst.msk [vmem:[%s321 + $0x88] sm:$0xf] %vm312, %v801
      %v1002 = vld [vmem:[%s321 + $0x8c] sm:$0x1]
      %v1003 = vsel %vm324, %v802, %v1002
      %1004 = vst [vmem:[%s321 + $0x8c] sm:$0x1] %v1003
      %v1005 = vld [vmem:[%s321 + $0x90] sm:$0xf]
      %v1006 = vsel %vm920, %v809, %v1005
      %1007 = vst [vmem:[%s321 + $0x90] sm:$0xf] %v1006
      %1008 = vst.msk [vmem:[%s321 + $0x94] sm:$0xf] %vm312, %v818
      %v1009 = vld [vmem:[%s321 + $0x98] sm:$0x1]
      %v1010 = vsel %vm324, %v819, %v1009
      %1011 = vst [vmem:[%s321 + $0x98] sm:$0x1] %v1010
      %v1012 = vld [vmem:[%s321 + $0x9c] sm:$0xf]
      %v1013 = vsel %vm920, %v826, %v1012
      %1014 = vst [vmem:[%s321 + $0x9c] sm:$0xf] %v1013
      %1015 = vst.msk [vmem:[%s321 + $0xa0] sm:$0xf] %vm312, %v835
      %v1016 = vld [vmem:[%s321 + $0xa4] sm:$0x1]
      %v1017 = vsel %vm324, %v836, %v1016
      %1018 = vst [vmem:[%s321 + $0xa4] sm:$0x1] %v1017
      %v1019 = vld [vmem:[%s321 + $0xa8] sm:$0xf]
      %v1020 = vsel %vm920, %v843, %v1019
      %1021 = vst [vmem:[%s321 + $0xa8] sm:$0xf] %v1020
      %1022 = vst.msk [vmem:[%s321 + $0xac] sm:$0xf] %vm312, %v852
      %v1023 = vld [vmem:[%s321 + $0xb0] sm:$0x1]
      %v1024 = vsel %vm324, %v853, %v1023
      %1025 = vst [vmem:[%s321 + $0xb0] sm:$0x1] %v1024
      %v1026 = vld [vmem:[%s321 + $0xb4] sm:$0xf]
      %v1027 = vsel %vm920, %v860, %v1026
      %1028 = vst [vmem:[%s321 + $0xb4] sm:$0xf] %v1027
      %1029 = vst.msk [vmem:[%s321 + $0xb8] sm:$0xf] %vm312, %v869
      %v1030 = vld [vmem:[%s321 + $0xbc] sm:$0x1]
      %v1031 = vsel %vm324, %v870, %v1030
      %1032 = vst [vmem:[%s321 + $0xbc] sm:$0x1] %v1031
      %v1033 = vld [vmem:[#allocation2] sm:$0xf]
      %v1034 = vld [vmem:[#allocation2 + $0x4] sm:$0xf]
      %v1035 = vld [vmem:[#allocation2 + $0xc] sm:$0xf]
      %v1036 = vld [vmem:[#allocation2 + $0x10] sm:$0xf]
      %v1037 = vld [vmem:[#allocation2 + $0x18] sm:$0xf]
      %v1038 = vld [vmem:[#allocation2 + $0x1c] sm:$0xf]
      %v1039 = vld [vmem:[#allocation2 + $0x24] sm:$0xf]
      %v1040 = vld [vmem:[#allocation2 + $0x28] sm:$0xf]
      %v1041 = vld [vmem:[#allocation2 + $0x30] sm:$0xf]
      %v1042 = vld [vmem:[#allocation2 + $0x34] sm:$0xf]
      %v1043 = vld [vmem:[#allocation2 + $0x3c] sm:$0xf]
      %v1044 = vld [vmem:[#allocation2 + $0x40] sm:$0xf]
      %v1045 = vld [vmem:[#allocation2 + $0x48] sm:$0xf]
      %v1046 = vld [vmem:[#allocation2 + $0x4c] sm:$0xf]
      %v1047 = vld [vmem:[#allocation2 + $0x54] sm:$0xf]
      %v1048 = vld [vmem:[#allocation2 + $0x58] sm:$0xf]
      %v1049 = vld [vmem:[#allocation2 + $0x60] sm:$0xf]
      %v1050 = vld [vmem:[#allocation2 + $0x64] sm:$0xf]
      %v1051 = vld [vmem:[#allocation2 + $0x6c] sm:$0xf]
      %v1052 = vld [vmem:[#allocation2 + $0x70] sm:$0xf]
      %v1053 = vld [vmem:[#allocation2 + $0x78] sm:$0xf]
      %v1054 = vld [vmem:[#allocation2 + $0x7c] sm:$0xf]
      %v1055 = vld [vmem:[#allocation2 + $0x84] sm:$0xf]
      %v1056 = vld [vmem:[#allocation2 + $0x88] sm:$0xf]
      %v1057 = vld [vmem:[#allocation2 + $0x90] sm:$0xf]
      %v1058 = vld [vmem:[#allocation2 + $0x94] sm:$0xf]
      %v1059 = vld [vmem:[#allocation2 + $0x9c] sm:$0xf]
      %v1060 = vld [vmem:[#allocation2 + $0xa0] sm:$0xf]
      %v1061 = vld [vmem:[#allocation2 + $0xa8] sm:$0xf]
      %v1062 = vld [vmem:[#allocation2 + $0xac] sm:$0xf]
      %v1063 = vld [vmem:[#allocation2 + $0xb4] sm:$0xf]
      %v1064 = vld [vmem:[#allocation2 + $0xb8] sm:$0xf]
      %v1065 = vld [vmem:[#allocation2 + $0x8] sm:$0x1]
      %v1066 = vld [vmem:[#allocation2 + $0x14] sm:$0x1]
      %v1067 = vld [vmem:[#allocation2 + $0x20] sm:$0x1]
      %v1068 = vld [vmem:[#allocation2 + $0x2c] sm:$0x1]
      %v1069 = vld [vmem:[#allocation2 + $0x38] sm:$0x1]
      %v1070 = vld [vmem:[#allocation2 + $0x44] sm:$0x1]
      %v1071 = vld [vmem:[#allocation2 + $0x50] sm:$0x1]
      %v1072 = vld [vmem:[#allocation2 + $0x5c] sm:$0x1]
      %v1073 = vld [vmem:[#allocation2 + $0x68] sm:$0x1]
      %v1074 = vld [vmem:[#allocation2 + $0x74] sm:$0x1]
      %v1075 = vld [vmem:[#allocation2 + $0x80] sm:$0x1]
      %v1076 = vld [vmem:[#allocation2 + $0x8c] sm:$0x1]
      %v1077 = vld [vmem:[#allocation2 + $0x98] sm:$0x1]
      %v1078 = vld [vmem:[#allocation2 + $0xa4] sm:$0x1]
      %v1079 = vld [vmem:[#allocation2 + $0xb0] sm:$0x1]
      %v1080 = vld [vmem:[#allocation2 + $0xbc] sm:$0x1]
      %vm1081 = vsmask.f32 3328
      %vm1082 = vsmask.f32 7440
      %vm1083 = vmor %vm1081, %vm1082
      %v1085 = vshrl.u32 %v1033, 16
      %v1087 = vrot.slane %v1085, 4
      %v1088 = vshll.u32 %v1033, 16
      %v1090 = vrot.slane %v1088, 5
      %v1091 = vor.u32 %v1087, %v1090
      %v1092 = vrot.slane %v1091, 4
      %v1094 = vshll.u32 %v1034, 16
      %v1096 = vrot.slane %v1094, 5
      %v1097 = vsel %vm1083, %v1092, %v1096
      %v1098 = vshrl.u32 %v1034, 16
      %v1100 = vrot.slane %v1098, 4
      %v1101 = vor.u32 %v1100, %v1096
      %v1102 = vrot.slane %v1101, 4
      %v1104 = vshll.u32 %v1065, 16
      %v1106 = vrot.slane %v1104, 5
      %v1107 = vsel %vm1083, %v1102, %v1106
      %v1109 = vshrl.u32 %v1035, 16
      %v1111 = vrot.slane %v1109, 4
      %v1112 = vshll.u32 %v1035, 16
      %v1114 = vrot.slane %v1112, 5
      %v1115 = vor.u32 %v1111, %v1114
      %v1116 = vrot.slane %v1115, 4
      %v1118 = vshll.u32 %v1036, 16
      %v1120 = vrot.slane %v1118, 5
      %v1121 = vsel %vm1083, %v1116, %v1120
      %v1122 = vshrl.u32 %v1036, 16
      %v1124 = vrot.slane %v1122, 4
      %v1125 = vor.u32 %v1124, %v1120
      %v1126 = vrot.slane %v1125, 4
      %v1128 = vshll.u32 %v1066, 16
      %v1130 = vrot.slane %v1128, 5
      %v1131 = vsel %vm1083, %v1126, %v1130
      %v1133 = vshrl.u32 %v1037, 16
      %v1135 = vrot.slane %v1133, 4
      %v1136 = vshll.u32 %v1037, 16
      %v1138 = vrot.slane %v1136, 5
      %v1139 = vor.u32 %v1135, %v1138
      %v1140 = vrot.slane %v1139, 4
      %v1142 = vshll.u32 %v1038, 16
      %v1144 = vrot.slane %v1142, 5
      %v1145 = vsel %vm1083, %v1140, %v1144
      %v1146 = vshrl.u32 %v1038, 16
      %v1148 = vrot.slane %v1146, 4
      %v1149 = vor.u32 %v1148, %v1144
      %v1150 = vrot.slane %v1149, 4
      %v1152 = vshll.u32 %v1067, 16
      %v1154 = vrot.slane %v1152, 5
      %v1155 = vsel %vm1083, %v1150, %v1154
      %v1157 = vshrl.u32 %v1039, 16
      %v1159 = vrot.slane %v1157, 4
      %v1160 = vshll.u32 %v1039, 16
      %v1162 = vrot.slane %v1160, 5
      %v1163 = vor.u32 %v1159, %v1162
      %v1164 = vrot.slane %v1163, 4
      %v1166 = vshll.u32 %v1040, 16
      %v1168 = vrot.slane %v1166, 5
      %v1169 = vsel %vm1083, %v1164, %v1168
      %v1170 = vshrl.u32 %v1040, 16
      %v1172 = vrot.slane %v1170, 4
      %v1173 = vor.u32 %v1172, %v1168
      %v1174 = vrot.slane %v1173, 4
      %v1176 = vshll.u32 %v1068, 16
      %v1178 = vrot.slane %v1176, 5
      %v1179 = vsel %vm1083, %v1174, %v1178
      %v1181 = vshrl.u32 %v1041, 16
      %v1183 = vrot.slane %v1181, 4
      %v1184 = vshll.u32 %v1041, 16
      %v1186 = vrot.slane %v1184, 5
      %v1187 = vor.u32 %v1183, %v1186
      %v1188 = vrot.slane %v1187, 4
      %v1190 = vshll.u32 %v1042, 16
      %v1192 = vrot.slane %v1190, 5
      %v1193 = vsel %vm1083, %v1188, %v1192
      %v1194 = vshrl.u32 %v1042, 16
      %v1196 = vrot.slane %v1194, 4
      %v1197 = vor.u32 %v1196, %v1192
      %v1198 = vrot.slane %v1197, 4
      %v1200 = vshll.u32 %v1069, 16
      %v1202 = vrot.slane %v1200, 5
      %v1203 = vsel %vm1083, %v1198, %v1202
      %v1205 = vshrl.u32 %v1043, 16
      %v1207 = vrot.slane %v1205, 4
      %v1208 = vshll.u32 %v1043, 16
      %v1210 = vrot.slane %v1208, 5
      %v1211 = vor.u32 %v1207, %v1210
      %v1212 = vrot.slane %v1211, 4
      %v1214 = vshll.u32 %v1044, 16
      %v1216 = vrot.slane %v1214, 5
      %v1217 = vsel %vm1083, %v1212, %v1216
      %v1218 = vshrl.u32 %v1044, 16
      %v1220 = vrot.slane %v1218, 4
      %v1221 = vor.u32 %v1220, %v1216
      %v1222 = vrot.slane %v1221, 4
      %v1224 = vshll.u32 %v1070, 16
      %v1226 = vrot.slane %v1224, 5
      %v1227 = vsel %vm1083, %v1222, %v1226
      %v1229 = vshrl.u32 %v1045, 16
      %v1231 = vrot.slane %v1229, 4
      %v1232 = vshll.u32 %v1045, 16
      %v1234 = vrot.slane %v1232, 5
      %v1235 = vor.u32 %v1231, %v1234
      %v1236 = vrot.slane %v1235, 4
      %v1238 = vshll.u32 %v1046, 16
      %v1240 = vrot.slane %v1238, 5
      %v1241 = vsel %vm1083, %v1236, %v1240
      %v1242 = vshrl.u32 %v1046, 16
      %v1244 = vrot.slane %v1242, 4
      %v1245 = vor.u32 %v1244, %v1240
      %v1246 = vrot.slane %v1245, 4
      %v1248 = vshll.u32 %v1071, 16
      %v1250 = vrot.slane %v1248, 5
      %v1251 = vsel %vm1083, %v1246, %v1250
      %v1253 = vshrl.u32 %v1047, 16
      %v1255 = vrot.slane %v1253, 4
      %v1256 = vshll.u32 %v1047, 16
      %v1258 = vrot.slane %v1256, 5
      %v1259 = vor.u32 %v1255, %v1258
      %v1260 = vrot.slane %v1259, 4
      %v1262 = vshll.u32 %v1048, 16
      %v1264 = vrot.slane %v1262, 5
      %v1265 = vsel %vm1083, %v1260, %v1264
      %v1266 = vshrl.u32 %v1048, 16
      %v1268 = vrot.slane %v1266, 4
      %v1269 = vor.u32 %v1268, %v1264
      %v1270 = vrot.slane %v1269, 4
      %v1272 = vshll.u32 %v1072, 16
      %v1274 = vrot.slane %v1272, 5
      %v1275 = vsel %vm1083, %v1270, %v1274
      %v1277 = vshrl.u32 %v1049, 16
      %v1279 = vrot.slane %v1277, 4
      %v1280 = vshll.u32 %v1049, 16
      %v1282 = vrot.slane %v1280, 5
      %v1283 = vor.u32 %v1279, %v1282
      %v1284 = vrot.slane %v1283, 4
      %v1286 = vshll.u32 %v1050, 16
      %v1288 = vrot.slane %v1286, 5
      %v1289 = vsel %vm1083, %v1284, %v1288
      %v1290 = vshrl.u32 %v1050, 16
      %v1292 = vrot.slane %v1290, 4
      %v1293 = vor.u32 %v1292, %v1288
      %v1294 = vrot.slane %v1293, 4
      %v1296 = vshll.u32 %v1073, 16
      %v1298 = vrot.slane %v1296, 5
      %v1299 = vsel %vm1083, %v1294, %v1298
      %v1301 = vshrl.u32 %v1051, 16
      %v1303 = vrot.slane %v1301, 4
      %v1304 = vshll.u32 %v1051, 16
      %v1306 = vrot.slane %v1304, 5
      %v1307 = vor.u32 %v1303, %v1306
      %v1308 = vrot.slane %v1307, 4
      %v1310 = vshll.u32 %v1052, 16
      %v1312 = vrot.slane %v1310, 5
      %v1313 = vsel %vm1083, %v1308, %v1312
      %v1314 = vshrl.u32 %v1052, 16
      %v1316 = vrot.slane %v1314, 4
      %v1317 = vor.u32 %v1316, %v1312
      %v1318 = vrot.slane %v1317, 4
      %v1320 = vshll.u32 %v1074, 16
      %v1322 = vrot.slane %v1320, 5
      %v1323 = vsel %vm1083, %v1318, %v1322
      %v1325 = vshrl.u32 %v1053, 16
      %v1327 = vrot.slane %v1325, 4
      %v1328 = vshll.u32 %v1053, 16
      %v1330 = vrot.slane %v1328, 5
      %v1331 = vor.u32 %v1327, %v1330
      %v1332 = vrot.slane %v1331, 4
      %v1334 = vshll.u32 %v1054, 16
      %v1336 = vrot.slane %v1334, 5
      %v1337 = vsel %vm1083, %v1332, %v1336
      %v1338 = vshrl.u32 %v1054, 16
      %v1340 = vrot.slane %v1338, 4
      %v1341 = vor.u32 %v1340, %v1336
      %v1342 = vrot.slane %v1341, 4
      %v1344 = vshll.u32 %v1075, 16
      %v1346 = vrot.slane %v1344, 5
      %v1347 = vsel %vm1083, %v1342, %v1346
      %v1349 = vshrl.u32 %v1055, 16
      %v1351 = vrot.slane %v1349, 4
      %v1352 = vshll.u32 %v1055, 16
      %v1354 = vrot.slane %v1352, 5
      %v1355 = vor.u32 %v1351, %v1354
      %v1356 = vrot.slane %v1355, 4
      %v1358 = vshll.u32 %v1056, 16
      %v1360 = vrot.slane %v1358, 5
      %v1361 = vsel %vm1083, %v1356, %v1360
      %v1362 = vshrl.u32 %v1056, 16
      %v1364 = vrot.slane %v1362, 4
      %v1365 = vor.u32 %v1364, %v1360
      %v1366 = vrot.slane %v1365, 4
      %v1368 = vshll.u32 %v1076, 16
      %v1370 = vrot.slane %v1368, 5
      %v1371 = vsel %vm1083, %v1366, %v1370
      %v1373 = vshrl.u32 %v1057, 16
      %v1375 = vrot.slane %v1373, 4
      %v1376 = vshll.u32 %v1057, 16
      %v1378 = vrot.slane %v1376, 5
      %v1379 = vor.u32 %v1375, %v1378
      %v1380 = vrot.slane %v1379, 4
      %v1382 = vshll.u32 %v1058, 16
      %v1384 = vrot.slane %v1382, 5
      %v1385 = vsel %vm1083, %v1380, %v1384
      %v1386 = vshrl.u32 %v1058, 16
      %v1388 = vrot.slane %v1386, 4
      %v1389 = vor.u32 %v1388, %v1384
      %v1390 = vrot.slane %v1389, 4
      %v1392 = vshll.u32 %v1077, 16
      %v1394 = vrot.slane %v1392, 5
      %v1395 = vsel %vm1083, %v1390, %v1394
      %v1397 = vshrl.u32 %v1059, 16
      %v1399 = vrot.slane %v1397, 4
      %v1400 = vshll.u32 %v1059, 16
      %v1402 = vrot.slane %v1400, 5
      %v1403 = vor.u32 %v1399, %v1402
      %v1404 = vrot.slane %v1403, 4
      %v1406 = vshll.u32 %v1060, 16
      %v1408 = vrot.slane %v1406, 5
      %v1409 = vsel %vm1083, %v1404, %v1408
      %v1410 = vshrl.u32 %v1060, 16
      %v1412 = vrot.slane %v1410, 4
      %v1413 = vor.u32 %v1412, %v1408
      %v1414 = vrot.slane %v1413, 4
      %v1416 = vshll.u32 %v1078, 16
      %v1418 = vrot.slane %v1416, 5
      %v1419 = vsel %vm1083, %v1414, %v1418
      %v1421 = vshrl.u32 %v1061, 16
      %v1423 = vrot.slane %v1421, 4
      %v1424 = vshll.u32 %v1061, 16
      %v1426 = vrot.slane %v1424, 5
      %v1427 = vor.u32 %v1423, %v1426
      %v1428 = vrot.slane %v1427, 4
      %v1430 = vshll.u32 %v1062, 16
      %v1432 = vrot.slane %v1430, 5
      %v1433 = vsel %vm1083, %v1428, %v1432
      %v1434 = vshrl.u32 %v1062, 16
      %v1436 = vrot.slane %v1434, 4
      %v1437 = vor.u32 %v1436, %v1432
      %v1438 = vrot.slane %v1437, 4
      %v1440 = vshll.u32 %v1079, 16
      %v1442 = vrot.slane %v1440, 5
      %v1443 = vsel %vm1083, %v1438, %v1442
      %v1445 = vshrl.u32 %v1063, 16
      %v1447 = vrot.slane %v1445, 4
      %v1448 = vshll.u32 %v1063, 16
      %v1450 = vrot.slane %v1448, 5
      %v1451 = vor.u32 %v1447, %v1450
      %v1452 = vrot.slane %v1451, 4
      %v1454 = vshll.u32 %v1064, 16
      %v1456 = vrot.slane %v1454, 5
      %v1457 = vsel %vm1083, %v1452, %v1456
      %v1458 = vshrl.u32 %v1064, 16
      %v1460 = vrot.slane %v1458, 4
      %v1461 = vor.u32 %v1460, %v1456
      %v1462 = vrot.slane %v1461, 4
      %v1464 = vshll.u32 %v1080, 16
      %v1466 = vrot.slane %v1464, 5
      %v1467 = vsel %vm1083, %v1462, %v1466
      %v1468 = vld [vmem:[#allocation2] sm:$0xe]
      %v1469 = vld [vmem:[#allocation2 + $0xc] sm:$0xe]
      %v1470 = vld [vmem:[#allocation2 + $0x18] sm:$0xe]
      %v1471 = vld [vmem:[#allocation2 + $0x24] sm:$0xe]
      %v1472 = vld [vmem:[#allocation2 + $0x30] sm:$0xe]
      %v1473 = vld [vmem:[#allocation2 + $0x3c] sm:$0xe]
      %v1474 = vld [vmem:[#allocation2 + $0x48] sm:$0xe]
      %v1475 = vld [vmem:[#allocation2 + $0x54] sm:$0xe]
      %v1476 = vld [vmem:[#allocation2 + $0x60] sm:$0xe]
      %v1477 = vld [vmem:[#allocation2 + $0x6c] sm:$0xe]
      %v1478 = vld [vmem:[#allocation2 + $0x78] sm:$0xe]
      %v1479 = vld [vmem:[#allocation2 + $0x84] sm:$0xe]
      %v1480 = vld [vmem:[#allocation2 + $0x90] sm:$0xe]
      %v1481 = vld [vmem:[#allocation2 + $0x9c] sm:$0xe]
      %v1482 = vld [vmem:[#allocation2 + $0xa8] sm:$0xe]
      %v1483 = vld [vmem:[#allocation2 + $0xb4] sm:$0xe]
      %vm1532 = vcmask 1042432
      %vm1533 = vcmask 1046532
      %vm1534 = vmor %vm1532, %vm1533
      %v1535 = vrot.slane %v1468, 5
      %v1536 = vrot.slane %v1535, 4
      %v1537 = vrot.slane %v1034, 5
      %v1538 = vsel %vm1534, %v1536, %v1537
      %v1539 = vrot.slane %v1537, 4
      %v1540 = vrot.slane %v1065, 5
      %v1541 = vsel %vm1534, %v1539, %v1540
      %v1542 = vrot.slane %v1469, 5
      %v1543 = vrot.slane %v1542, 4
      %v1544 = vrot.slane %v1036, 5
      %v1545 = vsel %vm1534, %v1543, %v1544
      %v1546 = vrot.slane %v1544, 4
      %v1547 = vrot.slane %v1066, 5
      %v1548 = vsel %vm1534, %v1546, %v1547
      %v1549 = vrot.slane %v1470, 5
      %v1550 = vrot.slane %v1549, 4
      %v1551 = vrot.slane %v1038, 5
      %v1552 = vsel %vm1534, %v1550, %v1551
      %v1553 = vrot.slane %v1551, 4
      %v1554 = vrot.slane %v1067, 5
      %v1555 = vsel %vm1534, %v1553, %v1554
      %v1556 = vrot.slane %v1471, 5
      %v1557 = vrot.slane %v1556, 4
      %v1558 = vrot.slane %v1040, 5
      %v1559 = vsel %vm1534, %v1557, %v1558
      %v1560 = vrot.slane %v1558, 4
      %v1561 = vrot.slane %v1068, 5
      %v1562 = vsel %vm1534, %v1560, %v1561
      %v1563 = vrot.slane %v1472, 5
      %v1564 = vrot.slane %v1563, 4
      %v1565 = vrot.slane %v1042, 5
      %v1566 = vsel %vm1534, %v1564, %v1565
      %v1567 = vrot.slane %v1565, 4
      %v1568 = vrot.slane %v1069, 5
      %v1569 = vsel %vm1534, %v1567, %v1568
      %v1570 = vrot.slane %v1473, 5
      %v1571 = vrot.slane %v1570, 4
      %v1572 = vrot.slane %v1044, 5
      %v1573 = vsel %vm1534, %v1571, %v1572
      %v1574 = vrot.slane %v1572, 4
      %v1575 = vrot.slane %v1070, 5
      %v1576 = vsel %vm1534, %v1574, %v1575
      %v1577 = vrot.slane %v1474, 5
      %v1578 = vrot.slane %v1577, 4
      %v1579 = vrot.slane %v1046, 5
      %v1580 = vsel %vm1534, %v1578, %v1579
      %v1581 = vrot.slane %v1579, 4
      %v1582 = vrot.slane %v1071, 5
      %v1583 = vsel %vm1534, %v1581, %v1582
      %v1584 = vrot.slane %v1475, 5
      %v1585 = vrot.slane %v1584, 4
      %v1586 = vrot.slane %v1048, 5
      %v1587 = vsel %vm1534, %v1585, %v1586
      %v1588 = vrot.slane %v1586, 4
      %v1589 = vrot.slane %v1072, 5
      %v1590 = vsel %vm1534, %v1588, %v1589
      %v1591 = vrot.slane %v1476, 5
      %v1592 = vrot.slane %v1591, 4
      %v1593 = vrot.slane %v1050, 5
      %v1594 = vsel %vm1534, %v1592, %v1593
      %v1595 = vrot.slane %v1593, 4
      %v1596 = vrot.slane %v1073, 5
      %v1597 = vsel %vm1534, %v1595, %v1596
      %v1598 = vrot.slane %v1477, 5
      %v1599 = vrot.slane %v1598, 4
      %v1600 = vrot.slane %v1052, 5
      %v1601 = vsel %vm1534, %v1599, %v1600
      %v1602 = vrot.slane %v1600, 4
      %v1603 = vrot.slane %v1074, 5
      %v1604 = vsel %vm1534, %v1602, %v1603
      %v1605 = vrot.slane %v1478, 5
      %v1606 = vrot.slane %v1605, 4
      %v1607 = vrot.slane %v1054, 5
      %v1608 = vsel %vm1534, %v1606, %v1607
      %v1609 = vrot.slane %v1607, 4
      %v1610 = vrot.slane %v1075, 5
      %v1611 = vsel %vm1534, %v1609, %v1610
      %v1612 = vrot.slane %v1479, 5
      %v1613 = vrot.slane %v1612, 4
      %v1614 = vrot.slane %v1056, 5
      %v1615 = vsel %vm1534, %v1613, %v1614
      %v1616 = vrot.slane %v1614, 4
      %v1617 = vrot.slane %v1076, 5
      %v1618 = vsel %vm1534, %v1616, %v1617
      %v1619 = vrot.slane %v1480, 5
      %v1620 = vrot.slane %v1619, 4
      %v1621 = vrot.slane %v1058, 5
      %v1622 = vsel %vm1534, %v1620, %v1621
      %v1623 = vrot.slane %v1621, 4
      %v1624 = vrot.slane %v1077, 5
      %v1625 = vsel %vm1534, %v1623, %v1624
      %v1626 = vrot.slane %v1481, 5
      %v1627 = vrot.slane %v1626, 4
      %v1628 = vrot.slane %v1060, 5
      %v1629 = vsel %vm1534, %v1627, %v1628
      %v1630 = vrot.slane %v1628, 4
      %v1631 = vrot.slane %v1078, 5
      %v1632 = vsel %vm1534, %v1630, %v1631
      %v1633 = vrot.slane %v1482, 5
      %v1634 = vrot.slane %v1633, 4
      %v1635 = vrot.slane %v1062, 5
      %v1636 = vsel %vm1534, %v1634, %v1635
      %v1637 = vrot.slane %v1635, 4
      %v1638 = vrot.slane %v1079, 5
      %v1639 = vsel %vm1534, %v1637, %v1638
      %v1640 = vrot.slane %v1483, 5
      %v1641 = vrot.slane %v1640, 4
      %v1642 = vrot.slane %v1064, 5
      %v1643 = vsel %vm1534, %v1641, %v1642
      %v1644 = vrot.slane %v1642, 4
      %v1645 = vrot.slane %v1080, 5
      %v1646 = vsel %vm1534, %v1644, %v1645
      %v1647 = vld [vmem:[%s321] sm:$0xf]
      %v1648 = vld [vmem:[%s321 + $0x4] sm:$0xf]
      %v1649 = vld [vmem:[%s321 + $0xc] sm:$0xf]
      %v1650 = vld [vmem:[%s321 + $0x10] sm:$0xf]
      %v1651 = vld [vmem:[%s321 + $0x18] sm:$0xf]
      %v1652 = vld [vmem:[%s321 + $0x1c] sm:$0xf]
      %v1653 = vld [vmem:[%s321 + $0x24] sm:$0xf]
      %v1654 = vld [vmem:[%s321 + $0x28] sm:$0xf]
      %v1655 = vld [vmem:[%s321 + $0x30] sm:$0xf]
      %v1656 = vld [vmem:[%s321 + $0x34] sm:$0xf]
      %v1657 = vld [vmem:[%s321 + $0x3c] sm:$0xf]
      %v1658 = vld [vmem:[%s321 + $0x40] sm:$0xf]
      %v1659 = vld [vmem:[%s321 + $0x48] sm:$0xf]
      %v1660 = vld [vmem:[%s321 + $0x4c] sm:$0xf]
      %v1661 = vld [vmem:[%s321 + $0x54] sm:$0xf]
      %v1662 = vld [vmem:[%s321 + $0x58] sm:$0xf]
      %v1663 = vld [vmem:[%s321 + $0x60] sm:$0xf]
      %v1664 = vld [vmem:[%s321 + $0x64] sm:$0xf]
      %v1665 = vld [vmem:[%s321 + $0x6c] sm:$0xf]
      %v1666 = vld [vmem:[%s321 + $0x70] sm:$0xf]
      %v1667 = vld [vmem:[%s321 + $0x78] sm:$0xf]
      %v1668 = vld [vmem:[%s321 + $0x7c] sm:$0xf]
      %v1669 = vld [vmem:[%s321 + $0x84] sm:$0xf]
      %v1670 = vld [vmem:[%s321 + $0x88] sm:$0xf]
      %v1671 = vld [vmem:[%s321 + $0x90] sm:$0xf]
      %v1672 = vld [vmem:[%s321 + $0x94] sm:$0xf]
      %v1673 = vld [vmem:[%s321 + $0x9c] sm:$0xf]
      %v1674 = vld [vmem:[%s321 + $0xa0] sm:$0xf]
      %v1675 = vld [vmem:[%s321 + $0xa8] sm:$0xf]
      %v1676 = vld [vmem:[%s321 + $0xac] sm:$0xf]
      %v1677 = vld [vmem:[%s321 + $0xb4] sm:$0xf]
      %v1678 = vld [vmem:[%s321 + $0xb8] sm:$0xf]
      %v1679 = vld [vmem:[%s321 + $0x8] sm:$0x1]
      %v1680 = vld [vmem:[%s321 + $0x14] sm:$0x1]
      %v1681 = vld [vmem:[%s321 + $0x20] sm:$0x1]
      %v1682 = vld [vmem:[%s321 + $0x2c] sm:$0x1]
      %v1683 = vld [vmem:[%s321 + $0x38] sm:$0x1]
      %v1684 = vld [vmem:[%s321 + $0x44] sm:$0x1]
      %v1685 = vld [vmem:[%s321 + $0x50] sm:$0x1]
      %v1686 = vld [vmem:[%s321 + $0x5c] sm:$0x1]
      %v1687 = vld [vmem:[%s321 + $0x68] sm:$0x1]
      %v1688 = vld [vmem:[%s321 + $0x74] sm:$0x1]
      %v1689 = vld [vmem:[%s321 + $0x80] sm:$0x1]
      %v1690 = vld [vmem:[%s321 + $0x8c] sm:$0x1]
      %v1691 = vld [vmem:[%s321 + $0x98] sm:$0x1]
      %v1692 = vld [vmem:[%s321 + $0xa4] sm:$0x1]
      %v1693 = vld [vmem:[%s321 + $0xb0] sm:$0x1]
      %v1694 = vld [vmem:[%s321 + $0xbc] sm:$0x1]
      %v1696 = vshrl.u32 %v1647, 16
      %v1698 = vrot.slane %v1696, 4
      %v1699 = vshll.u32 %v1647, 16
      %v1701 = vrot.slane %v1699, 5
      %v1702 = vor.u32 %v1698, %v1701
      %v1703 = vrot.slane %v1702, 4
      %v1705 = vshll.u32 %v1648, 16
      %v1707 = vrot.slane %v1705, 5
      %v1708 = vsel %vm1083, %v1703, %v1707
      %v1709 = vshrl.u32 %v1648, 16
      %v1711 = vrot.slane %v1709, 4
      %v1712 = vor.u32 %v1711, %v1707
      %v1713 = vrot.slane %v1712, 4
      %v1715 = vshll.u32 %v1679, 16
      %v1717 = vrot.slane %v1715, 5
      %v1718 = vsel %vm1083, %v1713, %v1717
      %v1720 = vshrl.u32 %v1649, 16
      %v1722 = vrot.slane %v1720, 4
      %v1723 = vshll.u32 %v1649, 16
      %v1725 = vrot.slane %v1723, 5
      %v1726 = vor.u32 %v1722, %v1725
      %v1727 = vrot.slane %v1726, 4
      %v1729 = vshll.u32 %v1650, 16
      %v1731 = vrot.slane %v1729, 5
      %v1732 = vsel %vm1083, %v1727, %v1731
      %v1733 = vshrl.u32 %v1650, 16
      %v1735 = vrot.slane %v1733, 4
      %v1736 = vor.u32 %v1735, %v1731
      %v1737 = vrot.slane %v1736, 4
      %v1739 = vshll.u32 %v1680, 16
      %v1741 = vrot.slane %v1739, 5
      %v1742 = vsel %vm1083, %v1737, %v1741
      %v1744 = vshrl.u32 %v1651, 16
      %v1746 = vrot.slane %v1744, 4
      %v1747 = vshll.u32 %v1651, 16
      %v1749 = vrot.slane %v1747, 5
      %v1750 = vor.u32 %v1746, %v1749
      %v1751 = vrot.slane %v1750, 4
      %v1753 = vshll.u32 %v1652, 16
      %v1755 = vrot.slane %v1753, 5
      %v1756 = vsel %vm1083, %v1751, %v1755
      %v1757 = vshrl.u32 %v1652, 16
      %v1759 = vrot.slane %v1757, 4
      %v1760 = vor.u32 %v1759, %v1755
      %v1761 = vrot.slane %v1760, 4
      %v1763 = vshll.u32 %v1681, 16
      %v1765 = vrot.slane %v1763, 5
      %v1766 = vsel %vm1083, %v1761, %v1765
      %v1768 = vshrl.u32 %v1653, 16
      %v1770 = vrot.slane %v1768, 4
      %v1771 = vshll.u32 %v1653, 16
      %v1773 = vrot.slane %v1771, 5
      %v1774 = vor.u32 %v1770, %v1773
      %v1775 = vrot.slane %v1774, 4
      %v1777 = vshll.u32 %v1654, 16
      %v1779 = vrot.slane %v1777, 5
      %v1780 = vsel %vm1083, %v1775, %v1779
      %v1781 = vshrl.u32 %v1654, 16
      %v1783 = vrot.slane %v1781, 4
      %v1784 = vor.u32 %v1783, %v1779
      %v1785 = vrot.slane %v1784, 4
      %v1787 = vshll.u32 %v1682, 16
      %v1789 = vrot.slane %v1787, 5
      %v1790 = vsel %vm1083, %v1785, %v1789
      %v1792 = vshrl.u32 %v1655, 16
      %v1794 = vrot.slane %v1792, 4
      %v1795 = vshll.u32 %v1655, 16
      %v1797 = vrot.slane %v1795, 5
      %v1798 = vor.u32 %v1794, %v1797
      %v1799 = vrot.slane %v1798, 4
      %v1801 = vshll.u32 %v1656, 16
      %v1803 = vrot.slane %v1801, 5
      %v1804 = vsel %vm1083, %v1799, %v1803
      %v1805 = vshrl.u32 %v1656, 16
      %v1807 = vrot.slane %v1805, 4
      %v1808 = vor.u32 %v1807, %v1803
      %v1809 = vrot.slane %v1808, 4
      %v1811 = vshll.u32 %v1683, 16
      %v1813 = vrot.slane %v1811, 5
      %v1814 = vsel %vm1083, %v1809, %v1813
      %v1816 = vshrl.u32 %v1657, 16
      %v1818 = vrot.slane %v1816, 4
      %v1819 = vshll.u32 %v1657, 16
      %v1821 = vrot.slane %v1819, 5
      %v1822 = vor.u32 %v1818, %v1821
      %v1823 = vrot.slane %v1822, 4
      %v1825 = vshll.u32 %v1658, 16
      %v1827 = vrot.slane %v1825, 5
      %v1828 = vsel %vm1083, %v1823, %v1827
      %v1829 = vshrl.u32 %v1658, 16
      %v1831 = vrot.slane %v1829, 4
      %v1832 = vor.u32 %v1831, %v1827
      %v1833 = vrot.slane %v1832, 4
      %v1835 = vshll.u32 %v1684, 16
      %v1837 = vrot.slane %v1835, 5
      %v1838 = vsel %vm1083, %v1833, %v1837
      %v1840 = vshrl.u32 %v1659, 16
      %v1842 = vrot.slane %v1840, 4
      %v1843 = vshll.u32 %v1659, 16
      %v1845 = vrot.slane %v1843, 5
      %v1846 = vor.u32 %v1842, %v1845
      %v1847 = vrot.slane %v1846, 4
      %v1849 = vshll.u32 %v1660, 16
      %v1851 = vrot.slane %v1849, 5
      %v1852 = vsel %vm1083, %v1847, %v1851
      %v1853 = vshrl.u32 %v1660, 16
      %v1855 = vrot.slane %v1853, 4
      %v1856 = vor.u32 %v1855, %v1851
      %v1857 = vrot.slane %v1856, 4
      %v1859 = vshll.u32 %v1685, 16
      %v1861 = vrot.slane %v1859, 5
      %v1862 = vsel %vm1083, %v1857, %v1861
      %v1864 = vshrl.u32 %v1661, 16
      %v1866 = vrot.slane %v1864, 4
      %v1867 = vshll.u32 %v1661, 16
      %v1869 = vrot.slane %v1867, 5
      %v1870 = vor.u32 %v1866, %v1869
      %v1871 = vrot.slane %v1870, 4
      %v1873 = vshll.u32 %v1662, 16
      %v1875 = vrot.slane %v1873, 5
      %v1876 = vsel %vm1083, %v1871, %v1875
      %v1877 = vshrl.u32 %v1662, 16
      %v1879 = vrot.slane %v1877, 4
      %v1880 = vor.u32 %v1879, %v1875
      %v1881 = vrot.slane %v1880, 4
      %v1883 = vshll.u32 %v1686, 16
      %v1885 = vrot.slane %v1883, 5
      %v1886 = vsel %vm1083, %v1881, %v1885
      %v1888 = vshrl.u32 %v1663, 16
      %v1890 = vrot.slane %v1888, 4
      %v1891 = vshll.u32 %v1663, 16
      %v1893 = vrot.slane %v1891, 5
      %v1894 = vor.u32 %v1890, %v1893
      %v1895 = vrot.slane %v1894, 4
      %v1897 = vshll.u32 %v1664, 16
      %v1899 = vrot.slane %v1897, 5
      %v1900 = vsel %vm1083, %v1895, %v1899
      %v1901 = vshrl.u32 %v1664, 16
      %v1903 = vrot.slane %v1901, 4
      %v1904 = vor.u32 %v1903, %v1899
      %v1905 = vrot.slane %v1904, 4
      %v1907 = vshll.u32 %v1687, 16
      %v1909 = vrot.slane %v1907, 5
      %v1910 = vsel %vm1083, %v1905, %v1909
      %v1912 = vshrl.u32 %v1665, 16
      %v1914 = vrot.slane %v1912, 4
      %v1915 = vshll.u32 %v1665, 16
      %v1917 = vrot.slane %v1915, 5
      %v1918 = vor.u32 %v1914, %v1917
      %v1919 = vrot.slane %v1918, 4
      %v1921 = vshll.u32 %v1666, 16
      %v1923 = vrot.slane %v1921, 5
      %v1924 = vsel %vm1083, %v1919, %v1923
      %v1925 = vshrl.u32 %v1666, 16
      %v1927 = vrot.slane %v1925, 4
      %v1928 = vor.u32 %v1927, %v1923
      %v1929 = vrot.slane %v1928, 4
      %v1931 = vshll.u32 %v1688, 16
      %v1933 = vrot.slane %v1931, 5
      %v1934 = vsel %vm1083, %v1929, %v1933
      %v1936 = vshrl.u32 %v1667, 16
      %v1938 = vrot.slane %v1936, 4
      %v1939 = vshll.u32 %v1667, 16
      %v1941 = vrot.slane %v1939, 5
      %v1942 = vor.u32 %v1938, %v1941
      %v1943 = vrot.slane %v1942, 4
      %v1945 = vshll.u32 %v1668, 16
      %v1947 = vrot.slane %v1945, 5
      %v1948 = vsel %vm1083, %v1943, %v1947
      %v1949 = vshrl.u32 %v1668, 16
      %v1951 = vrot.slane %v1949, 4
      %v1952 = vor.u32 %v1951, %v1947
      %v1953 = vrot.slane %v1952, 4
      %v1955 = vshll.u32 %v1689, 16
      %v1957 = vrot.slane %v1955, 5
      %v1958 = vsel %vm1083, %v1953, %v1957
      %v1960 = vshrl.u32 %v1669, 16
      %v1962 = vrot.slane %v1960, 4
      %v1963 = vshll.u32 %v1669, 16
      %v1965 = vrot.slane %v1963, 5
      %v1966 = vor.u32 %v1962, %v1965
      %v1967 = vrot.slane %v1966, 4
      %v1969 = vshll.u32 %v1670, 16
      %v1971 = vrot.slane %v1969, 5
      %v1972 = vsel %vm1083, %v1967, %v1971
      %v1973 = vshrl.u32 %v1670, 16
      %v1975 = vrot.slane %v1973, 4
      %v1976 = vor.u32 %v1975, %v1971
      %v1977 = vrot.slane %v1976, 4
      %v1979 = vshll.u32 %v1690, 16
      %v1981 = vrot.slane %v1979, 5
      %v1982 = vsel %vm1083, %v1977, %v1981
      %v1984 = vshrl.u32 %v1671, 16
      %v1986 = vrot.slane %v1984, 4
      %v1987 = vshll.u32 %v1671, 16
      %v1989 = vrot.slane %v1987, 5
      %v1990 = vor.u32 %v1986, %v1989
      %v1991 = vrot.slane %v1990, 4
      %v1993 = vshll.u32 %v1672, 16
      %v1995 = vrot.slane %v1993, 5
      %v1996 = vsel %vm1083, %v1991, %v1995
      %v1997 = vshrl.u32 %v1672, 16
      %v1999 = vrot.slane %v1997, 4
      %v2000 = vor.u32 %v1999, %v1995
      %v2001 = vrot.slane %v2000, 4
      %v2003 = vshll.u32 %v1691, 16
      %v2005 = vrot.slane %v2003, 5
      %v2006 = vsel %vm1083, %v2001, %v2005
      %v2008 = vshrl.u32 %v1673, 16
      %v2010 = vrot.slane %v2008, 4
      %v2011 = vshll.u32 %v1673, 16
      %v2013 = vrot.slane %v2011, 5
      %v2014 = vor.u32 %v2010, %v2013
      %v2015 = vrot.slane %v2014, 4
      %v2017 = vshll.u32 %v1674, 16
      %v2019 = vrot.slane %v2017, 5
      %v2020 = vsel %vm1083, %v2015, %v2019
      %v2021 = vshrl.u32 %v1674, 16
      %v2023 = vrot.slane %v2021, 4
      %v2024 = vor.u32 %v2023, %v2019
      %v2025 = vrot.slane %v2024, 4
      %v2027 = vshll.u32 %v1692, 16
      %v2029 = vrot.slane %v2027, 5
      %v2030 = vsel %vm1083, %v2025, %v2029
      %v2032 = vshrl.u32 %v1675, 16
      %v2034 = vrot.slane %v2032, 4
      %v2035 = vshll.u32 %v1675, 16
      %v2037 = vrot.slane %v2035, 5
      %v2038 = vor.u32 %v2034, %v2037
      %v2039 = vrot.slane %v2038, 4
      %v2041 = vshll.u32 %v1676, 16
      %v2043 = vrot.slane %v2041, 5
      %v2044 = vsel %vm1083, %v2039, %v2043
      %v2045 = vshrl.u32 %v1676, 16
      %v2047 = vrot.slane %v2045, 4
      %v2048 = vor.u32 %v2047, %v2043
      %v2049 = vrot.slane %v2048, 4
      %v2051 = vshll.u32 %v1693, 16
      %v2053 = vrot.slane %v2051, 5
      %v2054 = vsel %vm1083, %v2049, %v2053
      %v2056 = vshrl.u32 %v1677, 16
      %v2058 = vrot.slane %v2056, 4
      %v2059 = vshll.u32 %v1677, 16
      %v2061 = vrot.slane %v2059, 5
      %v2062 = vor.u32 %v2058, %v2061
      %v2063 = vrot.slane %v2062, 4
      %v2065 = vshll.u32 %v1678, 16
      %v2067 = vrot.slane %v2065, 5
      %v2068 = vsel %vm1083, %v2063, %v2067
      %v2069 = vshrl.u32 %v1678, 16
      %v2071 = vrot.slane %v2069, 4
      %v2072 = vor.u32 %v2071, %v2067
      %v2073 = vrot.slane %v2072, 4
      %v2075 = vshll.u32 %v1694, 16
      %v2077 = vrot.slane %v2075, 5
      %v2078 = vsel %vm1083, %v2073, %v2077
      %v2079 = vld [vmem:[%s321] sm:$0xe]
      %v2080 = vld [vmem:[%s321 + $0xc] sm:$0xe]
      %v2081 = vld [vmem:[%s321 + $0x18] sm:$0xe]
      %v2082 = vld [vmem:[%s321 + $0x24] sm:$0xe]
      %v2083 = vld [vmem:[%s321 + $0x30] sm:$0xe]
      %v2084 = vld [vmem:[%s321 + $0x3c] sm:$0xe]
      %v2085 = vld [vmem:[%s321 + $0x48] sm:$0xe]
      %v2086 = vld [vmem:[%s321 + $0x54] sm:$0xe]
      %v2087 = vld [vmem:[%s321 + $0x60] sm:$0xe]
      %v2088 = vld [vmem:[%s321 + $0x6c] sm:$0xe]
      %v2089 = vld [vmem:[%s321 + $0x78] sm:$0xe]
      %v2090 = vld [vmem:[%s321 + $0x84] sm:$0xe]
      %v2091 = vld [vmem:[%s321 + $0x90] sm:$0xe]
      %v2092 = vld [vmem:[%s321 + $0x9c] sm:$0xe]
      %v2093 = vld [vmem:[%s321 + $0xa8] sm:$0xe]
      %v2094 = vld [vmem:[%s321 + $0xb4] sm:$0xe]
      %v2143 = vrot.slane %v2079, 5
      %v2144 = vrot.slane %v2143, 4
      %v2145 = vrot.slane %v1648, 5
      %v2146 = vsel %vm1534, %v2144, %v2145
      %v2147 = vrot.slane %v2145, 4
      %v2148 = vrot.slane %v1679, 5
      %v2149 = vsel %vm1534, %v2147, %v2148
      %v2150 = vrot.slane %v2080, 5
      %v2151 = vrot.slane %v2150, 4
      %v2152 = vrot.slane %v1650, 5
      %v2153 = vsel %vm1534, %v2151, %v2152
      %v2154 = vrot.slane %v2152, 4
      %v2155 = vrot.slane %v1680, 5
      %v2156 = vsel %vm1534, %v2154, %v2155
      %v2157 = vrot.slane %v2081, 5
      %v2158 = vrot.slane %v2157, 4
      %v2159 = vrot.slane %v1652, 5
      %v2160 = vsel %vm1534, %v2158, %v2159
      %v2161 = vrot.slane %v2159, 4
      %v2162 = vrot.slane %v1681, 5
      %v2163 = vsel %vm1534, %v2161, %v2162
      %v2164 = vrot.slane %v2082, 5
      %v2165 = vrot.slane %v2164, 4
      %v2166 = vrot.slane %v1654, 5
      %v2167 = vsel %vm1534, %v2165, %v2166
      %v2168 = vrot.slane %v2166, 4
      %v2169 = vrot.slane %v1682, 5
      %v2170 = vsel %vm1534, %v2168, %v2169
      %v2171 = vrot.slane %v2083, 5
      %v2172 = vrot.slane %v2171, 4
      %v2173 = vrot.slane %v1656, 5
      %v2174 = vsel %vm1534, %v2172, %v2173
      %v2175 = vrot.slane %v2173, 4
      %v2176 = vrot.slane %v1683, 5
      %v2177 = vsel %vm1534, %v2175, %v2176
      %v2178 = vrot.slane %v2084, 5
      %v2179 = vrot.slane %v2178, 4
      %v2180 = vrot.slane %v1658, 5
      %v2181 = vsel %vm1534, %v2179, %v2180
      %v2182 = vrot.slane %v2180, 4
      %v2183 = vrot.slane %v1684, 5
      %v2184 = vsel %vm1534, %v2182, %v2183
      %v2185 = vrot.slane %v2085, 5
      %v2186 = vrot.slane %v2185, 4
      %v2187 = vrot.slane %v1660, 5
      %v2188 = vsel %vm1534, %v2186, %v2187
      %v2189 = vrot.slane %v2187, 4
      %v2190 = vrot.slane %v1685, 5
      %v2191 = vsel %vm1534, %v2189, %v2190
      %v2192 = vrot.slane %v2086, 5
      %v2193 = vrot.slane %v2192, 4
      %v2194 = vrot.slane %v1662, 5
      %v2195 = vsel %vm1534, %v2193, %v2194
      %v2196 = vrot.slane %v2194, 4
      %v2197 = vrot.slane %v1686, 5
      %v2198 = vsel %vm1534, %v2196, %v2197
      %v2199 = vrot.slane %v2087, 5
      %v2200 = vrot.slane %v2199, 4
      %v2201 = vrot.slane %v1664, 5
      %v2202 = vsel %vm1534, %v2200, %v2201
      %v2203 = vrot.slane %v2201, 4
      %v2204 = vrot.slane %v1687, 5
      %v2205 = vsel %vm1534, %v2203, %v2204
      %v2206 = vrot.slane %v2088, 5
      %v2207 = vrot.slane %v2206, 4
      %v2208 = vrot.slane %v1666, 5
      %v2209 = vsel %vm1534, %v2207, %v2208
      %v2210 = vrot.slane %v2208, 4
      %v2211 = vrot.slane %v1688, 5
      %v2212 = vsel %vm1534, %v2210, %v2211
      %v2213 = vrot.slane %v2089, 5
      %v2214 = vrot.slane %v2213, 4
      %v2215 = vrot.slane %v1668, 5
      %v2216 = vsel %vm1534, %v2214, %v2215
      %v2217 = vrot.slane %v2215, 4
      %v2218 = vrot.slane %v1689, 5
      %v2219 = vsel %vm1534, %v2217, %v2218
      %v2220 = vrot.slane %v2090, 5
      %v2221 = vrot.slane %v2220, 4
      %v2222 = vrot.slane %v1670, 5
      %v2223 = vsel %vm1534, %v2221, %v2222
      %v2224 = vrot.slane %v2222, 4
      %v2225 = vrot.slane %v1690, 5
      %v2226 = vsel %vm1534, %v2224, %v2225
      %v2227 = vrot.slane %v2091, 5
      %v2228 = vrot.slane %v2227, 4
      %v2229 = vrot.slane %v1672, 5
      %v2230 = vsel %vm1534, %v2228, %v2229
      %v2231 = vrot.slane %v2229, 4
      %v2232 = vrot.slane %v1691, 5
      %v2233 = vsel %vm1534, %v2231, %v2232
      %v2234 = vrot.slane %v2092, 5
      %v2235 = vrot.slane %v2234, 4
      %v2236 = vrot.slane %v1674, 5
      %v2237 = vsel %vm1534, %v2235, %v2236
      %v2238 = vrot.slane %v2236, 4
      %v2239 = vrot.slane %v1692, 5
      %v2240 = vsel %vm1534, %v2238, %v2239
      %v2241 = vrot.slane %v2093, 5
      %v2242 = vrot.slane %v2241, 4
      %v2243 = vrot.slane %v1676, 5
      %v2244 = vsel %vm1534, %v2242, %v2243
      %v2245 = vrot.slane %v2243, 4
      %v2246 = vrot.slane %v1693, 5
      %v2247 = vsel %vm1534, %v2245, %v2246
      %v2248 = vrot.slane %v2094, 5
      %v2249 = vrot.slane %v2248, 4
      %v2250 = vrot.slane %v1678, 5
      %v2251 = vsel %vm1534, %v2249, %v2250
      %v2252 = vrot.slane %v2250, 4
      %v2253 = vrot.slane %v1694, 5
      %v2254 = vsel %vm1534, %v2252, %v2253
      %s2255 = scalar_lea.vmem [#allocation2], 24
      %v2256 = vld [vmem:[%s2255] sm:$0xf]
      %v2257 = vld [vmem:[%s2255 + $0x4] sm:$0xf]
      %v2258 = vld [vmem:[%s2255 + $0xc] sm:$0xf]
      %v2259 = vld [vmem:[%s2255 + $0x10] sm:$0xf]
      %v2260 = vld [vmem:[%s2255 + $0x18] sm:$0xf]
      %v2261 = vld [vmem:[%s2255 + $0x1c] sm:$0xf]
      %v2262 = vld [vmem:[%s2255 + $0x24] sm:$0xf]
      %v2263 = vld [vmem:[%s2255 + $0x28] sm:$0xf]
      %v2264 = vld [vmem:[%s2255 + $0x30] sm:$0xf]
      %v2265 = vld [vmem:[%s2255 + $0x34] sm:$0xf]
      %v2266 = vld [vmem:[%s2255 + $0x3c] sm:$0xf]
      %v2267 = vld [vmem:[%s2255 + $0x40] sm:$0xf]
      %v2268 = vld [vmem:[%s2255 + $0x48] sm:$0xf]
      %v2269 = vld [vmem:[%s2255 + $0x4c] sm:$0xf]
      %v2270 = vld [vmem:[%s2255 + $0x54] sm:$0xf]
      %v2271 = vld [vmem:[%s2255 + $0x58] sm:$0xf]
      %v2272 = vld [vmem:[%s2255 + $0x60] sm:$0xf]
      %v2273 = vld [vmem:[%s2255 + $0x64] sm:$0xf]
      %v2274 = vld [vmem:[%s2255 + $0x6c] sm:$0xf]
      %v2275 = vld [vmem:[%s2255 + $0x70] sm:$0xf]
      %v2276 = vld [vmem:[%s2255 + $0x78] sm:$0xf]
      %v2277 = vld [vmem:[%s2255 + $0x7c] sm:$0xf]
      %v2278 = vld [vmem:[%s2255 + $0x84] sm:$0xf]
      %v2279 = vld [vmem:[%s2255 + $0x88] sm:$0xf]
      %v2280 = vld [vmem:[%s2255 + $0x90] sm:$0xf]
      %v2281 = vld [vmem:[%s2255 + $0x94] sm:$0xf]
      %v2282 = vld [vmem:[%s2255 + $0x9c] sm:$0xf]
      %v2283 = vld [vmem:[%s2255 + $0xa0] sm:$0xf]
      %v2284 = vld [vmem:[%s2255 + $0xa8] sm:$0xf]
      %v2285 = vld [vmem:[%s2255 + $0xac] sm:$0xf]
      %v2286 = vld [vmem:[%s2255 + $0xb4] sm:$0xf]
      %v2287 = vld [vmem:[%s2255 + $0xb8] sm:$0xf]
      %v2288 = vld [vmem:[%s2255 + $0x8] sm:$0x1]
      %v2289 = vld [vmem:[%s2255 + $0x14] sm:$0x1]
      %v2290 = vld [vmem:[%s2255 + $0x20] sm:$0x1]
      %v2291 = vld [vmem:[%s2255 + $0x2c] sm:$0x1]
      %v2292 = vld [vmem:[%s2255 + $0x38] sm:$0x1]
      %v2293 = vld [vmem:[%s2255 + $0x44] sm:$0x1]
      %v2294 = vld [vmem:[%s2255 + $0x50] sm:$0x1]
      %v2295 = vld [vmem:[%s2255 + $0x5c] sm:$0x1]
      %v2296 = vld [vmem:[%s2255 + $0x68] sm:$0x1]
      %v2297 = vld [vmem:[%s2255 + $0x74] sm:$0x1]
      %v2298 = vld [vmem:[%s2255 + $0x80] sm:$0x1]
      %v2299 = vld [vmem:[%s2255 + $0x8c] sm:$0x1]
      %v2300 = vld [vmem:[%s2255 + $0x98] sm:$0x1]
      %v2301 = vld [vmem:[%s2255 + $0xa4] sm:$0x1]
      %v2302 = vld [vmem:[%s2255 + $0xb0] sm:$0x1]
      %v2303 = vld [vmem:[%s2255 + $0xbc] sm:$0x1]
      %v2305 = vshrl.u32 %v2256, 16
      %v2307 = vrot.slane %v2305, 4
      %v2308 = vshll.u32 %v2256, 16
      %v2310 = vrot.slane %v2308, 5
      %v2311 = vor.u32 %v2307, %v2310
      %v2312 = vrot.slane %v2311, 4
      %v2314 = vshll.u32 %v2257, 16
      %v2316 = vrot.slane %v2314, 5
      %v2317 = vsel %vm1083, %v2312, %v2316
      %v2318 = vshrl.u32 %v2257, 16
      %v2320 = vrot.slane %v2318, 4
      %v2321 = vor.u32 %v2320, %v2316
      %v2322 = vrot.slane %v2321, 4
      %v2324 = vshll.u32 %v2288, 16
      %v2326 = vrot.slane %v2324, 5
      %v2327 = vsel %vm1083, %v2322, %v2326
      %v2329 = vshrl.u32 %v2258, 16
      %v2331 = vrot.slane %v2329, 4
      %v2332 = vshll.u32 %v2258, 16
      %v2334 = vrot.slane %v2332, 5
      %v2335 = vor.u32 %v2331, %v2334
      %v2336 = vrot.slane %v2335, 4
      %v2338 = vshll.u32 %v2259, 16
      %v2340 = vrot.slane %v2338, 5
      %v2341 = vsel %vm1083, %v2336, %v2340
      %v2342 = vshrl.u32 %v2259, 16
      %v2344 = vrot.slane %v2342, 4
      %v2345 = vor.u32 %v2344, %v2340
      %v2346 = vrot.slane %v2345, 4
      %v2348 = vshll.u32 %v2289, 16
      %v2350 = vrot.slane %v2348, 5
      %v2351 = vsel %vm1083, %v2346, %v2350
      %v2353 = vshrl.u32 %v2260, 16
      %v2355 = vrot.slane %v2353, 4
      %v2356 = vshll.u32 %v2260, 16
      %v2358 = vrot.slane %v2356, 5
      %v2359 = vor.u32 %v2355, %v2358
      %v2360 = vrot.slane %v2359, 4
      %v2362 = vshll.u32 %v2261, 16
      %v2364 = vrot.slane %v2362, 5
      %v2365 = vsel %vm1083, %v2360, %v2364
      %v2366 = vshrl.u32 %v2261, 16
      %v2368 = vrot.slane %v2366, 4
      %v2369 = vor.u32 %v2368, %v2364
      %v2370 = vrot.slane %v2369, 4
      %v2372 = vshll.u32 %v2290, 16
      %v2374 = vrot.slane %v2372, 5
      %v2375 = vsel %vm1083, %v2370, %v2374
      %v2377 = vshrl.u32 %v2262, 16
      %v2379 = vrot.slane %v2377, 4
      %v2380 = vshll.u32 %v2262, 16
      %v2382 = vrot.slane %v2380, 5
      %v2383 = vor.u32 %v2379, %v2382
      %v2384 = vrot.slane %v2383, 4
      %v2386 = vshll.u32 %v2263, 16
      %v2388 = vrot.slane %v2386, 5
      %v2389 = vsel %vm1083, %v2384, %v2388
      %v2390 = vshrl.u32 %v2263, 16
      %v2392 = vrot.slane %v2390, 4
      %v2393 = vor.u32 %v2392, %v2388
      %v2394 = vrot.slane %v2393, 4
      %v2396 = vshll.u32 %v2291, 16
      %v2398 = vrot.slane %v2396, 5
      %v2399 = vsel %vm1083, %v2394, %v2398
      %v2401 = vshrl.u32 %v2264, 16
      %v2403 = vrot.slane %v2401, 4
      %v2404 = vshll.u32 %v2264, 16
      %v2406 = vrot.slane %v2404, 5
      %v2407 = vor.u32 %v2403, %v2406
      %v2408 = vrot.slane %v2407, 4
      %v2410 = vshll.u32 %v2265, 16
      %v2412 = vrot.slane %v2410, 5
      %v2413 = vsel %vm1083, %v2408, %v2412
      %v2414 = vshrl.u32 %v2265, 16
      %v2416 = vrot.slane %v2414, 4
      %v2417 = vor.u32 %v2416, %v2412
      %v2418 = vrot.slane %v2417, 4
      %v2420 = vshll.u32 %v2292, 16
      %v2422 = vrot.slane %v2420, 5
      %v2423 = vsel %vm1083, %v2418, %v2422
      %v2425 = vshrl.u32 %v2266, 16
      %v2427 = vrot.slane %v2425, 4
      %v2428 = vshll.u32 %v2266, 16
      %v2430 = vrot.slane %v2428, 5
      %v2431 = vor.u32 %v2427, %v2430
      %v2432 = vrot.slane %v2431, 4
      %v2434 = vshll.u32 %v2267, 16
      %v2436 = vrot.slane %v2434, 5
      %v2437 = vsel %vm1083, %v2432, %v2436
      %v2438 = vshrl.u32 %v2267, 16
      %v2440 = vrot.slane %v2438, 4
      %v2441 = vor.u32 %v2440, %v2436
      %v2442 = vrot.slane %v2441, 4
      %v2444 = vshll.u32 %v2293, 16
      %v2446 = vrot.slane %v2444, 5
      %v2447 = vsel %vm1083, %v2442, %v2446
      %v2449 = vshrl.u32 %v2268, 16
      %v2451 = vrot.slane %v2449, 4
      %v2452 = vshll.u32 %v2268, 16
      %v2454 = vrot.slane %v2452, 5
      %v2455 = vor.u32 %v2451, %v2454
      %v2456 = vrot.slane %v2455, 4
      %v2458 = vshll.u32 %v2269, 16
      %v2460 = vrot.slane %v2458, 5
      %v2461 = vsel %vm1083, %v2456, %v2460
      %v2462 = vshrl.u32 %v2269, 16
      %v2464 = vrot.slane %v2462, 4
      %v2465 = vor.u32 %v2464, %v2460
      %v2466 = vrot.slane %v2465, 4
      %v2468 = vshll.u32 %v2294, 16
      %v2470 = vrot.slane %v2468, 5
      %v2471 = vsel %vm1083, %v2466, %v2470
      %v2473 = vshrl.u32 %v2270, 16
      %v2475 = vrot.slane %v2473, 4
      %v2476 = vshll.u32 %v2270, 16
      %v2478 = vrot.slane %v2476, 5
      %v2479 = vor.u32 %v2475, %v2478
      %v2480 = vrot.slane %v2479, 4
      %v2482 = vshll.u32 %v2271, 16
      %v2484 = vrot.slane %v2482, 5
      %v2485 = vsel %vm1083, %v2480, %v2484
      %v2486 = vshrl.u32 %v2271, 16
      %v2488 = vrot.slane %v2486, 4
      %v2489 = vor.u32 %v2488, %v2484
      %v2490 = vrot.slane %v2489, 4
      %v2492 = vshll.u32 %v2295, 16
      %v2494 = vrot.slane %v2492, 5
      %v2495 = vsel %vm1083, %v2490, %v2494
      %v2497 = vshrl.u32 %v2272, 16
      %v2499 = vrot.slane %v2497, 4
      %v2500 = vshll.u32 %v2272, 16
      %v2502 = vrot.slane %v2500, 5
      %v2503 = vor.u32 %v2499, %v2502
      %v2504 = vrot.slane %v2503, 4
      %v2506 = vshll.u32 %v2273, 16
      %v2508 = vrot.slane %v2506, 5
      %v2509 = vsel %vm1083, %v2504, %v2508
      %v2510 = vshrl.u32 %v2273, 16
      %v2512 = vrot.slane %v2510, 4
      %v2513 = vor.u32 %v2512, %v2508
      %v2514 = vrot.slane %v2513, 4
      %v2516 = vshll.u32 %v2296, 16
      %v2518 = vrot.slane %v2516, 5
      %v2519 = vsel %vm1083, %v2514, %v2518
      %v2521 = vshrl.u32 %v2274, 16
      %v2523 = vrot.slane %v2521, 4
      %v2524 = vshll.u32 %v2274, 16
      %v2526 = vrot.slane %v2524, 5
      %v2527 = vor.u32 %v2523, %v2526
      %v2528 = vrot.slane %v2527, 4
      %v2530 = vshll.u32 %v2275, 16
      %v2532 = vrot.slane %v2530, 5
      %v2533 = vsel %vm1083, %v2528, %v2532
      %v2534 = vshrl.u32 %v2275, 16
      %v2536 = vrot.slane %v2534, 4
      %v2537 = vor.u32 %v2536, %v2532
      %v2538 = vrot.slane %v2537, 4
      %v2540 = vshll.u32 %v2297, 16
      %v2542 = vrot.slane %v2540, 5
      %v2543 = vsel %vm1083, %v2538, %v2542
      %v2545 = vshrl.u32 %v2276, 16
      %v2547 = vrot.slane %v2545, 4
      %v2548 = vshll.u32 %v2276, 16
      %v2550 = vrot.slane %v2548, 5
      %v2551 = vor.u32 %v2547, %v2550
      %v2552 = vrot.slane %v2551, 4
      %v2554 = vshll.u32 %v2277, 16
      %v2556 = vrot.slane %v2554, 5
      %v2557 = vsel %vm1083, %v2552, %v2556
      %v2558 = vshrl.u32 %v2277, 16
      %v2560 = vrot.slane %v2558, 4
      %v2561 = vor.u32 %v2560, %v2556
      %v2562 = vrot.slane %v2561, 4
      %v2564 = vshll.u32 %v2298, 16
      %v2566 = vrot.slane %v2564, 5
      %v2567 = vsel %vm1083, %v2562, %v2566
      %v2569 = vshrl.u32 %v2278, 16
      %v2571 = vrot.slane %v2569, 4
      %v2572 = vshll.u32 %v2278, 16
      %v2574 = vrot.slane %v2572, 5
      %v2575 = vor.u32 %v2571, %v2574
      %v2576 = vrot.slane %v2575, 4
      %v2578 = vshll.u32 %v2279, 16
      %v2580 = vrot.slane %v2578, 5
      %v2581 = vsel %vm1083, %v2576, %v2580
      %v2582 = vshrl.u32 %v2279, 16
      %v2584 = vrot.slane %v2582, 4
      %v2585 = vor.u32 %v2584, %v2580
      %v2586 = vrot.slane %v2585, 4
      %v2588 = vshll.u32 %v2299, 16
      %v2590 = vrot.slane %v2588, 5
      %v2591 = vsel %vm1083, %v2586, %v2590
      %v2593 = vshrl.u32 %v2280, 16
      %v2595 = vrot.slane %v2593, 4
      %v2596 = vshll.u32 %v2280, 16
      %v2598 = vrot.slane %v2596, 5
      %v2599 = vor.u32 %v2595, %v2598
      %v2600 = vrot.slane %v2599, 4
      %v2602 = vshll.u32 %v2281, 16
      %v2604 = vrot.slane %v2602, 5
      %v2605 = vsel %vm1083, %v2600, %v2604
      %v2606 = vshrl.u32 %v2281, 16
      %v2608 = vrot.slane %v2606, 4
      %v2609 = vor.u32 %v2608, %v2604
      %v2610 = vrot.slane %v2609, 4
      %v2612 = vshll.u32 %v2300, 16
      %v2614 = vrot.slane %v2612, 5
      %v2615 = vsel %vm1083, %v2610, %v2614
      %v2617 = vshrl.u32 %v2282, 16
      %v2619 = vrot.slane %v2617, 4
      %v2620 = vshll.u32 %v2282, 16
      %v2622 = vrot.slane %v2620, 5
      %v2623 = vor.u32 %v2619, %v2622
      %v2624 = vrot.slane %v2623, 4
      %v2626 = vshll.u32 %v2283, 16
      %v2628 = vrot.slane %v2626, 5
      %v2629 = vsel %vm1083, %v2624, %v2628
      %v2630 = vshrl.u32 %v2283, 16
      %v2632 = vrot.slane %v2630, 4
      %v2633 = vor.u32 %v2632, %v2628
      %v2634 = vrot.slane %v2633, 4
      %v2636 = vshll.u32 %v2301, 16
      %v2638 = vrot.slane %v2636, 5
      %v2639 = vsel %vm1083, %v2634, %v2638
      %v2641 = vshrl.u32 %v2284, 16
      %v2643 = vrot.slane %v2641, 4
      %v2644 = vshll.u32 %v2284, 16
      %v2646 = vrot.slane %v2644, 5
      %v2647 = vor.u32 %v2643, %v2646
      %v2648 = vrot.slane %v2647, 4
      %v2650 = vshll.u32 %v2285, 16
      %v2652 = vrot.slane %v2650, 5
      %v2653 = vsel %vm1083, %v2648, %v2652
      %v2654 = vshrl.u32 %v2285, 16
      %v2656 = vrot.slane %v2654, 4
      %v2657 = vor.u32 %v2656, %v2652
      %v2658 = vrot.slane %v2657, 4
      %v2660 = vshll.u32 %v2302, 16
      %v2662 = vrot.slane %v2660, 5
      %v2663 = vsel %vm1083, %v2658, %v2662
      %v2665 = vshrl.u32 %v2286, 16
      %v2667 = vrot.slane %v2665, 4
      %v2668 = vshll.u32 %v2286, 16
      %v2670 = vrot.slane %v2668, 5
      %v2671 = vor.u32 %v2667, %v2670
      %v2672 = vrot.slane %v2671, 4
      %v2674 = vshll.u32 %v2287, 16
      %v2676 = vrot.slane %v2674, 5
      %v2677 = vsel %vm1083, %v2672, %v2676
      %v2678 = vshrl.u32 %v2287, 16
      %v2680 = vrot.slane %v2678, 4
      %v2681 = vor.u32 %v2680, %v2676
      %v2682 = vrot.slane %v2681, 4
      %v2684 = vshll.u32 %v2303, 16
      %v2686 = vrot.slane %v2684, 5
      %v2687 = vsel %vm1083, %v2682, %v2686
      %v2688 = vld [vmem:[%s2255] sm:$0xe]
      %v2689 = vld [vmem:[%s2255 + $0xc] sm:$0xe]
      %v2690 = vld [vmem:[%s2255 + $0x18] sm:$0xe]
      %v2691 = vld [vmem:[%s2255 + $0x24] sm:$0xe]
      %v2692 = vld [vmem:[%s2255 + $0x30] sm:$0xe]
      %v2693 = vld [vmem:[%s2255 + $0x3c] sm:$0xe]
      %v2694 = vld [vmem:[%s2255 + $0x48] sm:$0xe]
      %v2695 = vld [vmem:[%s2255 + $0x54] sm:$0xe]
      %v2696 = vld [vmem:[%s2255 + $0x60] sm:$0xe]
      %v2697 = vld [vmem:[%s2255 + $0x6c] sm:$0xe]
      %v2698 = vld [vmem:[%s2255 + $0x78] sm:$0xe]
      %v2699 = vld [vmem:[%s2255 + $0x84] sm:$0xe]
      %v2700 = vld [vmem:[%s2255 + $0x90] sm:$0xe]
      %v2701 = vld [vmem:[%s2255 + $0x9c] sm:$0xe]
      %v2702 = vld [vmem:[%s2255 + $0xa8] sm:$0xe]
      %v2703 = vld [vmem:[%s2255 + $0xb4] sm:$0xe]
      %v2752 = vrot.slane %v2688, 5
      %v2753 = vrot.slane %v2752, 4
      %v2754 = vrot.slane %v2257, 5
      %v2755 = vsel %vm1534, %v2753, %v2754
      %v2756 = vrot.slane %v2754, 4
      %v2757 = vrot.slane %v2288, 5
      %v2758 = vsel %vm1534, %v2756, %v2757
      %v2759 = vrot.slane %v2689, 5
      %v2760 = vrot.slane %v2759, 4
      %v2761 = vrot.slane %v2259, 5
      %v2762 = vsel %vm1534, %v2760, %v2761
      %v2763 = vrot.slane %v2761, 4
      %v2764 = vrot.slane %v2289, 5
      %v2765 = vsel %vm1534, %v2763, %v2764
      %v2766 = vrot.slane %v2690, 5
      %v2767 = vrot.slane %v2766, 4
      %v2768 = vrot.slane %v2261, 5
      %v2769 = vsel %vm1534, %v2767, %v2768
      %v2770 = vrot.slane %v2768, 4
      %v2771 = vrot.slane %v2290, 5
      %v2772 = vsel %vm1534, %v2770, %v2771
      %v2773 = vrot.slane %v2691, 5
      %v2774 = vrot.slane %v2773, 4
      %v2775 = vrot.slane %v2263, 5
      %v2776 = vsel %vm1534, %v2774, %v2775
      %v2777 = vrot.slane %v2775, 4
      %v2778 = vrot.slane %v2291, 5
      %v2779 = vsel %vm1534, %v2777, %v2778
      %v2780 = vrot.slane %v2692, 5
      %v2781 = vrot.slane %v2780, 4
      %v2782 = vrot.slane %v2265, 5
      %v2783 = vsel %vm1534, %v2781, %v2782
      %v2784 = vrot.slane %v2782, 4
      %v2785 = vrot.slane %v2292, 5
      %v2786 = vsel %vm1534, %v2784, %v2785
      %v2787 = vrot.slane %v2693, 5
      %v2788 = vrot.slane %v2787, 4
      %v2789 = vrot.slane %v2267, 5
      %v2790 = vsel %vm1534, %v2788, %v2789
      %v2791 = vrot.slane %v2789, 4
      %v2792 = vrot.slane %v2293, 5
      %v2793 = vsel %vm1534, %v2791, %v2792
      %v2794 = vrot.slane %v2694, 5
      %v2795 = vrot.slane %v2794, 4
      %v2796 = vrot.slane %v2269, 5
      %v2797 = vsel %vm1534, %v2795, %v2796
      %v2798 = vrot.slane %v2796, 4
      %v2799 = vrot.slane %v2294, 5
      %v2800 = vsel %vm1534, %v2798, %v2799
      %v2801 = vrot.slane %v2695, 5
      %v2802 = vrot.slane %v2801, 4
      %v2803 = vrot.slane %v2271, 5
      %v2804 = vsel %vm1534, %v2802, %v2803
      %v2805 = vrot.slane %v2803, 4
      %v2806 = vrot.slane %v2295, 5
      %v2807 = vsel %vm1534, %v2805, %v2806
      %v2808 = vrot.slane %v2696, 5
      %v2809 = vrot.slane %v2808, 4
      %v2810 = vrot.slane %v2273, 5
      %v2811 = vsel %vm1534, %v2809, %v2810
      %v2812 = vrot.slane %v2810, 4
      %v2813 = vrot.slane %v2296, 5
      %v2814 = vsel %vm1534, %v2812, %v2813
      %v2815 = vrot.slane %v2697, 5
      %v2816 = vrot.slane %v2815, 4
      %v2817 = vrot.slane %v2275, 5
      %v2818 = vsel %vm1534, %v2816, %v2817
      %v2819 = vrot.slane %v2817, 4
      %v2820 = vrot.slane %v2297, 5
      %v2821 = vsel %vm1534, %v2819, %v2820
      %v2822 = vrot.slane %v2698, 5
      %v2823 = vrot.slane %v2822, 4
      %v2824 = vrot.slane %v2277, 5
      %v2825 = vsel %vm1534, %v2823, %v2824
      %v2826 = vrot.slane %v2824, 4
      %v2827 = vrot.slane %v2298, 5
      %v2828 = vsel %vm1534, %v2826, %v2827
      %v2829 = vrot.slane %v2699, 5
      %v2830 = vrot.slane %v2829, 4
      %v2831 = vrot.slane %v2279, 5
      %v2832 = vsel %vm1534, %v2830, %v2831
      %v2833 = vrot.slane %v2831, 4
      %v2834 = vrot.slane %v2299, 5
      %v2835 = vsel %vm1534, %v2833, %v2834
      %v2836 = vrot.slane %v2700, 5
      %v2837 = vrot.slane %v2836, 4
      %v2838 = vrot.slane %v2281, 5
      %v2839 = vsel %vm1534, %v2837, %v2838
      %v2840 = vrot.slane %v2838, 4
      %v2841 = vrot.slane %v2300, 5
      %v2842 = vsel %vm1534, %v2840, %v2841
      %v2843 = vrot.slane %v2701, 5
      %v2844 = vrot.slane %v2843, 4
      %v2845 = vrot.slane %v2283, 5
      %v2846 = vsel %vm1534, %v2844, %v2845
      %v2847 = vrot.slane %v2845, 4
      %v2848 = vrot.slane %v2301, 5
      %v2849 = vsel %vm1534, %v2847, %v2848
      %v2850 = vrot.slane %v2702, 5
      %v2851 = vrot.slane %v2850, 4
      %v2852 = vrot.slane %v2285, 5
      %v2853 = vsel %vm1534, %v2851, %v2852
      %v2854 = vrot.slane %v2852, 4
      %v2855 = vrot.slane %v2302, 5
      %v2856 = vsel %vm1534, %v2854, %v2855
      %v2857 = vrot.slane %v2703, 5
      %v2858 = vrot.slane %v2857, 4
      %v2859 = vrot.slane %v2287, 5
      %v2860 = vsel %vm1534, %v2858, %v2859
      %v2861 = vrot.slane %v2859, 4
      %v2862 = vrot.slane %v2303, 5
      %v2863 = vsel %vm1534, %v2861, %v2862
      %v2880 = vunpack.c.l.b16 %v1033
      %v2881 = vunpack.c.l.b16 %v1034
      %v2882 = vunpack.c.l.b16 %v1035
      %v2883 = vunpack.c.l.b16 %v1036
      %v2884 = vunpack.c.l.b16 %v1037
      %v2885 = vunpack.c.l.b16 %v1038
      %v2886 = vunpack.c.l.b16 %v1039
      %v2887 = vunpack.c.l.b16 %v1040
      %v2888 = vunpack.c.l.b16 %v1041
      %v2889 = vunpack.c.l.b16 %v1042
      %v2890 = vunpack.c.l.b16 %v1043
      %v2891 = vunpack.c.l.b16 %v1044
      %v2892 = vunpack.c.l.b16 %v1045
      %v2893 = vunpack.c.l.b16 %v1046
      %v2894 = vunpack.c.l.b16 %v1047
      %v2895 = vunpack.c.l.b16 %v1048
      %v2896 = vunpack.c.l.b16 %v1049
      %v2897 = vunpack.c.l.b16 %v1050
      %v2898 = vunpack.c.l.b16 %v1051
      %v2899 = vunpack.c.l.b16 %v1052
      %v2900 = vunpack.c.l.b16 %v1053
      %v2901 = vunpack.c.l.b16 %v1054
      %v2902 = vunpack.c.l.b16 %v1055
      %v2903 = vunpack.c.l.b16 %v1056
      %v2904 = vunpack.c.l.b16 %v1057
      %v2905 = vunpack.c.l.b16 %v1058
      %v2906 = vunpack.c.l.b16 %v1059
      %v2907 = vunpack.c.l.b16 %v1060
      %v2908 = vunpack.c.l.b16 %v1061
      %v2909 = vunpack.c.l.b16 %v1062
      %v2910 = vunpack.c.l.b16 %v1063
      %v2911 = vunpack.c.l.b16 %v1064
      %v2912 = vpack.c.b16 %v2881, %v2880
      %v2913 = vpack.c.b16 %v2883, %v2882
      %v2914 = vpack.c.b16 %v2885, %v2884
      %v2915 = vpack.c.b16 %v2887, %v2886
      %v2916 = vpack.c.b16 %v2889, %v2888
      %v2917 = vpack.c.b16 %v2891, %v2890
      %v2918 = vpack.c.b16 %v2893, %v2892
      %v2919 = vpack.c.b16 %v2895, %v2894
      %v2920 = vpack.c.b16 %v2897, %v2896
      %v2921 = vpack.c.b16 %v2899, %v2898
      %v2922 = vpack.c.b16 %v2901, %v2900
      %v2923 = vpack.c.b16 %v2903, %v2902
      %v2924 = vpack.c.b16 %v2905, %v2904
      %v2925 = vpack.c.b16 %v2907, %v2906
      %v2926 = vpack.c.b16 %v2909, %v2908
      %v2927 = vpack.c.b16 %v2911, %v2910
      %v2928 = vunpack.c.l.b16 %v1097
      %v2929 = vunpack.c.l.b16 %v1107
      %v2930 = vunpack.c.l.b16 %v1121
      %v2931 = vunpack.c.l.b16 %v1131
      %v2932 = vunpack.c.l.b16 %v1145
      %v2933 = vunpack.c.l.b16 %v1155
      %v2934 = vunpack.c.l.b16 %v1169
      %v2935 = vunpack.c.l.b16 %v1179
      %v2936 = vunpack.c.l.b16 %v1193
      %v2937 = vunpack.c.l.b16 %v1203
      %v2938 = vunpack.c.l.b16 %v1217
      %v2939 = vunpack.c.l.b16 %v1227
      %v2940 = vunpack.c.l.b16 %v1241
      %v2941 = vunpack.c.l.b16 %v1251
      %v2942 = vunpack.c.l.b16 %v1265
      %v2943 = vunpack.c.l.b16 %v1275
      %v2944 = vunpack.c.l.b16 %v1289
      %v2945 = vunpack.c.l.b16 %v1299
      %v2946 = vunpack.c.l.b16 %v1313
      %v2947 = vunpack.c.l.b16 %v1323
      %v2948 = vunpack.c.l.b16 %v1337
      %v2949 = vunpack.c.l.b16 %v1347
      %v2950 = vunpack.c.l.b16 %v1361
      %v2951 = vunpack.c.l.b16 %v1371
      %v2952 = vunpack.c.l.b16 %v1385
      %v2953 = vunpack.c.l.b16 %v1395
      %v2954 = vunpack.c.l.b16 %v1409
      %v2955 = vunpack.c.l.b16 %v1419
      %v2956 = vunpack.c.l.b16 %v1433
      %v2957 = vunpack.c.l.b16 %v1443
      %v2958 = vunpack.c.l.b16 %v1457
      %v2959 = vunpack.c.l.b16 %v1467
      %v2960 = vpack.c.b16 %v2929, %v2928
      %v2961 = vpack.c.b16 %v2931, %v2930
      %v2962 = vpack.c.b16 %v2933, %v2932
      %v2963 = vpack.c.b16 %v2935, %v2934
      %v2964 = vpack.c.b16 %v2937, %v2936
      %v2965 = vpack.c.b16 %v2939, %v2938
      %v2966 = vpack.c.b16 %v2941, %v2940
      %v2967 = vpack.c.b16 %v2943, %v2942
      %v2968 = vpack.c.b16 %v2945, %v2944
      %v2969 = vpack.c.b16 %v2947, %v2946
      %v2970 = vpack.c.b16 %v2949, %v2948
      %v2971 = vpack.c.b16 %v2951, %v2950
      %v2972 = vpack.c.b16 %v2953, %v2952
      %v2973 = vpack.c.b16 %v2955, %v2954
      %v2974 = vpack.c.b16 %v2957, %v2956
      %v2975 = vpack.c.b16 %v2959, %v2958
      %2976 = vrot.lane.b32.xlu0 %v2960, 4
      %v2977 = vpop.permute.xlu0 %2976
      %2978 = vrot.lane.b32.xlu0 %v2961, 4
      %v2979 = vpop.permute.xlu0 %2978
      %2980 = vrot.lane.b32.xlu0 %v2962, 4
      %v2981 = vpop.permute.xlu0 %2980
      %2982 = vrot.lane.b32.xlu0 %v2963, 4
      %v2983 = vpop.permute.xlu0 %2982
      %2984 = vrot.lane.b32.xlu0 %v2964, 4
      %v2985 = vpop.permute.xlu0 %2984
      %2986 = vrot.lane.b32.xlu0 %v2965, 4
      %v2987 = vpop.permute.xlu0 %2986
      %2988 = vrot.lane.b32.xlu0 %v2966, 4
      %v2989 = vpop.permute.xlu0 %2988
      %2990 = vrot.lane.b32.xlu0 %v2967, 4
      %v2991 = vpop.permute.xlu0 %2990
      %2992 = vrot.lane.b32.xlu0 %v2968, 4
      %v2993 = vpop.permute.xlu0 %2992
      %2994 = vrot.lane.b32.xlu0 %v2969, 4
      %v2995 = vpop.permute.xlu0 %2994
      %2996 = vrot.lane.b32.xlu0 %v2970, 4
      %v2997 = vpop.permute.xlu0 %2996
      %2998 = vrot.lane.b32.xlu0 %v2971, 4
      %v2999 = vpop.permute.xlu0 %2998
      %3000 = vrot.lane.b32.xlu0 %v2972, 4
      %v3001 = vpop.permute.xlu0 %3000
      %3002 = vrot.lane.b32.xlu0 %v2973, 4
      %v3003 = vpop.permute.xlu0 %3002
      %3004 = vrot.lane.b32.xlu0 %v2974, 4
      %v3005 = vpop.permute.xlu0 %3004
      %3006 = vrot.lane.b32.xlu0 %v2975, 4
      %v3007 = vpop.permute.xlu0 %3006
      %v3008 = vunpack.c.l.b16 %v1538
      %v3009 = vunpack.c.l.b16 %v1541
      %v3010 = vunpack.c.l.b16 %v1545
      %v3011 = vunpack.c.l.b16 %v1548
      %v3012 = vunpack.c.l.b16 %v1552
      %v3013 = vunpack.c.l.b16 %v1555
      %v3014 = vunpack.c.l.b16 %v1559
      %v3015 = vunpack.c.l.b16 %v1562
      %v3016 = vunpack.c.l.b16 %v1566
      %v3017 = vunpack.c.l.b16 %v1569
      %v3018 = vunpack.c.l.b16 %v1573
      %v3019 = vunpack.c.l.b16 %v1576
      %v3020 = vunpack.c.l.b16 %v1580
      %v3021 = vunpack.c.l.b16 %v1583
      %v3022 = vunpack.c.l.b16 %v1587
      %v3023 = vunpack.c.l.b16 %v1590
      %v3024 = vunpack.c.l.b16 %v1594
      %v3025 = vunpack.c.l.b16 %v1597
      %v3026 = vunpack.c.l.b16 %v1601
      %v3027 = vunpack.c.l.b16 %v1604
      %v3028 = vunpack.c.l.b16 %v1608
      %v3029 = vunpack.c.l.b16 %v1611
      %v3030 = vunpack.c.l.b16 %v1615
      %v3031 = vunpack.c.l.b16 %v1618
      %v3032 = vunpack.c.l.b16 %v1622
      %v3033 = vunpack.c.l.b16 %v1625
      %v3034 = vunpack.c.l.b16 %v1629
      %v3035 = vunpack.c.l.b16 %v1632
      %v3036 = vunpack.c.l.b16 %v1636
      %v3037 = vunpack.c.l.b16 %v1639
      %v3038 = vunpack.c.l.b16 %v1643
      %v3039 = vunpack.c.l.b16 %v1646
      %v3040 = vpack.c.b16 %v3009, %v3008
      %v3041 = vpack.c.b16 %v3011, %v3010
      %v3042 = vpack.c.b16 %v3013, %v3012
      %v3043 = vpack.c.b16 %v3015, %v3014
      %v3044 = vpack.c.b16 %v3017, %v3016
      %v3045 = vpack.c.b16 %v3019, %v3018
      %v3046 = vpack.c.b16 %v3021, %v3020
      %v3047 = vpack.c.b16 %v3023, %v3022
      %v3048 = vpack.c.b16 %v3025, %v3024
      %v3049 = vpack.c.b16 %v3027, %v3026
      %v3050 = vpack.c.b16 %v3029, %v3028
      %v3051 = vpack.c.b16 %v3031, %v3030
      %v3052 = vpack.c.b16 %v3033, %v3032
      %v3053 = vpack.c.b16 %v3035, %v3034
      %v3054 = vpack.c.b16 %v3037, %v3036
      %v3055 = vpack.c.b16 %v3039, %v3038
      %3056 = vrot.lane.b32.xlu0 %v3040, 8
      %v3057 = vpop.permute.xlu0 %3056
      %3058 = vrot.lane.b32.xlu0 %v3041, 8
      %v3059 = vpop.permute.xlu0 %3058
      %3060 = vrot.lane.b32.xlu0 %v3042, 8
      %v3061 = vpop.permute.xlu0 %3060
      %3062 = vrot.lane.b32.xlu0 %v3043, 8
      %v3063 = vpop.permute.xlu0 %3062
      %3064 = vrot.lane.b32.xlu0 %v3044, 8
      %v3065 = vpop.permute.xlu0 %3064
      %3066 = vrot.lane.b32.xlu0 %v3045, 8
      %v3067 = vpop.permute.xlu0 %3066
      %3068 = vrot.lane.b32.xlu0 %v3046, 8
      %v3069 = vpop.permute.xlu0 %3068
      %3070 = vrot.lane.b32.xlu0 %v3047, 8
      %v3071 = vpop.permute.xlu0 %3070
      %3072 = vrot.lane.b32.xlu0 %v3048, 8
      %v3073 = vpop.permute.xlu0 %3072
      %3074 = vrot.lane.b32.xlu0 %v3049, 8
      %v3075 = vpop.permute.xlu0 %3074
      %3076 = vrot.lane.b32.xlu0 %v3050, 8
      %v3077 = vpop.permute.xlu0 %3076
      %3078 = vrot.lane.b32.xlu0 %v3051, 8
      %v3079 = vpop.permute.xlu0 %3078
      %3080 = vrot.lane.b32.xlu0 %v3052, 8
      %v3081 = vpop.permute.xlu0 %3080
      %3082 = vrot.lane.b32.xlu0 %v3053, 8
      %v3083 = vpop.permute.xlu0 %3082
      %3084 = vrot.lane.b32.xlu0 %v3054, 8
      %v3085 = vpop.permute.xlu0 %3084
      %3086 = vrot.lane.b32.xlu0 %v3055, 8
      %v3087 = vpop.permute.xlu0 %3086
      %v3104 = vunpack.c.l.b16 %v1647
      %v3105 = vunpack.c.l.b16 %v1648
      %v3106 = vunpack.c.l.b16 %v1649
      %v3107 = vunpack.c.l.b16 %v1650
      %v3108 = vunpack.c.l.b16 %v1651
      %v3109 = vunpack.c.l.b16 %v1652
      %v3110 = vunpack.c.l.b16 %v1653
      %v3111 = vunpack.c.l.b16 %v1654
      %v3112 = vunpack.c.l.b16 %v1655
      %v3113 = vunpack.c.l.b16 %v1656
      %v3114 = vunpack.c.l.b16 %v1657
      %v3115 = vunpack.c.l.b16 %v1658
      %v3116 = vunpack.c.l.b16 %v1659
      %v3117 = vunpack.c.l.b16 %v1660
      %v3118 = vunpack.c.l.b16 %v1661
      %v3119 = vunpack.c.l.b16 %v1662
      %v3120 = vunpack.c.l.b16 %v1663
      %v3121 = vunpack.c.l.b16 %v1664
      %v3122 = vunpack.c.l.b16 %v1665
      %v3123 = vunpack.c.l.b16 %v1666
      %v3124 = vunpack.c.l.b16 %v1667
      %v3125 = vunpack.c.l.b16 %v1668
      %v3126 = vunpack.c.l.b16 %v1669
      %v3127 = vunpack.c.l.b16 %v1670
      %v3128 = vunpack.c.l.b16 %v1671
      %v3129 = vunpack.c.l.b16 %v1672
      %v3130 = vunpack.c.l.b16 %v1673
      %v3131 = vunpack.c.l.b16 %v1674
      %v3132 = vunpack.c.l.b16 %v1675
      %v3133 = vunpack.c.l.b16 %v1676
      %v3134 = vunpack.c.l.b16 %v1677
      %v3135 = vunpack.c.l.b16 %v1678
      %v3136 = vpack.c.b16 %v3105, %v3104
      %v3137 = vpack.c.b16 %v3107, %v3106
      %v3138 = vpack.c.b16 %v3109, %v3108
      %v3139 = vpack.c.b16 %v3111, %v3110
      %v3140 = vpack.c.b16 %v3113, %v3112
      %v3141 = vpack.c.b16 %v3115, %v3114
      %v3142 = vpack.c.b16 %v3117, %v3116
      %v3143 = vpack.c.b16 %v3119, %v3118
      %v3144 = vpack.c.b16 %v3121, %v3120
      %v3145 = vpack.c.b16 %v3123, %v3122
      %v3146 = vpack.c.b16 %v3125, %v3124
      %v3147 = vpack.c.b16 %v3127, %v3126
      %v3148 = vpack.c.b16 %v3129, %v3128
      %v3149 = vpack.c.b16 %v3131, %v3130
      %v3150 = vpack.c.b16 %v3133, %v3132
      %v3151 = vpack.c.b16 %v3135, %v3134
      %3152 = vrot.lane.b32.xlu0 %v3136, 12
      %v3153 = vpop.permute.xlu0 %3152
      %3154 = vrot.lane.b32.xlu0 %v3137, 12
      %v3155 = vpop.permute.xlu0 %3154
      %3156 = vrot.lane.b32.xlu0 %v3138, 12
      %v3157 = vpop.permute.xlu0 %3156
      %3158 = vrot.lane.b32.xlu0 %v3139, 12
      %v3159 = vpop.permute.xlu0 %3158
      %3160 = vrot.lane.b32.xlu0 %v3140, 12
      %v3161 = vpop.permute.xlu0 %3160
      %3162 = vrot.lane.b32.xlu0 %v3141, 12
      %v3163 = vpop.permute.xlu0 %3162
      %3164 = vrot.lane.b32.xlu0 %v3142, 12
      %v3165 = vpop.permute.xlu0 %3164
      %3166 = vrot.lane.b32.xlu0 %v3143, 12
      %v3167 = vpop.permute.xlu0 %3166
      %3168 = vrot.lane.b32.xlu0 %v3144, 12
      %v3169 = vpop.permute.xlu0 %3168
      %3170 = vrot.lane.b32.xlu0 %v3145, 12
      %v3171 = vpop.permute.xlu0 %3170
      %3172 = vrot.lane.b32.xlu0 %v3146, 12
      %v3173 = vpop.permute.xlu0 %3172
      %3174 = vrot.lane.b32.xlu0 %v3147, 12
      %v3175 = vpop.permute.xlu0 %3174
      %3176 = vrot.lane.b32.xlu0 %v3148, 12
      %v3177 = vpop.permute.xlu0 %3176
      %3178 = vrot.lane.b32.xlu0 %v3149, 12
      %v3179 = vpop.permute.xlu0 %3178
      %3180 = vrot.lane.b32.xlu0 %v3150, 12
      %v3181 = vpop.permute.xlu0 %3180
      %3182 = vrot.lane.b32.xlu0 %v3151, 12
      %v3183 = vpop.permute.xlu0 %3182
      %v3184 = vunpack.c.l.b16 %v1708
      %v3185 = vunpack.c.l.b16 %v1718
      %v3186 = vunpack.c.l.b16 %v1732
      %v3187 = vunpack.c.l.b16 %v1742
      %v3188 = vunpack.c.l.b16 %v1756
      %v3189 = vunpack.c.l.b16 %v1766
      %v3190 = vunpack.c.l.b16 %v1780
      %v3191 = vunpack.c.l.b16 %v1790
      %v3192 = vunpack.c.l.b16 %v1804
      %v3193 = vunpack.c.l.b16 %v1814
      %v3194 = vunpack.c.l.b16 %v1828
      %v3195 = vunpack.c.l.b16 %v1838
      %v3196 = vunpack.c.l.b16 %v1852
      %v3197 = vunpack.c.l.b16 %v1862
      %v3198 = vunpack.c.l.b16 %v1876
      %v3199 = vunpack.c.l.b16 %v1886
      %v3200 = vunpack.c.l.b16 %v1900
      %v3201 = vunpack.c.l.b16 %v1910
      %v3202 = vunpack.c.l.b16 %v1924
      %v3203 = vunpack.c.l.b16 %v1934
      %v3204 = vunpack.c.l.b16 %v1948
      %v3205 = vunpack.c.l.b16 %v1958
      %v3206 = vunpack.c.l.b16 %v1972
      %v3207 = vunpack.c.l.b16 %v1982
      %v3208 = vunpack.c.l.b16 %v1996
      %v3209 = vunpack.c.l.b16 %v2006
      %v3210 = vunpack.c.l.b16 %v2020
      %v3211 = vunpack.c.l.b16 %v2030
      %v3212 = vunpack.c.l.b16 %v2044
      %v3213 = vunpack.c.l.b16 %v2054
      %v3214 = vunpack.c.l.b16 %v2068
      %v3215 = vunpack.c.l.b16 %v2078
      %v3216 = vpack.c.b16 %v3185, %v3184
      %v3217 = vpack.c.b16 %v3187, %v3186
      %v3218 = vpack.c.b16 %v3189, %v3188
      %v3219 = vpack.c.b16 %v3191, %v3190
      %v3220 = vpack.c.b16 %v3193, %v3192
      %v3221 = vpack.c.b16 %v3195, %v3194
      %v3222 = vpack.c.b16 %v3197, %v3196
      %v3223 = vpack.c.b16 %v3199, %v3198
      %v3224 = vpack.c.b16 %v3201, %v3200
      %v3225 = vpack.c.b16 %v3203, %v3202
      %v3226 = vpack.c.b16 %v3205, %v3204
      %v3227 = vpack.c.b16 %v3207, %v3206
      %v3228 = vpack.c.b16 %v3209, %v3208
      %v3229 = vpack.c.b16 %v3211, %v3210
      %v3230 = vpack.c.b16 %v3213, %v3212
      %v3231 = vpack.c.b16 %v3215, %v3214
      %3232 = vrot.lane.b32.xlu0 %v3216, 16
      %v3233 = vpop.permute.xlu0 %3232
      %3234 = vrot.lane.b32.xlu0 %v3217, 16
      %v3235 = vpop.permute.xlu0 %3234
      %3236 = vrot.lane.b32.xlu0 %v3218, 16
      %v3237 = vpop.permute.xlu0 %3236
      %3238 = vrot.lane.b32.xlu0 %v3219, 16
      %v3239 = vpop.permute.xlu0 %3238
      %3240 = vrot.lane.b32.xlu0 %v3220, 16
      %v3241 = vpop.permute.xlu0 %3240
      %3242 = vrot.lane.b32.xlu0 %v3221, 16
      %v3243 = vpop.permute.xlu0 %3242
      %3244 = vrot.lane.b32.xlu0 %v3222, 16
      %v3245 = vpop.permute.xlu0 %3244
      %3246 = vrot.lane.b32.xlu0 %v3223, 16
      %v3247 = vpop.permute.xlu0 %3246
      %3248 = vrot.lane.b32.xlu0 %v3224, 16
      %v3249 = vpop.permute.xlu0 %3248
      %3250 = vrot.lane.b32.xlu0 %v3225, 16
      %v3251 = vpop.permute.xlu0 %3250
      %3252 = vrot.lane.b32.xlu0 %v3226, 16
      %v3253 = vpop.permute.xlu0 %3252
      %3254 = vrot.lane.b32.xlu0 %v3227, 16
      %v3255 = vpop.permute.xlu0 %3254
      %3256 = vrot.lane.b32.xlu0 %v3228, 16
      %v3257 = vpop.permute.xlu0 %3256
      %3258 = vrot.lane.b32.xlu0 %v3229, 16
      %v3259 = vpop.permute.xlu0 %3258
      %3260 = vrot.lane.b32.xlu0 %v3230, 16
      %v3261 = vpop.permute.xlu0 %3260
      %3262 = vrot.lane.b32.xlu0 %v3231, 16
      %v3263 = vpop.permute.xlu0 %3262
      %v3264 = vunpack.c.l.b16 %v2146
      %v3265 = vunpack.c.l.b16 %v2149
      %v3266 = vunpack.c.l.b16 %v2153
      %v3267 = vunpack.c.l.b16 %v2156
      %v3268 = vunpack.c.l.b16 %v2160
      %v3269 = vunpack.c.l.b16 %v2163
      %v3270 = vunpack.c.l.b16 %v2167
      %v3271 = vunpack.c.l.b16 %v2170
      %v3272 = vunpack.c.l.b16 %v2174
      %v3273 = vunpack.c.l.b16 %v2177
      %v3274 = vunpack.c.l.b16 %v2181
      %v3275 = vunpack.c.l.b16 %v2184
      %v3276 = vunpack.c.l.b16 %v2188
      %v3277 = vunpack.c.l.b16 %v2191
      %v3278 = vunpack.c.l.b16 %v2195
      %v3279 = vunpack.c.l.b16 %v2198
      %v3280 = vunpack.c.l.b16 %v2202
      %v3281 = vunpack.c.l.b16 %v2205
      %v3282 = vunpack.c.l.b16 %v2209
      %v3283 = vunpack.c.l.b16 %v2212
      %v3284 = vunpack.c.l.b16 %v2216
      %v3285 = vunpack.c.l.b16 %v2219
      %v3286 = vunpack.c.l.b16 %v2223
      %v3287 = vunpack.c.l.b16 %v2226
      %v3288 = vunpack.c.l.b16 %v2230
      %v3289 = vunpack.c.l.b16 %v2233
      %v3290 = vunpack.c.l.b16 %v2237
      %v3291 = vunpack.c.l.b16 %v2240
      %v3292 = vunpack.c.l.b16 %v2244
      %v3293 = vunpack.c.l.b16 %v2247
      %v3294 = vunpack.c.l.b16 %v2251
      %v3295 = vunpack.c.l.b16 %v2254
      %v3296 = vpack.c.b16 %v3265, %v3264
      %v3297 = vpack.c.b16 %v3267, %v3266
      %v3298 = vpack.c.b16 %v3269, %v3268
      %v3299 = vpack.c.b16 %v3271, %v3270
      %v3300 = vpack.c.b16 %v3273, %v3272
      %v3301 = vpack.c.b16 %v3275, %v3274
      %v3302 = vpack.c.b16 %v3277, %v3276
      %v3303 = vpack.c.b16 %v3279, %v3278
      %v3304 = vpack.c.b16 %v3281, %v3280
      %v3305 = vpack.c.b16 %v3283, %v3282
      %v3306 = vpack.c.b16 %v3285, %v3284
      %v3307 = vpack.c.b16 %v3287, %v3286
      %v3308 = vpack.c.b16 %v3289, %v3288
      %v3309 = vpack.c.b16 %v3291, %v3290
      %v3310 = vpack.c.b16 %v3293, %v3292
      %v3311 = vpack.c.b16 %v3295, %v3294
      %3312 = vrot.lane.b32.xlu0 %v3296, 20
      %v3313 = vpop.permute.xlu0 %3312
      %3314 = vrot.lane.b32.xlu0 %v3297, 20
      %v3315 = vpop.permute.xlu0 %3314
      %3316 = vrot.lane.b32.xlu0 %v3298, 20
      %v3317 = vpop.permute.xlu0 %3316
      %3318 = vrot.lane.b32.xlu0 %v3299, 20
      %v3319 = vpop.permute.xlu0 %3318
      %3320 = vrot.lane.b32.xlu0 %v3300, 20
      %v3321 = vpop.permute.xlu0 %3320
      %3322 = vrot.lane.b32.xlu0 %v3301, 20
      %v3323 = vpop.permute.xlu0 %3322
      %3324 = vrot.lane.b32.xlu0 %v3302, 20
      %v3325 = vpop.permute.xlu0 %3324
      %3326 = vrot.lane.b32.xlu0 %v3303, 20
      %v3327 = vpop.permute.xlu0 %3326
      %3328 = vrot.lane.b32.xlu0 %v3304, 20
      %v3329 = vpop.permute.xlu0 %3328
      %3330 = vrot.lane.b32.xlu0 %v3305, 20
      %v3331 = vpop.permute.xlu0 %3330
      %3332 = vrot.lane.b32.xlu0 %v3306, 20
      %v3333 = vpop.permute.xlu0 %3332
      %3334 = vrot.lane.b32.xlu0 %v3307, 20
      %v3335 = vpop.permute.xlu0 %3334
      %3336 = vrot.lane.b32.xlu0 %v3308, 20
      %v3337 = vpop.permute.xlu0 %3336
      %3338 = vrot.lane.b32.xlu0 %v3309, 20
      %v3339 = vpop.permute.xlu0 %3338
      %3340 = vrot.lane.b32.xlu0 %v3310, 20
      %v3341 = vpop.permute.xlu0 %3340
      %3342 = vrot.lane.b32.xlu0 %v3311, 20
      %v3343 = vpop.permute.xlu0 %3342
      %v3360 = vunpack.c.l.b16 %v2256
      %v3361 = vunpack.c.l.b16 %v2257
      %v3362 = vunpack.c.l.b16 %v2258
      %v3363 = vunpack.c.l.b16 %v2259
      %v3364 = vunpack.c.l.b16 %v2260
      %v3365 = vunpack.c.l.b16 %v2261
      %v3366 = vunpack.c.l.b16 %v2262
      %v3367 = vunpack.c.l.b16 %v2263
      %v3368 = vunpack.c.l.b16 %v2264
      %v3369 = vunpack.c.l.b16 %v2265
      %v3370 = vunpack.c.l.b16 %v2266
      %v3371 = vunpack.c.l.b16 %v2267
      %v3372 = vunpack.c.l.b16 %v2268
      %v3373 = vunpack.c.l.b16 %v2269
      %v3374 = vunpack.c.l.b16 %v2270
      %v3375 = vunpack.c.l.b16 %v2271
      %v3376 = vunpack.c.l.b16 %v2272
      %v3377 = vunpack.c.l.b16 %v2273
      %v3378 = vunpack.c.l.b16 %v2274
      %v3379 = vunpack.c.l.b16 %v2275
      %v3380 = vunpack.c.l.b16 %v2276
      %v3381 = vunpack.c.l.b16 %v2277
      %v3382 = vunpack.c.l.b16 %v2278
      %v3383 = vunpack.c.l.b16 %v2279
      %v3384 = vunpack.c.l.b16 %v2280
      %v3385 = vunpack.c.l.b16 %v2281
      %v3386 = vunpack.c.l.b16 %v2282
      %v3387 = vunpack.c.l.b16 %v2283
      %v3388 = vunpack.c.l.b16 %v2284
      %v3389 = vunpack.c.l.b16 %v2285
      %v3390 = vunpack.c.l.b16 %v2286
      %v3391 = vunpack.c.l.b16 %v2287
      %v3392 = vpack.c.b16 %v3361, %v3360
      %v3393 = vpack.c.b16 %v3363, %v3362
      %v3394 = vpack.c.b16 %v3365, %v3364
      %v3395 = vpack.c.b16 %v3367, %v3366
      %v3396 = vpack.c.b16 %v3369, %v3368
      %v3397 = vpack.c.b16 %v3371, %v3370
      %v3398 = vpack.c.b16 %v3373, %v3372
      %v3399 = vpack.c.b16 %v3375, %v3374
      %v3400 = vpack.c.b16 %v3377, %v3376
      %v3401 = vpack.c.b16 %v3379, %v3378
      %v3402 = vpack.c.b16 %v3381, %v3380
      %v3403 = vpack.c.b16 %v3383, %v3382
      %v3404 = vpack.c.b16 %v3385, %v3384
      %v3405 = vpack.c.b16 %v3387, %v3386
      %v3406 = vpack.c.b16 %v3389, %v3388
      %v3407 = vpack.c.b16 %v3391, %v3390
      %3408 = vrot.lane.b32.xlu0 %v3392, 24
      %v3409 = vpop.permute.xlu0 %3408
      %3410 = vrot.lane.b32.xlu0 %v3393, 24
      %v3411 = vpop.permute.xlu0 %3410
      %3412 = vrot.lane.b32.xlu0 %v3394, 24
      %v3413 = vpop.permute.xlu0 %3412
      %3414 = vrot.lane.b32.xlu0 %v3395, 24
      %v3415 = vpop.permute.xlu0 %3414
      %3416 = vrot.lane.b32.xlu0 %v3396, 24
      %v3417 = vpop.permute.xlu0 %3416
      %3418 = vrot.lane.b32.xlu0 %v3397, 24
      %v3419 = vpop.permute.xlu0 %3418
      %3420 = vrot.lane.b32.xlu0 %v3398, 24
      %v3421 = vpop.permute.xlu0 %3420
      %3422 = vrot.lane.b32.xlu0 %v3399, 24
      %v3423 = vpop.permute.xlu0 %3422
      %3424 = vrot.lane.b32.xlu0 %v3400, 24
      %v3425 = vpop.permute.xlu0 %3424
      %3426 = vrot.lane.b32.xlu0 %v3401, 24
      %v3427 = vpop.permute.xlu0 %3426
      %3428 = vrot.lane.b32.xlu0 %v3402, 24
      %v3429 = vpop.permute.xlu0 %3428
      %3430 = vrot.lane.b32.xlu0 %v3403, 24
      %v3431 = vpop.permute.xlu0 %3430
      %3432 = vrot.lane.b32.xlu0 %v3404, 24
      %v3433 = vpop.permute.xlu0 %3432
      %3434 = vrot.lane.b32.xlu0 %v3405, 24
      %v3435 = vpop.permute.xlu0 %3434
      %3436 = vrot.lane.b32.xlu0 %v3406, 24
      %v3437 = vpop.permute.xlu0 %3436
      %3438 = vrot.lane.b32.xlu0 %v3407, 24
      %v3439 = vpop.permute.xlu0 %3438
      %v3440 = vunpack.c.l.b16 %v2317
      %v3441 = vunpack.c.l.b16 %v2327
      %v3442 = vunpack.c.l.b16 %v2341
      %v3443 = vunpack.c.l.b16 %v2351
      %v3444 = vunpack.c.l.b16 %v2365
      %v3445 = vunpack.c.l.b16 %v2375
      %v3446 = vunpack.c.l.b16 %v2389
      %v3447 = vunpack.c.l.b16 %v2399
      %v3448 = vunpack.c.l.b16 %v2413
      %v3449 = vunpack.c.l.b16 %v2423
      %v3450 = vunpack.c.l.b16 %v2437
      %v3451 = vunpack.c.l.b16 %v2447
      %v3452 = vunpack.c.l.b16 %v2461
      %v3453 = vunpack.c.l.b16 %v2471
      %v3454 = vunpack.c.l.b16 %v2485
      %v3455 = vunpack.c.l.b16 %v2495
      %v3456 = vunpack.c.l.b16 %v2509
      %v3457 = vunpack.c.l.b16 %v2519
      %v3458 = vunpack.c.l.b16 %v2533
      %v3459 = vunpack.c.l.b16 %v2543
      %v3460 = vunpack.c.l.b16 %v2557
      %v3461 = vunpack.c.l.b16 %v2567
      %v3462 = vunpack.c.l.b16 %v2581
      %v3463 = vunpack.c.l.b16 %v2591
      %v3464 = vunpack.c.l.b16 %v2605
      %v3465 = vunpack.c.l.b16 %v2615
      %v3466 = vunpack.c.l.b16 %v2629
      %v3467 = vunpack.c.l.b16 %v2639
      %v3468 = vunpack.c.l.b16 %v2653
      %v3469 = vunpack.c.l.b16 %v2663
      %v3470 = vunpack.c.l.b16 %v2677
      %v3471 = vunpack.c.l.b16 %v2687
      %v3472 = vpack.c.b16 %v3441, %v3440
      %v3473 = vpack.c.b16 %v3443, %v3442
      %v3474 = vpack.c.b16 %v3445, %v3444
      %v3475 = vpack.c.b16 %v3447, %v3446
      %v3476 = vpack.c.b16 %v3449, %v3448
      %v3477 = vpack.c.b16 %v3451, %v3450
      %v3478 = vpack.c.b16 %v3453, %v3452
      %v3479 = vpack.c.b16 %v3455, %v3454
      %v3480 = vpack.c.b16 %v3457, %v3456
      %v3481 = vpack.c.b16 %v3459, %v3458
      %v3482 = vpack.c.b16 %v3461, %v3460
      %v3483 = vpack.c.b16 %v3463, %v3462
      %v3484 = vpack.c.b16 %v3465, %v3464
      %v3485 = vpack.c.b16 %v3467, %v3466
      %v3486 = vpack.c.b16 %v3469, %v3468
      %v3487 = vpack.c.b16 %v3471, %v3470
      %3488 = vrot.lane.b32.xlu0 %v3472, 28
      %v3489 = vpop.permute.xlu0 %3488
      %3490 = vrot.lane.b32.xlu0 %v3473, 28
      %v3491 = vpop.permute.xlu0 %3490
      %3492 = vrot.lane.b32.xlu0 %v3474, 28
      %v3493 = vpop.permute.xlu0 %3492
      %3494 = vrot.lane.b32.xlu0 %v3475, 28
      %v3495 = vpop.permute.xlu0 %3494
      %3496 = vrot.lane.b32.xlu0 %v3476, 28
      %v3497 = vpop.permute.xlu0 %3496
      %3498 = vrot.lane.b32.xlu0 %v3477, 28
      %v3499 = vpop.permute.xlu0 %3498
      %3500 = vrot.lane.b32.xlu0 %v3478, 28
      %v3501 = vpop.permute.xlu0 %3500
      %3502 = vrot.lane.b32.xlu0 %v3479, 28
      %v3503 = vpop.permute.xlu0 %3502
      %3504 = vrot.lane.b32.xlu0 %v3480, 28
      %v3505 = vpop.permute.xlu0 %3504
      %3506 = vrot.lane.b32.xlu0 %v3481, 28
      %v3507 = vpop.permute.xlu0 %3506
      %3508 = vrot.lane.b32.xlu0 %v3482, 28
      %v3509 = vpop.permute.xlu0 %3508
      %3510 = vrot.lane.b32.xlu0 %v3483, 28
      %v3511 = vpop.permute.xlu0 %3510
      %3512 = vrot.lane.b32.xlu0 %v3484, 28
      %v3513 = vpop.permute.xlu0 %3512
      %3514 = vrot.lane.b32.xlu0 %v3485, 28
      %v3515 = vpop.permute.xlu0 %3514
      %3516 = vrot.lane.b32.xlu0 %v3486, 28
      %v3517 = vpop.permute.xlu0 %3516
      %3518 = vrot.lane.b32.xlu0 %v3487, 28
      %v3519 = vpop.permute.xlu0 %3518
      %v3520 = vunpack.c.l.b16 %v2755
      %v3521 = vunpack.c.l.b16 %v2758
      %v3522 = vunpack.c.l.b16 %v2762
      %v3523 = vunpack.c.l.b16 %v2765
      %v3524 = vunpack.c.l.b16 %v2769
      %v3525 = vunpack.c.l.b16 %v2772
      %v3526 = vunpack.c.l.b16 %v2776
      %v3527 = vunpack.c.l.b16 %v2779
      %v3528 = vunpack.c.l.b16 %v2783
      %v3529 = vunpack.c.l.b16 %v2786
      %v3530 = vunpack.c.l.b16 %v2790
      %v3531 = vunpack.c.l.b16 %v2793
      %v3532 = vunpack.c.l.b16 %v2797
      %v3533 = vunpack.c.l.b16 %v2800
      %v3534 = vunpack.c.l.b16 %v2804
      %v3535 = vunpack.c.l.b16 %v2807
      %v3536 = vunpack.c.l.b16 %v2811
      %v3537 = vunpack.c.l.b16 %v2814
      %v3538 = vunpack.c.l.b16 %v2818
      %v3539 = vunpack.c.l.b16 %v2821
      %v3540 = vunpack.c.l.b16 %v2825
      %v3541 = vunpack.c.l.b16 %v2828
      %v3542 = vunpack.c.l.b16 %v2832
      %v3543 = vunpack.c.l.b16 %v2835
      %v3544 = vunpack.c.l.b16 %v2839
      %v3545 = vunpack.c.l.b16 %v2842
      %v3546 = vunpack.c.l.b16 %v2846
      %v3547 = vunpack.c.l.b16 %v2849
      %v3548 = vunpack.c.l.b16 %v2853
      %v3549 = vunpack.c.l.b16 %v2856
      %v3550 = vunpack.c.l.b16 %v2860
      %v3551 = vunpack.c.l.b16 %v2863
      %v3552 = vpack.c.b16 %v3521, %v3520
      %v3553 = vpack.c.b16 %v3523, %v3522
      %v3554 = vpack.c.b16 %v3525, %v3524
      %v3555 = vpack.c.b16 %v3527, %v3526
      %v3556 = vpack.c.b16 %v3529, %v3528
      %v3557 = vpack.c.b16 %v3531, %v3530
      %v3558 = vpack.c.b16 %v3533, %v3532
      %v3559 = vpack.c.b16 %v3535, %v3534
      %v3560 = vpack.c.b16 %v3537, %v3536
      %v3561 = vpack.c.b16 %v3539, %v3538
      %v3562 = vpack.c.b16 %v3541, %v3540
      %v3563 = vpack.c.b16 %v3543, %v3542
      %v3564 = vpack.c.b16 %v3545, %v3544
      %v3565 = vpack.c.b16 %v3547, %v3546
      %v3566 = vpack.c.b16 %v3549, %v3548
      %v3567 = vpack.c.b16 %v3551, %v3550
      %3568 = vrot.lane.b32.xlu0 %v3552, 32
      %v3569 = vpop.permute.xlu0 %3568
      %3570 = vrot.lane.b32.xlu0 %v3553, 32
      %v3571 = vpop.permute.xlu0 %3570
      %3572 = vrot.lane.b32.xlu0 %v3554, 32
      %v3573 = vpop.permute.xlu0 %3572
      %3574 = vrot.lane.b32.xlu0 %v3555, 32
      %v3575 = vpop.permute.xlu0 %3574
      %3576 = vrot.lane.b32.xlu0 %v3556, 32
      %v3577 = vpop.permute.xlu0 %3576
      %3578 = vrot.lane.b32.xlu0 %v3557, 32
      %v3579 = vpop.permute.xlu0 %3578
      %3580 = vrot.lane.b32.xlu0 %v3558, 32
      %v3581 = vpop.permute.xlu0 %3580
      %3582 = vrot.lane.b32.xlu0 %v3559, 32
      %v3583 = vpop.permute.xlu0 %3582
      %3584 = vrot.lane.b32.xlu0 %v3560, 32
      %v3585 = vpop.permute.xlu0 %3584
      %3586 = vrot.lane.b32.xlu0 %v3561, 32
      %v3587 = vpop.permute.xlu0 %3586
      %3588 = vrot.lane.b32.xlu0 %v3562, 32
      %v3589 = vpop.permute.xlu0 %3588
      %3590 = vrot.lane.b32.xlu0 %v3563, 32
      %v3591 = vpop.permute.xlu0 %3590
      %3592 = vrot.lane.b32.xlu0 %v3564, 32
      %v3593 = vpop.permute.xlu0 %3592
      %3594 = vrot.lane.b32.xlu0 %v3565, 32
      %v3595 = vpop.permute.xlu0 %3594
      %3596 = vrot.lane.b32.xlu0 %v3566, 32
      %v3597 = vpop.permute.xlu0 %3596
      %3598 = vrot.lane.b32.xlu0 %v3567, 32
      %v3599 = vpop.permute.xlu0 %3598
      %vm3600 = vcmask 31744
      %v3603 = vsel %vm3600, %v2912, %v2977
      %v3606 = vsel %vm3600, %v2913, %v2979
      %v3609 = vsel %vm3600, %v2914, %v2981
      %v3612 = vsel %vm3600, %v2915, %v2983
      %v3615 = vsel %vm3600, %v2916, %v2985
      %v3618 = vsel %vm3600, %v2917, %v2987
      %v3621 = vsel %vm3600, %v2918, %v2989
      %v3624 = vsel %vm3600, %v2919, %v2991
      %v3627 = vsel %vm3600, %v2920, %v2993
      %v3630 = vsel %vm3600, %v2921, %v2995
      %v3633 = vsel %vm3600, %v2922, %v2997
      %v3636 = vsel %vm3600, %v2923, %v2999
      %v3639 = vsel %vm3600, %v2924, %v3001
      %v3642 = vsel %vm3600, %v2925, %v3003
      %v3645 = vsel %vm3600, %v2926, %v3005
      %v3648 = vsel %vm3600, %v2927, %v3007
      %vm3649 = vcmask 64512
      %v3651 = vsel %vm3649, %v3603, %v3057
      %v3653 = vsel %vm3649, %v3606, %v3059
      %v3655 = vsel %vm3649, %v3609, %v3061
      %v3657 = vsel %vm3649, %v3612, %v3063
      %v3659 = vsel %vm3649, %v3615, %v3065
      %v3661 = vsel %vm3649, %v3618, %v3067
      %v3663 = vsel %vm3649, %v3621, %v3069
      %v3665 = vsel %vm3649, %v3624, %v3071
      %v3667 = vsel %vm3649, %v3627, %v3073
      %v3669 = vsel %vm3649, %v3630, %v3075
      %v3671 = vsel %vm3649, %v3633, %v3077
      %v3673 = vsel %vm3649, %v3636, %v3079
      %v3675 = vsel %vm3649, %v3639, %v3081
      %v3677 = vsel %vm3649, %v3642, %v3083
      %v3679 = vsel %vm3649, %v3645, %v3085
      %v3681 = vsel %vm3649, %v3648, %v3087
      %vm3682 = vcmask 97280
      %v3684 = vsel %vm3682, %v3651, %v3153
      %v3686 = vsel %vm3682, %v3653, %v3155
      %v3688 = vsel %vm3682, %v3655, %v3157
      %v3690 = vsel %vm3682, %v3657, %v3159
      %v3692 = vsel %vm3682, %v3659, %v3161
      %v3694 = vsel %vm3682, %v3661, %v3163
      %v3696 = vsel %vm3682, %v3663, %v3165
      %v3698 = vsel %vm3682, %v3665, %v3167
      %v3700 = vsel %vm3682, %v3667, %v3169
      %v3702 = vsel %vm3682, %v3669, %v3171
      %v3704 = vsel %vm3682, %v3671, %v3173
      %v3706 = vsel %vm3682, %v3673, %v3175
      %v3708 = vsel %vm3682, %v3675, %v3177
      %v3710 = vsel %vm3682, %v3677, %v3179
      %v3712 = vsel %vm3682, %v3679, %v3181
      %v3714 = vsel %vm3682, %v3681, %v3183
      %vm3715 = vcmask 130048
      %v3717 = vsel %vm3715, %v3684, %v3233
      %v3719 = vsel %vm3715, %v3686, %v3235
      %v3721 = vsel %vm3715, %v3688, %v3237
      %v3723 = vsel %vm3715, %v3690, %v3239
      %v3725 = vsel %vm3715, %v3692, %v3241
      %v3727 = vsel %vm3715, %v3694, %v3243
      %v3729 = vsel %vm3715, %v3696, %v3245
      %v3731 = vsel %vm3715, %v3698, %v3247
      %v3733 = vsel %vm3715, %v3700, %v3249
      %v3735 = vsel %vm3715, %v3702, %v3251
      %v3737 = vsel %vm3715, %v3704, %v3253
      %v3739 = vsel %vm3715, %v3706, %v3255
      %v3741 = vsel %vm3715, %v3708, %v3257
      %v3743 = vsel %vm3715, %v3710, %v3259
      %v3745 = vsel %vm3715, %v3712, %v3261
      %v3747 = vsel %vm3715, %v3714, %v3263
      %vm3748 = vcmask 162816
      %v3750 = vsel %vm3748, %v3717, %v3313
      %v3752 = vsel %vm3748, %v3719, %v3315
      %v3754 = vsel %vm3748, %v3721, %v3317
      %v3756 = vsel %vm3748, %v3723, %v3319
      %v3758 = vsel %vm3748, %v3725, %v3321
      %v3760 = vsel %vm3748, %v3727, %v3323
      %v3762 = vsel %vm3748, %v3729, %v3325
      %v3764 = vsel %vm3748, %v3731, %v3327
      %v3766 = vsel %vm3748, %v3733, %v3329
      %v3768 = vsel %vm3748, %v3735, %v3331
      %v3770 = vsel %vm3748, %v3737, %v3333
      %v3772 = vsel %vm3748, %v3739, %v3335
      %v3774 = vsel %vm3748, %v3741, %v3337
      %v3776 = vsel %vm3748, %v3743, %v3339
      %v3778 = vsel %vm3748, %v3745, %v3341
      %v3780 = vsel %vm3748, %v3747, %v3343
      %vm3781 = vcmask 195584
      %v3783 = vsel %vm3781, %v3750, %v3409
      %v3785 = vsel %vm3781, %v3752, %v3411
      %v3787 = vsel %vm3781, %v3754, %v3413
      %v3789 = vsel %vm3781, %v3756, %v3415
      %v3791 = vsel %vm3781, %v3758, %v3417
      %v3793 = vsel %vm3781, %v3760, %v3419
      %v3795 = vsel %vm3781, %v3762, %v3421
      %v3797 = vsel %vm3781, %v3764, %v3423
      %v3799 = vsel %vm3781, %v3766, %v3425
      %v3801 = vsel %vm3781, %v3768, %v3427
      %v3803 = vsel %vm3781, %v3770, %v3429
      %v3805 = vsel %vm3781, %v3772, %v3431
      %v3807 = vsel %vm3781, %v3774, %v3433
      %v3809 = vsel %vm3781, %v3776, %v3435
      %v3811 = vsel %vm3781, %v3778, %v3437
      %v3813 = vsel %vm3781, %v3780, %v3439
      %vm3814 = vcmask 228352
      %v3816 = vsel %vm3814, %v3783, %v3489
      %v3818 = vsel %vm3814, %v3785, %v3491
      %v3820 = vsel %vm3814, %v3787, %v3493
      %v3822 = vsel %vm3814, %v3789, %v3495
      %v3824 = vsel %vm3814, %v3791, %v3497
      %v3826 = vsel %vm3814, %v3793, %v3499
      %v3828 = vsel %vm3814, %v3795, %v3501
      %v3830 = vsel %vm3814, %v3797, %v3503
      %v3832 = vsel %vm3814, %v3799, %v3505
      %v3834 = vsel %vm3814, %v3801, %v3507
      %v3836 = vsel %vm3814, %v3803, %v3509
      %v3838 = vsel %vm3814, %v3805, %v3511
      %v3840 = vsel %vm3814, %v3807, %v3513
      %v3842 = vsel %vm3814, %v3809, %v3515
      %v3844 = vsel %vm3814, %v3811, %v3517
      %v3846 = vsel %vm3814, %v3813, %v3519
      %vm3847 = vcmask 261120
      %v3849 = vsel %vm3847, %v3816, %v3569
      %v3851 = vsel %vm3847, %v3818, %v3571
      %v3853 = vsel %vm3847, %v3820, %v3573
      %v3855 = vsel %vm3847, %v3822, %v3575
      %v3857 = vsel %vm3847, %v3824, %v3577
      %v3859 = vsel %vm3847, %v3826, %v3579
      %v3861 = vsel %vm3847, %v3828, %v3581
      %v3863 = vsel %vm3847, %v3830, %v3583
      %v3865 = vsel %vm3847, %v3832, %v3585
      %v3867 = vsel %vm3847, %v3834, %v3587
      %v3869 = vsel %vm3847, %v3836, %v3589
      %v3871 = vsel %vm3847, %v3838, %v3591
      %v3873 = vsel %vm3847, %v3840, %v3593
      %v3875 = vsel %vm3847, %v3842, %v3595
      %v3877 = vsel %vm3847, %v3844, %v3597
      %v3879 = vsel %vm3847, %v3846, %v3599
      %v3880 = vld [vmem:[%s3] sm:$0xf]
      %v3881 = vld [vmem:[%s3 + $0x4] sm:$0xf]
      %v3882 = vld [vmem:[%s3 + $0x8] sm:$0xf]
      %v3883 = vld [vmem:[%s3 + $0xc] sm:$0xf]
      %v3884 = vld [vmem:[%s3 + $0x10] sm:$0x3]
      %v3885 = vld [vmem:[%s5] sm:$0x1]
      %v3887 = vlaneseq
      %v3888 = vshrl.u32 %v3887, 7
      %v3889 = vsub.s32 0, %v3888
      %v3890 = vrot.slane %v3885, %v3889
      %v3897 = vunpack.c.l.b16 %v3880
      %v3898 = vunpack.c.l.b16 %v3881
      %v3899 = vunpack.c.l.b16 %v3882
      %v3900 = vunpack.c.l.b16 %v3883
      %v3901 = vunpack.c.l.b16 %v3884
      %v3902 = vpack.c.b16 %v3898, %v3897
      %v3903 = vpack.c.b16 %v3900, %v3899
      %v3904 = vpack.c.b16 %v3901, %v3901
      %vm3907 = vcmask 293888
      %v3908 = vsel %vm3907, %v3849, 0
      %v3910 = vsel %vm3907, %v3851, 0
      %v3912 = vsel %vm3907, %v3853, 0
      %v3914 = vsel %vm3907, %v3855, 0
      %v3916 = vsel %vm3907, %v3857, 0
      %v3918 = vsel %vm3907, %v3859, 0
      %v3920 = vsel %vm3907, %v3861, 0
      %v3922 = vsel %vm3907, %v3863, 0
      %v3924 = vsel %vm3907, %v3865, 0
      %v3926 = vsel %vm3907, %v3867, 0
      %v3928 = vsel %vm3907, %v3869, 0
      %v3930 = vsel %vm3907, %v3871, 0
      %v3932 = vsel %vm3907, %v3873, 0
      %v3934 = vsel %vm3907, %v3875, 0
      %v3936 = vsel %vm3907, %v3877, 0
      %v3938 = vsel %vm3907, %v3879, 0
      %vm3940 = vcmask 1041408
      %v3942 = vsel %vm3940, %v3904, 0
      %3944 = vmatprep.subr.bf16.mxu0 0
      %3945 = vmatpush1.bf16.msra.mxu0 %v3902
      %3946 = vmatprep.subr.bf16.mxu0 0
      %3947 = vmatpush1.bf16.msra.mxu0 %v3903
      %3948 = vmatprep.subr.bf16.mxu0 0
      %3949 = vmatpush1.bf16.msra.mxu0 %v3942
      %3950 = vmatprep.subr.bf16.mxu0 0
      %3951 = vmatpush1.bf16.msra.mxu0 0
      %3952 = vmatprep.subr.bf16.mxu0 0
      %3953 = vmatpush1.bf16.msra.mxu0 0
      %3954 = vmatprep.subr.bf16.mxu0 0
      %3955 = vmatpush1.bf16.msra.mxu0 0
      %3956 = vmatprep.subr.bf16.mxu0 0
      %3957 = vmatpush1.bf16.msra.mxu0 0
      %3958 = vmatprep.subr.bf16.mxu0 0
      %3959 = vmatpush1.bf16.msra.mxu0 0
      %3960 = vmatprep.subr.bf16.mxu0 0
      %3961 = vmatpush1.bf16.msra.mxu0 0
      %3962 = vmatprep.subr.bf16.mxu0 0
      %3963 = vmatpush1.bf16.msra.mxu0 0
      %3964 = vmatprep.subr.bf16.mxu0 0
      %3965 = vmatpush1.bf16.msra.mxu0 0
      %3966 = vmatprep.subr.bf16.mxu0 0
      %3967 = vmatpush1.bf16.msra.mxu0 0
      %3968 = vmatprep.subr.bf16.mxu0 0
      %3969 = vmatpush1.bf16.msra.mxu0 0
      %3970 = vmatprep.subr.bf16.mxu0 0
      %3971 = vmatpush1.bf16.msra.mxu0 0
      %3972 = vmatprep.subr.bf16.mxu0 0
      %3973 = vmatpush1.bf16.msra.mxu0 0
      %3974 = vmatprep.subr.bf16.mxu0 0
      %3975 = vmatpush1.bf16.msra.mxu0 0
      %3976 = vmatprep.mubr.bf16.mxu0 0
      %3977 = vmatmul.mubr.bf16.gmra.mrb[0].mxu0 %v3908
      %v3978 = vpop.f32.mrb[0].mxu0
      %v3979 = vadd.f32 %v3890, %v3978
      %v3980 = vpop.f32.mrb[0].mxu0
      %v3981 = vpop.f32.mrb[0].mxu0
      %v3982 = vadd.f32 %v3890, %v3981
      %v3983 = vpop.f32.mrb[0].mxu0
      %3984 = vmatprep.mubr.bf16.mxu0 0
      %3985 = vmatmul.mubr.bf16.gmra.mrb[0].mxu0 %v3910
      %v3986 = vpop.f32.mrb[0].mxu0
      %v3987 = vadd.f32 %v3890, %v3986
      %v3988 = vpop.f32.mrb[0].mxu0
      %v3989 = vpop.f32.mrb[0].mxu0
      %v3990 = vadd.f32 %v3890, %v3989
      %v3991 = vpop.f32.mrb[0].mxu0
      %3992 = vmatprep.mubr.bf16.mxu0 0
      %3993 = vmatmul.mubr.bf16.gmra.mrb[0].mxu0 %v3912
      %v3994 = vpop.f32.mrb[0].mxu0
      %v3995 = vadd.f32 %v3890, %v3994
      %v3996 = vpop.f32.mrb[0].mxu0
      %v3997 = vpop.f32.mrb[0].mxu0
      %v3998 = vadd.f32 %v3890, %v3997
      %v3999 = vpop.f32.mrb[0].mxu0
      %4000 = vmatprep.mubr.bf16.mxu0 0
      %4001 = vmatmul.mubr.bf16.gmra.mrb[0].mxu0 %v3914
      %v4002 = vpop.f32.mrb[0].mxu0
      %v4003 = vadd.f32 %v3890, %v4002
      %v4004 = vpop.f32.mrb[0].mxu0
      %v4005 = vpop.f32.mrb[0].mxu0
      %v4006 = vadd.f32 %v3890, %v4005
      %v4007 = vpop.f32.mrb[0].mxu0
      %4008 = vmatprep.mubr.bf16.mxu0 0
      %4009 = vmatmul.mubr.bf16.gmra.mrb[0].mxu0 %v3916
      %v4010 = vpop.f32.mrb[0].mxu0
      %v4011 = vadd.f32 %v3890, %v4010
      %v4012 = vpop.f32.mrb[0].mxu0
      %v4013 = vpop.f32.mrb[0].mxu0
      %v4014 = vadd.f32 %v3890, %v4013
      %v4015 = vpop.f32.mrb[0].mxu0
      %4016 = vmatprep.mubr.bf16.mxu0 0
      %4017 = vmatmul.mubr.bf16.gmra.mrb[0].mxu0 %v3918
      %v4018 = vpop.f32.mrb[0].mxu0
      %v4019 = vadd.f32 %v3890, %v4018
      %v4020 = vpop.f32.mrb[0].mxu0
      %v4021 = vpop.f32.mrb[0].mxu0
      %v4022 = vadd.f32 %v3890, %v4021
      %v4023 = vpop.f32.mrb[0].mxu0
      %4024 = vmatprep.mubr.bf16.mxu0 0
      %4025 = vmatmul.mubr.bf16.gmra.mrb[0].mxu0 %v3920
      %v4026 = vpop.f32.mrb[0].mxu0
      %v4027 = vadd.f32 %v3890, %v4026
      %v4028 = vpop.f32.mrb[0].mxu0
      %v4029 = vpop.f32.mrb[0].mxu0
      %v4030 = vadd.f32 %v3890, %v4029
      %v4031 = vpop.f32.mrb[0].mxu0
      %4032 = vmatprep.mubr.bf16.mxu0 0
      %4033 = vmatmul.mubr.bf16.gmra.mrb[0].mxu0 %v3922
      %v4034 = vpop.f32.mrb[0].mxu0
      %v4035 = vadd.f32 %v3890, %v4034
      %v4036 = vpop.f32.mrb[0].mxu0
      %v4037 = vpop.f32.mrb[0].mxu0
      %v4038 = vadd.f32 %v3890, %v4037
      %v4039 = vpop.f32.mrb[0].mxu0
      %4040 = vmatprep.mubr.bf16.mxu0 0
      %4041 = vmatmul.mubr.bf16.gmra.mrb[0].mxu0 %v3924
      %v4042 = vpop.f32.mrb[0].mxu0
      %v4043 = vadd.f32 %v3890, %v4042
      %v4044 = vpop.f32.mrb[0].mxu0
      %v4045 = vpop.f32.mrb[0].mxu0
      %v4046 = vadd.f32 %v3890, %v4045
      %v4047 = vpop.f32.mrb[0].mxu0
      %4048 = vmatprep.mubr.bf16.mxu0 0
      %4049 = vmatmul.mubr.bf16.gmra.mrb[0].mxu0 %v3926
      %v4050 = vpop.f32.mrb[0].mxu0
      %v4051 = vadd.f32 %v3890, %v4050
      %v4052 = vpop.f32.mrb[0].mxu0
      %v4053 = vpop.f32.mrb[0].mxu0
      %v4054 = vadd.f32 %v3890, %v4053
      %v4055 = vpop.f32.mrb[0].mxu0
      %4056 = vmatprep.mubr.bf16.mxu0 0
      %4057 = vmatmul.mubr.bf16.gmra.mrb[0].mxu0 %v3928
      %v4058 = vpop.f32.mrb[0].mxu0
      %v4059 = vadd.f32 %v3890, %v4058
      %v4060 = vpop.f32.mrb[0].mxu0
      %v4061 = vpop.f32.mrb[0].mxu0
      %v4062 = vadd.f32 %v3890, %v4061
      %v4063 = vpop.f32.mrb[0].mxu0
      %4064 = vmatprep.mubr.bf16.mxu0 0
      %4065 = vmatmul.mubr.bf16.gmra.mrb[0].mxu0 %v3930
      %v4066 = vpop.f32.mrb[0].mxu0
      %v4067 = vadd.f32 %v3890, %v4066
      %v4068 = vpop.f32.mrb[0].mxu0
      %v4069 = vpop.f32.mrb[0].mxu0
      %v4070 = vadd.f32 %v3890, %v4069
      %v4071 = vpop.f32.mrb[0].mxu0
      %4072 = vmatprep.mubr.bf16.mxu0 0
      %4073 = vmatmul.mubr.bf16.gmra.mrb[0].mxu0 %v3932
      %v4074 = vpop.f32.mrb[0].mxu0
      %v4075 = vadd.f32 %v3890, %v4074
      %v4076 = vpop.f32.mrb[0].mxu0
      %v4077 = vpop.f32.mrb[0].mxu0
      %v4078 = vadd.f32 %v3890, %v4077
      %v4079 = vpop.f32.mrb[0].mxu0
      %4080 = vmatprep.mubr.bf16.mxu0 0
      %4081 = vmatmul.mubr.bf16.gmra.mrb[0].mxu0 %v3934
      %v4082 = vpop.f32.mrb[0].mxu0
      %v4083 = vadd.f32 %v3890, %v4082
      %v4084 = vpop.f32.mrb[0].mxu0
      %v4085 = vpop.f32.mrb[0].mxu0
      %v4086 = vadd.f32 %v3890, %v4085
      %v4087 = vpop.f32.mrb[0].mxu0
      %4088 = vmatprep.mubr.bf16.mxu0 0
      %4089 = vmatmul.mubr.bf16.gmra.mrb[0].mxu0 %v3936
      %v4090 = vpop.f32.mrb[0].mxu0
      %v4091 = vadd.f32 %v3890, %v4090
      %v4092 = vpop.f32.mrb[0].mxu0
      %v4093 = vpop.f32.mrb[0].mxu0
      %v4094 = vadd.f32 %v3890, %v4093
      %v4095 = vpop.f32.mrb[0].mxu0
      %4096 = vmatprep.mubr.bf16.mxu0 0
      %4097 = vmatmul.mubr.bf16.gmra.mrb[0].mxu0 %v3938
      %v4098 = vpop.f32.mrb[0].mxu0
      %v4099 = vadd.f32 %v3890, %v4098
      %v4100 = vpop.f32.mrb[0].mxu0
      %v4101 = vpop.f32.mrb[0].mxu0
      %v4102 = vadd.f32 %v3890, %v4101
      %v4103 = vpop.f32.mrb[0].mxu0
      %4104 = vdwg.mxu0
      %v4105 = vmax.f32 %v3979, 0.0
      %v4106 = vmax.f32 %v3982, 0.0
      %v4107 = vmax.f32 %v3987, 0.0
      %v4108 = vmax.f32 %v3990, 0.0
      %v4109 = vmax.f32 %v3995, 0.0
      %v4110 = vmax.f32 %v3998, 0.0
      %v4111 = vmax.f32 %v4003, 0.0
      %v4112 = vmax.f32 %v4006, 0.0
      %v4113 = vmax.f32 %v4011, 0.0
      %v4114 = vmax.f32 %v4014, 0.0
      %v4115 = vmax.f32 %v4019, 0.0
      %v4116 = vmax.f32 %v4022, 0.0
      %v4117 = vmax.f32 %v4027, 0.0
      %v4118 = vmax.f32 %v4030, 0.0
      %v4119 = vmax.f32 %v4035, 0.0
      %v4120 = vmax.f32 %v4038, 0.0
      %v4121 = vmax.f32 %v4043, 0.0
      %v4122 = vmax.f32 %v4046, 0.0
      %v4123 = vmax.f32 %v4051, 0.0
      %v4124 = vmax.f32 %v4054, 0.0
      %v4125 = vmax.f32 %v4059, 0.0
      %v4126 = vmax.f32 %v4062, 0.0
      %v4127 = vmax.f32 %v4067, 0.0
      %v4128 = vmax.f32 %v4070, 0.0
      %v4129 = vmax.f32 %v4075, 0.0
      %v4130 = vmax.f32 %v4078, 0.0
      %v4131 = vmax.f32 %v4083, 0.0
      %v4132 = vmax.f32 %v4086, 0.0
      %v4133 = vmax.f32 %v4091, 0.0
      %v4134 = vmax.f32 %v4094, 0.0
      %v4135 = vmax.f32 %v4099, 0.0
      %v4136 = vmax.f32 %v4102, 0.0
      %vm4137 = vcmask 60416
      %4138 = vst.msk [vmem:[#allocation3] sm:$0xf] %vm4137, 0
      %4139 = vst.msk [vmem:[#allocation3 + $0x4] sm:$0xf] %vm4137, 0
      %vm4140 = vcmask 57344
      %4141 = vst.msk [vmem:[#allocation3 + $0x8] sm:$0x1] %vm4140, 0
      %s4142 = scalar_lea.vmem [#allocation3], 204
      %4143 = vst.msk [vmem:[%s4142] sm:$0xf] %vm4137, 0
      %4144 = vst.msk [vmem:[%s4142 + $0x4] sm:$0xf] %vm4137, 0
      %4145 = vst.msk [vmem:[%s4142 + $0x8] sm:$0x1] %vm4140, 0
      %s4146 = scalar_lea.vmem [#allocation3], 12
      %vm4147 = vcmask 57344
      %vm4148 = vmand %vm4147, %vm323
      %v4149 = vld [vmem:[%s4146] sm:$0x1]
      %v4150 = vsel %vm4148, 0, %v4149
      %4151 = vst [vmem:[%s4146] sm:$0x1] %v4150
      %v4152 = vld [vmem:[%s4146 + $0xc] sm:$0x1]
      %v4153 = vsel %vm4148, 0, %v4152
      %4154 = vst [vmem:[%s4146 + $0xc] sm:$0x1] %v4153
      %v4155 = vld [vmem:[%s4146 + $0x18] sm:$0x1]
      %v4156 = vsel %vm4148, 0, %v4155
      %4157 = vst [vmem:[%s4146 + $0x18] sm:$0x1] %v4156
      %v4158 = vld [vmem:[%s4146 + $0x24] sm:$0x1]
      %v4159 = vsel %vm4148, 0, %v4158
      %4160 = vst [vmem:[%s4146 + $0x24] sm:$0x1] %v4159
      %v4161 = vld [vmem:[%s4146 + $0x30] sm:$0x1]
      %v4162 = vsel %vm4148, 0, %v4161
      %4163 = vst [vmem:[%s4146 + $0x30] sm:$0x1] %v4162
      %v4164 = vld [vmem:[%s4146 + $0x3c] sm:$0x1]
      %v4165 = vsel %vm4148, 0, %v4164
      %4166 = vst [vmem:[%s4146 + $0x3c] sm:$0x1] %v4165
      %v4167 = vld [vmem:[%s4146 + $0x48] sm:$0x1]
      %v4168 = vsel %vm4148, 0, %v4167
      %4169 = vst [vmem:[%s4146 + $0x48] sm:$0x1] %v4168
      %v4170 = vld [vmem:[%s4146 + $0x54] sm:$0x1]
      %v4171 = vsel %vm4148, 0, %v4170
      %4172 = vst [vmem:[%s4146 + $0x54] sm:$0x1] %v4171
      %v4173 = vld [vmem:[%s4146 + $0x60] sm:$0x1]
      %v4174 = vsel %vm4148, 0, %v4173
      %4175 = vst [vmem:[%s4146 + $0x60] sm:$0x1] %v4174
      %v4176 = vld [vmem:[%s4146 + $0x6c] sm:$0x1]
      %v4177 = vsel %vm4148, 0, %v4176
      %4178 = vst [vmem:[%s4146 + $0x6c] sm:$0x1] %v4177
      %v4179 = vld [vmem:[%s4146 + $0x78] sm:$0x1]
      %v4180 = vsel %vm4148, 0, %v4179
      %4181 = vst [vmem:[%s4146 + $0x78] sm:$0x1] %v4180
      %v4182 = vld [vmem:[%s4146 + $0x84] sm:$0x1]
      %v4183 = vsel %vm4148, 0, %v4182
      %4184 = vst [vmem:[%s4146 + $0x84] sm:$0x1] %v4183
      %v4185 = vld [vmem:[%s4146 + $0x90] sm:$0x1]
      %v4186 = vsel %vm4148, 0, %v4185
      %4187 = vst [vmem:[%s4146 + $0x90] sm:$0x1] %v4186
      %v4188 = vld [vmem:[%s4146 + $0x9c] sm:$0x1]
      %v4189 = vsel %vm4148, 0, %v4188
      %4190 = vst [vmem:[%s4146 + $0x9c] sm:$0x1] %v4189
      %v4191 = vld [vmem:[%s4146 + $0xa8] sm:$0x1]
      %v4192 = vsel %vm4148, 0, %v4191
      %4193 = vst [vmem:[%s4146 + $0xa8] sm:$0x1] %v4192
      %v4194 = vld [vmem:[%s4146 + $0xb4] sm:$0x1]
      %v4195 = vsel %vm4148, 0, %v4194
      %4196 = vst [vmem:[%s4146 + $0xb4] sm:$0x1] %v4195
      %vm4197 = vmand %vm4147, %vm373
      %v4198 = vld [vmem:[%s4146 + $0x8] sm:$0x1]
      %v4199 = vsel %vm4197, 0, %v4198
      %4200 = vst [vmem:[%s4146 + $0x8] sm:$0x1] %v4199
      %v4201 = vld [vmem:[%s4146 + $0x14] sm:$0x1]
      %v4202 = vsel %vm4197, 0, %v4201
      %4203 = vst [vmem:[%s4146 + $0x14] sm:$0x1] %v4202
      %v4204 = vld [vmem:[%s4146 + $0x20] sm:$0x1]
      %v4205 = vsel %vm4197, 0, %v4204
      %4206 = vst [vmem:[%s4146 + $0x20] sm:$0x1] %v4205
      %v4207 = vld [vmem:[%s4146 + $0x2c] sm:$0x1]
      %v4208 = vsel %vm4197, 0, %v4207
      %4209 = vst [vmem:[%s4146 + $0x2c] sm:$0x1] %v4208
      %v4210 = vld [vmem:[%s4146 + $0x38] sm:$0x1]
      %v4211 = vsel %vm4197, 0, %v4210
      %4212 = vst [vmem:[%s4146 + $0x38] sm:$0x1] %v4211
      %v4213 = vld [vmem:[%s4146 + $0x44] sm:$0x1]
      %v4214 = vsel %vm4197, 0, %v4213
      %4215 = vst [vmem:[%s4146 + $0x44] sm:$0x1] %v4214
      %v4216 = vld [vmem:[%s4146 + $0x50] sm:$0x1]
      %v4217 = vsel %vm4197, 0, %v4216
      %4218 = vst [vmem:[%s4146 + $0x50] sm:$0x1] %v4217
      %v4219 = vld [vmem:[%s4146 + $0x5c] sm:$0x1]
      %v4220 = vsel %vm4197, 0, %v4219
      %4221 = vst [vmem:[%s4146 + $0x5c] sm:$0x1] %v4220
      %v4222 = vld [vmem:[%s4146 + $0x68] sm:$0x1]
      %v4223 = vsel %vm4197, 0, %v4222
      %4224 = vst [vmem:[%s4146 + $0x68] sm:$0x1] %v4223
      %v4225 = vld [vmem:[%s4146 + $0x74] sm:$0x1]
      %v4226 = vsel %vm4197, 0, %v4225
      %4227 = vst [vmem:[%s4146 + $0x74] sm:$0x1] %v4226
      %v4228 = vld [vmem:[%s4146 + $0x80] sm:$0x1]
      %v4229 = vsel %vm4197, 0, %v4228
      %4230 = vst [vmem:[%s4146 + $0x80] sm:$0x1] %v4229
      %v4231 = vld [vmem:[%s4146 + $0x8c] sm:$0x1]
      %v4232 = vsel %vm4197, 0, %v4231
      %4233 = vst [vmem:[%s4146 + $0x8c] sm:$0x1] %v4232
      %v4234 = vld [vmem:[%s4146 + $0x98] sm:$0x1]
      %v4235 = vsel %vm4197, 0, %v4234
      %4236 = vst [vmem:[%s4146 + $0x98] sm:$0x1] %v4235
      %v4237 = vld [vmem:[%s4146 + $0xa4] sm:$0x1]
      %v4238 = vsel %vm4197, 0, %v4237
      %4239 = vst [vmem:[%s4146 + $0xa4] sm:$0x1] %v4238
      %v4240 = vld [vmem:[%s4146 + $0xb0] sm:$0x1]
      %v4241 = vsel %vm4197, 0, %v4240
      %4242 = vst [vmem:[%s4146 + $0xb0] sm:$0x1] %v4241
      %v4243 = vld [vmem:[%s4146 + $0xbc] sm:$0x1]
      %v4244 = vsel %vm4197, 0, %v4243
      %4245 = vst [vmem:[%s4146 + $0xbc] sm:$0x1] %v4244
      %v4246 = vpack.c.bf16 %v4106, %v4105
      %v4247 = vpack.c.bf16 %v4108, %v4107
      %v4248 = vpack.c.bf16 %v4110, %v4109
      %v4249 = vpack.c.bf16 %v4112, %v4111
      %v4250 = vpack.c.bf16 %v4114, %v4113
      %v4251 = vpack.c.bf16 %v4116, %v4115
      %v4252 = vpack.c.bf16 %v4118, %v4117
      %v4253 = vpack.c.bf16 %v4120, %v4119
      %v4254 = vpack.c.bf16 %v4122, %v4121
      %v4255 = vpack.c.bf16 %v4124, %v4123
      %v4256 = vpack.c.bf16 %v4126, %v4125
      %v4257 = vpack.c.bf16 %v4128, %v4127
      %v4258 = vpack.c.bf16 %v4130, %v4129
      %v4259 = vpack.c.bf16 %v4132, %v4131
      %v4260 = vpack.c.bf16 %v4134, %v4133
      %v4261 = vpack.c.bf16 %v4136, %v4135
      %v4278 = vunpack.c.l.b16 %v4246
      %v4279 = vunpack.c.h.b16 %v4246
      %v4280 = vunpack.c.l.b16 %v4247
      %v4281 = vunpack.c.h.b16 %v4247
      %v4282 = vunpack.c.l.b16 %v4248
      %v4283 = vunpack.c.h.b16 %v4248
      %v4284 = vunpack.c.l.b16 %v4249
      %v4285 = vunpack.c.h.b16 %v4249
      %v4286 = vunpack.c.l.b16 %v4250
      %v4287 = vunpack.c.h.b16 %v4250
      %v4288 = vunpack.c.l.b16 %v4251
      %v4289 = vunpack.c.h.b16 %v4251
      %v4290 = vunpack.c.l.b16 %v4252
      %v4291 = vunpack.c.h.b16 %v4252
      %v4292 = vunpack.c.l.b16 %v4253
      %v4293 = vunpack.c.h.b16 %v4253
      %v4294 = vunpack.c.l.b16 %v4254
      %v4295 = vunpack.c.h.b16 %v4254
      %v4296 = vunpack.c.l.b16 %v4255
      %v4297 = vunpack.c.h.b16 %v4255
      %v4298 = vunpack.c.l.b16 %v4256
      %v4299 = vunpack.c.h.b16 %v4256
      %v4300 = vunpack.c.l.b16 %v4257
      %v4301 = vunpack.c.h.b16 %v4257
      %v4302 = vunpack.c.l.b16 %v4258
      %v4303 = vunpack.c.h.b16 %v4258
      %v4304 = vunpack.c.l.b16 %v4259
      %v4305 = vunpack.c.h.b16 %v4259
      %v4306 = vunpack.c.l.b16 %v4260
      %v4307 = vunpack.c.h.b16 %v4260
      %v4308 = vunpack.c.l.b16 %v4261
      %v4309 = vunpack.c.h.b16 %v4261
      %v4310 = vpack.c.b16 %v4278, %v4278
      %v4311 = vpack.c.b16 %v4279, %v4279
      %v4312 = vpack.c.b16 %v4280, %v4280
      %v4313 = vpack.c.b16 %v4281, %v4281
      %v4314 = vpack.c.b16 %v4282, %v4282
      %v4315 = vpack.c.b16 %v4283, %v4283
      %v4316 = vpack.c.b16 %v4284, %v4284
      %v4317 = vpack.c.b16 %v4285, %v4285
      %v4318 = vpack.c.b16 %v4286, %v4286
      %v4319 = vpack.c.b16 %v4287, %v4287
      %v4320 = vpack.c.b16 %v4288, %v4288
      %v4321 = vpack.c.b16 %v4289, %v4289
      %v4322 = vpack.c.b16 %v4290, %v4290
      %v4323 = vpack.c.b16 %v4291, %v4291
      %v4324 = vpack.c.b16 %v4292, %v4292
      %v4325 = vpack.c.b16 %v4293, %v4293
      %v4326 = vpack.c.b16 %v4294, %v4294
      %v4327 = vpack.c.b16 %v4295, %v4295
      %v4328 = vpack.c.b16 %v4296, %v4296
      %v4329 = vpack.c.b16 %v4297, %v4297
      %v4330 = vpack.c.b16 %v4298, %v4298
      %v4331 = vpack.c.b16 %v4299, %v4299
      %v4332 = vpack.c.b16 %v4300, %v4300
      %v4333 = vpack.c.b16 %v4301, %v4301
      %v4334 = vpack.c.b16 %v4302, %v4302
      %v4335 = vpack.c.b16 %v4303, %v4303
      %v4336 = vpack.c.b16 %v4304, %v4304
      %v4337 = vpack.c.b16 %v4305, %v4305
      %v4338 = vpack.c.b16 %v4306, %v4306
      %v4339 = vpack.c.b16 %v4307, %v4307
      %v4340 = vpack.c.b16 %v4308, %v4308
      %v4341 = vpack.c.b16 %v4309, %v4309
      %v4343 = vshrl.u32 %v4310, 16
      %v4345 = vrot.slane %v4343, 7
      %v4346 = vshll.u32 %v4310, 16
      %v4348 = vor.u32 %v4345, %v4346
      %v4349 = vrot.slane %v4345, 4
      %v4351 = vshrl.u32 %v4311, 16
      %v4353 = vrot.slane %v4351, 7
      %v4354 = vshll.u32 %v4311, 16
      %v4356 = vor.u32 %v4353, %v4354
      %v4357 = vsel %vm598, %v4349, %v4356
      %v4358 = vrot.slane %v4353, 4
      %v4360 = vshrl.u32 %v4312, 16
      %v4362 = vrot.slane %v4360, 7
      %v4363 = vshll.u32 %v4312, 16
      %v4365 = vor.u32 %v4362, %v4363
      %v4366 = vrot.slane %v4362, 4
      %v4368 = vshrl.u32 %v4313, 16
      %v4370 = vrot.slane %v4368, 7
      %v4371 = vshll.u32 %v4313, 16
      %v4373 = vor.u32 %v4370, %v4371
      %v4374 = vsel %vm598, %v4366, %v4373
      %v4375 = vrot.slane %v4370, 4
      %v4377 = vshrl.u32 %v4314, 16
      %v4379 = vrot.slane %v4377, 7
      %v4380 = vshll.u32 %v4314, 16
      %v4382 = vor.u32 %v4379, %v4380
      %v4383 = vrot.slane %v4379, 4
      %v4385 = vshrl.u32 %v4315, 16
      %v4387 = vrot.slane %v4385, 7
      %v4388 = vshll.u32 %v4315, 16
      %v4390 = vor.u32 %v4387, %v4388
      %v4391 = vsel %vm598, %v4383, %v4390
      %v4392 = vrot.slane %v4387, 4
      %v4394 = vshrl.u32 %v4316, 16
      %v4396 = vrot.slane %v4394, 7
      %v4397 = vshll.u32 %v4316, 16
      %v4399 = vor.u32 %v4396, %v4397
      %v4400 = vrot.slane %v4396, 4
      %v4402 = vshrl.u32 %v4317, 16
      %v4404 = vrot.slane %v4402, 7
      %v4405 = vshll.u32 %v4317, 16
      %v4407 = vor.u32 %v4404, %v4405
      %v4408 = vsel %vm598, %v4400, %v4407
      %v4409 = vrot.slane %v4404, 4
      %v4411 = vshrl.u32 %v4318, 16
      %v4413 = vrot.slane %v4411, 7
      %v4414 = vshll.u32 %v4318, 16
      %v4416 = vor.u32 %v4413, %v4414
      %v4417 = vrot.slane %v4413, 4
      %v4419 = vshrl.u32 %v4319, 16
      %v4421 = vrot.slane %v4419, 7
      %v4422 = vshll.u32 %v4319, 16
      %v4424 = vor.u32 %v4421, %v4422
      %v4425 = vsel %vm598, %v4417, %v4424
      %v4426 = vrot.slane %v4421, 4
      %v4428 = vshrl.u32 %v4320, 16
      %v4430 = vrot.slane %v4428, 7
      %v4431 = vshll.u32 %v4320, 16
      %v4433 = vor.u32 %v4430, %v4431
      %v4434 = vrot.slane %v4430, 4
      %v4436 = vshrl.u32 %v4321, 16
      %v4438 = vrot.slane %v4436, 7
      %v4439 = vshll.u32 %v4321, 16
      %v4441 = vor.u32 %v4438, %v4439
      %v4442 = vsel %vm598, %v4434, %v4441
      %v4443 = vrot.slane %v4438, 4
      %v4445 = vshrl.u32 %v4322, 16
      %v4447 = vrot.slane %v4445, 7
      %v4448 = vshll.u32 %v4322, 16
      %v4450 = vor.u32 %v4447, %v4448
      %v4451 = vrot.slane %v4447, 4
      %v4453 = vshrl.u32 %v4323, 16
      %v4455 = vrot.slane %v4453, 7
      %v4456 = vshll.u32 %v4323, 16
      %v4458 = vor.u32 %v4455, %v4456
      %v4459 = vsel %vm598, %v4451, %v4458
      %v4460 = vrot.slane %v4455, 4
      %v4462 = vshrl.u32 %v4324, 16
      %v4464 = vrot.slane %v4462, 7
      %v4465 = vshll.u32 %v4324, 16
      %v4467 = vor.u32 %v4464, %v4465
      %v4468 = vrot.slane %v4464, 4
      %v4470 = vshrl.u32 %v4325, 16
      %v4472 = vrot.slane %v4470, 7
      %v4473 = vshll.u32 %v4325, 16
      %v4475 = vor.u32 %v4472, %v4473
      %v4476 = vsel %vm598, %v4468, %v4475
      %v4477 = vrot.slane %v4472, 4
      %v4479 = vshrl.u32 %v4326, 16
      %v4481 = vrot.slane %v4479, 7
      %v4482 = vshll.u32 %v4326, 16
      %v4484 = vor.u32 %v4481, %v4482
      %v4485 = vrot.slane %v4481, 4
      %v4487 = vshrl.u32 %v4327, 16
      %v4489 = vrot.slane %v4487, 7
      %v4490 = vshll.u32 %v4327, 16
      %v4492 = vor.u32 %v4489, %v4490
      %v4493 = vsel %vm598, %v4485, %v4492
      %v4494 = vrot.slane %v4489, 4
      %v4496 = vshrl.u32 %v4328, 16
      %v4498 = vrot.slane %v4496, 7
      %v4499 = vshll.u32 %v4328, 16
      %v4501 = vor.u32 %v4498, %v4499
      %v4502 = vrot.slane %v4498, 4
      %v4504 = vshrl.u32 %v4329, 16
      %v4506 = vrot.slane %v4504, 7
      %v4507 = vshll.u32 %v4329, 16
      %v4509 = vor.u32 %v4506, %v4507
      %v4510 = vsel %vm598, %v4502, %v4509
      %v4511 = vrot.slane %v4506, 4
      %v4513 = vshrl.u32 %v4330, 16
      %v4515 = vrot.slane %v4513, 7
      %v4516 = vshll.u32 %v4330, 16
      %v4518 = vor.u32 %v4515, %v4516
      %v4519 = vrot.slane %v4515, 4
      %v4521 = vshrl.u32 %v4331, 16
      %v4523 = vrot.slane %v4521, 7
      %v4524 = vshll.u32 %v4331, 16
      %v4526 = vor.u32 %v4523, %v4524
      %v4527 = vsel %vm598, %v4519, %v4526
      %v4528 = vrot.slane %v4523, 4
      %v4530 = vshrl.u32 %v4332, 16
      %v4532 = vrot.slane %v4530, 7
      %v4533 = vshll.u32 %v4332, 16
      %v4535 = vor.u32 %v4532, %v4533
      %v4536 = vrot.slane %v4532, 4
      %v4538 = vshrl.u32 %v4333, 16
      %v4540 = vrot.slane %v4538, 7
      %v4541 = vshll.u32 %v4333, 16
      %v4543 = vor.u32 %v4540, %v4541
      %v4544 = vsel %vm598, %v4536, %v4543
      %v4545 = vrot.slane %v4540, 4
      %v4547 = vshrl.u32 %v4334, 16
      %v4549 = vrot.slane %v4547, 7
      %v4550 = vshll.u32 %v4334, 16
      %v4552 = vor.u32 %v4549, %v4550
      %v4553 = vrot.slane %v4549, 4
      %v4555 = vshrl.u32 %v4335, 16
      %v4557 = vrot.slane %v4555, 7
      %v4558 = vshll.u32 %v4335, 16
      %v4560 = vor.u32 %v4557, %v4558
      %v4561 = vsel %vm598, %v4553, %v4560
      %v4562 = vrot.slane %v4557, 4
      %v4564 = vshrl.u32 %v4336, 16
      %v4566 = vrot.slane %v4564, 7
      %v4567 = vshll.u32 %v4336, 16
      %v4569 = vor.u32 %v4566, %v4567
      %v4570 = vrot.slane %v4566, 4
      %v4572 = vshrl.u32 %v4337, 16
      %v4574 = vrot.slane %v4572, 7
      %v4575 = vshll.u32 %v4337, 16
      %v4577 = vor.u32 %v4574, %v4575
      %v4578 = vsel %vm598, %v4570, %v4577
      %v4579 = vrot.slane %v4574, 4
      %v4581 = vshrl.u32 %v4338, 16
      %v4583 = vrot.slane %v4581, 7
      %v4584 = vshll.u32 %v4338, 16
      %v4586 = vor.u32 %v4583, %v4584
      %v4587 = vrot.slane %v4583, 4
      %v4589 = vshrl.u32 %v4339, 16
      %v4591 = vrot.slane %v4589, 7
      %v4592 = vshll.u32 %v4339, 16
      %v4594 = vor.u32 %v4591, %v4592
      %v4595 = vsel %vm598, %v4587, %v4594
      %v4596 = vrot.slane %v4591, 4
      %v4598 = vshrl.u32 %v4340, 16
      %v4600 = vrot.slane %v4598, 7
      %v4601 = vshll.u32 %v4340, 16
      %v4603 = vor.u32 %v4600, %v4601
      %v4604 = vrot.slane %v4600, 4
      %v4606 = vshrl.u32 %v4341, 16
      %v4608 = vrot.slane %v4606, 7
      %v4609 = vshll.u32 %v4341, 16
      %v4611 = vor.u32 %v4608, %v4609
      %v4612 = vsel %vm598, %v4604, %v4611
      %v4613 = vrot.slane %v4608, 4
      %vm4662 = vcmask 60416
      %vm4663 = vmand %vm4662, %vm373
      %v4664 = vld [vmem:[%s4146] sm:$0xf]
      %v4665 = vsel %vm4663, %v4348, %v4664
      %4666 = vst [vmem:[%s4146] sm:$0xf] %v4665
      %4667 = vst.msk [vmem:[%s4146 + $0x4] sm:$0xf] %vm4137, %v4357
      %v4668 = vld [vmem:[%s4146 + $0x8] sm:$0x1]
      %v4669 = vsel %vm4148, %v4358, %v4668
      %4670 = vst [vmem:[%s4146 + $0x8] sm:$0x1] %v4669
      %v4671 = vld [vmem:[%s4146 + $0xc] sm:$0xf]
      %v4672 = vsel %vm4663, %v4365, %v4671
      %4673 = vst [vmem:[%s4146 + $0xc] sm:$0xf] %v4672
      %4674 = vst.msk [vmem:[%s4146 + $0x10] sm:$0xf] %vm4137, %v4374
      %v4675 = vld [vmem:[%s4146 + $0x14] sm:$0x1]
      %v4676 = vsel %vm4148, %v4375, %v4675
      %4677 = vst [vmem:[%s4146 + $0x14] sm:$0x1] %v4676
      %v4678 = vld [vmem:[%s4146 + $0x18] sm:$0xf]
      %v4679 = vsel %vm4663, %v4382, %v4678
      %4680 = vst [vmem:[%s4146 + $0x18] sm:$0xf] %v4679
      %4681 = vst.msk [vmem:[%s4146 + $0x1c] sm:$0xf] %vm4137, %v4391
      %v4682 = vld [vmem:[%s4146 + $0x20] sm:$0x1]
      %v4683 = vsel %vm4148, %v4392, %v4682
      %4684 = vst [vmem:[%s4146 + $0x20] sm:$0x1] %v4683
      %v4685 = vld [vmem:[%s4146 + $0x24] sm:$0xf]
      %v4686 = vsel %vm4663, %v4399, %v4685
      %4687 = vst [vmem:[%s4146 + $0x24] sm:$0xf] %v4686
      %4688 = vst.msk [vmem:[%s4146 + $0x28] sm:$0xf] %vm4137, %v4408
      %v4689 = vld [vmem:[%s4146 + $0x2c] sm:$0x1]
      %v4690 = vsel %vm4148, %v4409, %v4689
      %4691 = vst [vmem:[%s4146 + $0x2c] sm:$0x1] %v4690
      %v4692 = vld [vmem:[%s4146 + $0x30] sm:$0xf]
      %v4693 = vsel %vm4663, %v4416, %v4692
      %4694 = vst [vmem:[%s4146 + $0x30] sm:$0xf] %v4693
      %4695 = vst.msk [vmem:[%s4146 + $0x34] sm:$0xf] %vm4137, %v4425
      %v4696 = vld [vmem:[%s4146 + $0x38] sm:$0x1]
      %v4697 = vsel %vm4148, %v4426, %v4696
      %4698 = vst [vmem:[%s4146 + $0x38] sm:$0x1] %v4697
      %v4699 = vld [vmem:[%s4146 + $0x3c] sm:$0xf]
      %v4700 = vsel %vm4663, %v4433, %v4699
      %4701 = vst [vmem:[%s4146 + $0x3c] sm:$0xf] %v4700
      %4702 = vst.msk [vmem:[%s4146 + $0x40] sm:$0xf] %vm4137, %v4442
      %v4703 = vld [vmem:[%s4146 + $0x44] sm:$0x1]
      %v4704 = vsel %vm4148, %v4443, %v4703
      %4705 = vst [vmem:[%s4146 + $0x44] sm:$0x1] %v4704
      %v4706 = vld [vmem:[%s4146 + $0x48] sm:$0xf]
      %v4707 = vsel %vm4663, %v4450, %v4706
      %4708 = vst [vmem:[%s4146 + $0x48] sm:$0xf] %v4707
      %4709 = vst.msk [vmem:[%s4146 + $0x4c] sm:$0xf] %vm4137, %v4459
      %v4710 = vld [vmem:[%s4146 + $0x50] sm:$0x1]
      %v4711 = vsel %vm4148, %v4460, %v4710
      %4712 = vst [vmem:[%s4146 + $0x50] sm:$0x1] %v4711
      %v4713 = vld [vmem:[%s4146 + $0x54] sm:$0xf]
      %v4714 = vsel %vm4663, %v4467, %v4713
      %4715 = vst [vmem:[%s4146 + $0x54] sm:$0xf] %v4714
      %4716 = vst.msk [vmem:[%s4146 + $0x58] sm:$0xf] %vm4137, %v4476
      %v4717 = vld [vmem:[%s4146 + $0x5c] sm:$0x1]
      %v4718 = vsel %vm4148, %v4477, %v4717
      %4719 = vst [vmem:[%s4146 + $0x5c] sm:$0x1] %v4718
      %v4720 = vld [vmem:[%s4146 + $0x60] sm:$0xf]
      %v4721 = vsel %vm4663, %v4484, %v4720
      %4722 = vst [vmem:[%s4146 + $0x60] sm:$0xf] %v4721
      %4723 = vst.msk [vmem:[%s4146 + $0x64] sm:$0xf] %vm4137, %v4493
      %v4724 = vld [vmem:[%s4146 + $0x68] sm:$0x1]
      %v4725 = vsel %vm4148, %v4494, %v4724
      %4726 = vst [vmem:[%s4146 + $0x68] sm:$0x1] %v4725
      %v4727 = vld [vmem:[%s4146 + $0x6c] sm:$0xf]
      %v4728 = vsel %vm4663, %v4501, %v4727
      %4729 = vst [vmem:[%s4146 + $0x6c] sm:$0xf] %v4728
      %4730 = vst.msk [vmem:[%s4146 + $0x70] sm:$0xf] %vm4137, %v4510
      %v4731 = vld [vmem:[%s4146 + $0x74] sm:$0x1]
      %v4732 = vsel %vm4148, %v4511, %v4731
      %4733 = vst [vmem:[%s4146 + $0x74] sm:$0x1] %v4732
      %v4734 = vld [vmem:[%s4146 + $0x78] sm:$0xf]
      %v4735 = vsel %vm4663, %v4518, %v4734
      %4736 = vst [vmem:[%s4146 + $0x78] sm:$0xf] %v4735
      %4737 = vst.msk [vmem:[%s4146 + $0x7c] sm:$0xf] %vm4137, %v4527
      %v4738 = vld [vmem:[%s4146 + $0x80] sm:$0x1]
      %v4739 = vsel %vm4148, %v4528, %v4738
      %4740 = vst [vmem:[%s4146 + $0x80] sm:$0x1] %v4739
      %v4741 = vld [vmem:[%s4146 + $0x84] sm:$0xf]
      %v4742 = vsel %vm4663, %v4535, %v4741
      %4743 = vst [vmem:[%s4146 + $0x84] sm:$0xf] %v4742
      %4744 = vst.msk [vmem:[%s4146 + $0x88] sm:$0xf] %vm4137, %v4544
      %v4745 = vld [vmem:[%s4146 + $0x8c] sm:$0x1]
      %v4746 = vsel %vm4148, %v4545, %v4745
      %4747 = vst [vmem:[%s4146 + $0x8c] sm:$0x1] %v4746
      %v4748 = vld [vmem:[%s4146 + $0x90] sm:$0xf]
      %v4749 = vsel %vm4663, %v4552, %v4748
      %4750 = vst [vmem:[%s4146 + $0x90] sm:$0xf] %v4749
      %4751 = vst.msk [vmem:[%s4146 + $0x94] sm:$0xf] %vm4137, %v4561
      %v4752 = vld [vmem:[%s4146 + $0x98] sm:$0x1]
      %v4753 = vsel %vm4148, %v4562, %v4752
      %4754 = vst [vmem:[%s4146 + $0x98] sm:$0x1] %v4753
      %v4755 = vld [vmem:[%s4146 + $0x9c] sm:$0xf]
      %v4756 = vsel %vm4663, %v4569, %v4755
      %4757 = vst [vmem:[%s4146 + $0x9c] sm:$0xf] %v4756
      %4758 = vst.msk [vmem:[%s4146 + $0xa0] sm:$0xf] %vm4137, %v4578
      %v4759 = vld [vmem:[%s4146 + $0xa4] sm:$0x1]
      %v4760 = vsel %vm4148, %v4579, %v4759
      %4761 = vst [vmem:[%s4146 + $0xa4] sm:$0x1] %v4760
      %v4762 = vld [vmem:[%s4146 + $0xa8] sm:$0xf]
      %v4763 = vsel %vm4663, %v4586, %v4762
      %4764 = vst [vmem:[%s4146 + $0xa8] sm:$0xf] %v4763
      %4765 = vst.msk [vmem:[%s4146 + $0xac] sm:$0xf] %vm4137, %v4595
      %v4766 = vld [vmem:[%s4146 + $0xb0] sm:$0x1]
      %v4767 = vsel %vm4148, %v4596, %v4766
      %4768 = vst [vmem:[%s4146 + $0xb0] sm:$0x1] %v4767
      %v4769 = vld [vmem:[%s4146 + $0xb4] sm:$0xf]
      %v4770 = vsel %vm4663, %v4603, %v4769
      %4771 = vst [vmem:[%s4146 + $0xb4] sm:$0xf] %v4770
      %4772 = vst.msk [vmem:[%s4146 + $0xb8] sm:$0xf] %vm4137, %v4612
      %v4773 = vld [vmem:[%s4146 + $0xbc] sm:$0x1]
      %v4774 = vsel %vm4148, %v4613, %v4773
      %4775 = vst [vmem:[%s4146 + $0xbc] sm:$0x1] %v4774
      %v4776 = vld [vmem:[#allocation3] sm:$0xf]
      %v4777 = vld [vmem:[#allocation3 + $0x4] sm:$0xf]
      %v4778 = vld [vmem:[#allocation3 + $0xc] sm:$0xf]
      %v4779 = vld [vmem:[#allocation3 + $0x10] sm:$0xf]
      %v4780 = vld [vmem:[#allocation3 + $0x18] sm:$0xf]
      %v4781 = vld [vmem:[#allocation3 + $0x1c] sm:$0xf]
      %v4782 = vld [vmem:[#allocation3 + $0x24] sm:$0xf]
      %v4783 = vld [vmem:[#allocation3 + $0x28] sm:$0xf]
      %v4784 = vld [vmem:[#allocation3 + $0x30] sm:$0xf]
      %v4785 = vld [vmem:[#allocation3 + $0x34] sm:$0xf]
      %v4786 = vld [vmem:[#allocation3 + $0x3c] sm:$0xf]
      %v4787 = vld [vmem:[#allocation3 + $0x40] sm:$0xf]
      %v4788 = vld [vmem:[#allocation3 + $0x48] sm:$0xf]
      %v4789 = vld [vmem:[#allocation3 + $0x4c] sm:$0xf]
      %v4790 = vld [vmem:[#allocation3 + $0x54] sm:$0xf]
      %v4791 = vld [vmem:[#allocation3 + $0x58] sm:$0xf]
      %v4792 = vld [vmem:[#allocation3 + $0x60] sm:$0xf]
      %v4793 = vld [vmem:[#allocation3 + $0x64] sm:$0xf]
      %v4794 = vld [vmem:[#allocation3 + $0x6c] sm:$0xf]
      %v4795 = vld [vmem:[#allocation3 + $0x70] sm:$0xf]
      %v4796 = vld [vmem:[#allocation3 + $0x78] sm:$0xf]
      %v4797 = vld [vmem:[#allocation3 + $0x7c] sm:$0xf]
      %v4798 = vld [vmem:[#allocation3 + $0x84] sm:$0xf]
      %v4799 = vld [vmem:[#allocation3 + $0x88] sm:$0xf]
      %v4800 = vld [vmem:[#allocation3 + $0x90] sm:$0xf]
      %v4801 = vld [vmem:[#allocation3 + $0x94] sm:$0xf]
      %v4802 = vld [vmem:[#allocation3 + $0x9c] sm:$0xf]
      %v4803 = vld [vmem:[#allocation3 + $0xa0] sm:$0xf]
      %v4804 = vld [vmem:[#allocation3 + $0xa8] sm:$0xf]
      %v4805 = vld [vmem:[#allocation3 + $0xac] sm:$0xf]
      %v4806 = vld [vmem:[#allocation3 + $0xb4] sm:$0xf]
      %v4807 = vld [vmem:[#allocation3 + $0xb8] sm:$0xf]
      %v4808 = vld [vmem:[#allocation3 + $0x8] sm:$0x1]
      %v4809 = vld [vmem:[#allocation3 + $0x14] sm:$0x1]
      %v4810 = vld [vmem:[#allocation3 + $0x20] sm:$0x1]
      %v4811 = vld [vmem:[#allocation3 + $0x2c] sm:$0x1]
      %v4812 = vld [vmem:[#allocation3 + $0x38] sm:$0x1]
      %v4813 = vld [vmem:[#allocation3 + $0x44] sm:$0x1]
      %v4814 = vld [vmem:[#allocation3 + $0x50] sm:$0x1]
      %v4815 = vld [vmem:[#allocation3 + $0x5c] sm:$0x1]
      %v4816 = vld [vmem:[#allocation3 + $0x68] sm:$0x1]
      %v4817 = vld [vmem:[#allocation3 + $0x74] sm:$0x1]
      %v4818 = vld [vmem:[#allocation3 + $0x80] sm:$0x1]
      %v4819 = vld [vmem:[#allocation3 + $0x8c] sm:$0x1]
      %v4820 = vld [vmem:[#allocation3 + $0x98] sm:$0x1]
      %v4821 = vld [vmem:[#allocation3 + $0xa4] sm:$0x1]
      %v4822 = vld [vmem:[#allocation3 + $0xb0] sm:$0x1]
      %v4823 = vld [vmem:[#allocation3 + $0xbc] sm:$0x1]
      %v4825 = vshrl.u32 %v4776, 16
      %v4827 = vrot.slane %v4825, 4
      %v4828 = vshll.u32 %v4776, 16
      %v4830 = vrot.slane %v4828, 5
      %v4831 = vor.u32 %v4827, %v4830
      %v4832 = vrot.slane %v4831, 4
      %v4834 = vshll.u32 %v4777, 16
      %v4836 = vrot.slane %v4834, 5
      %v4837 = vsel %vm1083, %v4832, %v4836
      %v4838 = vshrl.u32 %v4777, 16
      %v4840 = vrot.slane %v4838, 4
      %v4841 = vor.u32 %v4840, %v4836
      %v4842 = vrot.slane %v4841, 4
      %v4844 = vshll.u32 %v4808, 16
      %v4846 = vrot.slane %v4844, 5
      %v4847 = vsel %vm1083, %v4842, %v4846
      %v4849 = vshrl.u32 %v4778, 16
      %v4851 = vrot.slane %v4849, 4
      %v4852 = vshll.u32 %v4778, 16
      %v4854 = vrot.slane %v4852, 5
      %v4855 = vor.u32 %v4851, %v4854
      %v4856 = vrot.slane %v4855, 4
      %v4858 = vshll.u32 %v4779, 16
      %v4860 = vrot.slane %v4858, 5
      %v4861 = vsel %vm1083, %v4856, %v4860
      %v4862 = vshrl.u32 %v4779, 16
      %v4864 = vrot.slane %v4862, 4
      %v4865 = vor.u32 %v4864, %v4860
      %v4866 = vrot.slane %v4865, 4
      %v4868 = vshll.u32 %v4809, 16
      %v4870 = vrot.slane %v4868, 5
      %v4871 = vsel %vm1083, %v4866, %v4870
      %v4873 = vshrl.u32 %v4780, 16
      %v4875 = vrot.slane %v4873, 4
      %v4876 = vshll.u32 %v4780, 16
      %v4878 = vrot.slane %v4876, 5
      %v4879 = vor.u32 %v4875, %v4878
      %v4880 = vrot.slane %v4879, 4
      %v4882 = vshll.u32 %v4781, 16
      %v4884 = vrot.slane %v4882, 5
      %v4885 = vsel %vm1083, %v4880, %v4884
      %v4886 = vshrl.u32 %v4781, 16
      %v4888 = vrot.slane %v4886, 4
      %v4889 = vor.u32 %v4888, %v4884
      %v4890 = vrot.slane %v4889, 4
      %v4892 = vshll.u32 %v4810, 16
      %v4894 = vrot.slane %v4892, 5
      %v4895 = vsel %vm1083, %v4890, %v4894
      %v4897 = vshrl.u32 %v4782, 16
      %v4899 = vrot.slane %v4897, 4
      %v4900 = vshll.u32 %v4782, 16
      %v4902 = vrot.slane %v4900, 5
      %v4903 = vor.u32 %v4899, %v4902
      %v4904 = vrot.slane %v4903, 4
      %v4906 = vshll.u32 %v4783, 16
      %v4908 = vrot.slane %v4906, 5
      %v4909 = vsel %vm1083, %v4904, %v4908
      %v4910 = vshrl.u32 %v4783, 16
      %v4912 = vrot.slane %v4910, 4
      %v4913 = vor.u32 %v4912, %v4908
      %v4914 = vrot.slane %v4913, 4
      %v4916 = vshll.u32 %v4811, 16
      %v4918 = vrot.slane %v4916, 5
      %v4919 = vsel %vm1083, %v4914, %v4918
      %v4921 = vshrl.u32 %v4784, 16
      %v4923 = vrot.slane %v4921, 4
      %v4924 = vshll.u32 %v4784, 16
      %v4926 = vrot.slane %v4924, 5
      %v4927 = vor.u32 %v4923, %v4926
      %v4928 = vrot.slane %v4927, 4
      %v4930 = vshll.u32 %v4785, 16
      %v4932 = vrot.slane %v4930, 5
      %v4933 = vsel %vm1083, %v4928, %v4932
      %v4934 = vshrl.u32 %v4785, 16
      %v4936 = vrot.slane %v4934, 4
      %v4937 = vor.u32 %v4936, %v4932
      %v4938 = vrot.slane %v4937, 4
      %v4940 = vshll.u32 %v4812, 16
      %v4942 = vrot.slane %v4940, 5
      %v4943 = vsel %vm1083, %v4938, %v4942
      %v4945 = vshrl.u32 %v4786, 16
      %v4947 = vrot.slane %v4945, 4
      %v4948 = vshll.u32 %v4786, 16
      %v4950 = vrot.slane %v4948, 5
      %v4951 = vor.u32 %v4947, %v4950
      %v4952 = vrot.slane %v4951, 4
      %v4954 = vshll.u32 %v4787, 16
      %v4956 = vrot.slane %v4954, 5
      %v4957 = vsel %vm1083, %v4952, %v4956
      %v4958 = vshrl.u32 %v4787, 16
      %v4960 = vrot.slane %v4958, 4
      %v4961 = vor.u32 %v4960, %v4956
      %v4962 = vrot.slane %v4961, 4
      %v4964 = vshll.u32 %v4813, 16
      %v4966 = vrot.slane %v4964, 5
      %v4967 = vsel %vm1083, %v4962, %v4966
      %v4969 = vshrl.u32 %v4788, 16
      %v4971 = vrot.slane %v4969, 4
      %v4972 = vshll.u32 %v4788, 16
      %v4974 = vrot.slane %v4972, 5
      %v4975 = vor.u32 %v4971, %v4974
      %v4976 = vrot.slane %v4975, 4
      %v4978 = vshll.u32 %v4789, 16
      %v4980 = vrot.slane %v4978, 5
      %v4981 = vsel %vm1083, %v4976, %v4980
      %v4982 = vshrl.u32 %v4789, 16
      %v4984 = vrot.slane %v4982, 4
      %v4985 = vor.u32 %v4984, %v4980
      %v4986 = vrot.slane %v4985, 4
      %v4988 = vshll.u32 %v4814, 16
      %v4990 = vrot.slane %v4988, 5
      %v4991 = vsel %vm1083, %v4986, %v4990
      %v4993 = vshrl.u32 %v4790, 16
      %v4995 = vrot.slane %v4993, 4
      %v4996 = vshll.u32 %v4790, 16
      %v4998 = vrot.slane %v4996, 5
      %v4999 = vor.u32 %v4995, %v4998
      %v5000 = vrot.slane %v4999, 4
      %v5002 = vshll.u32 %v4791, 16
      %v5004 = vrot.slane %v5002, 5
      %v5005 = vsel %vm1083, %v5000, %v5004
      %v5006 = vshrl.u32 %v4791, 16
      %v5008 = vrot.slane %v5006, 4
      %v5009 = vor.u32 %v5008, %v5004
      %v5010 = vrot.slane %v5009, 4
      %v5012 = vshll.u32 %v4815, 16
      %v5014 = vrot.slane %v5012, 5
      %v5015 = vsel %vm1083, %v5010, %v5014
      %v5017 = vshrl.u32 %v4792, 16
      %v5019 = vrot.slane %v5017, 4
      %v5020 = vshll.u32 %v4792, 16
      %v5022 = vrot.slane %v5020, 5
      %v5023 = vor.u32 %v5019, %v5022
      %v5024 = vrot.slane %v5023, 4
      %v5026 = vshll.u32 %v4793, 16
      %v5028 = vrot.slane %v5026, 5
      %v5029 = vsel %vm1083, %v5024, %v5028
      %v5030 = vshrl.u32 %v4793, 16
      %v5032 = vrot.slane %v5030, 4
      %v5033 = vor.u32 %v5032, %v5028
      %v5034 = vrot.slane %v5033, 4
      %v5036 = vshll.u32 %v4816, 16
      %v5038 = vrot.slane %v5036, 5
      %v5039 = vsel %vm1083, %v5034, %v5038
      %v5041 = vshrl.u32 %v4794, 16
      %v5043 = vrot.slane %v5041, 4
      %v5044 = vshll.u32 %v4794, 16
      %v5046 = vrot.slane %v5044, 5
      %v5047 = vor.u32 %v5043, %v5046
      %v5048 = vrot.slane %v5047, 4
      %v5050 = vshll.u32 %v4795, 16
      %v5052 = vrot.slane %v5050, 5
      %v5053 = vsel %vm1083, %v5048, %v5052
      %v5054 = vshrl.u32 %v4795, 16
      %v5056 = vrot.slane %v5054, 4
      %v5057 = vor.u32 %v5056, %v5052
      %v5058 = vrot.slane %v5057, 4
      %v5060 = vshll.u32 %v4817, 16
      %v5062 = vrot.slane %v5060, 5
      %v5063 = vsel %vm1083, %v5058, %v5062
      %v5065 = vshrl.u32 %v4796, 16
      %v5067 = vrot.slane %v5065, 4
      %v5068 = vshll.u32 %v4796, 16
      %v5070 = vrot.slane %v5068, 5
      %v5071 = vor.u32 %v5067, %v5070
      %v5072 = vrot.slane %v5071, 4
      %v5074 = vshll.u32 %v4797, 16
      %v5076 = vrot.slane %v5074, 5
      %v5077 = vsel %vm1083, %v5072, %v5076
      %v5078 = vshrl.u32 %v4797, 16
      %v5080 = vrot.slane %v5078, 4
      %v5081 = vor.u32 %v5080, %v5076
      %v5082 = vrot.slane %v5081, 4
      %v5084 = vshll.u32 %v4818, 16
      %v5086 = vrot.slane %v5084, 5
      %v5087 = vsel %vm1083, %v5082, %v5086
      %v5089 = vshrl.u32 %v4798, 16
      %v5091 = vrot.slane %v5089, 4
      %v5092 = vshll.u32 %v4798, 16
      %v5094 = vrot.slane %v5092, 5
      %v5095 = vor.u32 %v5091, %v5094
      %v5096 = vrot.slane %v5095, 4
      %v5098 = vshll.u32 %v4799, 16
      %v5100 = vrot.slane %v5098, 5
      %v5101 = vsel %vm1083, %v5096, %v5100
      %v5102 = vshrl.u32 %v4799, 16
      %v5104 = vrot.slane %v5102, 4
      %v5105 = vor.u32 %v5104, %v5100
      %v5106 = vrot.slane %v5105, 4
      %v5108 = vshll.u32 %v4819, 16
      %v5110 = vrot.slane %v5108, 5
      %v5111 = vsel %vm1083, %v5106, %v5110
      %v5113 = vshrl.u32 %v4800, 16
      %v5115 = vrot.slane %v5113, 4
      %v5116 = vshll.u32 %v4800, 16
      %v5118 = vrot.slane %v5116, 5
      %v5119 = vor.u32 %v5115, %v5118
      %v5120 = vrot.slane %v5119, 4
      %v5122 = vshll.u32 %v4801, 16
      %v5124 = vrot.slane %v5122, 5
      %v5125 = vsel %vm1083, %v5120, %v5124
      %v5126 = vshrl.u32 %v4801, 16
      %v5128 = vrot.slane %v5126, 4
      %v5129 = vor.u32 %v5128, %v5124
      %v5130 = vrot.slane %v5129, 4
      %v5132 = vshll.u32 %v4820, 16
      %v5134 = vrot.slane %v5132, 5
      %v5135 = vsel %vm1083, %v5130, %v5134
      %v5137 = vshrl.u32 %v4802, 16
      %v5139 = vrot.slane %v5137, 4
      %v5140 = vshll.u32 %v4802, 16
      %v5142 = vrot.slane %v5140, 5
      %v5143 = vor.u32 %v5139, %v5142
      %v5144 = vrot.slane %v5143, 4
      %v5146 = vshll.u32 %v4803, 16
      %v5148 = vrot.slane %v5146, 5
      %v5149 = vsel %vm1083, %v5144, %v5148
      %v5150 = vshrl.u32 %v4803, 16
      %v5152 = vrot.slane %v5150, 4
      %v5153 = vor.u32 %v5152, %v5148
      %v5154 = vrot.slane %v5153, 4
      %v5156 = vshll.u32 %v4821, 16
      %v5158 = vrot.slane %v5156, 5
      %v5159 = vsel %vm1083, %v5154, %v5158
      %v5161 = vshrl.u32 %v4804, 16
      %v5163 = vrot.slane %v5161, 4
      %v5164 = vshll.u32 %v4804, 16
      %v5166 = vrot.slane %v5164, 5
      %v5167 = vor.u32 %v5163, %v5166
      %v5168 = vrot.slane %v5167, 4
      %v5170 = vshll.u32 %v4805, 16
      %v5172 = vrot.slane %v5170, 5
      %v5173 = vsel %vm1083, %v5168, %v5172
      %v5174 = vshrl.u32 %v4805, 16
      %v5176 = vrot.slane %v5174, 4
      %v5177 = vor.u32 %v5176, %v5172
      %v5178 = vrot.slane %v5177, 4
      %v5180 = vshll.u32 %v4822, 16
      %v5182 = vrot.slane %v5180, 5
      %v5183 = vsel %vm1083, %v5178, %v5182
      %v5185 = vshrl.u32 %v4806, 16
      %v5187 = vrot.slane %v5185, 4
      %v5188 = vshll.u32 %v4806, 16
      %v5190 = vrot.slane %v5188, 5
      %v5191 = vor.u32 %v5187, %v5190
      %v5192 = vrot.slane %v5191, 4
      %v5194 = vshll.u32 %v4807, 16
      %v5196 = vrot.slane %v5194, 5
      %v5197 = vsel %vm1083, %v5192, %v5196
      %v5198 = vshrl.u32 %v4807, 16
      %v5200 = vrot.slane %v5198, 4
      %v5201 = vor.u32 %v5200, %v5196
      %v5202 = vrot.slane %v5201, 4
      %v5204 = vshll.u32 %v4823, 16
      %v5206 = vrot.slane %v5204, 5
      %v5207 = vsel %vm1083, %v5202, %v5206
      %v5208 = vld [vmem:[#allocation3] sm:$0xe]
      %v5209 = vld [vmem:[#allocation3 + $0xc] sm:$0xe]
      %v5210 = vld [vmem:[#allocation3 + $0x18] sm:$0xe]
      %v5211 = vld [vmem:[#allocation3 + $0x24] sm:$0xe]
      %v5212 = vld [vmem:[#allocation3 + $0x30] sm:$0xe]
      %v5213 = vld [vmem:[#allocation3 + $0x3c] sm:$0xe]
      %v5214 = vld [vmem:[#allocation3 + $0x48] sm:$0xe]
      %v5215 = vld [vmem:[#allocation3 + $0x54] sm:$0xe]
      %v5216 = vld [vmem:[#allocation3 + $0x60] sm:$0xe]
      %v5217 = vld [vmem:[#allocation3 + $0x6c] sm:$0xe]
      %v5218 = vld [vmem:[#allocation3 + $0x78] sm:$0xe]
      %v5219 = vld [vmem:[#allocation3 + $0x84] sm:$0xe]
      %v5220 = vld [vmem:[#allocation3 + $0x90] sm:$0xe]
      %v5221 = vld [vmem:[#allocation3 + $0x9c] sm:$0xe]
      %v5222 = vld [vmem:[#allocation3 + $0xa8] sm:$0xe]
      %v5223 = vld [vmem:[#allocation3 + $0xb4] sm:$0xe]
      %v5272 = vrot.slane %v5208, 5
      %v5273 = vrot.slane %v5272, 4
      %v5274 = vrot.slane %v4777, 5
      %v5275 = vsel %vm1534, %v5273, %v5274
      %v5276 = vrot.slane %v5274, 4
      %v5277 = vrot.slane %v4808, 5
      %v5278 = vsel %vm1534, %v5276, %v5277
      %v5279 = vrot.slane %v5209, 5
      %v5280 = vrot.slane %v5279, 4
      %v5281 = vrot.slane %v4779, 5
      %v5282 = vsel %vm1534, %v5280, %v5281
      %v5283 = vrot.slane %v5281, 4
      %v5284 = vrot.slane %v4809, 5
      %v5285 = vsel %vm1534, %v5283, %v5284
      %v5286 = vrot.slane %v5210, 5
      %v5287 = vrot.slane %v5286, 4
      %v5288 = vrot.slane %v4781, 5
      %v5289 = vsel %vm1534, %v5287, %v5288
      %v5290 = vrot.slane %v5288, 4
      %v5291 = vrot.slane %v4810, 5
      %v5292 = vsel %vm1534, %v5290, %v5291
      %v5293 = vrot.slane %v5211, 5
      %v5294 = vrot.slane %v5293, 4
      %v5295 = vrot.slane %v4783, 5
      %v5296 = vsel %vm1534, %v5294, %v5295
      %v5297 = vrot.slane %v5295, 4
      %v5298 = vrot.slane %v4811, 5
      %v5299 = vsel %vm1534, %v5297, %v5298
      %v5300 = vrot.slane %v5212, 5
      %v5301 = vrot.slane %v5300, 4
      %v5302 = vrot.slane %v4785, 5
      %v5303 = vsel %vm1534, %v5301, %v5302
      %v5304 = vrot.slane %v5302, 4
      %v5305 = vrot.slane %v4812, 5
      %v5306 = vsel %vm1534, %v5304, %v5305
      %v5307 = vrot.slane %v5213, 5
      %v5308 = vrot.slane %v5307, 4
      %v5309 = vrot.slane %v4787, 5
      %v5310 = vsel %vm1534, %v5308, %v5309
      %v5311 = vrot.slane %v5309, 4
      %v5312 = vrot.slane %v4813, 5
      %v5313 = vsel %vm1534, %v5311, %v5312
      %v5314 = vrot.slane %v5214, 5
      %v5315 = vrot.slane %v5314, 4
      %v5316 = vrot.slane %v4789, 5
      %v5317 = vsel %vm1534, %v5315, %v5316
      %v5318 = vrot.slane %v5316, 4
      %v5319 = vrot.slane %v4814, 5
      %v5320 = vsel %vm1534, %v5318, %v5319
      %v5321 = vrot.slane %v5215, 5
      %v5322 = vrot.slane %v5321, 4
      %v5323 = vrot.slane %v4791, 5
      %v5324 = vsel %vm1534, %v5322, %v5323
      %v5325 = vrot.slane %v5323, 4
      %v5326 = vrot.slane %v4815, 5
      %v5327 = vsel %vm1534, %v5325, %v5326
      %v5328 = vrot.slane %v5216, 5
      %v5329 = vrot.slane %v5328, 4
      %v5330 = vrot.slane %v4793, 5
      %v5331 = vsel %vm1534, %v5329, %v5330
      %v5332 = vrot.slane %v5330, 4
      %v5333 = vrot.slane %v4816, 5
      %v5334 = vsel %vm1534, %v5332, %v5333
      %v5335 = vrot.slane %v5217, 5
      %v5336 = vrot.slane %v5335, 4
      %v5337 = vrot.slane %v4795, 5
      %v5338 = vsel %vm1534, %v5336, %v5337
      %v5339 = vrot.slane %v5337, 4
      %v5340 = vrot.slane %v4817, 5
      %v5341 = vsel %vm1534, %v5339, %v5340
      %v5342 = vrot.slane %v5218, 5
      %v5343 = vrot.slane %v5342, 4
      %v5344 = vrot.slane %v4797, 5
      %v5345 = vsel %vm1534, %v5343, %v5344
      %v5346 = vrot.slane %v5344, 4
      %v5347 = vrot.slane %v4818, 5
      %v5348 = vsel %vm1534, %v5346, %v5347
      %v5349 = vrot.slane %v5219, 5
      %v5350 = vrot.slane %v5349, 4
      %v5351 = vrot.slane %v4799, 5
      %v5352 = vsel %vm1534, %v5350, %v5351
      %v5353 = vrot.slane %v5351, 4
      %v5354 = vrot.slane %v4819, 5
      %v5355 = vsel %vm1534, %v5353, %v5354
      %v5356 = vrot.slane %v5220, 5
      %v5357 = vrot.slane %v5356, 4
      %v5358 = vrot.slane %v4801, 5
      %v5359 = vsel %vm1534, %v5357, %v5358
      %v5360 = vrot.slane %v5358, 4
      %v5361 = vrot.slane %v4820, 5
      %v5362 = vsel %vm1534, %v5360, %v5361
      %v5363 = vrot.slane %v5221, 5
      %v5364 = vrot.slane %v5363, 4
      %v5365 = vrot.slane %v4803, 5
      %v5366 = vsel %vm1534, %v5364, %v5365
      %v5367 = vrot.slane %v5365, 4
      %v5368 = vrot.slane %v4821, 5
      %v5369 = vsel %vm1534, %v5367, %v5368
      %v5370 = vrot.slane %v5222, 5
      %v5371 = vrot.slane %v5370, 4
      %v5372 = vrot.slane %v4805, 5
      %v5373 = vsel %vm1534, %v5371, %v5372
      %v5374 = vrot.slane %v5372, 4
      %v5375 = vrot.slane %v4822, 5
      %v5376 = vsel %vm1534, %v5374, %v5375
      %v5377 = vrot.slane %v5223, 5
      %v5378 = vrot.slane %v5377, 4
      %v5379 = vrot.slane %v4807, 5
      %v5380 = vsel %vm1534, %v5378, %v5379
      %v5381 = vrot.slane %v5379, 4
      %v5382 = vrot.slane %v4823, 5
      %v5383 = vsel %vm1534, %v5381, %v5382
      %v5384 = vld [vmem:[%s4146] sm:$0xf]
      %v5385 = vld [vmem:[%s4146 + $0x4] sm:$0xf]
      %v5386 = vld [vmem:[%s4146 + $0xc] sm:$0xf]
      %v5387 = vld [vmem:[%s4146 + $0x10] sm:$0xf]
      %v5388 = vld [vmem:[%s4146 + $0x18] sm:$0xf]
      %v5389 = vld [vmem:[%s4146 + $0x1c] sm:$0xf]
      %v5390 = vld [vmem:[%s4146 + $0x24] sm:$0xf]
      %v5391 = vld [vmem:[%s4146 + $0x28] sm:$0xf]
      %v5392 = vld [vmem:[%s4146 + $0x30] sm:$0xf]
      %v5393 = vld [vmem:[%s4146 + $0x34] sm:$0xf]
      %v5394 = vld [vmem:[%s4146 + $0x3c] sm:$0xf]
      %v5395 = vld [vmem:[%s4146 + $0x40] sm:$0xf]
      %v5396 = vld [vmem:[%s4146 + $0x48] sm:$0xf]
      %v5397 = vld [vmem:[%s4146 + $0x4c] sm:$0xf]
      %v5398 = vld [vmem:[%s4146 + $0x54] sm:$0xf]
      %v5399 = vld [vmem:[%s4146 + $0x58] sm:$0xf]
      %v5400 = vld [vmem:[%s4146 + $0x60] sm:$0xf]
      %v5401 = vld [vmem:[%s4146 + $0x64] sm:$0xf]
      %v5402 = vld [vmem:[%s4146 + $0x6c] sm:$0xf]
      %v5403 = vld [vmem:[%s4146 + $0x70] sm:$0xf]
      %v5404 = vld [vmem:[%s4146 + $0x78] sm:$0xf]
      %v5405 = vld [vmem:[%s4146 + $0x7c] sm:$0xf]
      %v5406 = vld [vmem:[%s4146 + $0x84] sm:$0xf]
      %v5407 = vld [vmem:[%s4146 + $0x88] sm:$0xf]
      %v5408 = vld [vmem:[%s4146 + $0x90] sm:$0xf]
      %v5409 = vld [vmem:[%s4146 + $0x94] sm:$0xf]
      %v5410 = vld [vmem:[%s4146 + $0x9c] sm:$0xf]
      %v5411 = vld [vmem:[%s4146 + $0xa0] sm:$0xf]
      %v5412 = vld [vmem:[%s4146 + $0xa8] sm:$0xf]
      %v5413 = vld [vmem:[%s4146 + $0xac] sm:$0xf]
      %v5414 = vld [vmem:[%s4146 + $0xb4] sm:$0xf]
      %v5415 = vld [vmem:[%s4146 + $0xb8] sm:$0xf]
      %v5416 = vld [vmem:[%s4146 + $0x8] sm:$0x1]
      %v5417 = vld [vmem:[%s4146 + $0x14] sm:$0x1]
      %v5418 = vld [vmem:[%s4146 + $0x20] sm:$0x1]
      %v5419 = vld [vmem:[%s4146 + $0x2c] sm:$0x1]
      %v5420 = vld [vmem:[%s4146 + $0x38] sm:$0x1]
      %v5421 = vld [vmem:[%s4146 + $0x44] sm:$0x1]
      %v5422 = vld [vmem:[%s4146 + $0x50] sm:$0x1]
      %v5423 = vld [vmem:[%s4146 + $0x5c] sm:$0x1]
      %v5424 = vld [vmem:[%s4146 + $0x68] sm:$0x1]
      %v5425 = vld [vmem:[%s4146 + $0x74] sm:$0x1]
      %v5426 = vld [vmem:[%s4146 + $0x80] sm:$0x1]
      %v5427 = vld [vmem:[%s4146 + $0x8c] sm:$0x1]
      %v5428 = vld [vmem:[%s4146 + $0x98] sm:$0x1]
      %v5429 = vld [vmem:[%s4146 + $0xa4] sm:$0x1]
      %v5430 = vld [vmem:[%s4146 + $0xb0] sm:$0x1]
      %v5431 = vld [vmem:[%s4146 + $0xbc] sm:$0x1]
      %v5433 = vshrl.u32 %v5384, 16
      %v5435 = vrot.slane %v5433, 4
      %v5436 = vshll.u32 %v5384, 16
      %v5438 = vrot.slane %v5436, 5
      %v5439 = vor.u32 %v5435, %v5438
      %v5440 = vrot.slane %v5439, 4
      %v5442 = vshll.u32 %v5385, 16
      %v5444 = vrot.slane %v5442, 5
      %v5445 = vsel %vm1083, %v5440, %v5444
      %v5446 = vshrl.u32 %v5385, 16
      %v5448 = vrot.slane %v5446, 4
      %v5449 = vor.u32 %v5448, %v5444
      %v5450 = vrot.slane %v5449, 4
      %v5452 = vshll.u32 %v5416, 16
      %v5454 = vrot.slane %v5452, 5
      %v5455 = vsel %vm1083, %v5450, %v5454
      %v5457 = vshrl.u32 %v5386, 16
      %v5459 = vrot.slane %v5457, 4
      %v5460 = vshll.u32 %v5386, 16
      %v5462 = vrot.slane %v5460, 5
      %v5463 = vor.u32 %v5459, %v5462
      %v5464 = vrot.slane %v5463, 4
      %v5466 = vshll.u32 %v5387, 16
      %v5468 = vrot.slane %v5466, 5
      %v5469 = vsel %vm1083, %v5464, %v5468
      %v5470 = vshrl.u32 %v5387, 16
      %v5472 = vrot.slane %v5470, 4
      %v5473 = vor.u32 %v5472, %v5468
      %v5474 = vrot.slane %v5473, 4
      %v5476 = vshll.u32 %v5417, 16
      %v5478 = vrot.slane %v5476, 5
      %v5479 = vsel %vm1083, %v5474, %v5478
      %v5481 = vshrl.u32 %v5388, 16
      %v5483 = vrot.slane %v5481, 4
      %v5484 = vshll.u32 %v5388, 16
      %v5486 = vrot.slane %v5484, 5
      %v5487 = vor.u32 %v5483, %v5486
      %v5488 = vrot.slane %v5487, 4
      %v5490 = vshll.u32 %v5389, 16
      %v5492 = vrot.slane %v5490, 5
      %v5493 = vsel %vm1083, %v5488, %v5492
      %v5494 = vshrl.u32 %v5389, 16
      %v5496 = vrot.slane %v5494, 4
      %v5497 = vor.u32 %v5496, %v5492
      %v5498 = vrot.slane %v5497, 4
      %v5500 = vshll.u32 %v5418, 16
      %v5502 = vrot.slane %v5500, 5
      %v5503 = vsel %vm1083, %v5498, %v5502
      %v5505 = vshrl.u32 %v5390, 16
      %v5507 = vrot.slane %v5505, 4
      %v5508 = vshll.u32 %v5390, 16
      %v5510 = vrot.slane %v5508, 5
      %v5511 = vor.u32 %v5507, %v5510
      %v5512 = vrot.slane %v5511, 4
      %v5514 = vshll.u32 %v5391, 16
      %v5516 = vrot.slane %v5514, 5
      %v5517 = vsel %vm1083, %v5512, %v5516
      %v5518 = vshrl.u32 %v5391, 16
      %v5520 = vrot.slane %v5518, 4
      %v5521 = vor.u32 %v5520, %v5516
      %v5522 = vrot.slane %v5521, 4
      %v5524 = vshll.u32 %v5419, 16
      %v5526 = vrot.slane %v5524, 5
      %v5527 = vsel %vm1083, %v5522, %v5526
      %v5529 = vshrl.u32 %v5392, 16
      %v5531 = vrot.slane %v5529, 4
      %v5532 = vshll.u32 %v5392, 16
      %v5534 = vrot.slane %v5532, 5
      %v5535 = vor.u32 %v5531, %v5534
      %v5536 = vrot.slane %v5535, 4
      %v5538 = vshll.u32 %v5393, 16
      %v5540 = vrot.slane %v5538, 5
      %v5541 = vsel %vm1083, %v5536, %v5540
      %v5542 = vshrl.u32 %v5393, 16
      %v5544 = vrot.slane %v5542, 4
      %v5545 = vor.u32 %v5544, %v5540
      %v5546 = vrot.slane %v5545, 4
      %v5548 = vshll.u32 %v5420, 16
      %v5550 = vrot.slane %v5548, 5
      %v5551 = vsel %vm1083, %v5546, %v5550
      %v5553 = vshrl.u32 %v5394, 16
      %v5555 = vrot.slane %v5553, 4
      %v5556 = vshll.u32 %v5394, 16
      %v5558 = vrot.slane %v5556, 5
      %v5559 = vor.u32 %v5555, %v5558
      %v5560 = vrot.slane %v5559, 4
      %v5562 = vshll.u32 %v5395, 16
      %v5564 = vrot.slane %v5562, 5
      %v5565 = vsel %vm1083, %v5560, %v5564
      %v5566 = vshrl.u32 %v5395, 16
      %v5568 = vrot.slane %v5566, 4
      %v5569 = vor.u32 %v5568, %v5564
      %v5570 = vrot.slane %v5569, 4
      %v5572 = vshll.u32 %v5421, 16
      %v5574 = vrot.slane %v5572, 5
      %v5575 = vsel %vm1083, %v5570, %v5574
      %v5577 = vshrl.u32 %v5396, 16
      %v5579 = vrot.slane %v5577, 4
      %v5580 = vshll.u32 %v5396, 16
      %v5582 = vrot.slane %v5580, 5
      %v5583 = vor.u32 %v5579, %v5582
      %v5584 = vrot.slane %v5583, 4
      %v5586 = vshll.u32 %v5397, 16
      %v5588 = vrot.slane %v5586, 5
      %v5589 = vsel %vm1083, %v5584, %v5588
      %v5590 = vshrl.u32 %v5397, 16
      %v5592 = vrot.slane %v5590, 4
      %v5593 = vor.u32 %v5592, %v5588
      %v5594 = vrot.slane %v5593, 4
      %v5596 = vshll.u32 %v5422, 16
      %v5598 = vrot.slane %v5596, 5
      %v5599 = vsel %vm1083, %v5594, %v5598
      %v5601 = vshrl.u32 %v5398, 16
      %v5603 = vrot.slane %v5601, 4
      %v5604 = vshll.u32 %v5398, 16
      %v5606 = vrot.slane %v5604, 5
      %v5607 = vor.u32 %v5603, %v5606
      %v5608 = vrot.slane %v5607, 4
      %v5610 = vshll.u32 %v5399, 16
      %v5612 = vrot.slane %v5610, 5
      %v5613 = vsel %vm1083, %v5608, %v5612
      %v5614 = vshrl.u32 %v5399, 16
      %v5616 = vrot.slane %v5614, 4
      %v5617 = vor.u32 %v5616, %v5612
      %v5618 = vrot.slane %v5617, 4
      %v5620 = vshll.u32 %v5423, 16
      %v5622 = vrot.slane %v5620, 5
      %v5623 = vsel %vm1083, %v5618, %v5622
      %v5625 = vshrl.u32 %v5400, 16
      %v5627 = vrot.slane %v5625, 4
      %v5628 = vshll.u32 %v5400, 16
      %v5630 = vrot.slane %v5628, 5
      %v5631 = vor.u32 %v5627, %v5630
      %v5632 = vrot.slane %v5631, 4
      %v5634 = vshll.u32 %v5401, 16
      %v5636 = vrot.slane %v5634, 5
      %v5637 = vsel %vm1083, %v5632, %v5636
      %v5638 = vshrl.u32 %v5401, 16
      %v5640 = vrot.slane %v5638, 4
      %v5641 = vor.u32 %v5640, %v5636
      %v5642 = vrot.slane %v5641, 4
      %v5644 = vshll.u32 %v5424, 16
      %v5646 = vrot.slane %v5644, 5
      %v5647 = vsel %vm1083, %v5642, %v5646
      %v5649 = vshrl.u32 %v5402, 16
      %v5651 = vrot.slane %v5649, 4
      %v5652 = vshll.u32 %v5402, 16
      %v5654 = vrot.slane %v5652, 5
      %v5655 = vor.u32 %v5651, %v5654
      %v5656 = vrot.slane %v5655, 4
      %v5658 = vshll.u32 %v5403, 16
      %v5660 = vrot.slane %v5658, 5
      %v5661 = vsel %vm1083, %v5656, %v5660
      %v5662 = vshrl.u32 %v5403, 16
      %v5664 = vrot.slane %v5662, 4
      %v5665 = vor.u32 %v5664, %v5660
      %v5666 = vrot.slane %v5665, 4
      %v5668 = vshll.u32 %v5425, 16
      %v5670 = vrot.slane %v5668, 5
      %v5671 = vsel %vm1083, %v5666, %v5670
      %v5673 = vshrl.u32 %v5404, 16
      %v5675 = vrot.slane %v5673, 4
      %v5676 = vshll.u32 %v5404, 16
      %v5678 = vrot.slane %v5676, 5
      %v5679 = vor.u32 %v5675, %v5678
      %v5680 = vrot.slane %v5679, 4
      %v5682 = vshll.u32 %v5405, 16
      %v5684 = vrot.slane %v5682, 5
      %v5685 = vsel %vm1083, %v5680, %v5684
      %v5686 = vshrl.u32 %v5405, 16
      %v5688 = vrot.slane %v5686, 4
      %v5689 = vor.u32 %v5688, %v5684
      %v5690 = vrot.slane %v5689, 4
      %v5692 = vshll.u32 %v5426, 16
      %v5694 = vrot.slane %v5692, 5
      %v5695 = vsel %vm1083, %v5690, %v5694
      %v5697 = vshrl.u32 %v5406, 16
      %v5699 = vrot.slane %v5697, 4
      %v5700 = vshll.u32 %v5406, 16
      %v5702 = vrot.slane %v5700, 5
      %v5703 = vor.u32 %v5699, %v5702
      %v5704 = vrot.slane %v5703, 4
      %v5706 = vshll.u32 %v5407, 16
      %v5708 = vrot.slane %v5706, 5
      %v5709 = vsel %vm1083, %v5704, %v5708
      %v5710 = vshrl.u32 %v5407, 16
      %v5712 = vrot.slane %v5710, 4
      %v5713 = vor.u32 %v5712, %v5708
      %v5714 = vrot.slane %v5713, 4
      %v5716 = vshll.u32 %v5427, 16
      %v5718 = vrot.slane %v5716, 5
      %v5719 = vsel %vm1083, %v5714, %v5718
      %v5721 = vshrl.u32 %v5408, 16
      %v5723 = vrot.slane %v5721, 4
      %v5724 = vshll.u32 %v5408, 16
      %v5726 = vrot.slane %v5724, 5
      %v5727 = vor.u32 %v5723, %v5726
      %v5728 = vrot.slane %v5727, 4
      %v5730 = vshll.u32 %v5409, 16
      %v5732 = vrot.slane %v5730, 5
      %v5733 = vsel %vm1083, %v5728, %v5732
      %v5734 = vshrl.u32 %v5409, 16
      %v5736 = vrot.slane %v5734, 4
      %v5737 = vor.u32 %v5736, %v5732
      %v5738 = vrot.slane %v5737, 4
      %v5740 = vshll.u32 %v5428, 16
      %v5742 = vrot.slane %v5740, 5
      %v5743 = vsel %vm1083, %v5738, %v5742
      %v5745 = vshrl.u32 %v5410, 16
      %v5747 = vrot.slane %v5745, 4
      %v5748 = vshll.u32 %v5410, 16
      %v5750 = vrot.slane %v5748, 5
      %v5751 = vor.u32 %v5747, %v5750
      %v5752 = vrot.slane %v5751, 4
      %v5754 = vshll.u32 %v5411, 16
      %v5756 = vrot.slane %v5754, 5
      %v5757 = vsel %vm1083, %v5752, %v5756
      %v5758 = vshrl.u32 %v5411, 16
      %v5760 = vrot.slane %v5758, 4
      %v5761 = vor.u32 %v5760, %v5756
      %v5762 = vrot.slane %v5761, 4
      %v5764 = vshll.u32 %v5429, 16
      %v5766 = vrot.slane %v5764, 5
      %v5767 = vsel %vm1083, %v5762, %v5766
      %v5769 = vshrl.u32 %v5412, 16
      %v5771 = vrot.slane %v5769, 4
      %v5772 = vshll.u32 %v5412, 16
      %v5774 = vrot.slane %v5772, 5
      %v5775 = vor.u32 %v5771, %v5774
      %v5776 = vrot.slane %v5775, 4
      %v5778 = vshll.u32 %v5413, 16
      %v5780 = vrot.slane %v5778, 5
      %v5781 = vsel %vm1083, %v5776, %v5780
      %v5782 = vshrl.u32 %v5413, 16
      %v5784 = vrot.slane %v5782, 4
      %v5785 = vor.u32 %v5784, %v5780
      %v5786 = vrot.slane %v5785, 4
      %v5788 = vshll.u32 %v5430, 16
      %v5790 = vrot.slane %v5788, 5
      %v5791 = vsel %vm1083, %v5786, %v5790
      %v5793 = vshrl.u32 %v5414, 16
      %v5795 = vrot.slane %v5793, 4
      %v5796 = vshll.u32 %v5414, 16
      %v5798 = vrot.slane %v5796, 5
      %v5799 = vor.u32 %v5795, %v5798
      %v5800 = vrot.slane %v5799, 4
      %v5802 = vshll.u32 %v5415, 16
      %v5804 = vrot.slane %v5802, 5
      %v5805 = vsel %vm1083, %v5800, %v5804
      %v5806 = vshrl.u32 %v5415, 16
      %v5808 = vrot.slane %v5806, 4
      %v5809 = vor.u32 %v5808, %v5804
      %v5810 = vrot.slane %v5809, 4
      %v5812 = vshll.u32 %v5431, 16
      %v5814 = vrot.slane %v5812, 5
      %v5815 = vsel %vm1083, %v5810, %v5814
      %v5816 = vld [vmem:[%s4146] sm:$0xe]
      %v5817 = vld [vmem:[%s4146 + $0xc] sm:$0xe]
      %v5818 = vld [vmem:[%s4146 + $0x18] sm:$0xe]
      %v5819 = vld [vmem:[%s4146 + $0x24] sm:$0xe]
      %v5820 = vld [vmem:[%s4146 + $0x30] sm:$0xe]
      %v5821 = vld [vmem:[%s4146 + $0x3c] sm:$0xe]
      %v5822 = vld [vmem:[%s4146 + $0x48] sm:$0xe]
      %v5823 = vld [vmem:[%s4146 + $0x54] sm:$0xe]
      %v5824 = vld [vmem:[%s4146 + $0x60] sm:$0xe]
      %v5825 = vld [vmem:[%s4146 + $0x6c] sm:$0xe]
      %v5826 = vld [vmem:[%s4146 + $0x78] sm:$0xe]
      %v5827 = vld [vmem:[%s4146 + $0x84] sm:$0xe]
      %v5828 = vld [vmem:[%s4146 + $0x90] sm:$0xe]
      %v5829 = vld [vmem:[%s4146 + $0x9c] sm:$0xe]
      %v5830 = vld [vmem:[%s4146 + $0xa8] sm:$0xe]
      %v5831 = vld [vmem:[%s4146 + $0xb4] sm:$0xe]
      %v5880 = vrot.slane %v5816, 5
      %v5881 = vrot.slane %v5880, 4
      %v5882 = vrot.slane %v5385, 5
      %v5883 = vsel %vm1534, %v5881, %v5882
      %v5884 = vrot.slane %v5882, 4
      %v5885 = vrot.slane %v5416, 5
      %v5886 = vsel %vm1534, %v5884, %v5885
      %v5887 = vrot.slane %v5817, 5
      %v5888 = vrot.slane %v5887, 4
      %v5889 = vrot.slane %v5387, 5
      %v5890 = vsel %vm1534, %v5888, %v5889
      %v5891 = vrot.slane %v5889, 4
      %v5892 = vrot.slane %v5417, 5
      %v5893 = vsel %vm1534, %v5891, %v5892
      %v5894 = vrot.slane %v5818, 5
      %v5895 = vrot.slane %v5894, 4
      %v5896 = vrot.slane %v5389, 5
      %v5897 = vsel %vm1534, %v5895, %v5896
      %v5898 = vrot.slane %v5896, 4
      %v5899 = vrot.slane %v5418, 5
      %v5900 = vsel %vm1534, %v5898, %v5899
      %v5901 = vrot.slane %v5819, 5
      %v5902 = vrot.slane %v5901, 4
      %v5903 = vrot.slane %v5391, 5
      %v5904 = vsel %vm1534, %v5902, %v5903
      %v5905 = vrot.slane %v5903, 4
      %v5906 = vrot.slane %v5419, 5
      %v5907 = vsel %vm1534, %v5905, %v5906
      %v5908 = vrot.slane %v5820, 5
      %v5909 = vrot.slane %v5908, 4
      %v5910 = vrot.slane %v5393, 5
      %v5911 = vsel %vm1534, %v5909, %v5910
      %v5912 = vrot.slane %v5910, 4
      %v5913 = vrot.slane %v5420, 5
      %v5914 = vsel %vm1534, %v5912, %v5913
      %v5915 = vrot.slane %v5821, 5
      %v5916 = vrot.slane %v5915, 4
      %v5917 = vrot.slane %v5395, 5
      %v5918 = vsel %vm1534, %v5916, %v5917
      %v5919 = vrot.slane %v5917, 4
      %v5920 = vrot.slane %v5421, 5
      %v5921 = vsel %vm1534, %v5919, %v5920
      %v5922 = vrot.slane %v5822, 5
      %v5923 = vrot.slane %v5922, 4
      %v5924 = vrot.slane %v5397, 5
      %v5925 = vsel %vm1534, %v5923, %v5924
      %v5926 = vrot.slane %v5924, 4
      %v5927 = vrot.slane %v5422, 5
      %v5928 = vsel %vm1534, %v5926, %v5927
      %v5929 = vrot.slane %v5823, 5
      %v5930 = vrot.slane %v5929, 4
      %v5931 = vrot.slane %v5399, 5
      %v5932 = vsel %vm1534, %v5930, %v5931
      %v5933 = vrot.slane %v5931, 4
      %v5934 = vrot.slane %v5423, 5
      %v5935 = vsel %vm1534, %v5933, %v5934
      %v5936 = vrot.slane %v5824, 5
      %v5937 = vrot.slane %v5936, 4
      %v5938 = vrot.slane %v5401, 5
      %v5939 = vsel %vm1534, %v5937, %v5938
      %v5940 = vrot.slane %v5938, 4
      %v5941 = vrot.slane %v5424, 5
      %v5942 = vsel %vm1534, %v5940, %v5941
      %v5943 = vrot.slane %v5825, 5
      %v5944 = vrot.slane %v5943, 4
      %v5945 = vrot.slane %v5403, 5
      %v5946 = vsel %vm1534, %v5944, %v5945
      %v5947 = vrot.slane %v5945, 4
      %v5948 = vrot.slane %v5425, 5
      %v5949 = vsel %vm1534, %v5947, %v5948
      %v5950 = vrot.slane %v5826, 5
      %v5951 = vrot.slane %v5950, 4
      %v5952 = vrot.slane %v5405, 5
      %v5953 = vsel %vm1534, %v5951, %v5952
      %v5954 = vrot.slane %v5952, 4
      %v5955 = vrot.slane %v5426, 5
      %v5956 = vsel %vm1534, %v5954, %v5955
      %v5957 = vrot.slane %v5827, 5
      %v5958 = vrot.slane %v5957, 4
      %v5959 = vrot.slane %v5407, 5
      %v5960 = vsel %vm1534, %v5958, %v5959
      %v5961 = vrot.slane %v5959, 4
      %v5962 = vrot.slane %v5427, 5
      %v5963 = vsel %vm1534, %v5961, %v5962
      %v5964 = vrot.slane %v5828, 5
      %v5965 = vrot.slane %v5964, 4
      %v5966 = vrot.slane %v5409, 5
      %v5967 = vsel %vm1534, %v5965, %v5966
      %v5968 = vrot.slane %v5966, 4
      %v5969 = vrot.slane %v5428, 5
      %v5970 = vsel %vm1534, %v5968, %v5969
      %v5971 = vrot.slane %v5829, 5
      %v5972 = vrot.slane %v5971, 4
      %v5973 = vrot.slane %v5411, 5
      %v5974 = vsel %vm1534, %v5972, %v5973
      %v5975 = vrot.slane %v5973, 4
      %v5976 = vrot.slane %v5429, 5
      %v5977 = vsel %vm1534, %v5975, %v5976
      %v5978 = vrot.slane %v5830, 5
      %v5979 = vrot.slane %v5978, 4
      %v5980 = vrot.slane %v5413, 5
      %v5981 = vsel %vm1534, %v5979, %v5980
      %v5982 = vrot.slane %v5980, 4
      %v5983 = vrot.slane %v5430, 5
      %v5984 = vsel %vm1534, %v5982, %v5983
      %v5985 = vrot.slane %v5831, 5
      %v5986 = vrot.slane %v5985, 4
      %v5987 = vrot.slane %v5415, 5
      %v5988 = vsel %vm1534, %v5986, %v5987
      %v5989 = vrot.slane %v5987, 4
      %v5990 = vrot.slane %v5431, 5
      %v5991 = vsel %vm1534, %v5989, %v5990
      %s5992 = scalar_lea.vmem [#allocation3], 24
      %v5993 = vld [vmem:[%s5992] sm:$0xf]
      %v5994 = vld [vmem:[%s5992 + $0x4] sm:$0xf]
      %v5995 = vld [vmem:[%s5992 + $0xc] sm:$0xf]
      %v5996 = vld [vmem:[%s5992 + $0x10] sm:$0xf]
      %v5997 = vld [vmem:[%s5992 + $0x18] sm:$0xf]
      %v5998 = vld [vmem:[%s5992 + $0x1c] sm:$0xf]
      %v5999 = vld [vmem:[%s5992 + $0x24] sm:$0xf]
      %v6000 = vld [vmem:[%s5992 + $0x28] sm:$0xf]
      %v6001 = vld [vmem:[%s5992 + $0x30] sm:$0xf]
      %v6002 = vld [vmem:[%s5992 + $0x34] sm:$0xf]
      %v6003 = vld [vmem:[%s5992 + $0x3c] sm:$0xf]
      %v6004 = vld [vmem:[%s5992 + $0x40] sm:$0xf]
      %v6005 = vld [vmem:[%s5992 + $0x48] sm:$0xf]
      %v6006 = vld [vmem:[%s5992 + $0x4c] sm:$0xf]
      %v6007 = vld [vmem:[%s5992 + $0x54] sm:$0xf]
      %v6008 = vld [vmem:[%s5992 + $0x58] sm:$0xf]
      %v6009 = vld [vmem:[%s5992 + $0x60] sm:$0xf]
      %v6010 = vld [vmem:[%s5992 + $0x64] sm:$0xf]
      %v6011 = vld [vmem:[%s5992 + $0x6c] sm:$0xf]
      %v6012 = vld [vmem:[%s5992 + $0x70] sm:$0xf]
      %v6013 = vld [vmem:[%s5992 + $0x78] sm:$0xf]
      %v6014 = vld [vmem:[%s5992 + $0x7c] sm:$0xf]
      %v6015 = vld [vmem:[%s5992 + $0x84] sm:$0xf]
      %v6016 = vld [vmem:[%s5992 + $0x88] sm:$0xf]
      %v6017 = vld [vmem:[%s5992 + $0x90] sm:$0xf]
      %v6018 = vld [vmem:[%s5992 + $0x94] sm:$0xf]
      %v6019 = vld [vmem:[%s5992 + $0x9c] sm:$0xf]
      %v6020 = vld [vmem:[%s5992 + $0xa0] sm:$0xf]
      %v6021 = vld [vmem:[%s5992 + $0xa8] sm:$0xf]
      %v6022 = vld [vmem:[%s5992 + $0xac] sm:$0xf]
      %v6023 = vld [vmem:[%s5992 + $0xb4] sm:$0xf]
      %v6024 = vld [vmem:[%s5992 + $0xb8] sm:$0xf]
      %v6025 = vld [vmem:[%s5992 + $0x8] sm:$0x1]
      %v6026 = vld [vmem:[%s5992 + $0x14] sm:$0x1]
      %v6027 = vld [vmem:[%s5992 + $0x20] sm:$0x1]
      %v6028 = vld [vmem:[%s5992 + $0x2c] sm:$0x1]
      %v6029 = vld [vmem:[%s5992 + $0x38] sm:$0x1]
      %v6030 = vld [vmem:[%s5992 + $0x44] sm:$0x1]
      %v6031 = vld [vmem:[%s5992 + $0x50] sm:$0x1]
      %v6032 = vld [vmem:[%s5992 + $0x5c] sm:$0x1]
      %v6033 = vld [vmem:[%s5992 + $0x68] sm:$0x1]
      %v6034 = vld [vmem:[%s5992 + $0x74] sm:$0x1]
      %v6035 = vld [vmem:[%s5992 + $0x80] sm:$0x1]
      %v6036 = vld [vmem:[%s5992 + $0x8c] sm:$0x1]
      %v6037 = vld [vmem:[%s5992 + $0x98] sm:$0x1]
      %v6038 = vld [vmem:[%s5992 + $0xa4] sm:$0x1]
      %v6039 = vld [vmem:[%s5992 + $0xb0] sm:$0x1]
      %v6040 = vld [vmem:[%s5992 + $0xbc] sm:$0x1]
      %v6042 = vshrl.u32 %v5993, 16
      %v6044 = vrot.slane %v6042, 4
      %v6045 = vshll.u32 %v5993, 16
      %v6047 = vrot.slane %v6045, 5
      %v6048 = vor.u32 %v6044, %v6047
      %v6049 = vrot.slane %v6048, 4
      %v6051 = vshll.u32 %v5994, 16
      %v6053 = vrot.slane %v6051, 5
      %v6054 = vsel %vm1083, %v6049, %v6053
      %v6055 = vshrl.u32 %v5994, 16
      %v6057 = vrot.slane %v6055, 4
      %v6058 = vor.u32 %v6057, %v6053
      %v6059 = vrot.slane %v6058, 4
      %v6061 = vshll.u32 %v6025, 16
      %v6063 = vrot.slane %v6061, 5
      %v6064 = vsel %vm1083, %v6059, %v6063
      %v6066 = vshrl.u32 %v5995, 16
      %v6068 = vrot.slane %v6066, 4
      %v6069 = vshll.u32 %v5995, 16
      %v6071 = vrot.slane %v6069, 5
      %v6072 = vor.u32 %v6068, %v6071
      %v6073 = vrot.slane %v6072, 4
      %v6075 = vshll.u32 %v5996, 16
      %v6077 = vrot.slane %v6075, 5
      %v6078 = vsel %vm1083, %v6073, %v6077
      %v6079 = vshrl.u32 %v5996, 16
      %v6081 = vrot.slane %v6079, 4
      %v6082 = vor.u32 %v6081, %v6077
      %v6083 = vrot.slane %v6082, 4
      %v6085 = vshll.u32 %v6026, 16
      %v6087 = vrot.slane %v6085, 5
      %v6088 = vsel %vm1083, %v6083, %v6087
      %v6090 = vshrl.u32 %v5997, 16
      %v6092 = vrot.slane %v6090, 4
      %v6093 = vshll.u32 %v5997, 16
      %v6095 = vrot.slane %v6093, 5
      %v6096 = vor.u32 %v6092, %v6095
      %v6097 = vrot.slane %v6096, 4
      %v6099 = vshll.u32 %v5998, 16
      %v6101 = vrot.slane %v6099, 5
      %v6102 = vsel %vm1083, %v6097, %v6101
      %v6103 = vshrl.u32 %v5998, 16
      %v6105 = vrot.slane %v6103, 4
      %v6106 = vor.u32 %v6105, %v6101
      %v6107 = vrot.slane %v6106, 4
      %v6109 = vshll.u32 %v6027, 16
      %v6111 = vrot.slane %v6109, 5
      %v6112 = vsel %vm1083, %v6107, %v6111
      %v6114 = vshrl.u32 %v5999, 16
      %v6116 = vrot.slane %v6114, 4
      %v6117 = vshll.u32 %v5999, 16
      %v6119 = vrot.slane %v6117, 5
      %v6120 = vor.u32 %v6116, %v6119
      %v6121 = vrot.slane %v6120, 4
      %v6123 = vshll.u32 %v6000, 16
      %v6125 = vrot.slane %v6123, 5
      %v6126 = vsel %vm1083, %v6121, %v6125
      %v6127 = vshrl.u32 %v6000, 16
      %v6129 = vrot.slane %v6127, 4
      %v6130 = vor.u32 %v6129, %v6125
      %v6131 = vrot.slane %v6130, 4
      %v6133 = vshll.u32 %v6028, 16
      %v6135 = vrot.slane %v6133, 5
      %v6136 = vsel %vm1083, %v6131, %v6135
      %v6138 = vshrl.u32 %v6001, 16
      %v6140 = vrot.slane %v6138, 4
      %v6141 = vshll.u32 %v6001, 16
      %v6143 = vrot.slane %v6141, 5
      %v6144 = vor.u32 %v6140, %v6143
      %v6145 = vrot.slane %v6144, 4
      %v6147 = vshll.u32 %v6002, 16
      %v6149 = vrot.slane %v6147, 5
      %v6150 = vsel %vm1083, %v6145, %v6149
      %v6151 = vshrl.u32 %v6002, 16
      %v6153 = vrot.slane %v6151, 4
      %v6154 = vor.u32 %v6153, %v6149
      %v6155 = vrot.slane %v6154, 4
      %v6157 = vshll.u32 %v6029, 16
      %v6159 = vrot.slane %v6157, 5
      %v6160 = vsel %vm1083, %v6155, %v6159
      %v6162 = vshrl.u32 %v6003, 16
      %v6164 = vrot.slane %v6162, 4
      %v6165 = vshll.u32 %v6003, 16
      %v6167 = vrot.slane %v6165, 5
      %v6168 = vor.u32 %v6164, %v6167
      %v6169 = vrot.slane %v6168, 4
      %v6171 = vshll.u32 %v6004, 16
      %v6173 = vrot.slane %v6171, 5
      %v6174 = vsel %vm1083, %v6169, %v6173
      %v6175 = vshrl.u32 %v6004, 16
      %v6177 = vrot.slane %v6175, 4
      %v6178 = vor.u32 %v6177, %v6173
      %v6179 = vrot.slane %v6178, 4
      %v6181 = vshll.u32 %v6030, 16
      %v6183 = vrot.slane %v6181, 5
      %v6184 = vsel %vm1083, %v6179, %v6183
      %v6186 = vshrl.u32 %v6005, 16
      %v6188 = vrot.slane %v6186, 4
      %v6189 = vshll.u32 %v6005, 16
      %v6191 = vrot.slane %v6189, 5
      %v6192 = vor.u32 %v6188, %v6191
      %v6193 = vrot.slane %v6192, 4
      %v6195 = vshll.u32 %v6006, 16
      %v6197 = vrot.slane %v6195, 5
      %v6198 = vsel %vm1083, %v6193, %v6197
      %v6199 = vshrl.u32 %v6006, 16
      %v6201 = vrot.slane %v6199, 4
      %v6202 = vor.u32 %v6201, %v6197
      %v6203 = vrot.slane %v6202, 4
      %v6205 = vshll.u32 %v6031, 16
      %v6207 = vrot.slane %v6205, 5
      %v6208 = vsel %vm1083, %v6203, %v6207
      %v6210 = vshrl.u32 %v6007, 16
      %v6212 = vrot.slane %v6210, 4
      %v6213 = vshll.u32 %v6007, 16
      %v6215 = vrot.slane %v6213, 5
      %v6216 = vor.u32 %v6212, %v6215
      %v6217 = vrot.slane %v6216, 4
      %v6219 = vshll.u32 %v6008, 16
      %v6221 = vrot.slane %v6219, 5
      %v6222 = vsel %vm1083, %v6217, %v6221
      %v6223 = vshrl.u32 %v6008, 16
      %v6225 = vrot.slane %v6223, 4
      %v6226 = vor.u32 %v6225, %v6221
      %v6227 = vrot.slane %v6226, 4
      %v6229 = vshll.u32 %v6032, 16
      %v6231 = vrot.slane %v6229, 5
      %v6232 = vsel %vm1083, %v6227, %v6231
      %v6234 = vshrl.u32 %v6009, 16
      %v6236 = vrot.slane %v6234, 4
      %v6237 = vshll.u32 %v6009, 16
      %v6239 = vrot.slane %v6237, 5
      %v6240 = vor.u32 %v6236, %v6239
      %v6241 = vrot.slane %v6240, 4
      %v6243 = vshll.u32 %v6010, 16
      %v6245 = vrot.slane %v6243, 5
      %v6246 = vsel %vm1083, %v6241, %v6245
      %v6247 = vshrl.u32 %v6010, 16
      %v6249 = vrot.slane %v6247, 4
      %v6250 = vor.u32 %v6249, %v6245
      %v6251 = vrot.slane %v6250, 4
      %v6253 = vshll.u32 %v6033, 16
      %v6255 = vrot.slane %v6253, 5
      %v6256 = vsel %vm1083, %v6251, %v6255
      %v6258 = vshrl.u32 %v6011, 16
      %v6260 = vrot.slane %v6258, 4
      %v6261 = vshll.u32 %v6011, 16
      %v6263 = vrot.slane %v6261, 5
      %v6264 = vor.u32 %v6260, %v6263
      %v6265 = vrot.slane %v6264, 4
      %v6267 = vshll.u32 %v6012, 16
      %v6269 = vrot.slane %v6267, 5
      %v6270 = vsel %vm1083, %v6265, %v6269
      %v6271 = vshrl.u32 %v6012, 16
      %v6273 = vrot.slane %v6271, 4
      %v6274 = vor.u32 %v6273, %v6269
      %v6275 = vrot.slane %v6274, 4
      %v6277 = vshll.u32 %v6034, 16
      %v6279 = vrot.slane %v6277, 5
      %v6280 = vsel %vm1083, %v6275, %v6279
      %v6282 = vshrl.u32 %v6013, 16
      %v6284 = vrot.slane %v6282, 4
      %v6285 = vshll.u32 %v6013, 16
      %v6287 = vrot.slane %v6285, 5
      %v6288 = vor.u32 %v6284, %v6287
      %v6289 = vrot.slane %v6288, 4
      %v6291 = vshll.u32 %v6014, 16
      %v6293 = vrot.slane %v6291, 5
      %v6294 = vsel %vm1083, %v6289, %v6293
      %v6295 = vshrl.u32 %v6014, 16
      %v6297 = vrot.slane %v6295, 4
      %v6298 = vor.u32 %v6297, %v6293
      %v6299 = vrot.slane %v6298, 4
      %v6301 = vshll.u32 %v6035, 16
      %v6303 = vrot.slane %v6301, 5
      %v6304 = vsel %vm1083, %v6299, %v6303
      %v6306 = vshrl.u32 %v6015, 16
      %v6308 = vrot.slane %v6306, 4
      %v6309 = vshll.u32 %v6015, 16
      %v6311 = vrot.slane %v6309, 5
      %v6312 = vor.u32 %v6308, %v6311
      %v6313 = vrot.slane %v6312, 4
      %v6315 = vshll.u32 %v6016, 16
      %v6317 = vrot.slane %v6315, 5
      %v6318 = vsel %vm1083, %v6313, %v6317
      %v6319 = vshrl.u32 %v6016, 16
      %v6321 = vrot.slane %v6319, 4
      %v6322 = vor.u32 %v6321, %v6317
      %v6323 = vrot.slane %v6322, 4
      %v6325 = vshll.u32 %v6036, 16
      %v6327 = vrot.slane %v6325, 5
      %v6328 = vsel %vm1083, %v6323, %v6327
      %v6330 = vshrl.u32 %v6017, 16
      %v6332 = vrot.slane %v6330, 4
      %v6333 = vshll.u32 %v6017, 16
      %v6335 = vrot.slane %v6333, 5
      %v6336 = vor.u32 %v6332, %v6335
      %v6337 = vrot.slane %v6336, 4
      %v6339 = vshll.u32 %v6018, 16
      %v6341 = vrot.slane %v6339, 5
      %v6342 = vsel %vm1083, %v6337, %v6341
      %v6343 = vshrl.u32 %v6018, 16
      %v6345 = vrot.slane %v6343, 4
      %v6346 = vor.u32 %v6345, %v6341
      %v6347 = vrot.slane %v6346, 4
      %v6349 = vshll.u32 %v6037, 16
      %v6351 = vrot.slane %v6349, 5
      %v6352 = vsel %vm1083, %v6347, %v6351
      %v6354 = vshrl.u32 %v6019, 16
      %v6356 = vrot.slane %v6354, 4
      %v6357 = vshll.u32 %v6019, 16
      %v6359 = vrot.slane %v6357, 5
      %v6360 = vor.u32 %v6356, %v6359
      %v6361 = vrot.slane %v6360, 4
      %v6363 = vshll.u32 %v6020, 16
      %v6365 = vrot.slane %v6363, 5
      %v6366 = vsel %vm1083, %v6361, %v6365
      %v6367 = vshrl.u32 %v6020, 16
      %v6369 = vrot.slane %v6367, 4
      %v6370 = vor.u32 %v6369, %v6365
      %v6371 = vrot.slane %v6370, 4
      %v6373 = vshll.u32 %v6038, 16
      %v6375 = vrot.slane %v6373, 5
      %v6376 = vsel %vm1083, %v6371, %v6375
      %v6378 = vshrl.u32 %v6021, 16
      %v6380 = vrot.slane %v6378, 4
      %v6381 = vshll.u32 %v6021, 16
      %v6383 = vrot.slane %v6381, 5
      %v6384 = vor.u32 %v6380, %v6383
      %v6385 = vrot.slane %v6384, 4
      %v6387 = vshll.u32 %v6022, 16
      %v6389 = vrot.slane %v6387, 5
      %v6390 = vsel %vm1083, %v6385, %v6389
      %v6391 = vshrl.u32 %v6022, 16
      %v6393 = vrot.slane %v6391, 4
      %v6394 = vor.u32 %v6393, %v6389
      %v6395 = vrot.slane %v6394, 4
      %v6397 = vshll.u32 %v6039, 16
      %v6399 = vrot.slane %v6397, 5
      %v6400 = vsel %vm1083, %v6395, %v6399
      %v6402 = vshrl.u32 %v6023, 16
      %v6404 = vrot.slane %v6402, 4
      %v6405 = vshll.u32 %v6023, 16
      %v6407 = vrot.slane %v6405, 5
      %v6408 = vor.u32 %v6404, %v6407
      %v6409 = vrot.slane %v6408, 4
      %v6411 = vshll.u32 %v6024, 16
      %v6413 = vrot.slane %v6411, 5
      %v6414 = vsel %vm1083, %v6409, %v6413
      %v6415 = vshrl.u32 %v6024, 16
      %v6417 = vrot.slane %v6415, 4
      %v6418 = vor.u32 %v6417, %v6413
      %v6419 = vrot.slane %v6418, 4
      %v6421 = vshll.u32 %v6040, 16
      %v6423 = vrot.slane %v6421, 5
      %v6424 = vsel %vm1083, %v6419, %v6423
      %v6425 = vld [vmem:[%s5992] sm:$0xe]
      %v6426 = vld [vmem:[%s5992 + $0xc] sm:$0xe]
      %v6427 = vld [vmem:[%s5992 + $0x18] sm:$0xe]
      %v6428 = vld [vmem:[%s5992 + $0x24] sm:$0xe]
      %v6429 = vld [vmem:[%s5992 + $0x30] sm:$0xe]
      %v6430 = vld [vmem:[%s5992 + $0x3c] sm:$0xe]
      %v6431 = vld [vmem:[%s5992 + $0x48] sm:$0xe]
      %v6432 = vld [vmem:[%s5992 + $0x54] sm:$0xe]
      %v6433 = vld [vmem:[%s5992 + $0x60] sm:$0xe]
      %v6434 = vld [vmem:[%s5992 + $0x6c] sm:$0xe]
      %v6435 = vld [vmem:[%s5992 + $0x78] sm:$0xe]
      %v6436 = vld [vmem:[%s5992 + $0x84] sm:$0xe]
      %v6437 = vld [vmem:[%s5992 + $0x90] sm:$0xe]
      %v6438 = vld [vmem:[%s5992 + $0x9c] sm:$0xe]
      %v6439 = vld [vmem:[%s5992 + $0xa8] sm:$0xe]
      %v6440 = vld [vmem:[%s5992 + $0xb4] sm:$0xe]
      %v6489 = vrot.slane %v6425, 5
      %v6490 = vrot.slane %v6489, 4
      %v6491 = vrot.slane %v5994, 5
      %v6492 = vsel %vm1534, %v6490, %v6491
      %v6493 = vrot.slane %v6491, 4
      %v6494 = vrot.slane %v6025, 5
      %v6495 = vsel %vm1534, %v6493, %v6494
      %v6496 = vrot.slane %v6426, 5
      %v6497 = vrot.slane %v6496, 4
      %v6498 = vrot.slane %v5996, 5
      %v6499 = vsel %vm1534, %v6497, %v6498
      %v6500 = vrot.slane %v6498, 4
      %v6501 = vrot.slane %v6026, 5
      %v6502 = vsel %vm1534, %v6500, %v6501
      %v6503 = vrot.slane %v6427, 5
      %v6504 = vrot.slane %v6503, 4
      %v6505 = vrot.slane %v5998, 5
      %v6506 = vsel %vm1534, %v6504, %v6505
      %v6507 = vrot.slane %v6505, 4
      %v6508 = vrot.slane %v6027, 5
      %v6509 = vsel %vm1534, %v6507, %v6508
      %v6510 = vrot.slane %v6428, 5
      %v6511 = vrot.slane %v6510, 4
      %v6512 = vrot.slane %v6000, 5
      %v6513 = vsel %vm1534, %v6511, %v6512
      %v6514 = vrot.slane %v6512, 4
      %v6515 = vrot.slane %v6028, 5
      %v6516 = vsel %vm1534, %v6514, %v6515
      %v6517 = vrot.slane %v6429, 5
      %v6518 = vrot.slane %v6517, 4
      %v6519 = vrot.slane %v6002, 5
      %v6520 = vsel %vm1534, %v6518, %v6519
      %v6521 = vrot.slane %v6519, 4
      %v6522 = vrot.slane %v6029, 5
      %v6523 = vsel %vm1534, %v6521, %v6522
      %v6524 = vrot.slane %v6430, 5
      %v6525 = vrot.slane %v6524, 4
      %v6526 = vrot.slane %v6004, 5
      %v6527 = vsel %vm1534, %v6525, %v6526
      %v6528 = vrot.slane %v6526, 4
      %v6529 = vrot.slane %v6030, 5
      %v6530 = vsel %vm1534, %v6528, %v6529
      %v6531 = vrot.slane %v6431, 5
      %v6532 = vrot.slane %v6531, 4
      %v6533 = vrot.slane %v6006, 5
      %v6534 = vsel %vm1534, %v6532, %v6533
      %v6535 = vrot.slane %v6533, 4
      %v6536 = vrot.slane %v6031, 5
      %v6537 = vsel %vm1534, %v6535, %v6536
      %v6538 = vrot.slane %v6432, 5
      %v6539 = vrot.slane %v6538, 4
      %v6540 = vrot.slane %v6008, 5
      %v6541 = vsel %vm1534, %v6539, %v6540
      %v6542 = vrot.slane %v6540, 4
      %v6543 = vrot.slane %v6032, 5
      %v6544 = vsel %vm1534, %v6542, %v6543
      %v6545 = vrot.slane %v6433, 5
      %v6546 = vrot.slane %v6545, 4
      %v6547 = vrot.slane %v6010, 5
      %v6548 = vsel %vm1534, %v6546, %v6547
      %v6549 = vrot.slane %v6547, 4
      %v6550 = vrot.slane %v6033, 5
      %v6551 = vsel %vm1534, %v6549, %v6550
      %v6552 = vrot.slane %v6434, 5
      %v6553 = vrot.slane %v6552, 4
      %v6554 = vrot.slane %v6012, 5
      %v6555 = vsel %vm1534, %v6553, %v6554
      %v6556 = vrot.slane %v6554, 4
      %v6557 = vrot.slane %v6034, 5
      %v6558 = vsel %vm1534, %v6556, %v6557
      %v6559 = vrot.slane %v6435, 5
      %v6560 = vrot.slane %v6559, 4
      %v6561 = vrot.slane %v6014, 5
      %v6562 = vsel %vm1534, %v6560, %v6561
      %v6563 = vrot.slane %v6561, 4
      %v6564 = vrot.slane %v6035, 5
      %v6565 = vsel %vm1534, %v6563, %v6564
      %v6566 = vrot.slane %v6436, 5
      %v6567 = vrot.slane %v6566, 4
      %v6568 = vrot.slane %v6016, 5
      %v6569 = vsel %vm1534, %v6567, %v6568
      %v6570 = vrot.slane %v6568, 4
      %v6571 = vrot.slane %v6036, 5
      %v6572 = vsel %vm1534, %v6570, %v6571
      %v6573 = vrot.slane %v6437, 5
      %v6574 = vrot.slane %v6573, 4
      %v6575 = vrot.slane %v6018, 5
      %v6576 = vsel %vm1534, %v6574, %v6575
      %v6577 = vrot.slane %v6575, 4
      %v6578 = vrot.slane %v6037, 5
      %v6579 = vsel %vm1534, %v6577, %v6578
      %v6580 = vrot.slane %v6438, 5
      %v6581 = vrot.slane %v6580, 4
      %v6582 = vrot.slane %v6020, 5
      %v6583 = vsel %vm1534, %v6581, %v6582
      %v6584 = vrot.slane %v6582, 4
      %v6585 = vrot.slane %v6038, 5
      %v6586 = vsel %vm1534, %v6584, %v6585
      %v6587 = vrot.slane %v6439, 5
      %v6588 = vrot.slane %v6587, 4
      %v6589 = vrot.slane %v6022, 5
      %v6590 = vsel %vm1534, %v6588, %v6589
      %v6591 = vrot.slane %v6589, 4
      %v6592 = vrot.slane %v6039, 5
      %v6593 = vsel %vm1534, %v6591, %v6592
      %v6594 = vrot.slane %v6440, 5
      %v6595 = vrot.slane %v6594, 4
      %v6596 = vrot.slane %v6024, 5
      %v6597 = vsel %vm1534, %v6595, %v6596
      %v6598 = vrot.slane %v6596, 4
      %v6599 = vrot.slane %v6040, 5
      %v6600 = vsel %vm1534, %v6598, %v6599
      %v6617 = vunpack.c.l.b16 %v4776
      %v6618 = vunpack.c.l.b16 %v4777
      %v6619 = vunpack.c.l.b16 %v4778
      %v6620 = vunpack.c.l.b16 %v4779
      %v6621 = vunpack.c.l.b16 %v4780
      %v6622 = vunpack.c.l.b16 %v4781
      %v6623 = vunpack.c.l.b16 %v4782
      %v6624 = vunpack.c.l.b16 %v4783
      %v6625 = vunpack.c.l.b16 %v4784
      %v6626 = vunpack.c.l.b16 %v4785
      %v6627 = vunpack.c.l.b16 %v4786
      %v6628 = vunpack.c.l.b16 %v4787
      %v6629 = vunpack.c.l.b16 %v4788
      %v6630 = vunpack.c.l.b16 %v4789
      %v6631 = vunpack.c.l.b16 %v4790
      %v6632 = vunpack.c.l.b16 %v4791
      %v6633 = vunpack.c.l.b16 %v4792
      %v6634 = vunpack.c.l.b16 %v4793
      %v6635 = vunpack.c.l.b16 %v4794
      %v6636 = vunpack.c.l.b16 %v4795
      %v6637 = vunpack.c.l.b16 %v4796
      %v6638 = vunpack.c.l.b16 %v4797
      %v6639 = vunpack.c.l.b16 %v4798
      %v6640 = vunpack.c.l.b16 %v4799
      %v6641 = vunpack.c.l.b16 %v4800
      %v6642 = vunpack.c.l.b16 %v4801
      %v6643 = vunpack.c.l.b16 %v4802
      %v6644 = vunpack.c.l.b16 %v4803
      %v6645 = vunpack.c.l.b16 %v4804
      %v6646 = vunpack.c.l.b16 %v4805
      %v6647 = vunpack.c.l.b16 %v4806
      %v6648 = vunpack.c.l.b16 %v4807
      %v6649 = vpack.c.b16 %v6618, %v6617
      %v6650 = vpack.c.b16 %v6620, %v6619
      %v6651 = vpack.c.b16 %v6622, %v6621
      %v6652 = vpack.c.b16 %v6624, %v6623
      %v6653 = vpack.c.b16 %v6626, %v6625
      %v6654 = vpack.c.b16 %v6628, %v6627
      %v6655 = vpack.c.b16 %v6630, %v6629
      %v6656 = vpack.c.b16 %v6632, %v6631
      %v6657 = vpack.c.b16 %v6634, %v6633
      %v6658 = vpack.c.b16 %v6636, %v6635
      %v6659 = vpack.c.b16 %v6638, %v6637
      %v6660 = vpack.c.b16 %v6640, %v6639
      %v6661 = vpack.c.b16 %v6642, %v6641
      %v6662 = vpack.c.b16 %v6644, %v6643
      %v6663 = vpack.c.b16 %v6646, %v6645
      %v6664 = vpack.c.b16 %v6648, %v6647
      %v6665 = vunpack.c.l.b16 %v4837
      %v6666 = vunpack.c.l.b16 %v4847
      %v6667 = vunpack.c.l.b16 %v4861
      %v6668 = vunpack.c.l.b16 %v4871
      %v6669 = vunpack.c.l.b16 %v4885
      %v6670 = vunpack.c.l.b16 %v4895
      %v6671 = vunpack.c.l.b16 %v4909
      %v6672 = vunpack.c.l.b16 %v4919
      %v6673 = vunpack.c.l.b16 %v4933
      %v6674 = vunpack.c.l.b16 %v4943
      %v6675 = vunpack.c.l.b16 %v4957
      %v6676 = vunpack.c.l.b16 %v4967
      %v6677 = vunpack.c.l.b16 %v4981
      %v6678 = vunpack.c.l.b16 %v4991
      %v6679 = vunpack.c.l.b16 %v5005
      %v6680 = vunpack.c.l.b16 %v5015
      %v6681 = vunpack.c.l.b16 %v5029
      %v6682 = vunpack.c.l.b16 %v5039
      %v6683 = vunpack.c.l.b16 %v5053
      %v6684 = vunpack.c.l.b16 %v5063
      %v6685 = vunpack.c.l.b16 %v5077
      %v6686 = vunpack.c.l.b16 %v5087
      %v6687 = vunpack.c.l.b16 %v5101
      %v6688 = vunpack.c.l.b16 %v5111
      %v6689 = vunpack.c.l.b16 %v5125
      %v6690 = vunpack.c.l.b16 %v5135
      %v6691 = vunpack.c.l.b16 %v5149
      %v6692 = vunpack.c.l.b16 %v5159
      %v6693 = vunpack.c.l.b16 %v5173
      %v6694 = vunpack.c.l.b16 %v5183
      %v6695 = vunpack.c.l.b16 %v5197
      %v6696 = vunpack.c.l.b16 %v5207
      %v6697 = vpack.c.b16 %v6666, %v6665
      %v6698 = vpack.c.b16 %v6668, %v6667
      %v6699 = vpack.c.b16 %v6670, %v6669
      %v6700 = vpack.c.b16 %v6672, %v6671
      %v6701 = vpack.c.b16 %v6674, %v6673
      %v6702 = vpack.c.b16 %v6676, %v6675
      %v6703 = vpack.c.b16 %v6678, %v6677
      %v6704 = vpack.c.b16 %v6680, %v6679
      %v6705 = vpack.c.b16 %v6682, %v6681
      %v6706 = vpack.c.b16 %v6684, %v6683
      %v6707 = vpack.c.b16 %v6686, %v6685
      %v6708 = vpack.c.b16 %v6688, %v6687
      %v6709 = vpack.c.b16 %v6690, %v6689
      %v6710 = vpack.c.b16 %v6692, %v6691
      %v6711 = vpack.c.b16 %v6694, %v6693
      %v6712 = vpack.c.b16 %v6696, %v6695
      %6713 = vrot.lane.b32.xlu0 %v6697, 8
      %v6714 = vpop.permute.xlu0 %6713
      %6715 = vrot.lane.b32.xlu0 %v6698, 8
      %v6716 = vpop.permute.xlu0 %6715
      %6717 = vrot.lane.b32.xlu0 %v6699, 8
      %v6718 = vpop.permute.xlu0 %6717
      %6719 = vrot.lane.b32.xlu0 %v6700, 8
      %v6720 = vpop.permute.xlu0 %6719
      %6721 = vrot.lane.b32.xlu0 %v6701, 8
      %v6722 = vpop.permute.xlu0 %6721
      %6723 = vrot.lane.b32.xlu0 %v6702, 8
      %v6724 = vpop.permute.xlu0 %6723
      %6725 = vrot.lane.b32.xlu0 %v6703, 8
      %v6726 = vpop.permute.xlu0 %6725
      %6727 = vrot.lane.b32.xlu0 %v6704, 8
      %v6728 = vpop.permute.xlu0 %6727
      %6729 = vrot.lane.b32.xlu0 %v6705, 8
      %v6730 = vpop.permute.xlu0 %6729
      %6731 = vrot.lane.b32.xlu0 %v6706, 8
      %v6732 = vpop.permute.xlu0 %6731
      %6733 = vrot.lane.b32.xlu0 %v6707, 8
      %v6734 = vpop.permute.xlu0 %6733
      %6735 = vrot.lane.b32.xlu0 %v6708, 8
      %v6736 = vpop.permute.xlu0 %6735
      %6737 = vrot.lane.b32.xlu0 %v6709, 8
      %v6738 = vpop.permute.xlu0 %6737
      %6739 = vrot.lane.b32.xlu0 %v6710, 8
      %v6740 = vpop.permute.xlu0 %6739
      %6741 = vrot.lane.b32.xlu0 %v6711, 8
      %v6742 = vpop.permute.xlu0 %6741
      %6743 = vrot.lane.b32.xlu0 %v6712, 8
      %v6744 = vpop.permute.xlu0 %6743
      %v6745 = vunpack.c.l.b16 %v5275
      %v6746 = vunpack.c.l.b16 %v5278
      %v6747 = vunpack.c.l.b16 %v5282
      %v6748 = vunpack.c.l.b16 %v5285
      %v6749 = vunpack.c.l.b16 %v5289
      %v6750 = vunpack.c.l.b16 %v5292
      %v6751 = vunpack.c.l.b16 %v5296
      %v6752 = vunpack.c.l.b16 %v5299
      %v6753 = vunpack.c.l.b16 %v5303
      %v6754 = vunpack.c.l.b16 %v5306
      %v6755 = vunpack.c.l.b16 %v5310
      %v6756 = vunpack.c.l.b16 %v5313
      %v6757 = vunpack.c.l.b16 %v5317
      %v6758 = vunpack.c.l.b16 %v5320
      %v6759 = vunpack.c.l.b16 %v5324
      %v6760 = vunpack.c.l.b16 %v5327
      %v6761 = vunpack.c.l.b16 %v5331
      %v6762 = vunpack.c.l.b16 %v5334
      %v6763 = vunpack.c.l.b16 %v5338
      %v6764 = vunpack.c.l.b16 %v5341
      %v6765 = vunpack.c.l.b16 %v5345
      %v6766 = vunpack.c.l.b16 %v5348
      %v6767 = vunpack.c.l.b16 %v5352
      %v6768 = vunpack.c.l.b16 %v5355
      %v6769 = vunpack.c.l.b16 %v5359
      %v6770 = vunpack.c.l.b16 %v5362
      %v6771 = vunpack.c.l.b16 %v5366
      %v6772 = vunpack.c.l.b16 %v5369
      %v6773 = vunpack.c.l.b16 %v5373
      %v6774 = vunpack.c.l.b16 %v5376
      %v6775 = vunpack.c.l.b16 %v5380
      %v6776 = vunpack.c.l.b16 %v5383
      %v6777 = vpack.c.b16 %v6746, %v6745
      %v6778 = vpack.c.b16 %v6748, %v6747
      %v6779 = vpack.c.b16 %v6750, %v6749
      %v6780 = vpack.c.b16 %v6752, %v6751
      %v6781 = vpack.c.b16 %v6754, %v6753
      %v6782 = vpack.c.b16 %v6756, %v6755
      %v6783 = vpack.c.b16 %v6758, %v6757
      %v6784 = vpack.c.b16 %v6760, %v6759
      %v6785 = vpack.c.b16 %v6762, %v6761
      %v6786 = vpack.c.b16 %v6764, %v6763
      %v6787 = vpack.c.b16 %v6766, %v6765
      %v6788 = vpack.c.b16 %v6768, %v6767
      %v6789 = vpack.c.b16 %v6770, %v6769
      %v6790 = vpack.c.b16 %v6772, %v6771
      %v6791 = vpack.c.b16 %v6774, %v6773
      %v6792 = vpack.c.b16 %v6776, %v6775
      %6793 = vrot.lane.b32.xlu0 %v6777, 16
      %v6794 = vpop.permute.xlu0 %6793
      %6795 = vrot.lane.b32.xlu0 %v6778, 16
      %v6796 = vpop.permute.xlu0 %6795
      %6797 = vrot.lane.b32.xlu0 %v6779, 16
      %v6798 = vpop.permute.xlu0 %6797
      %6799 = vrot.lane.b32.xlu0 %v6780, 16
      %v6800 = vpop.permute.xlu0 %6799
      %6801 = vrot.lane.b32.xlu0 %v6781, 16
      %v6802 = vpop.permute.xlu0 %6801
      %6803 = vrot.lane.b32.xlu0 %v6782, 16
      %v6804 = vpop.permute.xlu0 %6803
      %6805 = vrot.lane.b32.xlu0 %v6783, 16
      %v6806 = vpop.permute.xlu0 %6805
      %6807 = vrot.lane.b32.xlu0 %v6784, 16
      %v6808 = vpop.permute.xlu0 %6807
      %6809 = vrot.lane.b32.xlu0 %v6785, 16
      %v6810 = vpop.permute.xlu0 %6809
      %6811 = vrot.lane.b32.xlu0 %v6786, 16
      %v6812 = vpop.permute.xlu0 %6811
      %6813 = vrot.lane.b32.xlu0 %v6787, 16
      %v6814 = vpop.permute.xlu0 %6813
      %6815 = vrot.lane.b32.xlu0 %v6788, 16
      %v6816 = vpop.permute.xlu0 %6815
      %6817 = vrot.lane.b32.xlu0 %v6789, 16
      %v6818 = vpop.permute.xlu0 %6817
      %6819 = vrot.lane.b32.xlu0 %v6790, 16
      %v6820 = vpop.permute.xlu0 %6819
      %6821 = vrot.lane.b32.xlu0 %v6791, 16
      %v6822 = vpop.permute.xlu0 %6821
      %6823 = vrot.lane.b32.xlu0 %v6792, 16
      %v6824 = vpop.permute.xlu0 %6823
      %v6841 = vunpack.c.l.b16 %v5384
      %v6842 = vunpack.c.l.b16 %v5385
      %v6843 = vunpack.c.l.b16 %v5386
      %v6844 = vunpack.c.l.b16 %v5387
      %v6845 = vunpack.c.l.b16 %v5388
      %v6846 = vunpack.c.l.b16 %v5389
      %v6847 = vunpack.c.l.b16 %v5390
      %v6848 = vunpack.c.l.b16 %v5391
      %v6849 = vunpack.c.l.b16 %v5392
      %v6850 = vunpack.c.l.b16 %v5393
      %v6851 = vunpack.c.l.b16 %v5394
      %v6852 = vunpack.c.l.b16 %v5395
      %v6853 = vunpack.c.l.b16 %v5396
      %v6854 = vunpack.c.l.b16 %v5397
      %v6855 = vunpack.c.l.b16 %v5398
      %v6856 = vunpack.c.l.b16 %v5399
      %v6857 = vunpack.c.l.b16 %v5400
      %v6858 = vunpack.c.l.b16 %v5401
      %v6859 = vunpack.c.l.b16 %v5402
      %v6860 = vunpack.c.l.b16 %v5403
      %v6861 = vunpack.c.l.b16 %v5404
      %v6862 = vunpack.c.l.b16 %v5405
      %v6863 = vunpack.c.l.b16 %v5406
      %v6864 = vunpack.c.l.b16 %v5407
      %v6865 = vunpack.c.l.b16 %v5408
      %v6866 = vunpack.c.l.b16 %v5409
      %v6867 = vunpack.c.l.b16 %v5410
      %v6868 = vunpack.c.l.b16 %v5411
      %v6869 = vunpack.c.l.b16 %v5412
      %v6870 = vunpack.c.l.b16 %v5413
      %v6871 = vunpack.c.l.b16 %v5414
      %v6872 = vunpack.c.l.b16 %v5415
      %v6873 = vpack.c.b16 %v6842, %v6841
      %v6874 = vpack.c.b16 %v6844, %v6843
      %v6875 = vpack.c.b16 %v6846, %v6845
      %v6876 = vpack.c.b16 %v6848, %v6847
      %v6877 = vpack.c.b16 %v6850, %v6849
      %v6878 = vpack.c.b16 %v6852, %v6851
      %v6879 = vpack.c.b16 %v6854, %v6853
      %v6880 = vpack.c.b16 %v6856, %v6855
      %v6881 = vpack.c.b16 %v6858, %v6857
      %v6882 = vpack.c.b16 %v6860, %v6859
      %v6883 = vpack.c.b16 %v6862, %v6861
      %v6884 = vpack.c.b16 %v6864, %v6863
      %v6885 = vpack.c.b16 %v6866, %v6865
      %v6886 = vpack.c.b16 %v6868, %v6867
      %v6887 = vpack.c.b16 %v6870, %v6869
      %v6888 = vpack.c.b16 %v6872, %v6871
      %6889 = vrot.lane.b32.xlu0 %v6873, 24
      %v6890 = vpop.permute.xlu0 %6889
      %6891 = vrot.lane.b32.xlu0 %v6874, 24
      %v6892 = vpop.permute.xlu0 %6891
      %6893 = vrot.lane.b32.xlu0 %v6875, 24
      %v6894 = vpop.permute.xlu0 %6893
      %6895 = vrot.lane.b32.xlu0 %v6876, 24
      %v6896 = vpop.permute.xlu0 %6895
      %6897 = vrot.lane.b32.xlu0 %v6877, 24
      %v6898 = vpop.permute.xlu0 %6897
      %6899 = vrot.lane.b32.xlu0 %v6878, 24
      %v6900 = vpop.permute.xlu0 %6899
      %6901 = vrot.lane.b32.xlu0 %v6879, 24
      %v6902 = vpop.permute.xlu0 %6901
      %6903 = vrot.lane.b32.xlu0 %v6880, 24
      %v6904 = vpop.permute.xlu0 %6903
      %6905 = vrot.lane.b32.xlu0 %v6881, 24
      %v6906 = vpop.permute.xlu0 %6905
      %6907 = vrot.lane.b32.xlu0 %v6882, 24
      %v6908 = vpop.permute.xlu0 %6907
      %6909 = vrot.lane.b32.xlu0 %v6883, 24
      %v6910 = vpop.permute.xlu0 %6909
      %6911 = vrot.lane.b32.xlu0 %v6884, 24
      %v6912 = vpop.permute.xlu0 %6911
      %6913 = vrot.lane.b32.xlu0 %v6885, 24
      %v6914 = vpop.permute.xlu0 %6913
      %6915 = vrot.lane.b32.xlu0 %v6886, 24
      %v6916 = vpop.permute.xlu0 %6915
      %6917 = vrot.lane.b32.xlu0 %v6887, 24
      %v6918 = vpop.permute.xlu0 %6917
      %6919 = vrot.lane.b32.xlu0 %v6888, 24
      %v6920 = vpop.permute.xlu0 %6919
      %v6921 = vunpack.c.l.b16 %v5445
      %v6922 = vunpack.c.l.b16 %v5455
      %v6923 = vunpack.c.l.b16 %v5469
      %v6924 = vunpack.c.l.b16 %v5479
      %v6925 = vunpack.c.l.b16 %v5493
      %v6926 = vunpack.c.l.b16 %v5503
      %v6927 = vunpack.c.l.b16 %v5517
      %v6928 = vunpack.c.l.b16 %v5527
      %v6929 = vunpack.c.l.b16 %v5541
      %v6930 = vunpack.c.l.b16 %v5551
      %v6931 = vunpack.c.l.b16 %v5565
      %v6932 = vunpack.c.l.b16 %v5575
      %v6933 = vunpack.c.l.b16 %v5589
      %v6934 = vunpack.c.l.b16 %v5599
      %v6935 = vunpack.c.l.b16 %v5613
      %v6936 = vunpack.c.l.b16 %v5623
      %v6937 = vunpack.c.l.b16 %v5637
      %v6938 = vunpack.c.l.b16 %v5647
      %v6939 = vunpack.c.l.b16 %v5661
      %v6940 = vunpack.c.l.b16 %v5671
      %v6941 = vunpack.c.l.b16 %v5685
      %v6942 = vunpack.c.l.b16 %v5695
      %v6943 = vunpack.c.l.b16 %v5709
      %v6944 = vunpack.c.l.b16 %v5719
      %v6945 = vunpack.c.l.b16 %v5733
      %v6946 = vunpack.c.l.b16 %v5743
      %v6947 = vunpack.c.l.b16 %v5757
      %v6948 = vunpack.c.l.b16 %v5767
      %v6949 = vunpack.c.l.b16 %v5781
      %v6950 = vunpack.c.l.b16 %v5791
      %v6951 = vunpack.c.l.b16 %v5805
      %v6952 = vunpack.c.l.b16 %v5815
      %v6953 = vpack.c.b16 %v6922, %v6921
      %v6954 = vpack.c.b16 %v6924, %v6923
      %v6955 = vpack.c.b16 %v6926, %v6925
      %v6956 = vpack.c.b16 %v6928, %v6927
      %v6957 = vpack.c.b16 %v6930, %v6929
      %v6958 = vpack.c.b16 %v6932, %v6931
      %v6959 = vpack.c.b16 %v6934, %v6933
      %v6960 = vpack.c.b16 %v6936, %v6935
      %v6961 = vpack.c.b16 %v6938, %v6937
      %v6962 = vpack.c.b16 %v6940, %v6939
      %v6963 = vpack.c.b16 %v6942, %v6941
      %v6964 = vpack.c.b16 %v6944, %v6943
      %v6965 = vpack.c.b16 %v6946, %v6945
      %v6966 = vpack.c.b16 %v6948, %v6947
      %v6967 = vpack.c.b16 %v6950, %v6949
      %v6968 = vpack.c.b16 %v6952, %v6951
      %6969 = vrot.lane.b32.xlu0 %v6953, 32
      %v6970 = vpop.permute.xlu0 %6969
      %6971 = vrot.lane.b32.xlu0 %v6954, 32
      %v6972 = vpop.permute.xlu0 %6971
      %6973 = vrot.lane.b32.xlu0 %v6955, 32
      %v6974 = vpop.permute.xlu0 %6973
      %6975 = vrot.lane.b32.xlu0 %v6956, 32
      %v6976 = vpop.permute.xlu0 %6975
      %6977 = vrot.lane.b32.xlu0 %v6957, 32
      %v6978 = vpop.permute.xlu0 %6977
      %6979 = vrot.lane.b32.xlu0 %v6958, 32
      %v6980 = vpop.permute.xlu0 %6979
      %6981 = vrot.lane.b32.xlu0 %v6959, 32
      %v6982 = vpop.permute.xlu0 %6981
      %6983 = vrot.lane.b32.xlu0 %v6960, 32
      %v6984 = vpop.permute.xlu0 %6983
      %6985 = vrot.lane.b32.xlu0 %v6961, 32
      %v6986 = vpop.permute.xlu0 %6985
      %6987 = vrot.lane.b32.xlu0 %v6962, 32
      %v6988 = vpop.permute.xlu0 %6987
      %6989 = vrot.lane.b32.xlu0 %v6963, 32
      %v6990 = vpop.permute.xlu0 %6989
      %6991 = vrot.lane.b32.xlu0 %v6964, 32
      %v6992 = vpop.permute.xlu0 %6991
      %6993 = vrot.lane.b32.xlu0 %v6965, 32
      %v6994 = vpop.permute.xlu0 %6993
      %6995 = vrot.lane.b32.xlu0 %v6966, 32
      %v6996 = vpop.permute.xlu0 %6995
      %6997 = vrot.lane.b32.xlu0 %v6967, 32
      %v6998 = vpop.permute.xlu0 %6997
      %6999 = vrot.lane.b32.xlu0 %v6968, 32
      %v7000 = vpop.permute.xlu0 %6999
      %v7001 = vunpack.c.l.b16 %v5883
      %v7002 = vunpack.c.l.b16 %v5886
      %v7003 = vunpack.c.l.b16 %v5890
      %v7004 = vunpack.c.l.b16 %v5893
      %v7005 = vunpack.c.l.b16 %v5897
      %v7006 = vunpack.c.l.b16 %v5900
      %v7007 = vunpack.c.l.b16 %v5904
      %v7008 = vunpack.c.l.b16 %v5907
      %v7009 = vunpack.c.l.b16 %v5911
      %v7010 = vunpack.c.l.b16 %v5914
      %v7011 = vunpack.c.l.b16 %v5918
      %v7012 = vunpack.c.l.b16 %v5921
      %v7013 = vunpack.c.l.b16 %v5925
      %v7014 = vunpack.c.l.b16 %v5928
      %v7015 = vunpack.c.l.b16 %v5932
      %v7016 = vunpack.c.l.b16 %v5935
      %v7017 = vunpack.c.l.b16 %v5939
      %v7018 = vunpack.c.l.b16 %v5942
      %v7019 = vunpack.c.l.b16 %v5946
      %v7020 = vunpack.c.l.b16 %v5949
      %v7021 = vunpack.c.l.b16 %v5953
      %v7022 = vunpack.c.l.b16 %v5956
      %v7023 = vunpack.c.l.b16 %v5960
      %v7024 = vunpack.c.l.b16 %v5963
      %v7025 = vunpack.c.l.b16 %v5967
      %v7026 = vunpack.c.l.b16 %v5970
      %v7027 = vunpack.c.l.b16 %v5974
      %v7028 = vunpack.c.l.b16 %v5977
      %v7029 = vunpack.c.l.b16 %v5981
      %v7030 = vunpack.c.l.b16 %v5984
      %v7031 = vunpack.c.l.b16 %v5988
      %v7032 = vunpack.c.l.b16 %v5991
      %v7033 = vpack.c.b16 %v7002, %v7001
      %v7034 = vpack.c.b16 %v7004, %v7003
      %v7035 = vpack.c.b16 %v7006, %v7005
      %v7036 = vpack.c.b16 %v7008, %v7007
      %v7037 = vpack.c.b16 %v7010, %v7009
      %v7038 = vpack.c.b16 %v7012, %v7011
      %v7039 = vpack.c.b16 %v7014, %v7013
      %v7040 = vpack.c.b16 %v7016, %v7015
      %v7041 = vpack.c.b16 %v7018, %v7017
      %v7042 = vpack.c.b16 %v7020, %v7019
      %v7043 = vpack.c.b16 %v7022, %v7021
      %v7044 = vpack.c.b16 %v7024, %v7023
      %v7045 = vpack.c.b16 %v7026, %v7025
      %v7046 = vpack.c.b16 %v7028, %v7027
      %v7047 = vpack.c.b16 %v7030, %v7029
      %v7048 = vpack.c.b16 %v7032, %v7031
      %7049 = vrot.lane.b32.xlu0 %v7033, 40
      %v7050 = vpop.permute.xlu0 %7049
      %7051 = vrot.lane.b32.xlu0 %v7034, 40
      %v7052 = vpop.permute.xlu0 %7051
      %7053 = vrot.lane.b32.xlu0 %v7035, 40
      %v7054 = vpop.permute.xlu0 %7053
      %7055 = vrot.lane.b32.xlu0 %v7036, 40
      %v7056 = vpop.permute.xlu0 %7055
      %7057 = vrot.lane.b32.xlu0 %v7037, 40
      %v7058 = vpop.permute.xlu0 %7057
      %7059 = vrot.lane.b32.xlu0 %v7038, 40
      %v7060 = vpop.permute.xlu0 %7059
      %7061 = vrot.lane.b32.xlu0 %v7039, 40
      %v7062 = vpop.permute.xlu0 %7061
      %7063 = vrot.lane.b32.xlu0 %v7040, 40
      %v7064 = vpop.permute.xlu0 %7063
      %7065 = vrot.lane.b32.xlu0 %v7041, 40
      %v7066 = vpop.permute.xlu0 %7065
      %7067 = vrot.lane.b32.xlu0 %v7042, 40
      %v7068 = vpop.permute.xlu0 %7067
      %7069 = vrot.lane.b32.xlu0 %v7043, 40
      %v7070 = vpop.permute.xlu0 %7069
      %7071 = vrot.lane.b32.xlu0 %v7044, 40
      %v7072 = vpop.permute.xlu0 %7071
      %7073 = vrot.lane.b32.xlu0 %v7045, 40
      %v7074 = vpop.permute.xlu0 %7073
      %7075 = vrot.lane.b32.xlu0 %v7046, 40
      %v7076 = vpop.permute.xlu0 %7075
      %7077 = vrot.lane.b32.xlu0 %v7047, 40
      %v7078 = vpop.permute.xlu0 %7077
      %7079 = vrot.lane.b32.xlu0 %v7048, 40
      %v7080 = vpop.permute.xlu0 %7079
      %v7097 = vunpack.c.l.b16 %v5993
      %v7098 = vunpack.c.l.b16 %v5994
      %v7099 = vunpack.c.l.b16 %v5995
      %v7100 = vunpack.c.l.b16 %v5996
      %v7101 = vunpack.c.l.b16 %v5997
      %v7102 = vunpack.c.l.b16 %v5998
      %v7103 = vunpack.c.l.b16 %v5999
      %v7104 = vunpack.c.l.b16 %v6000
      %v7105 = vunpack.c.l.b16 %v6001
      %v7106 = vunpack.c.l.b16 %v6002
      %v7107 = vunpack.c.l.b16 %v6003
      %v7108 = vunpack.c.l.b16 %v6004
      %v7109 = vunpack.c.l.b16 %v6005
      %v7110 = vunpack.c.l.b16 %v6006
      %v7111 = vunpack.c.l.b16 %v6007
      %v7112 = vunpack.c.l.b16 %v6008
      %v7113 = vunpack.c.l.b16 %v6009
      %v7114 = vunpack.c.l.b16 %v6010
      %v7115 = vunpack.c.l.b16 %v6011
      %v7116 = vunpack.c.l.b16 %v6012
      %v7117 = vunpack.c.l.b16 %v6013
      %v7118 = vunpack.c.l.b16 %v6014
      %v7119 = vunpack.c.l.b16 %v6015
      %v7120 = vunpack.c.l.b16 %v6016
      %v7121 = vunpack.c.l.b16 %v6017
      %v7122 = vunpack.c.l.b16 %v6018
      %v7123 = vunpack.c.l.b16 %v6019
      %v7124 = vunpack.c.l.b16 %v6020
      %v7125 = vunpack.c.l.b16 %v6021
      %v7126 = vunpack.c.l.b16 %v6022
      %v7127 = vunpack.c.l.b16 %v6023
      %v7128 = vunpack.c.l.b16 %v6024
      %v7129 = vpack.c.b16 %v7098, %v7097
      %v7130 = vpack.c.b16 %v7100, %v7099
      %v7131 = vpack.c.b16 %v7102, %v7101
      %v7132 = vpack.c.b16 %v7104, %v7103
      %v7133 = vpack.c.b16 %v7106, %v7105
      %v7134 = vpack.c.b16 %v7108, %v7107
      %v7135 = vpack.c.b16 %v7110, %v7109
      %v7136 = vpack.c.b16 %v7112, %v7111
      %v7137 = vpack.c.b16 %v7114, %v7113
      %v7138 = vpack.c.b16 %v7116, %v7115
      %v7139 = vpack.c.b16 %v7118, %v7117
      %v7140 = vpack.c.b16 %v7120, %v7119
      %v7141 = vpack.c.b16 %v7122, %v7121
      %v7142 = vpack.c.b16 %v7124, %v7123
      %v7143 = vpack.c.b16 %v7126, %v7125
      %v7144 = vpack.c.b16 %v7128, %v7127
      %7145 = vrot.lane.b32.xlu0 %v7129, 48
      %v7146 = vpop.permute.xlu0 %7145
      %7147 = vrot.lane.b32.xlu0 %v7130, 48
      %v7148 = vpop.permute.xlu0 %7147
      %7149 = vrot.lane.b32.xlu0 %v7131, 48
      %v7150 = vpop.permute.xlu0 %7149
      %7151 = vrot.lane.b32.xlu0 %v7132, 48
      %v7152 = vpop.permute.xlu0 %7151
      %7153 = vrot.lane.b32.xlu0 %v7133, 48
      %v7154 = vpop.permute.xlu0 %7153
      %7155 = vrot.lane.b32.xlu0 %v7134, 48
      %v7156 = vpop.permute.xlu0 %7155
      %7157 = vrot.lane.b32.xlu0 %v7135, 48
      %v7158 = vpop.permute.xlu0 %7157
      %7159 = vrot.lane.b32.xlu0 %v7136, 48
      %v7160 = vpop.permute.xlu0 %7159
      %7161 = vrot.lane.b32.xlu0 %v7137, 48
      %v7162 = vpop.permute.xlu0 %7161
      %7163 = vrot.lane.b32.xlu0 %v7138, 48
      %v7164 = vpop.permute.xlu0 %7163
      %7165 = vrot.lane.b32.xlu0 %v7139, 48
      %v7166 = vpop.permute.xlu0 %7165
      %7167 = vrot.lane.b32.xlu0 %v7140, 48
      %v7168 = vpop.permute.xlu0 %7167
      %7169 = vrot.lane.b32.xlu0 %v7141, 48
      %v7170 = vpop.permute.xlu0 %7169
      %7171 = vrot.lane.b32.xlu0 %v7142, 48
      %v7172 = vpop.permute.xlu0 %7171
      %7173 = vrot.lane.b32.xlu0 %v7143, 48
      %v7174 = vpop.permute.xlu0 %7173
      %7175 = vrot.lane.b32.xlu0 %v7144, 48
      %v7176 = vpop.permute.xlu0 %7175
      %v7177 = vunpack.c.l.b16 %v6054
      %v7178 = vunpack.c.l.b16 %v6064
      %v7179 = vunpack.c.l.b16 %v6078
      %v7180 = vunpack.c.l.b16 %v6088
      %v7181 = vunpack.c.l.b16 %v6102
      %v7182 = vunpack.c.l.b16 %v6112
      %v7183 = vunpack.c.l.b16 %v6126
      %v7184 = vunpack.c.l.b16 %v6136
      %v7185 = vunpack.c.l.b16 %v6150
      %v7186 = vunpack.c.l.b16 %v6160
      %v7187 = vunpack.c.l.b16 %v6174
      %v7188 = vunpack.c.l.b16 %v6184
      %v7189 = vunpack.c.l.b16 %v6198
      %v7190 = vunpack.c.l.b16 %v6208
      %v7191 = vunpack.c.l.b16 %v6222
      %v7192 = vunpack.c.l.b16 %v6232
      %v7193 = vunpack.c.l.b16 %v6246
      %v7194 = vunpack.c.l.b16 %v6256
      %v7195 = vunpack.c.l.b16 %v6270
      %v7196 = vunpack.c.l.b16 %v6280
      %v7197 = vunpack.c.l.b16 %v6294
      %v7198 = vunpack.c.l.b16 %v6304
      %v7199 = vunpack.c.l.b16 %v6318
      %v7200 = vunpack.c.l.b16 %v6328
      %v7201 = vunpack.c.l.b16 %v6342
      %v7202 = vunpack.c.l.b16 %v6352
      %v7203 = vunpack.c.l.b16 %v6366
      %v7204 = vunpack.c.l.b16 %v6376
      %v7205 = vunpack.c.l.b16 %v6390
      %v7206 = vunpack.c.l.b16 %v6400
      %v7207 = vunpack.c.l.b16 %v6414
      %v7208 = vunpack.c.l.b16 %v6424
      %v7209 = vpack.c.b16 %v7178, %v7177
      %v7210 = vpack.c.b16 %v7180, %v7179
      %v7211 = vpack.c.b16 %v7182, %v7181
      %v7212 = vpack.c.b16 %v7184, %v7183
      %v7213 = vpack.c.b16 %v7186, %v7185
      %v7214 = vpack.c.b16 %v7188, %v7187
      %v7215 = vpack.c.b16 %v7190, %v7189
      %v7216 = vpack.c.b16 %v7192, %v7191
      %v7217 = vpack.c.b16 %v7194, %v7193
      %v7218 = vpack.c.b16 %v7196, %v7195
      %v7219 = vpack.c.b16 %v7198, %v7197
      %v7220 = vpack.c.b16 %v7200, %v7199
      %v7221 = vpack.c.b16 %v7202, %v7201
      %v7222 = vpack.c.b16 %v7204, %v7203
      %v7223 = vpack.c.b16 %v7206, %v7205
      %v7224 = vpack.c.b16 %v7208, %v7207
      %7225 = vrot.lane.b32.xlu0 %v7209, 56
      %v7226 = vpop.permute.xlu0 %7225
      %7227 = vrot.lane.b32.xlu0 %v7210, 56
      %v7228 = vpop.permute.xlu0 %7227
      %7229 = vrot.lane.b32.xlu0 %v7211, 56
      %v7230 = vpop.permute.xlu0 %7229
      %7231 = vrot.lane.b32.xlu0 %v7212, 56
      %v7232 = vpop.permute.xlu0 %7231
      %7233 = vrot.lane.b32.xlu0 %v7213, 56
      %v7234 = vpop.permute.xlu0 %7233
      %7235 = vrot.lane.b32.xlu0 %v7214, 56
      %v7236 = vpop.permute.xlu0 %7235
      %7237 = vrot.lane.b32.xlu0 %v7215, 56
      %v7238 = vpop.permute.xlu0 %7237
      %7239 = vrot.lane.b32.xlu0 %v7216, 56
      %v7240 = vpop.permute.xlu0 %7239
      %7241 = vrot.lane.b32.xlu0 %v7217, 56
      %v7242 = vpop.permute.xlu0 %7241
      %7243 = vrot.lane.b32.xlu0 %v7218, 56
      %v7244 = vpop.permute.xlu0 %7243
      %7245 = vrot.lane.b32.xlu0 %v7219, 56
      %v7246 = vpop.permute.xlu0 %7245
      %7247 = vrot.lane.b32.xlu0 %v7220, 56
      %v7248 = vpop.permute.xlu0 %7247
      %7249 = vrot.lane.b32.xlu0 %v7221, 56
      %v7250 = vpop.permute.xlu0 %7249
      %7251 = vrot.lane.b32.xlu0 %v7222, 56
      %v7252 = vpop.permute.xlu0 %7251
      %7253 = vrot.lane.b32.xlu0 %v7223, 56
      %v7254 = vpop.permute.xlu0 %7253
      %7255 = vrot.lane.b32.xlu0 %v7224, 56
      %v7256 = vpop.permute.xlu0 %7255
      %v7257 = vunpack.c.l.b16 %v6492
      %v7258 = vunpack.c.l.b16 %v6495
      %v7259 = vunpack.c.l.b16 %v6499
      %v7260 = vunpack.c.l.b16 %v6502
      %v7261 = vunpack.c.l.b16 %v6506
      %v7262 = vunpack.c.l.b16 %v6509
      %v7263 = vunpack.c.l.b16 %v6513
      %v7264 = vunpack.c.l.b16 %v6516
      %v7265 = vunpack.c.l.b16 %v6520
      %v7266 = vunpack.c.l.b16 %v6523
      %v7267 = vunpack.c.l.b16 %v6527
      %v7268 = vunpack.c.l.b16 %v6530
      %v7269 = vunpack.c.l.b16 %v6534
      %v7270 = vunpack.c.l.b16 %v6537
      %v7271 = vunpack.c.l.b16 %v6541
      %v7272 = vunpack.c.l.b16 %v6544
      %v7273 = vunpack.c.l.b16 %v6548
      %v7274 = vunpack.c.l.b16 %v6551
      %v7275 = vunpack.c.l.b16 %v6555
      %v7276 = vunpack.c.l.b16 %v6558
      %v7277 = vunpack.c.l.b16 %v6562
      %v7278 = vunpack.c.l.b16 %v6565
      %v7279 = vunpack.c.l.b16 %v6569
      %v7280 = vunpack.c.l.b16 %v6572
      %v7281 = vunpack.c.l.b16 %v6576
      %v7282 = vunpack.c.l.b16 %v6579
      %v7283 = vunpack.c.l.b16 %v6583
      %v7284 = vunpack.c.l.b16 %v6586
      %v7285 = vunpack.c.l.b16 %v6590
      %v7286 = vunpack.c.l.b16 %v6593
      %v7287 = vunpack.c.l.b16 %v6597
      %v7288 = vunpack.c.l.b16 %v6600
      %v7289 = vpack.c.b16 %v7258, %v7257
      %v7290 = vpack.c.b16 %v7260, %v7259
      %v7291 = vpack.c.b16 %v7262, %v7261
      %v7292 = vpack.c.b16 %v7264, %v7263
      %v7293 = vpack.c.b16 %v7266, %v7265
      %v7294 = vpack.c.b16 %v7268, %v7267
      %v7295 = vpack.c.b16 %v7270, %v7269
      %v7296 = vpack.c.b16 %v7272, %v7271
      %v7297 = vpack.c.b16 %v7274, %v7273
      %v7298 = vpack.c.b16 %v7276, %v7275
      %v7299 = vpack.c.b16 %v7278, %v7277
      %v7300 = vpack.c.b16 %v7280, %v7279
      %v7301 = vpack.c.b16 %v7282, %v7281
      %v7302 = vpack.c.b16 %v7284, %v7283
      %v7303 = vpack.c.b16 %v7286, %v7285
      %v7304 = vpack.c.b16 %v7288, %v7287
      %7305 = vrot.lane.b32.xlu0 %v7289, 64
      %v7306 = vpop.permute.xlu0 %7305
      %7307 = vrot.lane.b32.xlu0 %v7290, 64
      %v7308 = vpop.permute.xlu0 %7307
      %7309 = vrot.lane.b32.xlu0 %v7291, 64
      %v7310 = vpop.permute.xlu0 %7309
      %7311 = vrot.lane.b32.xlu0 %v7292, 64
      %v7312 = vpop.permute.xlu0 %7311
      %7313 = vrot.lane.b32.xlu0 %v7293, 64
      %v7314 = vpop.permute.xlu0 %7313
      %7315 = vrot.lane.b32.xlu0 %v7294, 64
      %v7316 = vpop.permute.xlu0 %7315
      %7317 = vrot.lane.b32.xlu0 %v7295, 64
      %v7318 = vpop.permute.xlu0 %7317
      %7319 = vrot.lane.b32.xlu0 %v7296, 64
      %v7320 = vpop.permute.xlu0 %7319
      %7321 = vrot.lane.b32.xlu0 %v7297, 64
      %v7322 = vpop.permute.xlu0 %7321
      %7323 = vrot.lane.b32.xlu0 %v7298, 64
      %v7324 = vpop.permute.xlu0 %7323
      %7325 = vrot.lane.b32.xlu0 %v7299, 64
      %v7326 = vpop.permute.xlu0 %7325
      %7327 = vrot.lane.b32.xlu0 %v7300, 64
      %v7328 = vpop.permute.xlu0 %7327
      %7329 = vrot.lane.b32.xlu0 %v7301, 64
      %v7330 = vpop.permute.xlu0 %7329
      %7331 = vrot.lane.b32.xlu0 %v7302, 64
      %v7332 = vpop.permute.xlu0 %7331
      %7333 = vrot.lane.b32.xlu0 %v7303, 64
      %v7334 = vpop.permute.xlu0 %7333
      %7335 = vrot.lane.b32.xlu0 %v7304, 64
      %v7336 = vpop.permute.xlu0 %7335
      %v7339 = vsel %vm3649, %v6649, %v6714
      %v7342 = vsel %vm3649, %v6650, %v6716
      %v7345 = vsel %vm3649, %v6651, %v6718
      %v7348 = vsel %vm3649, %v6652, %v6720
      %v7351 = vsel %vm3649, %v6653, %v6722
      %v7354 = vsel %vm3649, %v6654, %v6724
      %v7357 = vsel %vm3649, %v6655, %v6726
      %v7360 = vsel %vm3649, %v6656, %v6728
      %v7363 = vsel %vm3649, %v6657, %v6730
      %v7366 = vsel %vm3649, %v6658, %v6732
      %v7369 = vsel %vm3649, %v6659, %v6734
      %v7372 = vsel %vm3649, %v6660, %v6736
      %v7375 = vsel %vm3649, %v6661, %v6738
      %v7378 = vsel %vm3649, %v6662, %v6740
      %v7381 = vsel %vm3649, %v6663, %v6742
      %v7384 = vsel %vm3649, %v6664, %v6744
      %v7386 = vsel %vm3715, %v7339, %v6794
      %v7388 = vsel %vm3715, %v7342, %v6796
      %v7390 = vsel %vm3715, %v7345, %v6798
      %v7392 = vsel %vm3715, %v7348, %v6800
      %v7394 = vsel %vm3715, %v7351, %v6802
      %v7396 = vsel %vm3715, %v7354, %v6804
      %v7398 = vsel %vm3715, %v7357, %v6806
      %v7400 = vsel %vm3715, %v7360, %v6808
      %v7402 = vsel %vm3715, %v7363, %v6810
      %v7404 = vsel %vm3715, %v7366, %v6812
      %v7406 = vsel %vm3715, %v7369, %v6814
      %v7408 = vsel %vm3715, %v7372, %v6816
      %v7410 = vsel %vm3715, %v7375, %v6818
      %v7412 = vsel %vm3715, %v7378, %v6820
      %v7414 = vsel %vm3715, %v7381, %v6822
      %v7416 = vsel %vm3715, %v7384, %v6824
      %v7418 = vsel %vm3781, %v7386, %v6890
      %v7420 = vsel %vm3781, %v7388, %v6892
      %v7422 = vsel %vm3781, %v7390, %v6894
      %v7424 = vsel %vm3781, %v7392, %v6896
      %v7426 = vsel %vm3781, %v7394, %v6898
      %v7428 = vsel %vm3781, %v7396, %v6900
      %v7430 = vsel %vm3781, %v7398, %v6902
      %v7432 = vsel %vm3781, %v7400, %v6904
      %v7434 = vsel %vm3781, %v7402, %v6906
      %v7436 = vsel %vm3781, %v7404, %v6908
      %v7438 = vsel %vm3781, %v7406, %v6910
      %v7440 = vsel %vm3781, %v7408, %v6912
      %v7442 = vsel %vm3781, %v7410, %v6914
      %v7444 = vsel %vm3781, %v7412, %v6916
      %v7446 = vsel %vm3781, %v7414, %v6918
      %v7448 = vsel %vm3781, %v7416, %v6920
      %v7450 = vsel %vm3847, %v7418, %v6970
      %v7452 = vsel %vm3847, %v7420, %v6972
      %v7454 = vsel %vm3847, %v7422, %v6974
      %v7456 = vsel %vm3847, %v7424, %v6976
      %v7458 = vsel %vm3847, %v7426, %v6978
      %v7460 = vsel %vm3847, %v7428, %v6980
      %v7462 = vsel %vm3847, %v7430, %v6982
      %v7464 = vsel %vm3847, %v7432, %v6984
      %v7466 = vsel %vm3847, %v7434, %v6986
      %v7468 = vsel %vm3847, %v7436, %v6988
      %v7470 = vsel %vm3847, %v7438, %v6990
      %v7472 = vsel %vm3847, %v7440, %v6992
      %v7474 = vsel %vm3847, %v7442, %v6994
      %v7476 = vsel %vm3847, %v7444, %v6996
      %v7478 = vsel %vm3847, %v7446, %v6998
      %v7480 = vsel %vm3847, %v7448, %v7000
      %vm7481 = vcmask 326656
      %v7483 = vsel %vm7481, %v7450, %v7050
      %v7485 = vsel %vm7481, %v7452, %v7052
      %v7487 = vsel %vm7481, %v7454, %v7054
      %v7489 = vsel %vm7481, %v7456, %v7056
      %v7491 = vsel %vm7481, %v7458, %v7058
      %v7493 = vsel %vm7481, %v7460, %v7060
      %v7495 = vsel %vm7481, %v7462, %v7062
      %v7497 = vsel %vm7481, %v7464, %v7064
      %v7499 = vsel %vm7481, %v7466, %v7066
      %v7501 = vsel %vm7481, %v7468, %v7068
      %v7503 = vsel %vm7481, %v7470, %v7070
      %v7505 = vsel %vm7481, %v7472, %v7072
      %v7507 = vsel %vm7481, %v7474, %v7074
      %v7509 = vsel %vm7481, %v7476, %v7076
      %v7511 = vsel %vm7481, %v7478, %v7078
      %v7513 = vsel %vm7481, %v7480, %v7080
      %vm7514 = vcmask 392192
      %v7516 = vsel %vm7514, %v7483, %v7146
      %v7518 = vsel %vm7514, %v7485, %v7148
      %v7520 = vsel %vm7514, %v7487, %v7150
      %v7522 = vsel %vm7514, %v7489, %v7152
      %v7524 = vsel %vm7514, %v7491, %v7154
      %v7526 = vsel %vm7514, %v7493, %v7156
      %v7528 = vsel %vm7514, %v7495, %v7158
      %v7530 = vsel %vm7514, %v7497, %v7160
      %v7532 = vsel %vm7514, %v7499, %v7162
      %v7534 = vsel %vm7514, %v7501, %v7164
      %v7536 = vsel %vm7514, %v7503, %v7166
      %v7538 = vsel %vm7514, %v7505, %v7168
      %v7540 = vsel %vm7514, %v7507, %v7170
      %v7542 = vsel %vm7514, %v7509, %v7172
      %v7544 = vsel %vm7514, %v7511, %v7174
      %v7546 = vsel %vm7514, %v7513, %v7176
      %vm7547 = vcmask 457728
      %v7549 = vsel %vm7547, %v7516, %v7226
      %v7551 = vsel %vm7547, %v7518, %v7228
      %v7553 = vsel %vm7547, %v7520, %v7230
      %v7555 = vsel %vm7547, %v7522, %v7232
      %v7557 = vsel %vm7547, %v7524, %v7234
      %v7559 = vsel %vm7547, %v7526, %v7236
      %v7561 = vsel %vm7547, %v7528, %v7238
      %v7563 = vsel %vm7547, %v7530, %v7240
      %v7565 = vsel %vm7547, %v7532, %v7242
      %v7567 = vsel %vm7547, %v7534, %v7244
      %v7569 = vsel %vm7547, %v7536, %v7246
      %v7571 = vsel %vm7547, %v7538, %v7248
      %v7573 = vsel %vm7547, %v7540, %v7250
      %v7575 = vsel %vm7547, %v7542, %v7252
      %v7577 = vsel %vm7547, %v7544, %v7254
      %v7579 = vsel %vm7547, %v7546, %v7256
      %vm7580 = vcmask 523264
      %v7582 = vsel %vm7580, %v7549, %v7306
      %v7584 = vsel %vm7580, %v7551, %v7308
      %v7586 = vsel %vm7580, %v7553, %v7310
      %v7588 = vsel %vm7580, %v7555, %v7312
      %v7590 = vsel %vm7580, %v7557, %v7314
      %v7592 = vsel %vm7580, %v7559, %v7316
      %v7594 = vsel %vm7580, %v7561, %v7318
      %v7596 = vsel %vm7580, %v7563, %v7320
      %v7598 = vsel %vm7580, %v7565, %v7322
      %v7600 = vsel %vm7580, %v7567, %v7324
      %v7602 = vsel %vm7580, %v7569, %v7326
      %v7604 = vsel %vm7580, %v7571, %v7328
      %v7606 = vsel %vm7580, %v7573, %v7330
      %v7608 = vsel %vm7580, %v7575, %v7332
      %v7610 = vsel %vm7580, %v7577, %v7334
      %v7612 = vsel %vm7580, %v7579, %v7336
      %v7613 = vld [vmem:[%s4] sm:$0xf]
      %v7614 = vld [vmem:[%s4 + $0x4] sm:$0xf]
      %v7615 = vld [vmem:[%s4 + $0x8] sm:$0xf]
      %v7616 = vld [vmem:[%s4 + $0xc] sm:$0xf]
      %v7617 = vld [vmem:[%s4 + $0x10] sm:$0xf]
      %v7618 = vld [vmem:[%s4 + $0x14] sm:$0xf]
      %v7619 = vld [vmem:[%s4 + $0x18] sm:$0xf]
      %v7620 = vld [vmem:[%s4 + $0x1c] sm:$0xf]
      %v7621 = vld [vmem:[%s4 + $0x20] sm:$0xf]
      %v7622 = vld [vmem:[%s6] sm:$0x1]
      %v7624 = vlaneseq
      %v7625 = vshrl.u32 %v7624, 7
      %v7626 = vsub.s32 0, %v7625
      %v7627 = vrot.slane %v7622, %v7626
      %v7638 = vunpack.c.l.b16 %v7613
      %v7639 = vunpack.c.l.b16 %v7614
      %v7640 = vunpack.c.l.b16 %v7615
      %v7641 = vunpack.c.l.b16 %v7616
      %v7642 = vunpack.c.l.b16 %v7617
      %v7643 = vunpack.c.l.b16 %v7618
      %v7644 = vunpack.c.l.b16 %v7619
      %v7645 = vunpack.c.l.b16 %v7620
      %v7646 = vunpack.c.l.b16 %v7621
      %v7647 = vpack.c.b16 %v7639, %v7638
      %v7648 = vpack.c.b16 %v7641, %v7640
      %v7649 = vpack.c.b16 %v7643, %v7642
      %v7650 = vpack.c.b16 %v7645, %v7644
      %v7651 = vpack.c.b16 %v7646, %v7646
      %vm7656 = vcmask 588800
      %v7657 = vsel %vm7656, %v7582, 0
      %v7659 = vsel %vm7656, %v7584, 0
      %v7661 = vsel %vm7656, %v7586, 0
      %v7663 = vsel %vm7656, %v7588, 0
      %v7665 = vsel %vm7656, %v7590, 0
      %v7667 = vsel %vm7656, %v7592, 0
      %v7669 = vsel %vm7656, %v7594, 0
      %v7671 = vsel %vm7656, %v7596, 0
      %v7673 = vsel %vm7656, %v7598, 0
      %v7675 = vsel %vm7656, %v7600, 0
      %v7677 = vsel %vm7656, %v7602, 0
      %v7679 = vsel %vm7656, %v7604, 0
      %v7681 = vsel %vm7656, %v7606, 0
      %v7683 = vsel %vm7656, %v7608, 0
      %v7685 = vsel %vm7656, %v7610, 0
      %v7687 = vsel %vm7656, %v7612, 0
      %vm7689 = vcmask 1043456
      %v7691 = vsel %vm7689, %v7651, 0
      %7693 = vmatprep.subr.bf16.mxu0 0
      %7694 = vmatpush1.bf16.msra.mxu0 %v7647
      %7695 = vmatprep.subr.bf16.mxu0 0
      %7696 = vmatpush1.bf16.msra.mxu0 %v7648
      %7697 = vmatprep.subr.bf16.mxu0 0
      %7698 = vmatpush1.bf16.msra.mxu0 %v7649
      %7699 = vmatprep.subr.bf16.mxu0 0
      %7700 = vmatpush1.bf16.msra.mxu0 %v7650
      %7701 = vmatprep.subr.bf16.mxu0 0
      %7702 = vmatpush1.bf16.msra.mxu0 %v7691
      %7703 = vmatprep.subr.bf16.mxu0 0
      %7704 = vmatpush1.bf16.msra.mxu0 0
      %7705 = vmatprep.subr.bf16.mxu0 0
      %7706 = vmatpush1.bf16.msra.mxu0 0
      %7707 = vmatprep.subr.bf16.mxu0 0
      %7708 = vmatpush1.bf16.msra.mxu0 0
      %7709 = vmatprep.subr.bf16.mxu0 0
      %7710 = vmatpush1.bf16.msra.mxu0 0
      %7711 = vmatprep.subr.bf16.mxu0 0
      %7712 = vmatpush1.bf16.msra.mxu0 0
      %7713 = vmatprep.subr.bf16.mxu0 0
      %7714 = vmatpush1.bf16.msra.mxu0 0
      %7715 = vmatprep.subr.bf16.mxu0 0
      %7716 = vmatpush1.bf16.msra.mxu0 0
      %7717 = vmatprep.subr.bf16.mxu0 0
      %7718 = vmatpush1.bf16.msra.mxu0 0
      %7719 = vmatprep.subr.bf16.mxu0 0
      %7720 = vmatpush1.bf16.msra.mxu0 0
      %7721 = vmatprep.subr.bf16.mxu0 0
      %7722 = vmatpush1.bf16.msra.mxu0 0
      %7723 = vmatprep.subr.bf16.mxu0 0
      %7724 = vmatpush1.bf16.msra.mxu0 0
      %7725 = vmatprep.mubr.bf16.mxu0 0
      %7726 = vmatmul.mubr.bf16.gmra.mrb[0].mxu0 %v7657
      %v7727 = vpop.f32.mrb[0].mxu0
      %v7728 = vadd.f32 %v7627, %v7727
      %v7729 = vpop.f32.mrb[0].mxu0
      %v7730 = vpop.f32.mrb[0].mxu0
      %v7731 = vadd.f32 %v7627, %v7730
      %v7732 = vpop.f32.mrb[0].mxu0
      %7733 = vmatprep.mubr.bf16.mxu0 0
      %7734 = vmatmul.mubr.bf16.gmra.mrb[0].mxu0 %v7659
      %v7735 = vpop.f32.mrb[0].mxu0
      %v7736 = vadd.f32 %v7627, %v7735
      %v7737 = vpop.f32.mrb[0].mxu0
      %v7738 = vpop.f32.mrb[0].mxu0
      %v7739 = vadd.f32 %v7627, %v7738
      %v7740 = vpop.f32.mrb[0].mxu0
      %7741 = vmatprep.mubr.bf16.mxu0 0
      %7742 = vmatmul.mubr.bf16.gmra.mrb[0].mxu0 %v7661
      %v7743 = vpop.f32.mrb[0].mxu0
      %v7744 = vadd.f32 %v7627, %v7743
      %v7745 = vpop.f32.mrb[0].mxu0
      %v7746 = vpop.f32.mrb[0].mxu0
      %v7747 = vadd.f32 %v7627, %v7746
      %v7748 = vpop.f32.mrb[0].mxu0
      %7749 = vmatprep.mubr.bf16.mxu0 0
      %7750 = vmatmul.mubr.bf16.gmra.mrb[0].mxu0 %v7663
      %v7751 = vpop.f32.mrb[0].mxu0
      %v7752 = vadd.f32 %v7627, %v7751
      %v7753 = vpop.f32.mrb[0].mxu0
      %v7754 = vpop.f32.mrb[0].mxu0
      %v7755 = vadd.f32 %v7627, %v7754
      %v7756 = vpop.f32.mrb[0].mxu0
      %7757 = vmatprep.mubr.bf16.mxu0 0
      %7758 = vmatmul.mubr.bf16.gmra.mrb[0].mxu0 %v7665
      %v7759 = vpop.f32.mrb[0].mxu0
      %v7760 = vadd.f32 %v7627, %v7759
      %v7761 = vpop.f32.mrb[0].mxu0
      %v7762 = vpop.f32.mrb[0].mxu0
      %v7763 = vadd.f32 %v7627, %v7762
      %v7764 = vpop.f32.mrb[0].mxu0
      %7765 = vmatprep.mubr.bf16.mxu0 0
      %7766 = vmatmul.mubr.bf16.gmra.mrb[0].mxu0 %v7667
      %v7767 = vpop.f32.mrb[0].mxu0
      %v7768 = vadd.f32 %v7627, %v7767
      %v7769 = vpop.f32.mrb[0].mxu0
      %v7770 = vpop.f32.mrb[0].mxu0
      %v7771 = vadd.f32 %v7627, %v7770
      %v7772 = vpop.f32.mrb[0].mxu0
      %7773 = vmatprep.mubr.bf16.mxu0 0
      %7774 = vmatmul.mubr.bf16.gmra.mrb[0].mxu0 %v7669
      %v7775 = vpop.f32.mrb[0].mxu0
      %v7776 = vadd.f32 %v7627, %v7775
      %v7777 = vpop.f32.mrb[0].mxu0
      %v7778 = vpop.f32.mrb[0].mxu0
      %v7779 = vadd.f32 %v7627, %v7778
      %v7780 = vpop.f32.mrb[0].mxu0
      %7781 = vmatprep.mubr.bf16.mxu0 0
      %7782 = vmatmul.mubr.bf16.gmra.mrb[0].mxu0 %v7671
      %v7783 = vpop.f32.mrb[0].mxu0
      %v7784 = vadd.f32 %v7627, %v7783
      %v7785 = vpop.f32.mrb[0].mxu0
      %v7786 = vpop.f32.mrb[0].mxu0
      %v7787 = vadd.f32 %v7627, %v7786
      %v7788 = vpop.f32.mrb[0].mxu0
      %7789 = vmatprep.mubr.bf16.mxu0 0
      %7790 = vmatmul.mubr.bf16.gmra.mrb[0].mxu0 %v7673
      %v7791 = vpop.f32.mrb[0].mxu0
      %v7792 = vadd.f32 %v7627, %v7791
      %v7793 = vpop.f32.mrb[0].mxu0
      %v7794 = vpop.f32.mrb[0].mxu0
      %v7795 = vadd.f32 %v7627, %v7794
      %v7796 = vpop.f32.mrb[0].mxu0
      %7797 = vmatprep.mubr.bf16.mxu0 0
      %7798 = vmatmul.mubr.bf16.gmra.mrb[0].mxu0 %v7675
      %v7799 = vpop.f32.mrb[0].mxu0
      %v7800 = vadd.f32 %v7627, %v7799
      %v7801 = vpop.f32.mrb[0].mxu0
      %v7802 = vpop.f32.mrb[0].mxu0
      %v7803 = vadd.f32 %v7627, %v7802
      %v7804 = vpop.f32.mrb[0].mxu0
      %7805 = vmatprep.mubr.bf16.mxu0 0
      %7806 = vmatmul.mubr.bf16.gmra.mrb[0].mxu0 %v7677
      %v7807 = vpop.f32.mrb[0].mxu0
      %v7808 = vadd.f32 %v7627, %v7807
      %v7809 = vpop.f32.mrb[0].mxu0
      %v7810 = vpop.f32.mrb[0].mxu0
      %v7811 = vadd.f32 %v7627, %v7810
      %v7812 = vpop.f32.mrb[0].mxu0
      %7813 = vmatprep.mubr.bf16.mxu0 0
      %7814 = vmatmul.mubr.bf16.gmra.mrb[0].mxu0 %v7679
      %v7815 = vpop.f32.mrb[0].mxu0
      %v7816 = vadd.f32 %v7627, %v7815
      %v7817 = vpop.f32.mrb[0].mxu0
      %v7818 = vpop.f32.mrb[0].mxu0
      %v7819 = vadd.f32 %v7627, %v7818
      %v7820 = vpop.f32.mrb[0].mxu0
      %7821 = vmatprep.mubr.bf16.mxu0 0
      %7822 = vmatmul.mubr.bf16.gmra.mrb[0].mxu0 %v7681
      %v7823 = vpop.f32.mrb[0].mxu0
      %v7824 = vadd.f32 %v7627, %v7823
      %v7825 = vpop.f32.mrb[0].mxu0
      %v7826 = vpop.f32.mrb[0].mxu0
      %v7827 = vadd.f32 %v7627, %v7826
      %v7828 = vpop.f32.mrb[0].mxu0
      %7829 = vmatprep.mubr.bf16.mxu0 0
      %7830 = vmatmul.mubr.bf16.gmra.mrb[0].mxu0 %v7683
      %v7831 = vpop.f32.mrb[0].mxu0
      %v7832 = vadd.f32 %v7627, %v7831
      %v7833 = vpop.f32.mrb[0].mxu0
      %v7834 = vpop.f32.mrb[0].mxu0
      %v7835 = vadd.f32 %v7627, %v7834
      %v7836 = vpop.f32.mrb[0].mxu0
      %7837 = vmatprep.mubr.bf16.mxu0 0
      %7838 = vmatmul.mubr.bf16.gmra.mrb[0].mxu0 %v7685
      %v7839 = vpop.f32.mrb[0].mxu0
      %v7840 = vadd.f32 %v7627, %v7839
      %v7841 = vpop.f32.mrb[0].mxu0
      %v7842 = vpop.f32.mrb[0].mxu0
      %v7843 = vadd.f32 %v7627, %v7842
      %v7844 = vpop.f32.mrb[0].mxu0
      %7845 = vmatprep.mubr.bf16.mxu0 0
      %7846 = vmatmul.mubr.bf16.gmra.mrb[0].mxu0 %v7687
      %v7847 = vpop.f32.mrb[0].mxu0
      %v7848 = vadd.f32 %v7627, %v7847
      %v7849 = vpop.f32.mrb[0].mxu0
      %v7850 = vpop.f32.mrb[0].mxu0
      %v7851 = vadd.f32 %v7627, %v7850
      %v7852 = vpop.f32.mrb[0].mxu0
      %7853 = vdwg.mxu0
      %v7854 = vsel %vm3600, %v280, 0.0
      %v7855 = vsel %vm3600, %v281, 0.0
      %v7856 = vsel %vm3600, %v282, 0.0
      %v7857 = vsel %vm3600, %v283, 0.0
      %v7858 = vsel %vm3600, %v284, 0.0
      %v7859 = vsel %vm3600, %v285, 0.0
      %v7860 = vsel %vm3600, %v286, 0.0
      %v7861 = vsel %vm3600, %v287, 0.0
      %v7862 = vsel %vm3600, %v288, 0.0
      %v7863 = vsel %vm3600, %v289, 0.0
      %v7864 = vsel %vm3600, %v290, 0.0
      %v7865 = vsel %vm3600, %v291, 0.0
      %v7866 = vsel %vm3600, %v292, 0.0
      %v7867 = vsel %vm3600, %v293, 0.0
      %v7868 = vsel %vm3600, %v294, 0.0
      %v7869 = vsel %vm3600, %v295, 0.0
      %v7870 = vsel %vm3600, %v296, 0.0
      %v7871 = vsel %vm3600, %v297, 0.0
      %v7872 = vsel %vm3600, %v298, 0.0
      %v7873 = vsel %vm3600, %v299, 0.0
      %v7874 = vsel %vm3600, %v300, 0.0
      %v7875 = vsel %vm3600, %v301, 0.0
      %v7876 = vsel %vm3600, %v302, 0.0
      %v7877 = vsel %vm3600, %v303, 0.0
      %v7878 = vsel %vm3600, %v304, 0.0
      %v7879 = vsel %vm3600, %v305, 0.0
      %v7880 = vsel %vm3600, %v306, 0.0
      %v7881 = vsel %vm3600, %v307, 0.0
      %v7882 = vsel %vm3600, %v308, 0.0
      %v7883 = vsel %vm3600, %v309, 0.0
      %v7884 = vsel %vm3600, %v310, 0.0
      %v7885 = vsel %vm3600, %v311, 0.0
      %v7886 = vadd.f32 %v7728, %v7854
      %v7887 = vadd.f32 %v7731, %v7855
      %v7888 = vadd.f32 %v7736, %v7856
      %v7889 = vadd.f32 %v7739, %v7857
      %v7890 = vadd.f32 %v7744, %v7858
      %v7891 = vadd.f32 %v7747, %v7859
      %v7892 = vadd.f32 %v7752, %v7860
      %v7893 = vadd.f32 %v7755, %v7861
      %v7894 = vadd.f32 %v7760, %v7862
      %v7895 = vadd.f32 %v7763, %v7863
      %v7896 = vadd.f32 %v7768, %v7864
      %v7897 = vadd.f32 %v7771, %v7865
      %v7898 = vadd.f32 %v7776, %v7866
      %v7899 = vadd.f32 %v7779, %v7867
      %v7900 = vadd.f32 %v7784, %v7868
      %v7901 = vadd.f32 %v7787, %v7869
      %v7902 = vadd.f32 %v7792, %v7870
      %v7903 = vadd.f32 %v7795, %v7871
      %v7904 = vadd.f32 %v7800, %v7872
      %v7905 = vadd.f32 %v7803, %v7873
      %v7906 = vadd.f32 %v7808, %v7874
      %v7907 = vadd.f32 %v7811, %v7875
      %v7908 = vadd.f32 %v7816, %v7876
      %v7909 = vadd.f32 %v7819, %v7877
      %v7910 = vadd.f32 %v7824, %v7878
      %v7911 = vadd.f32 %v7827, %v7879
      %v7912 = vadd.f32 %v7832, %v7880
      %v7913 = vadd.f32 %v7835, %v7881
      %v7914 = vadd.f32 %v7840, %v7882
      %v7915 = vadd.f32 %v7843, %v7883
      %v7916 = vadd.f32 %v7848, %v7884
      %v7917 = vadd.f32 %v7851, %v7885
      %7918 = vst.msk [vmem:[%s278] sm:$0xff] %vm3649, %v7886
      %7919 = vst.msk [vmem:[%s278 + $0x8] sm:$0xff] %vm3649, %v7887
      %7920 = vst.msk [vmem:[%s278 + $0x10] sm:$0xff] %vm3649, %v7888
      %7921 = vst.msk [vmem:[%s278 + $0x18] sm:$0xff] %vm3649, %v7889
      %7922 = vst.msk [vmem:[%s278 + $0x20] sm:$0xff] %vm3649, %v7890
      %7923 = vst.msk [vmem:[%s278 + $0x28] sm:$0xff] %vm3649, %v7891
      %7924 = vst.msk [vmem:[%s278 + $0x30] sm:$0xff] %vm3649, %v7892
      %7925 = vst.msk [vmem:[%s278 + $0x38] sm:$0xff] %vm3649, %v7893
      %7926 = vst.msk [vmem:[%s278 + $0x40] sm:$0xff] %vm3649, %v7894
      %7927 = vst.msk [vmem:[%s278 + $0x48] sm:$0xff] %vm3649, %v7895
      %7928 = vst.msk [vmem:[%s278 + $0x50] sm:$0xff] %vm3649, %v7896
      %7929 = vst.msk [vmem:[%s278 + $0x58] sm:$0xff] %vm3649, %v7897
      %7930 = vst.msk [vmem:[%s278 + $0x60] sm:$0xff] %vm3649, %v7898
      %7931 = vst.msk [vmem:[%s278 + $0x68] sm:$0xff] %vm3649, %v7899
      %7932 = vst.msk [vmem:[%s278 + $0x70] sm:$0xff] %vm3649, %v7900
      %7933 = vst.msk [vmem:[%s278 + $0x78] sm:$0xff] %vm3649, %v7901
      %7934 = vst.msk [vmem:[%s278 + $0x80] sm:$0xff] %vm3649, %v7902
      %7935 = vst.msk [vmem:[%s278 + $0x88] sm:$0xff] %vm3649, %v7903
      %7936 = vst.msk [vmem:[%s278 + $0x90] sm:$0xff] %vm3649, %v7904
      %7937 = vst.msk [vmem:[%s278 + $0x98] sm:$0xff] %vm3649, %v7905
      %7938 = vst.msk [vmem:[%s278 + $0xa0] sm:$0xff] %vm3649, %v7906
      %7939 = vst.msk [vmem:[%s278 + $0xa8] sm:$0xff] %vm3649, %v7907
      %7940 = vst.msk [vmem:[%s278 + $0xb0] sm:$0xff] %vm3649, %v7908
      %7941 = vst.msk [vmem:[%s278 + $0xb8] sm:$0xff] %vm3649, %v7909
      %7942 = vst.msk [vmem:[%s278 + $0xc0] sm:$0xff] %vm3649, %v7910
      %7943 = vst.msk [vmem:[%s278 + $0xc8] sm:$0xff] %vm3649, %v7911
      %7944 = vst.msk [vmem:[%s278 + $0xd0] sm:$0xff] %vm3649, %v7912
      %7945 = vst.msk [vmem:[%s278 + $0xd8] sm:$0xff] %vm3649, %v7913
      %7946 = vst.msk [vmem:[%s278 + $0xe0] sm:$0xff] %vm3649, %v7914
      %7947 = vst.msk [vmem:[%s278 + $0xe8] sm:$0xff] %vm3649, %v7915
      %7948 = vst.msk [vmem:[%s278 + $0xf0] sm:$0xff] %vm3649, %v7916
      %7949 = vst.msk [vmem:[%s278 + $0xf8] sm:$0xff] %vm3649, %v7917
      %p7950 = scmp.lt.s32.totalorder %s18, 1
      %s7951 = scalar_select %p7950, %s18, 1
      %s7952 = smul.addr %s7951, 32
      %s7953 = smul.addr %s7952, 8
      %s7954 = scalar_lea.vmem %s7, %s7953
      // Predicated region
      $region49: #{tpu_custom_call.1} parent=47 // pred_check
        %p7955 = pneg %p188
      $region50: #{tpu_custom_call.1} parent=47 // pred_check_branch
        %7957 = sbr.rel (%p7955) target = $region52
      $region51: #{tpu_custom_call.1} parent=47 // pred_region
        _
      $region52: #{tpu_custom_call.1} parent=47 // pred_fallthru
        _
    $region48: #{tpu_custom_call.1} parent=5 // pred_fallthru
      _
    %p7958 = scmp.le.s32.totalorder 2, %s13
    // Predicated region
    $region53: #{tpu_custom_call.1} parent=5 // pred_check
      %p7959 = pneg %p7958
    $region54: #{tpu_custom_call.1} parent=5 // pred_check_branch
      %7961 = sbr.rel (%p7959) target = $region56
    $region55: #{tpu_custom_call.1} parent=5 // pred_region
      %s7962 = ssub.s32 %s13, 2
      // Predicated region
      $region57: #{tpu_custom_call.1} parent=55 // pred_check
        %p7963 = pneg %p194
      $region58: #{tpu_custom_call.1} parent=55 // pred_check_branch
        %7965 = sbr.rel (%p7963) target = $region60
      $region59: #{tpu_custom_call.1} parent=55 // pred_region
        %p7966 = scmp.lt.s32.totalorder %s19, 1
        %s7967 = scalar_select %p7966, %s19, 1
        %s7968 = smul.addr %s7967, 32
        %s7969 = smul.addr %s7968, 8
        %s7970 = scalar_lea.vmem %s7, %s7969
      $region60: #{tpu_custom_call.1} parent=55 // pred_fallthru
        _
    $region56: #{tpu_custom_call.1} parent=5 // pred_fallthru
      _
  $region6: #{tpu_custom_call.1} parent=0 // loop_footer
    %s17 = sadd.s32 1, %s13
  $region7: #{tpu_custom_call.1} parent=0 // loop_footer_branch
    %12 = sbr.rel target = $region3
  $region8: #{tpu_custom_call.1} parent=0 // loop_exit
    _

</llo_original>
